<compile_context>
chip_gen: v7x
topology: tpu7x:2x2x1
jax: 0.10.0
libtpu: 0.0.40
codegen_flags: <defaults>
</compile_context>

<pallas_src>
import math

import numpy as np

import jax
import jax.numpy as jnp
from jax.experimental import pallas as pl
from jax.experimental.pallas import tpu as pltpu  # noqa: F401  (TPU backend)

# ----------------------------------------------------------------------------
# Config (cfg.COTRM.{d_model, nhead, d_ffn}; TRM uses the same sizes)
# ----------------------------------------------------------------------------
D_MODEL = 32
NHEAD = 4
D_FFN = 64
LN_EPS = 1e-5

_LANES = 128        # vreg lane width; every slab entry is padded to 128 lanes
_ROW_ALIGN = 8      # vreg sublane count; every slab entry starts 8-row aligned
_MASK_NEG = -1e30   # additive bias masking cross-batch attention pairs


# ----------------------------------------------------------------------------
# Parameter slab packing (one VMEM-resident (rows, 128) f32 array for ALL params)
# ----------------------------------------------------------------------------
class _SlabBuilder:
    """Packs many small parameter arrays into one (rows, 128) f32 slab."""

    def __init__(self):
        self._blocks = []
        self._layout = {}   # name -> (row_offset, n_rows, n_cols)
        self._rows = 0

    def add(self, name, arr):
        a = np.asarray(arr, np.float32)
        if a.ndim == 1:
            a = a[None, :]
        assert a.ndim == 2 and a.shape[1] <= _LANES, (name, a.shape)
        r, c = a.shape
        rp = -(-r // _ROW_ALIGN) * _ROW_ALIGN          # 8-row aligned start/extent
        blk = np.zeros((rp, _LANES), np.float32)
        blk[:r, :c] = a
        self._layout[name] = (self._rows, r, c)
        self._blocks.append(blk)
        self._rows += rp

    def finish(self):
        slab = np.concatenate(self._blocks, axis=0)
        return jnp.asarray(slab), dict(self._layout)


# ----------------------------------------------------------------------------
# Fused whole-layer kernel
# ----------------------------------------------------------------------------
def _make_cotrm_kernel(layout, d_model, nhead, eps):
    D, H = d_model, nhead
    hd = D // H

    def get(slab_ref, name):
        off, r, c = layout[name]
        return slab_ref[off:off + r, :c]          # static slice: zero runtime cost

    def layer_norm(y, gamma, beta):
        mu = jnp.mean(y, axis=-1, keepdims=True)
        var = jnp.mean((y - mu) ** 2, axis=-1, keepdims=True)
        return (y - mu) * jax.lax.rsqrt(var + eps) * gamma + beta

    def mha(slab_ref, q2, k2, v2, pfx, mask_bias):
        """Multi-head attention on flat (tokens, D) activations.

        Per-batch attention is realized by the additive block-diagonal
        `mask_bias` (0 within a batch, -1e30 across batches), so no (B, S, D)
        reshape/transposing is ever needed inside the kernel.  The output
        projection is accumulated per head (no head concatenation).
        """
        wo_t = get(slab_ref, pfx + "wo_t")        # (D, D) = W_out.T
        acc = None
        # TODO(synk): heads still use hd=8 lane slices + per-head sub-vreg MXU
        # ops; a fully head-batched dot_general needs a 4-D relayout that is not
        # guaranteed to lower in Mosaic, so the safe per-head unroll is kept.
        for h in range(H):
            sl = slice(h * hd, (h + 1) * hd)
            s = jnp.einsum("qd,kd->qk", q2[:, sl], k2[:, sl],
                           preferred_element_type=jnp.float32) + mask_bias
            m = jnp.max(s, axis=-1, keepdims=True)
            p = jnp.exp(s - m)
            p = p * pl.reciprocal(jnp.sum(p, axis=-1, keepdims=True), approx=True)
            oh = jnp.einsum("qk,kd->qd", p, v2[:, sl],
                            preferred_element_type=jnp.float32)
            contrib = jnp.dot(oh, wo_t[sl, :], preferred_element_type=jnp.float32)
            acc = contrib if acc is None else acc + contrib
        return acc + get(slab_ref, pfx + "bo")

    def half_block(slab_ref, x, mem, pfx, m_self, m_cross):
        """CoTRMLayerHalf.forward (norm_first=False, eval, no user masks)."""
        qkv = jnp.dot(x, get(slab_ref, pfx + "sa_wqkv_t"),
                      preferred_element_type=jnp.float32) + get(slab_ref, pfx + "sa_bqkv")
        sa = mha(slab_ref, qkv[:, :D], qkv[:, D:2 * D], qkv[:, 2 * D:],
                 pfx + "sa_", m_self)
        x = layer_norm(x + sa, get(slab_ref, pfx + "n1_g"), get(slab_ref, pfx + "n1_b"))

        qc = jnp.dot(x, get(slab_ref, pfx + "ca_wq_t"),
                     preferred_element_type=jnp.float32) + get(slab_ref, pfx + "ca_bq")
        kvc = jnp.dot(mem, get(slab_ref, pfx + "ca_wkv_t"),
                      preferred_element_type=jnp.float32) + get(slab_ref, pfx + "ca_bkv")
        ca = mha(slab_ref, qc, kvc[:, :D], kvc[:, D:], pfx + "ca_", m_cross)
        x = layer_norm(x + ca, get(slab_ref, pfx + "n2_g"), get(slab_ref, pfx + "n2_b"))

        hidden = jnp.maximum(
            jnp.dot(x, get(slab_ref, pfx + "w1_t"),
                    preferred_element_type=jnp.float32) + get(slab_ref, pfx + "b1"),
            0.0)
        ff = jnp.dot(hidden, get(slab_ref, pfx + "w2_t"),
                     preferred_element_type=jnp.float32) + get(slab_ref, pfx + "b2")
        return layer_norm(x + ff, get(slab_ref, pfx + "n3_g"), get(slab_ref, pfx + "n3_b"))

    def encoder_block(slab_ref, x, pfx, m_self):
        """nn.TransformerEncoderLayer.forward (norm_first=False, eval)."""
        qkv = jnp.dot(x, get(slab_ref, pfx + "sa_wqkv_t"),
                      preferred_element_type=jnp.float32) + get(slab_ref, pfx + "sa_bqkv")
        sa = mha(slab_ref, qkv[:, :D], qkv[:, D:2 * D], qkv[:, 2 * D:],
                 pfx + "sa_", m_self)
        x = layer_norm(x + sa, get(slab_ref, pfx + "n1_g"), get(slab_ref, pfx + "n1_b"))

        hidden = jnp.maximum(
            jnp.dot(x, get(slab_ref, pfx + "w1_t"),
                    preferred_element_type=jnp.float32) + get(slab_ref, pfx + "b1"),
            0.0)
        ff = jnp.dot(hidden, get(slab_ref, pfx + "w2_t"),
                     preferred_element_type=jnp.float32) + get(slab_ref, pfx + "b2")
        return layer_norm(x + ff, get(slab_ref, pfx + "n2_g"), get(slab_ref, pfx + "n2_b"))

    def kernel(struct_ref, seq_ref, slab_ref, struct_out_ref, seq_out_ref):
        xs = struct_ref[...].astype(jnp.float32)   # (B*Ss, D) flat struct tokens
        xq = seq_ref[...].astype(jnp.float32)      # (B*Sq, D) flat seq tokens

        m_ss = get(slab_ref, "m_ss")   # struct->struct block-diag mask bias
        m_sq = get(slab_ref, "m_sq")   # struct->seq
        m_qq = get(slab_ref, "m_qq")   # seq->seq
        m_qs = get(slab_ref, "m_qs")   # seq->struct

        hs = half_block(slab_ref, xs, xq, "lh_", m_ss, m_sq)    # LeftHalf
        hq = half_block(slab_ref, xq, xs, "rh_", m_qq, m_qs)    # RightHalf
        hs = encoder_block(slab_ref, hs, "lt_", m_ss)           # LeftTRM
        hq = encoder_block(slab_ref, hq, "rt_", m_qq)           # RightTRM

        struct_out_ref[...] = hs.astype(struct_out_ref.dtype)
        seq_out_ref[...] = hq.astype(seq_out_ref.dtype)

    return kernel


# ----------------------------------------------------------------------------
# Parameter preparation: PyTorch layout -> one packed slab + static layout table
#   * weights pre-transposed to (Din, Dout)
#   * softmax 1/sqrt(head_dim) folded into the Q projection weight/bias
# ----------------------------------------------------------------------------
def _add_attn_qkv_fused(builder, pfx, p, nhead):
    D = p["out_w"].shape[0]
    scale = 1.0 / math.sqrt(D // nhead)
    w = np.asarray(p["in_proj_w"], np.float32)        # (3D, D), rows = [q; k; v]
    b = np.asarray(p["in_proj_b"], np.float32)        # (3D,)
    col_scale = np.concatenate([np.full(D, scale, np.float32),
                                np.ones(2 * D, np.float32)])
    builder.add(pfx + "wqkv_t", w.T * col_scale[None, :])       # (D, 3D)
    builder.add(pfx + "bqkv", b * col_scale)
    builder.add(pfx + "wo_t", np.asarray(p["out_w"], np.float32).T)
    builder.add(pfx + "bo", np.asarray(p["out_b"], np.float32))


def _add_attn_cross(builder, pfx, p, nhead):
    D = p["out_w"].shape[0]
    scale = 1.0 / math.sqrt(D // nhead)
    w = np.asarray(p["in_proj_w"], np.float32)
    b = np.asarray(p["in_proj_b"], np.float32)
    builder.add(pfx + "wq_t", w[:D].T * scale)                  # (D, D)
    builder.add(pfx + "bq", b[:D] * scale)
    builder.add(pfx + "wkv_t", w[D:].T)                         # (D, 2D)
    builder.add(pfx + "bkv", b[D:])
    builder.add(pfx + "wo_t", np.asarray(p["out_w"], np.float32).T)
    builder.add(pfx + "bo", np.asarray(p["out_b"], np.float32))


def _add_ffn(builder, pfx, p):
    builder.add(pfx + "w1_t", np.asarray(p["lin1_w"], np.float32).T)   # (D, Dffn)
    builder.add(pfx + "b1", np.asarray(p["lin1_b"], np.float32))
    builder.add(pfx + "w2_t", np.asarray(p["lin2_w"], np.float32).T)   # (Dffn, D)
    builder.add(pfx + "b2", np.asarray(p["lin2_b"], np.float32))


def _add_norm(builder, pfx, p, idx):
    builder.add(pfx + f"n{idx}_g", np.asarray(p[f"norm{idx}_w"], np.float32))
    builder.add(pfx + f"n{idx}_b", np.asarray(p[f"norm{idx}_b"], np.float32))


def _block_diag_mask(batch, s_q, s_k):
    """Additive bias: 0 for same-batch (query, key) pairs, -1e30 otherwise."""
    bq = np.repeat(np.arange(batch), s_q)
    bk = np.repeat(np.arange(batch), s_k)
    return np.where(bq[:, None] == bk[None, :], 0.0, _MASK_NEG).astype(np.float32)


def prepare_cotrm_params(raw, nhead, batch, s_struct, s_seq):
    b = _SlabBuilder()
    for pfx, p in (("lh_", raw["left_half"]), ("rh_", raw["right_half"])):
        _add_attn_qkv_fused(b, pfx + "sa_", p["self_attn"], nhead)
        _add_attn_cross(b, pfx + "ca_", p["cross_attn"], nhead)
        _add_ffn(b, pfx, p)
        for i in (1, 2, 3):
            _add_norm(b, pfx, p, i)
    for pfx, p in (("lt_", raw["left_trm"]), ("rt_", raw["right_trm"])):
        _add_attn_qkv_fused(b, pfx + "sa_", p["self_attn"], nhead)
        _add_ffn(b, pfx, p)
        for i in (1, 2):
            _add_norm(b, pfx, p, i)
    # Block-diagonal (per-batch) attention-mask biases for the flat token axis.
    b.add("m_ss", _block_diag_mask(batch, s_struct, s_struct))
    b.add("m_sq", _block_diag_mask(batch, s_struct, s_seq))
    b.add("m_qq", _block_diag_mask(batch, s_seq, s_seq))
    b.add("m_qs", _block_diag_mask(batch, s_seq, s_struct))
    slab, layout = b.finish()
    d_model = int(raw["left_half"]["norm1_w"].shape[0])
    return {"slab": slab, "layout": layout, "d_model": d_model, "nhead": nhead,
            "batch": batch, "s_struct": s_struct, "s_seq": s_seq}


# ----------------------------------------------------------------------------
# Forward wrapper: one pallas_call for the whole CoTRMLayer
# ----------------------------------------------------------------------------
def make_cotrm_forward(packed):
    D = packed["d_model"]
    B, Ss, Sq = packed["batch"], packed["s_struct"], packed["s_seq"]
    Ns, Nt = B * Ss, B * Sq
    kern = _make_cotrm_kernel(packed["layout"], D, packed["nhead"], LN_EPS)
    slab = packed["slab"]

    # TODO(synk): on v7x the data-independent left/right branches could be
    # sharded across the 2 TensorCores (grid=(2,), dimension_semantics=
    # ("parallel",)) at the cost of padding both sequences to a common length.
    def forward(struct, seq, struct_mask=None, seq_mask=None,
                struct_padding_mask=None, seq_padding_mask=None):
        # TODO(synk): user-supplied attention / key-padding masks are not wired
        # into the kernel (the reference configuration passes None for all).
        assert struct.shape == (B, Ss, D) and seq.shape == (B, Sq, D)
        # (B,S,D)->(B*S,D) flattening is done here (free in XLA) so the kernel
        # is purely 2-D; B*Ss=16 / B*Sq=24 are already sublane (8) aligned.
        out_s, out_q = pl.pallas_call(
            kern,
            out_shape=(jax.ShapeDtypeStruct((Ns, D), struct.dtype),
                       jax.ShapeDtypeStruct((Nt, D), seq.dtype)),
        )(struct.reshape(Ns, D), seq.reshape(Nt, D), slab)
        return (out_s.reshape(B, Ss, D), out_q.reshape(B, Sq, D),
                struct_mask, seq_mask, struct_padding_mask, seq_padding_mask)

    return forward


# ----------------------------------------------------------------------------
# Deterministic parameter initialization (PyTorch weight layout)
# ----------------------------------------------------------------------------
def _init_mha(key, d_model):
    k1, k2 = jax.random.split(key)
    return {
        "in_proj_w": 0.05 * jax.random.normal(k1, (3 * d_model, d_model), jnp.float32),
        "in_proj_b": jnp.zeros((3 * d_model,), jnp.float32),
        "out_w": 0.05 * jax.random.normal(k2, (d_model, d_model), jnp.float32),
        "out_b": jnp.zeros((d_model,), jnp.float32),
    }


def _init_ffn(key, d_model, d_ffn):
    k1, k2 = jax.random.split(key)
    return {
        "lin1_w": 0.05 * jax.random.normal(k1, (d_ffn, d_model), jnp.float32),
        "lin1_b": jnp.zeros((d_ffn,), jnp.float32),
        "lin2_w": 0.05 * jax.random.normal(k2, (d_model, d_ffn), jnp.float32),
        "lin2_b": jnp.zeros((d_model,), jnp.float32),
    }


def _ln_params(d_model):
    return jnp.ones((d_model,), jnp.float32), jnp.zeros((d_model,), jnp.float32)


def init_cotrm_half(key, d_model, d_ffn):
    k1, k2, k3 = jax.random.split(key, 3)
    p = {"self_attn": _init_mha(k1, d_model), "cross_attn": _init_mha(k2, d_model)}
    p.update(_init_ffn(k3, d_model, d_ffn))
    p["norm1_w"], p["norm1_b"] = _ln_params(d_model)
    p["norm2_w"], p["norm2_b"] = _ln_params(d_model)
    p["norm3_w"], p["norm3_b"] = _ln_params(d_model)
    return p


def init_encoder_layer(key, d_model, d_ffn):
    k1, k2 = jax.random.split(key)
    p = {"self_attn": _init_mha(k1, d_model)}
    p.update(_init_ffn(k2, d_model, d_ffn))
    p["norm1_w"], p["norm1_b"] = _ln_params(d_model)
    p["norm2_w"], p["norm2_b"] = _ln_params(d_model)
    return p


def init_cotrm_layer(key, d_model, d_ffn):
    k1, k2, k3, k4 = jax.random.split(key, 4)
    return {
        "left_half": init_cotrm_half(k1, d_model, d_ffn),
        "right_half": init_cotrm_half(k2, d_model, d_ffn),
        "left_trm": init_encoder_layer(k3, d_model, d_ffn),
        "right_trm": init_encoder_layer(k4, d_model, d_ffn),
    }


# ----------------------------------------------------------------------------
# Pure-JAX reference (eval-mode PyTorch semantics) for correctness checking
# ----------------------------------------------------------------------------
def _ref_mha(x_q, x_kv, p, nhead):
    B, Sq, D = x_q.shape
    Sk = x_kv.shape[1]
    hd = D // nhead
    wq, wk, wv = jnp.split(p["in_proj_w"], 3, axis=0)
    bq, bk, bv = jnp.split(p["in_proj_b"], 3, axis=0)
    q = (x_q @ wq.T + bq).reshape(B, Sq, nhead, hd).transpose(0, 2, 1, 3)
    k = (x_kv @ wk.T + bk).reshape(B, Sk, nhead, hd).transpose(0, 2, 1, 3)
    v = (x_kv @ wv.T + bv).reshape(B, Sk, nhead, hd).transpose(0, 2, 1, 3)
    s = jnp.einsum("bhqd,bhkd->bhqk", q, k) / math.sqrt(hd)
    a = jax.nn.softmax(s, axis=-1)
    o = jnp.einsum("bhqk,bhkd->bhqd", a, v).transpose(0, 2, 1, 3).reshape(B, Sq, D)
    return o @ p["out_w"].T + p["out_b"]


def _ref_ln(x, g, b, eps=LN_EPS):
    mean = jnp.mean(x, -1, keepdims=True)
    var = jnp.mean((x - mean) ** 2, -1, keepdims=True)
    return (x - mean) / jnp.sqrt(var + eps) * g + b


def _ref_ff(x, p):
    return jnp.maximum(x @ p["lin1_w"].T + p["lin1_b"], 0.0) @ p["lin2_w"].T + p["lin2_b"]


def _ref_half(q, kv, p, nhead):
    x = q
    x = _ref_ln(x + _ref_mha(x, x, p["self_attn"], nhead), p["norm1_w"], p["norm1_b"])
    x = _ref_ln(x + _ref_mha(x, kv, p["cross_attn"], nhead), p["norm2_w"], p["norm2_b"])
    x = _ref_ln(x + _ref_ff(x, p), p["norm3_w"], p["norm3_b"])
    return x


def _ref_encoder(x, p, nhead):
    x = _ref_ln(x + _ref_mha(x, x, p["self_attn"], nhead), p["norm1_w"], p["norm1_b"])
    x = _ref_ln(x + _ref_ff(x, p), p["norm2_w"], p["norm2_b"])
    return x


def _ref_cotrm_layer(struct, seq, params, nhead):
    sh = _ref_half(struct, seq, params["left_half"], nhead)
    qh = _ref_half(seq, struct, params["right_half"], nhead)
    sh = _ref_encoder(sh, params["left_trm"], nhead)
    qh = _ref_encoder(qh, params["right_trm"], nhead)
    return sh, qh


# ----------------------------------------------------------------------------
# Main
# ----------------------------------------------------------------------------
if __name__ == "__main__":
    key = jax.random.PRNGKey(0)
    k_params, k_struct, k_seq = jax.random.split(key, 3)

    B, S_STRUCT, S_SEQ = 2, 8, 12
    struct = jax.random.normal(k_struct, (B, S_STRUCT, D_MODEL), jnp.float32)
    seq = jax.random.normal(k_seq, (B, S_SEQ, D_MODEL), jnp.float32)

    raw_params = init_cotrm_layer(k_params, D_MODEL, D_FFN)
    packed = prepare_cotrm_params(raw_params, NHEAD, B, S_STRUCT, S_SEQ)

    forward = make_cotrm_forward(packed)
    fwd = jax.jit(forward)
    struct_hidden, seq_hidden, *_ = fwd(struct, seq)
    jax.block_until_ready((struct_hidden, seq_hidden))

    # correctness check against a pure-JAX reference of the PyTorch forward
    ref_struct, ref_seq = _ref_cotrm_layer(struct, seq, raw_params, NHEAD)

    assert struct_hidden.shape == (B, S_STRUCT, D_MODEL)
    assert seq_hidden.shape == (B, S_SEQ, D_MODEL)
    assert bool(jnp.all(jnp.isfinite(struct_hidden)))
    assert bool(jnp.all(jnp.isfinite(seq_hidden)))
    assert bool(jnp.allclose(struct_hidden, ref_struct, atol=2e-3, rtol=2e-3))
    assert bool(jnp.allclose(seq_hidden, ref_seq, atol=2e-3, rtol=2e-3))
    print("KERNEL_OK")
</pallas_src>

<mosaic_0001>
module attributes {stable_mosaic.version = 11 : i64} {
  func.func @kernel(%arg0: memref<16x32xf32, #tpu.memory_space<vmem>>, %arg1: memref<24x32xf32, #tpu.memory_space<vmem>>, %arg2: memref<1248x128xf32, #tpu.memory_space<vmem>>, %arg3: memref<16x32xf32, #tpu.memory_space<vmem>>, %arg4: memref<24x32xf32, #tpu.memory_space<vmem>>) attributes {dimension_semantics = [], scalar_prefetch = 0 : i64, scratch_operands = 0 : i64, tpu.core_type = #tpu.core_type<tc>} {
    %c0 = arith.constant 0 : index
    %c0_0 = arith.constant 0 : index
    %0 = vector.load %arg0[%c0, %c0_0] : memref<16x32xf32, #tpu.memory_space<vmem>>, vector<16x32xf32>
    %c0_1 = arith.constant 0 : index
    %c0_2 = arith.constant 0 : index
    %1 = vector.load %arg1[%c0_1, %c0_2] : memref<24x32xf32, #tpu.memory_space<vmem>>, vector<24x32xf32>
    %c1168 = arith.constant 1168 : index
    %c0_3 = arith.constant 0 : index
    %2 = vector.load %arg2[%c1168, %c0_3] : memref<1248x128xf32, #tpu.memory_space<vmem>>, vector<16x16xf32>
    %c1184 = arith.constant 1184 : index
    %c0_4 = arith.constant 0 : index
    %3 = vector.load %arg2[%c1184, %c0_4] : memref<1248x128xf32, #tpu.memory_space<vmem>>, vector<16x24xf32>
    %c1200 = arith.constant 1200 : index
    %c0_5 = arith.constant 0 : index
    %4 = vector.load %arg2[%c1200, %c0_5] : memref<1248x128xf32, #tpu.memory_space<vmem>>, vector<24x24xf32>
    %c1224 = arith.constant 1224 : index
    %c0_6 = arith.constant 0 : index
    %5 = vector.load %arg2[%c1224, %c0_6] : memref<1248x128xf32, #tpu.memory_space<vmem>>, vector<24x16xf32>
    %c0_7 = arith.constant 0 : index
    %c0_8 = arith.constant 0 : index
    %6 = vector.load %arg2[%c0_7, %c0_8] : memref<1248x128xf32, #tpu.memory_space<vmem>>, vector<32x96xf32>
    %cst = arith.constant dense<0.000000e+00> : vector<16x96xf32>
    %7 = tpu.matmul %0, %6, %cst {dimension_numbers = #tpu.dot_dimension_numbers<[1], [0], [0], [1], [0, 0, 1, 1], [], []>} : vector<16x32xf32>, vector<32x96xf32>, vector<16x96xf32> -> vector<16x96xf32>
    %c32 = arith.constant 32 : index
    %c0_9 = arith.constant 0 : index
    %8 = vector.load %arg2[%c32, %c0_9] : memref<1248x128xf32, #tpu.memory_space<vmem>>, vector<1x96xf32>
    %9 = vector.broadcast %8 : vector<1x96xf32> to vector<16x96xf32>
    %10 = arith.addf %7, %9 : vector<16x96xf32>
    %11 = vector.extract_strided_slice %10 {offsets = [0, 0], sizes = [16, 32], strides = [1, 1]} : vector<16x96xf32> to vector<16x32xf32>
    %12 = vector.extract_strided_slice %10 {offsets = [0, 32], sizes = [16, 32], strides = [1, 1]} : vector<16x96xf32> to vector<16x32xf32>
    %13 = vector.extract_strided_slice %10 {offsets = [0, 64], sizes = [16, 32], strides = [1, 1]} : vector<16x96xf32> to vector<16x32xf32>
    %c40 = arith.constant 40 : index
    %c0_10 = arith.constant 0 : index
    %14 = vector.load %arg2[%c40, %c0_10] : memref<1248x128xf32, #tpu.memory_space<vmem>>, vector<32x32xf32>
    %15 = vector.extract_strided_slice %11 {offsets = [0, 0], sizes = [16, 8], strides = [1, 1]} : vector<16x32xf32> to vector<16x8xf32>
    %16 = vector.extract_strided_slice %12 {offsets = [0, 0], sizes = [16, 8], strides = [1, 1]} : vector<16x32xf32> to vector<16x8xf32>
    "tpu.trace_start"() <{level = 10 : i32, message = "qd,kd->qk"}> : () -> ()
    %cst_11 = arith.constant dense<0.000000e+00> : vector<16x16xf32>
    %17 = tpu.matmul %15, %16, %cst_11 {dimension_numbers = #tpu.dot_dimension_numbers<[1], [1], [0], [0], [0, 0, 1, 0], [], []>} : vector<16x8xf32>, vector<16x8xf32>, vector<16x16xf32> -> vector<16x16xf32>
    "tpu.trace_stop"() : () -> ()
    %18 = arith.addf %17, %2 : vector<16x16xf32>
    %cst_12 = arith.constant dense<0xFF800000> : vector<16xf32>
    %19 = vector.multi_reduction <maximumf>, %18, %cst_12 [1] : vector<16x16xf32> to vector<16xf32>
    %20 = vector.shape_cast %19 : vector<16xf32> to vector<16x1xf32>
    %21 = vector.broadcast %20 : vector<16x1xf32> to vector<16x16xf32>
    %22 = arith.subf %18, %21 : vector<16x16xf32>
    %23 = math.exp %22 : vector<16x16xf32>
    %cst_13 = arith.constant dense<0.000000e+00> : vector<16xf32>
    %24 = vector.multi_reduction <add>, %23, %cst_13 [1] : vector<16x16xf32> to vector<16xf32>
    %25 = vector.shape_cast %24 : vector<16xf32> to vector<16x1xf32>
    %26 = tpu.reciprocal %25 {approx = true} : vector<16x1xf32> -> vector<16x1xf32>
    %27 = vector.broadcast %26 : vector<16x1xf32> to vector<16x16xf32>
    %28 = arith.mulf %23, %27 : vector<16x16xf32>
    %29 = vector.extract_strided_slice %13 {offsets = [0, 0], sizes = [16, 8], strides = [1, 1]} : vector<16x32xf32> to vector<16x8xf32>
    "tpu.trace_start"() <{level = 10 : i32, message = "qk,kd->qd"}> : () -> ()
    %cst_14 = arith.constant dense<0.000000e+00> : vector<16x8xf32>
    %30 = tpu.matmul %28, %29, %cst_14 {dimension_numbers = #tpu.dot_dimension_numbers<[1], [0], [0], [1], [0, 0, 1, 1], [], []>} : vector<16x16xf32>, vector<16x8xf32>, vector<16x8xf32> -> vector<16x8xf32>
    "tpu.trace_stop"() : () -> ()
    %31 = vector.extract_strided_slice %14 {offsets = [0, 0], sizes = [8, 32], strides = [1, 1]} : vector<32x32xf32> to vector<8x32xf32>
    %cst_15 = arith.constant dense<0.000000e+00> : vector<16x32xf32>
    %32 = tpu.matmul %30, %31, %cst_15 {dimension_numbers = #tpu.dot_dimension_numbers<[1], [0], [0], [1], [0, 0, 1, 1], [], []>} : vector<16x8xf32>, vector<8x32xf32>, vector<16x32xf32> -> vector<16x32xf32>
    %33 = vector.extract_strided_slice %11 {offsets = [0, 8], sizes = [16, 8], strides = [1, 1]} : vector<16x32xf32> to vector<16x8xf32>
    %34 = vector.extract_strided_slice %12 {offsets = [0, 8], sizes = [16, 8], strides = [1, 1]} : vector<16x32xf32> to vector<16x8xf32>
    "tpu.trace_start"() <{level = 10 : i32, message = "qd,kd->qk"}> : () -> ()
    %cst_16 = arith.constant dense<0.000000e+00> : vector<16x16xf32>
    %35 = tpu.matmul %33, %34, %cst_16 {dimension_numbers = #tpu.dot_dimension_numbers<[1], [1], [0], [0], [0, 0, 1, 0], [], []>} : vector<16x8xf32>, vector<16x8xf32>, vector<16x16xf32> -> vector<16x16xf32>
    "tpu.trace_stop"() : () -> ()
    %36 = arith.addf %35, %2 : vector<16x16xf32>
    %cst_17 = arith.constant dense<0xFF800000> : vector<16xf32>
    %37 = vector.multi_reduction <maximumf>, %36, %cst_17 [1] : vector<16x16xf32> to vector<16xf32>
    %38 = vector.shape_cast %37 : vector<16xf32> to vector<16x1xf32>
    %39 = vector.broadcast %38 : vector<16x1xf32> to vector<16x16xf32>
    %40 = arith.subf %36, %39 : vector<16x16xf32>
    %41 = math.exp %40 : vector<16x16xf32>
    %cst_18 = arith.constant dense<0.000000e+00> : vector<16xf32>
    %42 = vector.multi_reduction <add>, %41, %cst_18 [1] : vector<16x16xf32> to vector<16xf32>
    %43 = vector.shape_cast %42 : vector<16xf32> to vector<16x1xf32>
    %44 = tpu.reciprocal %43 {approx = true} : vector<16x1xf32> -> vector<16x1xf32>
    %45 = vector.broadcast %44 : vector<16x1xf32> to vector<16x16xf32>
    %46 = arith.mulf %41, %45 : vector<16x16xf32>
    %47 = vector.extract_strided_slice %13 {offsets = [0, 8], sizes = [16, 8], strides = [1, 1]} : vector<16x32xf32> to vector<16x8xf32>
    "tpu.trace_start"() <{level = 10 : i32, message = "qk,kd->qd"}> : () -> ()
    %cst_19 = arith.constant dense<0.000000e+00> : vector<16x8xf32>
    %48 = tpu.matmul %46, %47, %cst_19 {dimension_numbers = #tpu.dot_dimension_numbers<[1], [0], [0], [1], [0, 0, 1, 1], [], []>} : vector<16x16xf32>, vector<16x8xf32>, vector<16x8xf32> -> vector<16x8xf32>
    "tpu.trace_stop"() : () -> ()
    %49 = vector.extract_strided_slice %14 {offsets = [8, 0], sizes = [8, 32], strides = [1, 1]} : vector<32x32xf32> to vector<8x32xf32>
    %cst_20 = arith.constant dense<0.000000e+00> : vector<16x32xf32>
    %50 = tpu.matmul %48, %49, %cst_20 {dimension_numbers = #tpu.dot_dimension_numbers<[1], [0], [0], [1], [0, 0, 1, 1], [], []>} : vector<16x8xf32>, vector<8x32xf32>, vector<16x32xf32> -> vector<16x32xf32>
    %51 = arith.addf %32, %50 : vector<16x32xf32>
    %52 = vector.extract_strided_slice %11 {offsets = [0, 16], sizes = [16, 8], strides = [1, 1]} : vector<16x32xf32> to vector<16x8xf32>
    %53 = vector.extract_strided_slice %12 {offsets = [0, 16], sizes = [16, 8], strides = [1, 1]} : vector<16x32xf32> to vector<16x8xf32>
    "tpu.trace_start"() <{level = 10 : i32, message = "qd,kd->qk"}> : () -> ()
    %cst_21 = arith.constant dense<0.000000e+00> : vector<16x16xf32>
    %54 = tpu.matmul %52, %53, %cst_21 {dimension_numbers = #tpu.dot_dimension_numbers<[1], [1], [0], [0], [0, 0, 1, 0], [], []>} : vector<16x8xf32>, vector<16x8xf32>, vector<16x16xf32> -> vector<16x16xf32>
    "tpu.trace_stop"() : () -> ()
    %55 = arith.addf %54, %2 : vector<16x16xf32>
    %cst_22 = arith.constant dense<0xFF800000> : vector<16xf32>
    %56 = vector.multi_reduction <maximumf>, %55, %cst_22 [1] : vector<16x16xf32> to vector<16xf32>
    %57 = vector.shape_cast %56 : vector<16xf32> to vector<16x1xf32>
    %58 = vector.broadcast %57 : vector<16x1xf32> to vector<16x16xf32>
    %59 = arith.subf %55, %58 : vector<16x16xf32>
    %60 = math.exp %59 : vector<16x16xf32>
    %cst_23 = arith.constant dense<0.000000e+00> : vector<16xf32>
    %61 = vector.multi_reduction <add>, %60, %cst_23 [1] : vector<16x16xf32> to vector<16xf32>
    %62 = vector.shape_cast %61 : vector<16xf32> to vector<16x1xf32>
    %63 = tpu.reciprocal %62 {approx = true} : vector<16x1xf32> -> vector<16x1xf32>
    %64 = vector.broadcast %63 : vector<16x1xf32> to vector<16x16xf32>
    %65 = arith.mulf %60, %64 : vector<16x16xf32>
    %66 = vector.extract_strided_slice %13 {offsets = [0, 16], sizes = [16, 8], strides = [1, 1]} : vector<16x32xf32> to vector<16x8xf32>
    "tpu.trace_start"() <{level = 10 : i32, message = "qk,kd->qd"}> : () -> ()
    %cst_24 = arith.constant dense<0.000000e+00> : vector<16x8xf32>
    %67 = tpu.matmul %65, %66, %cst_24 {dimension_numbers = #tpu.dot_dimension_numbers<[1], [0], [0], [1], [0, 0, 1, 1], [], []>} : vector<16x16xf32>, vector<16x8xf32>, vector<16x8xf32> -> vector<16x8xf32>
    "tpu.trace_stop"() : () -> ()
    %68 = vector.extract_strided_slice %14 {offsets = [16, 0], sizes = [8, 32], strides = [1, 1]} : vector<32x32xf32> to vector<8x32xf32>
    %cst_25 = arith.constant dense<0.000000e+00> : vector<16x32xf32>
    %69 = tpu.matmul %67, %68, %cst_25 {dimension_numbers = #tpu.dot_dimension_numbers<[1], [0], [0], [1], [0, 0, 1, 1], [], []>} : vector<16x8xf32>, vector<8x32xf32>, vector<16x32xf32> -> vector<16x32xf32>
    %70 = arith.addf %51, %69 : vector<16x32xf32>
    %71 = vector.extract_strided_slice %11 {offsets = [0, 24], sizes = [16, 8], strides = [1, 1]} : vector<16x32xf32> to vector<16x8xf32>
    %72 = vector.extract_strided_slice %12 {offsets = [0, 24], sizes = [16, 8], strides = [1, 1]} : vector<16x32xf32> to vector<16x8xf32>
    "tpu.trace_start"() <{level = 10 : i32, message = "qd,kd->qk"}> : () -> ()
    %cst_26 = arith.constant dense<0.000000e+00> : vector<16x16xf32>
    %73 = tpu.matmul %71, %72, %cst_26 {dimension_numbers = #tpu.dot_dimension_numbers<[1], [1], [0], [0], [0, 0, 1, 0], [], []>} : vector<16x8xf32>, vector<16x8xf32>, vector<16x16xf32> -> vector<16x16xf32>
    "tpu.trace_stop"() : () -> ()
    %74 = arith.addf %73, %2 : vector<16x16xf32>
    %cst_27 = arith.constant dense<0xFF800000> : vector<16xf32>
    %75 = vector.multi_reduction <maximumf>, %74, %cst_27 [1] : vector<16x16xf32> to vector<16xf32>
    %76 = vector.shape_cast %75 : vector<16xf32> to vector<16x1xf32>
    %77 = vector.broadcast %76 : vector<16x1xf32> to vector<16x16xf32>
    %78 = arith.subf %74, %77 : vector<16x16xf32>
    %79 = math.exp %78 : vector<16x16xf32>
    %cst_28 = arith.constant dense<0.000000e+00> : vector<16xf32>
    %80 = vector.multi_reduction <add>, %79, %cst_28 [1] : vector<16x16xf32> to vector<16xf32>
    %81 = vector.shape_cast %80 : vector<16xf32> to vector<16x1xf32>
    %82 = tpu.reciprocal %81 {approx = true} : vector<16x1xf32> -> vector<16x1xf32>
    %83 = vector.broadcast %82 : vector<16x1xf32> to vector<16x16xf32>
    %84 = arith.mulf %79, %83 : vector<16x16xf32>
    %85 = vector.extract_strided_slice %13 {offsets = [0, 24], sizes = [16, 8], strides = [1, 1]} : vector<16x32xf32> to vector<16x8xf32>
    "tpu.trace_start"() <{level = 10 : i32, message = "qk,kd->qd"}> : () -> ()
    %cst_29 = arith.constant dense<0.000000e+00> : vector<16x8xf32>
    %86 = tpu.matmul %84, %85, %cst_29 {dimension_numbers = #tpu.dot_dimension_numbers<[1], [0], [0], [1], [0, 0, 1, 1], [], []>} : vector<16x16xf32>, vector<16x8xf32>, vector<16x8xf32> -> vector<16x8xf32>
    "tpu.trace_stop"() : () -> ()
    %87 = vector.extract_strided_slice %14 {offsets = [24, 0], sizes = [8, 32], strides = [1, 1]} : vector<32x32xf32> to vector<8x32xf32>
    %cst_30 = arith.constant dense<0.000000e+00> : vector<16x32xf32>
    %88 = tpu.matmul %86, %87, %cst_30 {dimension_numbers = #tpu.dot_dimension_numbers<[1], [0], [0], [1], [0, 0, 1, 1], [], []>} : vector<16x8xf32>, vector<8x32xf32>, vector<16x32xf32> -> vector<16x32xf32>
    %89 = arith.addf %70, %88 : vector<16x32xf32>
    %c72 = arith.constant 72 : index
    %c0_31 = arith.constant 0 : index
    %90 = vector.load %arg2[%c72, %c0_31] : memref<1248x128xf32, #tpu.memory_space<vmem>>, vector<1x32xf32>
    %91 = vector.broadcast %90 : vector<1x32xf32> to vector<16x32xf32>
    %92 = arith.addf %89, %91 : vector<16x32xf32>
    %93 = arith.addf %0, %92 : vector<16x32xf32>
    %c312 = arith.constant 312 : index
    %c0_32 = arith.constant 0 : index
    %94 = vector.load %arg2[%c312, %c0_32] : memref<1248x128xf32, #tpu.memory_space<vmem>>, vector<1x32xf32>
    %c320 = arith.constant 320 : index
    %c0_33 = arith.constant 0 : index
    %95 = vector.load %arg2[%c320, %c0_33] : memref<1248x128xf32, #tpu.memory_space<vmem>>, vector<1x32xf32>
    %cst_34 = arith.constant dense<0.000000e+00> : vector<16xf32>
    %96 = vector.multi_reduction <add>, %93, %cst_34 [1] : vector<16x32xf32> to vector<16xf32>
    %97 = vector.shape_cast %96 : vector<16xf32> to vector<16x1xf32>
    %cst_35 = arith.constant 3.200000e+01 : f32
    %98 = vector.broadcast %cst_35 : f32 to vector<16x1xf32>
    %99 = arith.divf %97, %98 : vector<16x1xf32>
    %100 = vector.broadcast %99 : vector<16x1xf32> to vector<16x32xf32>
    %101 = arith.subf %93, %100 : vector<16x32xf32>
    %102 = arith.mulf %101, %101 : vector<16x32xf32>
    %cst_36 = arith.constant dense<0.000000e+00> : vector<16xf32>
    %103 = vector.multi_reduction <add>, %102, %cst_36 [1] : vector<16x32xf32> to vector<16xf32>
    %104 = vector.shape_cast %103 : vector<16xf32> to vector<16x1xf32>
    %cst_37 = arith.constant 3.200000e+01 : f32
    %105 = vector.broadcast %cst_37 : f32 to vector<16x1xf32>
    %106 = arith.divf %104, %105 : vector<16x1xf32>
    %107 = vector.broadcast %99 : vector<16x1xf32> to vector<16x32xf32>
    %108 = arith.subf %93, %107 : vector<16x32xf32>
    %cst_38 = arith.constant 9.99999974E-6 : f32
    %109 = vector.broadcast %cst_38 : f32 to vector<16x1xf32>
    %110 = arith.addf %106, %109 : vector<16x1xf32>
    %111 = math.rsqrt %110 : vector<16x1xf32>
    %112 = vector.broadcast %111 : vector<16x1xf32> to vector<16x32xf32>
    %113 = arith.mulf %108, %112 : vector<16x32xf32>
    %114 = vector.broadcast %94 : vector<1x32xf32> to vector<16x32xf32>
    %115 = arith.mulf %113, %114 : vector<16x32xf32>
    %116 = vector.broadcast %95 : vector<1x32xf32> to vector<16x32xf32>
    %117 = arith.addf %115, %116 : vector<16x32xf32>
    %c80 = arith.constant 80 : index
    %c0_39 = arith.constant 0 : index
    %118 = vector.load %arg2[%c80, %c0_39] : memref<1248x128xf32, #tpu.memory_space<vmem>>, vector<32x32xf32>
    %cst_40 = arith.constant dense<0.000000e+00> : vector<16x32xf32>
    %119 = tpu.matmul %117, %118, %cst_40 {dimension_numbers = #tpu.dot_dimension_numbers<[1], [0], [0], [1], [0, 0, 1, 1], [], []>} : vector<16x32xf32>, vector<32x32xf32>, vector<16x32xf32> -> vector<16x32xf32>
    %c112 = arith.constant 112 : index
    %c0_41 = arith.constant 0 : index
    %120 = vector.load %arg2[%c112, %c0_41] : memref<1248x128xf32, #tpu.memory_space<vmem>>, vector<1x32xf32>
    %121 = vector.broadcast %120 : vector<1x32xf32> to vector<16x32xf32>
    %122 = arith.addf %119, %121 : vector<16x32xf32>
    %c120 = arith.constant 120 : index
    %c0_42 = arith.constant 0 : index
    %123 = vector.load %arg2[%c120, %c0_42] : memref<1248x128xf32, #tpu.memory_space<vmem>>, vector<32x64xf32>
    %cst_43 = arith.constant dense<0.000000e+00> : vector<24x64xf32>
    %124 = tpu.matmul %1, %123, %cst_43 {dimension_numbers = #tpu.dot_dimension_numbers<[1], [0], [0], [1], [0, 0, 1, 1], [], []>} : vector<24x32xf32>, vector<32x64xf32>, vector<24x64xf32> -> vector<24x64xf32>
    %c152 = arith.constant 152 : index
    %c0_44 = arith.constant 0 : index
    %125 = vector.load %arg2[%c152, %c0_44] : memref<1248x128xf32, #tpu.memory_space<vmem>>, vector<1x64xf32>
    %126 = vector.broadcast %125 : vector<1x64xf32> to vector<24x64xf32>
    %127 = arith.addf %124, %126 : vector<24x64xf32>
    %128 = vector.extract_strided_slice %127 {offsets = [0, 0], sizes = [24, 32], strides = [1, 1]} : vector<24x64xf32> to vector<24x32xf32>
    %129 = vector.extract_strided_slice %127 {offsets = [0, 32], sizes = [24, 32], strides = [1, 1]} : vector<24x64xf32> to vector<24x32xf32>
    %c160 = arith.constant 160 : index
    %c0_45 = arith.constant 0 : index
    %130 = vector.load %arg2[%c160, %c0_45] : memref<1248x128xf32, #tpu.memory_space<vmem>>, vector<32x32xf32>
    %131 = vector.extract_strided_slice %122 {offsets = [0, 0], sizes = [16, 8], strides = [1, 1]} : vector<16x32xf32> to vector<16x8xf32>
    %132 = vector.extract_strided_slice %128 {offsets = [0, 0], sizes = [24, 8], strides = [1, 1]} : vector<24x32xf32> to vector<24x8xf32>
    "tpu.trace_start"() <{level = 10 : i32, message = "qd,kd->qk"}> : () -> ()
    %cst_46 = arith.constant dense<0.000000e+00> : vector<16x24xf32>
    %133 = tpu.matmul %131, %132, %cst_46 {dimension_numbers = #tpu.dot_dimension_numbers<[1], [1], [0], [0], [0, 0, 1, 0], [], []>} : vector<16x8xf32>, vector<24x8xf32>, vector<16x24xf32> -> vector<16x24xf32>
    "tpu.trace_stop"() : () -> ()
    %134 = arith.addf %133, %3 : vector<16x24xf32>
    %cst_47 = arith.constant dense<0xFF800000> : vector<16xf32>
    %135 = vector.multi_reduction <maximumf>, %134, %cst_47 [1] : vector<16x24xf32> to vector<16xf32>
    %136 = vector.shape_cast %135 : vector<16xf32> to vector<16x1xf32>
    %137 = vector.broadcast %136 : vector<16x1xf32> to vector<16x24xf32>
    %138 = arith.subf %134, %137 : vector<16x24xf32>
    %139 = math.exp %138 : vector<16x24xf32>
    %cst_48 = arith.constant dense<0.000000e+00> : vector<16xf32>
    %140 = vector.multi_reduction <add>, %139, %cst_48 [1] : vector<16x24xf32> to vector<16xf32>
    %141 = vector.shape_cast %140 : vector<16xf32> to vector<16x1xf32>
    %142 = tpu.reciprocal %141 {approx = true} : vector<16x1xf32> -> vector<16x1xf32>
    %143 = vector.broadcast %142 : vector<16x1xf32> to vector<16x24xf32>
    %144 = arith.mulf %139, %143 : vector<16x24xf32>
    %145 = vector.extract_strided_slice %129 {offsets = [0, 0], sizes = [24, 8], strides = [1, 1]} : vector<24x32xf32> to vector<24x8xf32>
    "tpu.trace_start"() <{level = 10 : i32, message = "qk,kd->qd"}> : () -> ()
    %cst_49 = arith.constant dense<0.000000e+00> : vector<16x8xf32>
    %146 = tpu.matmul %144, %145, %cst_49 {dimension_numbers = #tpu.dot_dimension_numbers<[1], [0], [0], [1], [0, 0, 1, 1], [], []>} : vector<16x24xf32>, vector<24x8xf32>, vector<16x8xf32> -> vector<16x8xf32>
    "tpu.trace_stop"() : () -> ()
    %147 = vector.extract_strided_slice %130 {offsets = [0, 0], sizes = [8, 32], strides = [1, 1]} : vector<32x32xf32> to vector<8x32xf32>
    %cst_50 = arith.constant dense<0.000000e+00> : vector<16x32xf32>
    %148 = tpu.matmul %146, %147, %cst_50 {dimension_numbers = #tpu.dot_dimension_numbers<[1], [0], [0], [1], [0, 0, 1, 1], [], []>} : vector<16x8xf32>, vector<8x32xf32>, vector<16x32xf32> -> vector<16x32xf32>
    %149 = vector.extract_strided_slice %122 {offsets = [0, 8], sizes = [16, 8], strides = [1, 1]} : vector<16x32xf32> to vector<16x8xf32>
    %150 = vector.extract_strided_slice %128 {offsets = [0, 8], sizes = [24, 8], strides = [1, 1]} : vector<24x32xf32> to vector<24x8xf32>
    "tpu.trace_start"() <{level = 10 : i32, message = "qd,kd->qk"}> : () -> ()
    %cst_51 = arith.constant dense<0.000000e+00> : vector<16x24xf32>
    %151 = tpu.matmul %149, %150, %cst_51 {dimension_numbers = #tpu.dot_dimension_numbers<[1], [1], [0], [0], [0, 0, 1, 0], [], []>} : vector<16x8xf32>, vector<24x8xf32>, vector<16x24xf32> -> vector<16x24xf32>
    "tpu.trace_stop"() : () -> ()
    %152 = arith.addf %151, %3 : vector<16x24xf32>
    %cst_52 = arith.constant dense<0xFF800000> : vector<16xf32>
    %153 = vector.multi_reduction <maximumf>, %152, %cst_52 [1] : vector<16x24xf32> to vector<16xf32>
    %154 = vector.shape_cast %153 : vector<16xf32> to vector<16x1xf32>
    %155 = vector.broadcast %154 : vector<16x1xf32> to vector<16x24xf32>
    %156 = arith.subf %152, %155 : vector<16x24xf32>
    %157 = math.exp %156 : vector<16x24xf32>
    %cst_53 = arith.constant dense<0.000000e+00> : vector<16xf32>
    %158 = vector.multi_reduction <add>, %157, %cst_53 [1] : vector<16x24xf32> to vector<16xf32>
    %159 = vector.shape_cast %158 : vector<16xf32> to vector<16x1xf32>
    %160 = tpu.reciprocal %159 {approx = true} : vector<16x1xf32> -> vector<16x1xf32>
    %161 = vector.broadcast %160 : vector<16x1xf32> to vector<16x24xf32>
    %162 = arith.mulf %157, %161 : vector<16x24xf32>
    %163 = vector.extract_strided_slice %129 {offsets = [0, 8], sizes = [24, 8], strides = [1, 1]} : vector<24x32xf32> to vector<24x8xf32>
    "tpu.trace_start"() <{level = 10 : i32, message = "qk,kd->qd"}> : () -> ()
    %cst_54 = arith.constant dense<0.000000e+00> : vector<16x8xf32>
    %164 = tpu.matmul %162, %163, %cst_54 {dimension_numbers = #tpu.dot_dimension_numbers<[1], [0], [0], [1], [0, 0, 1, 1], [], []>} : vector<16x24xf32>, vector<24x8xf32>, vector<16x8xf32> -> vector<16x8xf32>
    "tpu.trace_stop"() : () -> ()
    %165 = vector.extract_strided_slice %130 {offsets = [8, 0], sizes = [8, 32], strides = [1, 1]} : vector<32x32xf32> to vector<8x32xf32>
    %cst_55 = arith.constant dense<0.000000e+00> : vector<16x32xf32>
    %166 = tpu.matmul %164, %165, %cst_55 {dimension_numbers = #tpu.dot_dimension_numbers<[1], [0], [0], [1], [0, 0, 1, 1], [], []>} : vector<16x8xf32>, vector<8x32xf32>, vector<16x32xf32> -> vector<16x32xf32>
    %167 = arith.addf %148, %166 : vector<16x32xf32>
    %168 = vector.extract_strided_slice %122 {offsets = [0, 16], sizes = [16, 8], strides = [1, 1]} : vector<16x32xf32> to vector<16x8xf32>
    %169 = vector.extract_strided_slice %128 {offsets = [0, 16], sizes = [24, 8], strides = [1, 1]} : vector<24x32xf32> to vector<24x8xf32>
    "tpu.trace_start"() <{level = 10 : i32, message = "qd,kd->qk"}> : () -> ()
    %cst_56 = arith.constant dense<0.000000e+00> : vector<16x24xf32>
    %170 = tpu.matmul %168, %169, %cst_56 {dimension_numbers = #tpu.dot_dimension_numbers<[1], [1], [0], [0], [0, 0, 1, 0], [], []>} : vector<16x8xf32>, vector<24x8xf32>, vector<16x24xf32> -> vector<16x24xf32>
    "tpu.trace_stop"() : () -> ()
    %171 = arith.addf %170, %3 : vector<16x24xf32>
    %cst_57 = arith.constant dense<0xFF800000> : vector<16xf32>
    %172 = vector.multi_reduction <maximumf>, %171, %cst_57 [1] : vector<16x24xf32> to vector<16xf32>
    %173 = vector.shape_cast %172 : vector<16xf32> to vector<16x1xf32>
    %174 = vector.broadcast %173 : vector<16x1xf32> to vector<16x24xf32>
    %175 = arith.subf %171, %174 : vector<16x24xf32>
    %176 = math.exp %175 : vector<16x24xf32>
    %cst_58 = arith.constant dense<0.000000e+00> : vector<16xf32>
    %177 = vector.multi_reduction <add>, %176, %cst_58 [1] : vector<16x24xf32> to vector<16xf32>
    %178 = vector.shape_cast %177 : vector<16xf32> to vector<16x1xf32>
    %179 = tpu.reciprocal %178 {approx = true} : vector<16x1xf32> -> vector<16x1xf32>
    %180 = vector.broadcast %179 : vector<16x1xf32> to vector<16x24xf32>
    %181 = arith.mulf %176, %180 : vector<16x24xf32>
    %182 = vector.extract_strided_slice %129 {offsets = [0, 16], sizes = [24, 8], strides = [1, 1]} : vector<24x32xf32> to vector<24x8xf32>
    "tpu.trace_start"() <{level = 10 : i32, message = "qk,kd->qd"}> : () -> ()
    %cst_59 = arith.constant dense<0.000000e+00> : vector<16x8xf32>
    %183 = tpu.matmul %181, %182, %cst_59 {dimension_numbers = #tpu.dot_dimension_numbers<[1], [0], [0], [1], [0, 0, 1, 1], [], []>} : vector<16x24xf32>, vector<24x8xf32>, vector<16x8xf32> -> vector<16x8xf32>
    "tpu.trace_stop"() : () -> ()
    %184 = vector.extract_strided_slice %130 {offsets = [16, 0], sizes = [8, 32], strides = [1, 1]} : vector<32x32xf32> to vector<8x32xf32>
    %cst_60 = arith.constant dense<0.000000e+00> : vector<16x32xf32>
    %185 = tpu.matmul %183, %184, %cst_60 {dimension_numbers = #tpu.dot_dimension_numbers<[1], [0], [0], [1], [0, 0, 1, 1], [], []>} : vector<16x8xf32>, vector<8x32xf32>, vector<16x32xf32> -> vector<16x32xf32>
    %186 = arith.addf %167, %185 : vector<16x32xf32>
    %187 = vector.extract_strided_slice %122 {offsets = [0, 24], sizes = [16, 8], strides = [1, 1]} : vector<16x32xf32> to vector<16x8xf32>
    %188 = vector.extract_strided_slice %128 {offsets = [0, 24], sizes = [24, 8], strides = [1, 1]} : vector<24x32xf32> to vector<24x8xf32>
    "tpu.trace_start"() <{level = 10 : i32, message = "qd,kd->qk"}> : () -> ()
    %cst_61 = arith.constant dense<0.000000e+00> : vector<16x24xf32>
    %189 = tpu.matmul %187, %188, %cst_61 {dimension_numbers = #tpu.dot_dimension_numbers<[1], [1], [0], [0], [0, 0, 1, 0], [], []>} : vector<16x8xf32>, vector<24x8xf32>, vector<16x24xf32> -> vector<16x24xf32>
    "tpu.trace_stop"() : () -> ()
    %190 = arith.addf %189, %3 : vector<16x24xf32>
    %cst_62 = arith.constant dense<0xFF800000> : vector<16xf32>
    %191 = vector.multi_reduction <maximumf>, %190, %cst_62 [1] : vector<16x24xf32> to vector<16xf32>
    %192 = vector.shape_cast %191 : vector<16xf32> to vector<16x1xf32>
    %193 = vector.broadcast %192 : vector<16x1xf32> to vector<16x24xf32>
    %194 = arith.subf %190, %193 : vector<16x24xf32>
    %195 = math.exp %194 : vector<16x24xf32>
    %cst_63 = arith.constant dense<0.000000e+00> : vector<16xf32>
    %196 = vector.multi_reduction <add>, %195, %cst_63 [1] : vector<16x24xf32> to vector<16xf32>
    %197 = vector.shape_cast %196 : vector<16xf32> to vector<16x1xf32>
    %198 = tpu.reciprocal %197 {approx = true} : vector<16x1xf32> -> vector<16x1xf32>
    %199 = vector.broadcast %198 : vector<16x1xf32> to vector<16x24xf32>
    %200 = arith.mulf %195, %199 : vector<16x24xf32>
    %201 = vector.extract_strided_slice %129 {offsets = [0, 24], sizes = [24, 8], strides = [1, 1]} : vector<24x32xf32> to vector<24x8xf32>
    "tpu.trace_start"() <{level = 10 : i32, message = "qk,kd->qd"}> : () -> ()
    %cst_64 = arith.constant dense<0.000000e+00> : vector<16x8xf32>
    %202 = tpu.matmul %200, %201, %cst_64 {dimension_numbers = #tpu.dot_dimension_numbers<[1], [0], [0], [1], [0, 0, 1, 1], [], []>} : vector<16x24xf32>, vector<24x8xf32>, vector<16x8xf32> -> vector<16x8xf32>
    "tpu.trace_stop"() : () -> ()
    %203 = vector.extract_strided_slice %130 {offsets = [24, 0], sizes = [8, 32], strides = [1, 1]} : vector<32x32xf32> to vector<8x32xf32>
    %cst_65 = arith.constant dense<0.000000e+00> : vector<16x32xf32>
    %204 = tpu.matmul %202, %203, %cst_65 {dimension_numbers = #tpu.dot_dimension_numbers<[1], [0], [0], [1], [0, 0, 1, 1], [], []>} : vector<16x8xf32>, vector<8x32xf32>, vector<16x32xf32> -> vector<16x32xf32>
    %205 = arith.addf %186, %204 : vector<16x32xf32>
    %c192 = arith.constant 192 : index
    %c0_66 = arith.constant 0 : index
    %206 = vector.load %arg2[%c192, %c0_66] : memref<1248x128xf32, #tpu.memory_space<vmem>>, vector<1x32xf32>
    %207 = vector.broadcast %206 : vector<1x32xf32> to vector<16x32xf32>
    %208 = arith.addf %205, %207 : vector<16x32xf32>
    %209 = arith.addf %117, %208 : vector<16x32xf32>
    %c328 = arith.constant 328 : index
    %c0_67 = arith.constant 0 : index
    %210 = vector.load %arg2[%c328, %c0_67] : memref<1248x128xf32, #tpu.memory_space<vmem>>, vector<1x32xf32>
    %c336 = arith.constant 336 : index
    %c0_68 = arith.constant 0 : index
    %211 = vector.load %arg2[%c336, %c0_68] : memref<1248x128xf32, #tpu.memory_space<vmem>>, vector<1x32xf32>
    %cst_69 = arith.constant dense<0.000000e+00> : vector<16xf32>
    %212 = vector.multi_reduction <add>, %209, %cst_69 [1] : vector<16x32xf32> to vector<16xf32>
    %213 = vector.shape_cast %212 : vector<16xf32> to vector<16x1xf32>
    %cst_70 = arith.constant 3.200000e+01 : f32
    %214 = vector.broadcast %cst_70 : f32 to vector<16x1xf32>
    %215 = arith.divf %213, %214 : vector<16x1xf32>
    %216 = vector.broadcast %215 : vector<16x1xf32> to vector<16x32xf32>
    %217 = arith.subf %209, %216 : vector<16x32xf32>
    %218 = arith.mulf %217, %217 : vector<16x32xf32>
    %cst_71 = arith.constant dense<0.000000e+00> : vector<16xf32>
    %219 = vector.multi_reduction <add>, %218, %cst_71 [1] : vector<16x32xf32> to vector<16xf32>
    %220 = vector.shape_cast %219 : vector<16xf32> to vector<16x1xf32>
    %cst_72 = arith.constant 3.200000e+01 : f32
    %221 = vector.broadcast %cst_72 : f32 to vector<16x1xf32>
    %222 = arith.divf %220, %221 : vector<16x1xf32>
    %223 = vector.broadcast %215 : vector<16x1xf32> to vector<16x32xf32>
    %224 = arith.subf %209, %223 : vector<16x32xf32>
    %cst_73 = arith.constant 9.99999974E-6 : f32
    %225 = vector.broadcast %cst_73 : f32 to vector<16x1xf32>
    %226 = arith.addf %222, %225 : vector<16x1xf32>
    %227 = math.rsqrt %226 : vector<16x1xf32>
    %228 = vector.broadcast %227 : vector<16x1xf32> to vector<16x32xf32>
    %229 = arith.mulf %224, %228 : vector<16x32xf32>
    %230 = vector.broadcast %210 : vector<1x32xf32> to vector<16x32xf32>
    %231 = arith.mulf %229, %230 : vector<16x32xf32>
    %232 = vector.broadcast %211 : vector<1x32xf32> to vector<16x32xf32>
    %233 = arith.addf %231, %232 : vector<16x32xf32>
    %c200 = arith.constant 200 : index
    %c0_74 = arith.constant 0 : index
    %234 = vector.load %arg2[%c200, %c0_74] : memref<1248x128xf32, #tpu.memory_space<vmem>>, vector<32x64xf32>
    %cst_75 = arith.constant dense<0.000000e+00> : vector<16x64xf32>
    %235 = tpu.matmul %233, %234, %cst_75 {dimension_numbers = #tpu.dot_dimension_numbers<[1], [0], [0], [1], [0, 0, 1, 1], [], []>} : vector<16x32xf32>, vector<32x64xf32>, vector<16x64xf32> -> vector<16x64xf32>
    %c232 = arith.constant 232 : index
    %c0_76 = arith.constant 0 : index
    %236 = vector.load %arg2[%c232, %c0_76] : memref<1248x128xf32, #tpu.memory_space<vmem>>, vector<1x64xf32>
    %237 = vector.broadcast %236 : vector<1x64xf32> to vector<16x64xf32>
    %238 = arith.addf %235, %237 : vector<16x64xf32>
    %cst_77 = arith.constant 0.000000e+00 : f32
    %239 = vector.broadcast %cst_77 : f32 to vector<16x64xf32>
    %240 = arith.maximumf %238, %239 : vector<16x64xf32>
    %c240 = arith.constant 240 : index
    %c0_78 = arith.constant 0 : index
    %241 = vector.load %arg2[%c240, %c0_78] : memref<1248x128xf32, #tpu.memory_space<vmem>>, vector<64x32xf32>
    %cst_79 = arith.constant dense<0.000000e+00> : vector<16x32xf32>
    %242 = tpu.matmul %240, %241, %cst_79 {dimension_numbers = #tpu.dot_dimension_numbers<[1], [0], [0], [1], [0, 0, 1, 1], [], []>} : vector<16x64xf32>, vector<64x32xf32>, vector<16x32xf32> -> vector<16x32xf32>
    %c304 = arith.constant 304 : index
    %c0_80 = arith.constant 0 : index
    %243 = vector.load %arg2[%c304, %c0_80] : memref<1248x128xf32, #tpu.memory_space<vmem>>, vector<1x32xf32>
    %244 = vector.broadcast %243 : vector<1x32xf32> to vector<16x32xf32>
    %245 = arith.addf %242, %244 : vector<16x32xf32>
    %246 = arith.addf %233, %245 : vector<16x32xf32>
    %c344 = arith.constant 344 : index
    %c0_81 = arith.constant 0 : index
    %247 = vector.load %arg2[%c344, %c0_81] : memref<1248x128xf32, #tpu.memory_space<vmem>>, vector<1x32xf32>
    %c352 = arith.constant 352 : index
    %c0_82 = arith.constant 0 : index
    %248 = vector.load %arg2[%c352, %c0_82] : memref<1248x128xf32, #tpu.memory_space<vmem>>, vector<1x32xf32>
    %cst_83 = arith.constant dense<0.000000e+00> : vector<16xf32>
    %249 = vector.multi_reduction <add>, %246, %cst_83 [1] : vector<16x32xf32> to vector<16xf32>
    %250 = vector.shape_cast %249 : vector<16xf32> to vector<16x1xf32>
    %cst_84 = arith.constant 3.200000e+01 : f32
    %251 = vector.broadcast %cst_84 : f32 to vector<16x1xf32>
    %252 = arith.divf %250, %251 : vector<16x1xf32>
    %253 = vector.broadcast %252 : vector<16x1xf32> to vector<16x32xf32>
    %254 = arith.subf %246, %253 : vector<16x32xf32>
    %255 = arith.mulf %254, %254 : vector<16x32xf32>
    %cst_85 = arith.constant dense<0.000000e+00> : vector<16xf32>
    %256 = vector.multi_reduction <add>, %255, %cst_85 [1] : vector<16x32xf32> to vector<16xf32>
    %257 = vector.shape_cast %256 : vector<16xf32> to vector<16x1xf32>
    %cst_86 = arith.constant 3.200000e+01 : f32
    %258 = vector.broadcast %cst_86 : f32 to vector<16x1xf32>
    %259 = arith.divf %257, %258 : vector<16x1xf32>
    %260 = vector.broadcast %252 : vector<16x1xf32> to vector<16x32xf32>
    %261 = arith.subf %246, %260 : vector<16x32xf32>
    %cst_87 = arith.constant 9.99999974E-6 : f32
    %262 = vector.broadcast %cst_87 : f32 to vector<16x1xf32>
    %263 = arith.addf %259, %262 : vector<16x1xf32>
    %264 = math.rsqrt %263 : vector<16x1xf32>
    %265 = vector.broadcast %264 : vector<16x1xf32> to vector<16x32xf32>
    %266 = arith.mulf %261, %265 : vector<16x32xf32>
    %267 = vector.broadcast %247 : vector<1x32xf32> to vector<16x32xf32>
    %268 = arith.mulf %266, %267 : vector<16x32xf32>
    %269 = vector.broadcast %248 : vector<1x32xf32> to vector<16x32xf32>
    %270 = arith.addf %268, %269 : vector<16x32xf32>
    %c360 = arith.constant 360 : index
    %c0_88 = arith.constant 0 : index
    %271 = vector.load %arg2[%c360, %c0_88] : memref<1248x128xf32, #tpu.memory_space<vmem>>, vector<32x96xf32>
    %cst_89 = arith.constant dense<0.000000e+00> : vector<24x96xf32>
    %272 = tpu.matmul %1, %271, %cst_89 {dimension_numbers = #tpu.dot_dimension_numbers<[1], [0], [0], [1], [0, 0, 1, 1], [], []>} : vector<24x32xf32>, vector<32x96xf32>, vector<24x96xf32> -> vector<24x96xf32>
    %c392 = arith.constant 392 : index
    %c0_90 = arith.constant 0 : index
    %273 = vector.load %arg2[%c392, %c0_90] : memref<1248x128xf32, #tpu.memory_space<vmem>>, vector<1x96xf32>
    %274 = vector.broadcast %273 : vector<1x96xf32> to vector<24x96xf32>
    %275 = arith.addf %272, %274 : vector<24x96xf32>
    %276 = vector.extract_strided_slice %275 {offsets = [0, 0], sizes = [24, 32], strides = [1, 1]} : vector<24x96xf32> to vector<24x32xf32>
    %277 = vector.extract_strided_slice %275 {offsets = [0, 32], sizes = [24, 32], strides = [1, 1]} : vector<24x96xf32> to vector<24x32xf32>
    %278 = vector.extract_strided_slice %275 {offsets = [0, 64], sizes = [24, 32], strides = [1, 1]} : vector<24x96xf32> to vector<24x32xf32>
    %c400 = arith.constant 400 : index
    %c0_91 = arith.constant 0 : index
    %279 = vector.load %arg2[%c400, %c0_91] : memref<1248x128xf32, #tpu.memory_space<vmem>>, vector<32x32xf32>
    %280 = vector.extract_strided_slice %276 {offsets = [0, 0], sizes = [24, 8], strides = [1, 1]} : vector<24x32xf32> to vector<24x8xf32>
    %281 = vector.extract_strided_slice %277 {offsets = [0, 0], sizes = [24, 8], strides = [1, 1]} : vector<24x32xf32> to vector<24x8xf32>
    "tpu.trace_start"() <{level = 10 : i32, message = "qd,kd->qk"}> : () -> ()
    %cst_92 = arith.constant dense<0.000000e+00> : vector<24x24xf32>
    %282 = tpu.matmul %280, %281, %cst_92 {dimension_numbers = #tpu.dot_dimension_numbers<[1], [1], [0], [0], [0, 0, 1, 0], [], []>} : vector<24x8xf32>, vector<24x8xf32>, vector<24x24xf32> -> vector<24x24xf32>
    "tpu.trace_stop"() : () -> ()
    %283 = arith.addf %282, %4 : vector<24x24xf32>
    %cst_93 = arith.constant dense<0xFF800000> : vector<24xf32>
    %284 = vector.multi_reduction <maximumf>, %283, %cst_93 [1] : vector<24x24xf32> to vector<24xf32>
    %285 = vector.shape_cast %284 : vector<24xf32> to vector<24x1xf32>
    %286 = vector.broadcast %285 : vector<24x1xf32> to vector<24x24xf32>
    %287 = arith.subf %283, %286 : vector<24x24xf32>
    %288 = math.exp %287 : vector<24x24xf32>
    %cst_94 = arith.constant dense<0.000000e+00> : vector<24xf32>
    %289 = vector.multi_reduction <add>, %288, %cst_94 [1] : vector<24x24xf32> to vector<24xf32>
    %290 = vector.shape_cast %289 : vector<24xf32> to vector<24x1xf32>
    %291 = tpu.reciprocal %290 {approx = true} : vector<24x1xf32> -> vector<24x1xf32>
    %292 = vector.broadcast %291 : vector<24x1xf32> to vector<24x24xf32>
    %293 = arith.mulf %288, %292 : vector<24x24xf32>
    %294 = vector.extract_strided_slice %278 {offsets = [0, 0], sizes = [24, 8], strides = [1, 1]} : vector<24x32xf32> to vector<24x8xf32>
    "tpu.trace_start"() <{level = 10 : i32, message = "qk,kd->qd"}> : () -> ()
    %cst_95 = arith.constant dense<0.000000e+00> : vector<24x8xf32>
    %295 = tpu.matmul %293, %294, %cst_95 {dimension_numbers = #tpu.dot_dimension_numbers<[1], [0], [0], [1], [0, 0, 1, 1], [], []>} : vector<24x24xf32>, vector<24x8xf32>, vector<24x8xf32> -> vector<24x8xf32>
    "tpu.trace_stop"() : () -> ()
    %296 = vector.extract_strided_slice %279 {offsets = [0, 0], sizes = [8, 32], strides = [1, 1]} : vector<32x32xf32> to vector<8x32xf32>
    %cst_96 = arith.constant dense<0.000000e+00> : vector<24x32xf32>
    %297 = tpu.matmul %295, %296, %cst_96 {dimension_numbers = #tpu.dot_dimension_numbers<[1], [0], [0], [1], [0, 0, 1, 1], [], []>} : vector<24x8xf32>, vector<8x32xf32>, vector<24x32xf32> -> vector<24x32xf32>
    %298 = vector.extract_strided_slice %276 {offsets = [0, 8], sizes = [24, 8], strides = [1, 1]} : vector<24x32xf32> to vector<24x8xf32>
    %299 = vector.extract_strided_slice %277 {offsets = [0, 8], sizes = [24, 8], strides = [1, 1]} : vector<24x32xf32> to vector<24x8xf32>
    "tpu.trace_start"() <{level = 10 : i32, message = "qd,kd->qk"}> : () -> ()
    %cst_97 = arith.constant dense<0.000000e+00> : vector<24x24xf32>
    %300 = tpu.matmul %298, %299, %cst_97 {dimension_numbers = #tpu.dot_dimension_numbers<[1], [1], [0], [0], [0, 0, 1, 0], [], []>} : vector<24x8xf32>, vector<24x8xf32>, vector<24x24xf32> -> vector<24x24xf32>
    "tpu.trace_stop"() : () -> ()
    %301 = arith.addf %300, %4 : vector<24x24xf32>
    %cst_98 = arith.constant dense<0xFF800000> : vector<24xf32>
    %302 = vector.multi_reduction <maximumf>, %301, %cst_98 [1] : vector<24x24xf32> to vector<24xf32>
    %303 = vector.shape_cast %302 : vector<24xf32> to vector<24x1xf32>
    %304 = vector.broadcast %303 : vector<24x1xf32> to vector<24x24xf32>
    %305 = arith.subf %301, %304 : vector<24x24xf32>
    %306 = math.exp %305 : vector<24x24xf32>
    %cst_99 = arith.constant dense<0.000000e+00> : vector<24xf32>
    %307 = vector.multi_reduction <add>, %306, %cst_99 [1] : vector<24x24xf32> to vector<24xf32>
    %308 = vector.shape_cast %307 : vector<24xf32> to vector<24x1xf32>
    %309 = tpu.reciprocal %308 {approx = true} : vector<24x1xf32> -> vector<24x1xf32>
    %310 = vector.broadcast %309 : vector<24x1xf32> to vector<24x24xf32>
    %311 = arith.mulf %306, %310 : vector<24x24xf32>
    %312 = vector.extract_strided_slice %278 {offsets = [0, 8], sizes = [24, 8], strides = [1, 1]} : vector<24x32xf32> to vector<24x8xf32>
    "tpu.trace_start"() <{level = 10 : i32, message = "qk,kd->qd"}> : () -> ()
    %cst_100 = arith.constant dense<0.000000e+00> : vector<24x8xf32>
    %313 = tpu.matmul %311, %312, %cst_100 {dimension_numbers = #tpu.dot_dimension_numbers<[1], [0], [0], [1], [0, 0, 1, 1], [], []>} : vector<24x24xf32>, vector<24x8xf32>, vector<24x8xf32> -> vector<24x8xf32>
    "tpu.trace_stop"() : () -> ()
    %314 = vector.extract_strided_slice %279 {offsets = [8, 0], sizes = [8, 32], strides = [1, 1]} : vector<32x32xf32> to vector<8x32xf32>
    %cst_101 = arith.constant dense<0.000000e+00> : vector<24x32xf32>
    %315 = tpu.matmul %313, %314, %cst_101 {dimension_numbers = #tpu.dot_dimension_numbers<[1], [0], [0], [1], [0, 0, 1, 1], [], []>} : vector<24x8xf32>, vector<8x32xf32>, vector<24x32xf32> -> vector<24x32xf32>
    %316 = arith.addf %297, %315 : vector<24x32xf32>
    %317 = vector.extract_strided_slice %276 {offsets = [0, 16], sizes = [24, 8], strides = [1, 1]} : vector<24x32xf32> to vector<24x8xf32>
    %318 = vector.extract_strided_slice %277 {offsets = [0, 16], sizes = [24, 8], strides = [1, 1]} : vector<24x32xf32> to vector<24x8xf32>
    "tpu.trace_start"() <{level = 10 : i32, message = "qd,kd->qk"}> : () -> ()
    %cst_102 = arith.constant dense<0.000000e+00> : vector<24x24xf32>
    %319 = tpu.matmul %317, %318, %cst_102 {dimension_numbers = #tpu.dot_dimension_numbers<[1], [1], [0], [0], [0, 0, 1, 0], [], []>} : vector<24x8xf32>, vector<24x8xf32>, vector<24x24xf32> -> vector<24x24xf32>
    "tpu.trace_stop"() : () -> ()
    %320 = arith.addf %319, %4 : vector<24x24xf32>
    %cst_103 = arith.constant dense<0xFF800000> : vector<24xf32>
    %321 = vector.multi_reduction <maximumf>, %320, %cst_103 [1] : vector<24x24xf32> to vector<24xf32>
    %322 = vector.shape_cast %321 : vector<24xf32> to vector<24x1xf32>
    %323 = vector.broadcast %322 : vector<24x1xf32> to vector<24x24xf32>
    %324 = arith.subf %320, %323 : vector<24x24xf32>
    %325 = math.exp %324 : vector<24x24xf32>
    %cst_104 = arith.constant dense<0.000000e+00> : vector<24xf32>
    %326 = vector.multi_reduction <add>, %325, %cst_104 [1] : vector<24x24xf32> to vector<24xf32>
    %327 = vector.shape_cast %326 : vector<24xf32> to vector<24x1xf32>
    %328 = tpu.reciprocal %327 {approx = true} : vector<24x1xf32> -> vector<24x1xf32>
    %329 = vector.broadcast %328 : vector<24x1xf32> to vector<24x24xf32>
    %330 = arith.mulf %325, %329 : vector<24x24xf32>
    %331 = vector.extract_strided_slice %278 {offsets = [0, 16], sizes = [24, 8], strides = [1, 1]} : vector<24x32xf32> to vector<24x8xf32>
    "tpu.trace_start"() <{level = 10 : i32, message = "qk,kd->qd"}> : () -> ()
    %cst_105 = arith.constant dense<0.000000e+00> : vector<24x8xf32>
    %332 = tpu.matmul %330, %331, %cst_105 {dimension_numbers = #tpu.dot_dimension_numbers<[1], [0], [0], [1], [0, 0, 1, 1], [], []>} : vector<24x24xf32>, vector<24x8xf32>, vector<24x8xf32> -> vector<24x8xf32>
    "tpu.trace_stop"() : () -> ()
    %333 = vector.extract_strided_slice %279 {offsets = [16, 0], sizes = [8, 32], strides = [1, 1]} : vector<32x32xf32> to vector<8x32xf32>
    %cst_106 = arith.constant dense<0.000000e+00> : vector<24x32xf32>
    %334 = tpu.matmul %332, %333, %cst_106 {dimension_numbers = #tpu.dot_dimension_numbers<[1], [0], [0], [1], [0, 0, 1, 1], [], []>} : vector<24x8xf32>, vector<8x32xf32>, vector<24x32xf32> -> vector<24x32xf32>
    %335 = arith.addf %316, %334 : vector<24x32xf32>
    %336 = vector.extract_strided_slice %276 {offsets = [0, 24], sizes = [24, 8], strides = [1, 1]} : vector<24x32xf32> to vector<24x8xf32>
    %337 = vector.extract_strided_slice %277 {offsets = [0, 24], sizes = [24, 8], strides = [1, 1]} : vector<24x32xf32> to vector<24x8xf32>
    "tpu.trace_start"() <{level = 10 : i32, message = "qd,kd->qk"}> : () -> ()
    %cst_107 = arith.constant dense<0.000000e+00> : vector<24x24xf32>
    %338 = tpu.matmul %336, %337, %cst_107 {dimension_numbers = #tpu.dot_dimension_numbers<[1], [1], [0], [0], [0, 0, 1, 0], [], []>} : vector<24x8xf32>, vector<24x8xf32>, vector<24x24xf32> -> vector<24x24xf32>
    "tpu.trace_stop"() : () -> ()
    %339 = arith.addf %338, %4 : vector<24x24xf32>
    %cst_108 = arith.constant dense<0xFF800000> : vector<24xf32>
    %340 = vector.multi_reduction <maximumf>, %339, %cst_108 [1] : vector<24x24xf32> to vector<24xf32>
    %341 = vector.shape_cast %340 : vector<24xf32> to vector<24x1xf32>
    %342 = vector.broadcast %341 : vector<24x1xf32> to vector<24x24xf32>
    %343 = arith.subf %339, %342 : vector<24x24xf32>
    %344 = math.exp %343 : vector<24x24xf32>
    %cst_109 = arith.constant dense<0.000000e+00> : vector<24xf32>
    %345 = vector.multi_reduction <add>, %344, %cst_109 [1] : vector<24x24xf32> to vector<24xf32>
    %346 = vector.shape_cast %345 : vector<24xf32> to vector<24x1xf32>
    %347 = tpu.reciprocal %346 {approx = true} : vector<24x1xf32> -> vector<24x1xf32>
    %348 = vector.broadcast %347 : vector<24x1xf32> to vector<24x24xf32>
    %349 = arith.mulf %344, %348 : vector<24x24xf32>
    %350 = vector.extract_strided_slice %278 {offsets = [0, 24], sizes = [24, 8], strides = [1, 1]} : vector<24x32xf32> to vector<24x8xf32>
    "tpu.trace_start"() <{level = 10 : i32, message = "qk,kd->qd"}> : () -> ()
    %cst_110 = arith.constant dense<0.000000e+00> : vector<24x8xf32>
    %351 = tpu.matmul %349, %350, %cst_110 {dimension_numbers = #tpu.dot_dimension_numbers<[1], [0], [0], [1], [0, 0, 1, 1], [], []>} : vector<24x24xf32>, vector<24x8xf32>, vector<24x8xf32> -> vector<24x8xf32>
    "tpu.trace_stop"() : () -> ()
    %352 = vector.extract_strided_slice %279 {offsets = [24, 0], sizes = [8, 32], strides = [1, 1]} : vector<32x32xf32> to vector<8x32xf32>
    %cst_111 = arith.constant dense<0.000000e+00> : vector<24x32xf32>
    %353 = tpu.matmul %351, %352, %cst_111 {dimension_numbers = #tpu.dot_dimension_numbers<[1], [0], [0], [1], [0, 0, 1, 1], [], []>} : vector<24x8xf32>, vector<8x32xf32>, vector<24x32xf32> -> vector<24x32xf32>
    %354 = arith.addf %335, %353 : vector<24x32xf32>
    %c432 = arith.constant 432 : index
    %c0_112 = arith.constant 0 : index
    %355 = vector.load %arg2[%c432, %c0_112] : memref<1248x128xf32, #tpu.memory_space<vmem>>, vector<1x32xf32>
    %356 = vector.broadcast %355 : vector<1x32xf32> to vector<24x32xf32>
    %357 = arith.addf %354, %356 : vector<24x32xf32>
    %358 = arith.addf %1, %357 : vector<24x32xf32>
    %c672 = arith.constant 672 : index
    %c0_113 = arith.constant 0 : index
    %359 = vector.load %arg2[%c672, %c0_113] : memref<1248x128xf32, #tpu.memory_space<vmem>>, vector<1x32xf32>
    %c680 = arith.constant 680 : index
    %c0_114 = arith.constant 0 : index
    %360 = vector.load %arg2[%c680, %c0_114] : memref<1248x128xf32, #tpu.memory_space<vmem>>, vector<1x32xf32>
    %cst_115 = arith.constant dense<0.000000e+00> : vector<24xf32>
    %361 = vector.multi_reduction <add>, %358, %cst_115 [1] : vector<24x32xf32> to vector<24xf32>
    %362 = vector.shape_cast %361 : vector<24xf32> to vector<24x1xf32>
    %cst_116 = arith.constant 3.200000e+01 : f32
    %363 = vector.broadcast %cst_116 : f32 to vector<24x1xf32>
    %364 = arith.divf %362, %363 : vector<24x1xf32>
    %365 = vector.broadcast %364 : vector<24x1xf32> to vector<24x32xf32>
    %366 = arith.subf %358, %365 : vector<24x32xf32>
    %367 = arith.mulf %366, %366 : vector<24x32xf32>
    %cst_117 = arith.constant dense<0.000000e+00> : vector<24xf32>
    %368 = vector.multi_reduction <add>, %367, %cst_117 [1] : vector<24x32xf32> to vector<24xf32>
    %369 = vector.shape_cast %368 : vector<24xf32> to vector<24x1xf32>
    %cst_118 = arith.constant 3.200000e+01 : f32
    %370 = vector.broadcast %cst_118 : f32 to vector<24x1xf32>
    %371 = arith.divf %369, %370 : vector<24x1xf32>
    %372 = vector.broadcast %364 : vector<24x1xf32> to vector<24x32xf32>
    %373 = arith.subf %358, %372 : vector<24x32xf32>
    %cst_119 = arith.constant 9.99999974E-6 : f32
    %374 = vector.broadcast %cst_119 : f32 to vector<24x1xf32>
    %375 = arith.addf %371, %374 : vector<24x1xf32>
    %376 = math.rsqrt %375 : vector<24x1xf32>
    %377 = vector.broadcast %376 : vector<24x1xf32> to vector<24x32xf32>
    %378 = arith.mulf %373, %377 : vector<24x32xf32>
    %379 = vector.broadcast %359 : vector<1x32xf32> to vector<24x32xf32>
    %380 = arith.mulf %378, %379 : vector<24x32xf32>
    %381 = vector.broadcast %360 : vector<1x32xf32> to vector<24x32xf32>
    %382 = arith.addf %380, %381 : vector<24x32xf32>
    %c440 = arith.constant 440 : index
    %c0_120 = arith.constant 0 : index
    %383 = vector.load %arg2[%c440, %c0_120] : memref<1248x128xf32, #tpu.memory_space<vmem>>, vector<32x32xf32>
    %cst_121 = arith.constant dense<0.000000e+00> : vector<24x32xf32>
    %384 = tpu.matmul %382, %383, %cst_121 {dimension_numbers = #tpu.dot_dimension_numbers<[1], [0], [0], [1], [0, 0, 1, 1], [], []>} : vector<24x32xf32>, vector<32x32xf32>, vector<24x32xf32> -> vector<24x32xf32>
    %c472 = arith.constant 472 : index
    %c0_122 = arith.constant 0 : index
    %385 = vector.load %arg2[%c472, %c0_122] : memref<1248x128xf32, #tpu.memory_space<vmem>>, vector<1x32xf32>
    %386 = vector.broadcast %385 : vector<1x32xf32> to vector<24x32xf32>
    %387 = arith.addf %384, %386 : vector<24x32xf32>
    %c480 = arith.constant 480 : index
    %c0_123 = arith.constant 0 : index
    %388 = vector.load %arg2[%c480, %c0_123] : memref<1248x128xf32, #tpu.memory_space<vmem>>, vector<32x64xf32>
    %cst_124 = arith.constant dense<0.000000e+00> : vector<16x64xf32>
    %389 = tpu.matmul %0, %388, %cst_124 {dimension_numbers = #tpu.dot_dimension_numbers<[1], [0], [0], [1], [0, 0, 1, 1], [], []>} : vector<16x32xf32>, vector<32x64xf32>, vector<16x64xf32> -> vector<16x64xf32>
    %c512 = arith.constant 512 : index
    %c0_125 = arith.constant 0 : index
    %390 = vector.load %arg2[%c512, %c0_125] : memref<1248x128xf32, #tpu.memory_space<vmem>>, vector<1x64xf32>
    %391 = vector.broadcast %390 : vector<1x64xf32> to vector<16x64xf32>
    %392 = arith.addf %389, %391 : vector<16x64xf32>
    %393 = vector.extract_strided_slice %392 {offsets = [0, 0], sizes = [16, 32], strides = [1, 1]} : vector<16x64xf32> to vector<16x32xf32>
    %394 = vector.extract_strided_slice %392 {offsets = [0, 32], sizes = [16, 32], strides = [1, 1]} : vector<16x64xf32> to vector<16x32xf32>
    %c520 = arith.constant 520 : index
    %c0_126 = arith.constant 0 : index
    %395 = vector.load %arg2[%c520, %c0_126] : memref<1248x128xf32, #tpu.memory_space<vmem>>, vector<32x32xf32>
    %396 = vector.extract_strided_slice %387 {offsets = [0, 0], sizes = [24, 8], strides = [1, 1]} : vector<24x32xf32> to vector<24x8xf32>
    %397 = vector.extract_strided_slice %393 {offsets = [0, 0], sizes = [16, 8], strides = [1, 1]} : vector<16x32xf32> to vector<16x8xf32>
    "tpu.trace_start"() <{level = 10 : i32, message = "qd,kd->qk"}> : () -> ()
    %cst_127 = arith.constant dense<0.000000e+00> : vector<24x16xf32>
    %398 = tpu.matmul %396, %397, %cst_127 {dimension_numbers = #tpu.dot_dimension_numbers<[1], [1], [0], [0], [0, 0, 1, 0], [], []>} : vector<24x8xf32>, vector<16x8xf32>, vector<24x16xf32> -> vector<24x16xf32>
    "tpu.trace_stop"() : () -> ()
    %399 = arith.addf %398, %5 : vector<24x16xf32>
    %cst_128 = arith.constant dense<0xFF800000> : vector<24xf32>
    %400 = vector.multi_reduction <maximumf>, %399, %cst_128 [1] : vector<24x16xf32> to vector<24xf32>
    %401 = vector.shape_cast %400 : vector<24xf32> to vector<24x1xf32>
    %402 = vector.broadcast %401 : vector<24x1xf32> to vector<24x16xf32>
    %403 = arith.subf %399, %402 : vector<24x16xf32>
    %404 = math.exp %403 : vector<24x16xf32>
    %cst_129 = arith.constant dense<0.000000e+00> : vector<24xf32>
    %405 = vector.multi_reduction <add>, %404, %cst_129 [1] : vector<24x16xf32> to vector<24xf32>
    %406 = vector.shape_cast %405 : vector<24xf32> to vector<24x1xf32>
    %407 = tpu.reciprocal %406 {approx = true} : vector<24x1xf32> -> vector<24x1xf32>
    %408 = vector.broadcast %407 : vector<24x1xf32> to vector<24x16xf32>
    %409 = arith.mulf %404, %408 : vector<24x16xf32>
    %410 = vector.extract_strided_slice %394 {offsets = [0, 0], sizes = [16, 8], strides = [1, 1]} : vector<16x32xf32> to vector<16x8xf32>
    "tpu.trace_start"() <{level = 10 : i32, message = "qk,kd->qd"}> : () -> ()
    %cst_130 = arith.constant dense<0.000000e+00> : vector<24x8xf32>
    %411 = tpu.matmul %409, %410, %cst_130 {dimension_numbers = #tpu.dot_dimension_numbers<[1], [0], [0], [1], [0, 0, 1, 1], [], []>} : vector<24x16xf32>, vector<16x8xf32>, vector<24x8xf32> -> vector<24x8xf32>
    "tpu.trace_stop"() : () -> ()
    %412 = vector.extract_strided_slice %395 {offsets = [0, 0], sizes = [8, 32], strides = [1, 1]} : vector<32x32xf32> to vector<8x32xf32>
    %cst_131 = arith.constant dense<0.000000e+00> : vector<24x32xf32>
    %413 = tpu.matmul %411, %412, %cst_131 {dimension_numbers = #tpu.dot_dimension_numbers<[1], [0], [0], [1], [0, 0, 1, 1], [], []>} : vector<24x8xf32>, vector<8x32xf32>, vector<24x32xf32> -> vector<24x32xf32>
    %414 = vector.extract_strided_slice %387 {offsets = [0, 8], sizes = [24, 8], strides = [1, 1]} : vector<24x32xf32> to vector<24x8xf32>
    %415 = vector.extract_strided_slice %393 {offsets = [0, 8], sizes = [16, 8], strides = [1, 1]} : vector<16x32xf32> to vector<16x8xf32>
    "tpu.trace_start"() <{level = 10 : i32, message = "qd,kd->qk"}> : () -> ()
    %cst_132 = arith.constant dense<0.000000e+00> : vector<24x16xf32>
    %416 = tpu.matmul %414, %415, %cst_132 {dimension_numbers = #tpu.dot_dimension_numbers<[1], [1], [0], [0], [0, 0, 1, 0], [], []>} : vector<24x8xf32>, vector<16x8xf32>, vector<24x16xf32> -> vector<24x16xf32>
    "tpu.trace_stop"() : () -> ()
    %417 = arith.addf %416, %5 : vector<24x16xf32>
    %cst_133 = arith.constant dense<0xFF800000> : vector<24xf32>
    %418 = vector.multi_reduction <maximumf>, %417, %cst_133 [1] : vector<24x16xf32> to vector<24xf32>
    %419 = vector.shape_cast %418 : vector<24xf32> to vector<24x1xf32>
    %420 = vector.broadcast %419 : vector<24x1xf32> to vector<24x16xf32>
    %421 = arith.subf %417, %420 : vector<24x16xf32>
    %422 = math.exp %421 : vector<24x16xf32>
    %cst_134 = arith.constant dense<0.000000e+00> : vector<24xf32>
    %423 = vector.multi_reduction <add>, %422, %cst_134 [1] : vector<24x16xf32> to vector<24xf32>
    %424 = vector.shape_cast %423 : vector<24xf32> to vector<24x1xf32>
    %425 = tpu.reciprocal %424 {approx = true} : vector<24x1xf32> -> vector<24x1xf32>
    %426 = vector.broadcast %425 : vector<24x1xf32> to vector<24x16xf32>
    %427 = arith.mulf %422, %426 : vector<24x16xf32>
    %428 = vector.extract_strided_slice %394 {offsets = [0, 8], sizes = [16, 8], strides = [1, 1]} : vector<16x32xf32> to vector<16x8xf32>
    "tpu.trace_start"() <{level = 10 : i32, message = "qk,kd->qd"}> : () -> ()
    %cst_135 = arith.constant dense<0.000000e+00> : vector<24x8xf32>
    %429 = tpu.matmul %427, %428, %cst_135 {dimension_numbers = #tpu.dot_dimension_numbers<[1], [0], [0], [1], [0, 0, 1, 1], [], []>} : vector<24x16xf32>, vector<16x8xf32>, vector<24x8xf32> -> vector<24x8xf32>
    "tpu.trace_stop"() : () -> ()
    %430 = vector.extract_strided_slice %395 {offsets = [8, 0], sizes = [8, 32], strides = [1, 1]} : vector<32x32xf32> to vector<8x32xf32>
    %cst_136 = arith.constant dense<0.000000e+00> : vector<24x32xf32>
    %431 = tpu.matmul %429, %430, %cst_136 {dimension_numbers = #tpu.dot_dimension_numbers<[1], [0], [0], [1], [0, 0, 1, 1], [], []>} : vector<24x8xf32>, vector<8x32xf32>, vector<24x32xf32> -> vector<24x32xf32>
    %432 = arith.addf %413, %431 : vector<24x32xf32>
    %433 = vector.extract_strided_slice %387 {offsets = [0, 16], sizes = [24, 8], strides = [1, 1]} : vector<24x32xf32> to vector<24x8xf32>
    %434 = vector.extract_strided_slice %393 {offsets = [0, 16], sizes = [16, 8], strides = [1, 1]} : vector<16x32xf32> to vector<16x8xf32>
    "tpu.trace_start"() <{level = 10 : i32, message = "qd,kd->qk"}> : () -> ()
    %cst_137 = arith.constant dense<0.000000e+00> : vector<24x16xf32>
    %435 = tpu.matmul %433, %434, %cst_137 {dimension_numbers = #tpu.dot_dimension_numbers<[1], [1], [0], [0], [0, 0, 1, 0], [], []>} : vector<24x8xf32>, vector<16x8xf32>, vector<24x16xf32> -> vector<24x16xf32>
    "tpu.trace_stop"() : () -> ()
    %436 = arith.addf %435, %5 : vector<24x16xf32>
    %cst_138 = arith.constant dense<0xFF800000> : vector<24xf32>
    %437 = vector.multi_reduction <maximumf>, %436, %cst_138 [1] : vector<24x16xf32> to vector<24xf32>
    %438 = vector.shape_cast %437 : vector<24xf32> to vector<24x1xf32>
    %439 = vector.broadcast %438 : vector<24x1xf32> to vector<24x16xf32>
    %440 = arith.subf %436, %439 : vector<24x16xf32>
    %441 = math.exp %440 : vector<24x16xf32>
    %cst_139 = arith.constant dense<0.000000e+00> : vector<24xf32>
    %442 = vector.multi_reduction <add>, %441, %cst_139 [1] : vector<24x16xf32> to vector<24xf32>
    %443 = vector.shape_cast %442 : vector<24xf32> to vector<24x1xf32>
    %444 = tpu.reciprocal %443 {approx = true} : vector<24x1xf32> -> vector<24x1xf32>
    %445 = vector.broadcast %444 : vector<24x1xf32> to vector<24x16xf32>
    %446 = arith.mulf %441, %445 : vector<24x16xf32>
    %447 = vector.extract_strided_slice %394 {offsets = [0, 16], sizes = [16, 8], strides = [1, 1]} : vector<16x32xf32> to vector<16x8xf32>
    "tpu.trace_start"() <{level = 10 : i32, message = "qk,kd->qd"}> : () -> ()
    %cst_140 = arith.constant dense<0.000000e+00> : vector<24x8xf32>
    %448 = tpu.matmul %446, %447, %cst_140 {dimension_numbers = #tpu.dot_dimension_numbers<[1], [0], [0], [1], [0, 0, 1, 1], [], []>} : vector<24x16xf32>, vector<16x8xf32>, vector<24x8xf32> -> vector<24x8xf32>
    "tpu.trace_stop"() : () -> ()
    %449 = vector.extract_strided_slice %395 {offsets = [16, 0], sizes = [8, 32], strides = [1, 1]} : vector<32x32xf32> to vector<8x32xf32>
    %cst_141 = arith.constant dense<0.000000e+00> : vector<24x32xf32>
    %450 = tpu.matmul %448, %449, %cst_141 {dimension_numbers = #tpu.dot_dimension_numbers<[1], [0], [0], [1], [0, 0, 1, 1], [], []>} : vector<24x8xf32>, vector<8x32xf32>, vector<24x32xf32> -> vector<24x32xf32>
    %451 = arith.addf %432, %450 : vector<24x32xf32>
    %452 = vector.extract_strided_slice %387 {offsets = [0, 24], sizes = [24, 8], strides = [1, 1]} : vector<24x32xf32> to vector<24x8xf32>
    %453 = vector.extract_strided_slice %393 {offsets = [0, 24], sizes = [16, 8], strides = [1, 1]} : vector<16x32xf32> to vector<16x8xf32>
    "tpu.trace_start"() <{level = 10 : i32, message = "qd,kd->qk"}> : () -> ()
    %cst_142 = arith.constant dense<0.000000e+00> : vector<24x16xf32>
    %454 = tpu.matmul %452, %453, %cst_142 {dimension_numbers = #tpu.dot_dimension_numbers<[1], [1], [0], [0], [0, 0, 1, 0], [], []>} : vector<24x8xf32>, vector<16x8xf32>, vector<24x16xf32> -> vector<24x16xf32>
    "tpu.trace_stop"() : () -> ()
    %455 = arith.addf %454, %5 : vector<24x16xf32>
    %cst_143 = arith.constant dense<0xFF800000> : vector<24xf32>
    %456 = vector.multi_reduction <maximumf>, %455, %cst_143 [1] : vector<24x16xf32> to vector<24xf32>
    %457 = vector.shape_cast %456 : vector<24xf32> to vector<24x1xf32>
    %458 = vector.broadcast %457 : vector<24x1xf32> to vector<24x16xf32>
    %459 = arith.subf %455, %458 : vector<24x16xf32>
    %460 = math.exp %459 : vector<24x16xf32>
    %cst_144 = arith.constant dense<0.000000e+00> : vector<24xf32>
    %461 = vector.multi_reduction <add>, %460, %cst_144 [1] : vector<24x16xf32> to vector<24xf32>
    %462 = vector.shape_cast %461 : vector<24xf32> to vector<24x1xf32>
    %463 = tpu.reciprocal %462 {approx = true} : vector<24x1xf32> -> vector<24x1xf32>
    %464 = vector.broadcast %463 : vector<24x1xf32> to vector<24x16xf32>
    %465 = arith.mulf %460, %464 : vector<24x16xf32>
    %466 = vector.extract_strided_slice %394 {offsets = [0, 24], sizes = [16, 8], strides = [1, 1]} : vector<16x32xf32> to vector<16x8xf32>
    "tpu.trace_start"() <{level = 10 : i32, message = "qk,kd->qd"}> : () -> ()
    %cst_145 = arith.constant dense<0.000000e+00> : vector<24x8xf32>
    %467 = tpu.matmul %465, %466, %cst_145 {dimension_numbers = #tpu.dot_dimension_numbers<[1], [0], [0], [1], [0, 0, 1, 1], [], []>} : vector<24x16xf32>, vector<16x8xf32>, vector<24x8xf32> -> vector<24x8xf32>
    "tpu.trace_stop"() : () -> ()
    %468 = vector.extract_strided_slice %395 {offsets = [24, 0], sizes = [8, 32], strides = [1, 1]} : vector<32x32xf32> to vector<8x32xf32>
    %cst_146 = arith.constant dense<0.000000e+00> : vector<24x32xf32>
    %469 = tpu.matmul %467, %468, %cst_146 {dimension_numbers = #tpu.dot_dimension_numbers<[1], [0], [0], [1], [0, 0, 1, 1], [], []>} : vector<24x8xf32>, vector<8x32xf32>, vector<24x32xf32> -> vector<24x32xf32>
    %470 = arith.addf %451, %469 : vector<24x32xf32>
    %c552 = arith.constant 552 : index
    %c0_147 = arith.constant 0 : index
    %471 = vector.load %arg2[%c552, %c0_147] : memref<1248x128xf32, #tpu.memory_space<vmem>>, vector<1x32xf32>
    %472 = vector.broadcast %471 : vector<1x32xf32> to vector<24x32xf32>
    %473 = arith.addf %470, %472 : vector<24x32xf32>
    %474 = arith.addf %382, %473 : vector<24x32xf32>
    %c688 = arith.constant 688 : index
    %c0_148 = arith.constant 0 : index
    %475 = vector.load %arg2[%c688, %c0_148] : memref<1248x128xf32, #tpu.memory_space<vmem>>, vector<1x32xf32>
    %c696 = arith.constant 696 : index
    %c0_149 = arith.constant 0 : index
    %476 = vector.load %arg2[%c696, %c0_149] : memref<1248x128xf32, #tpu.memory_space<vmem>>, vector<1x32xf32>
    %cst_150 = arith.constant dense<0.000000e+00> : vector<24xf32>
    %477 = vector.multi_reduction <add>, %474, %cst_150 [1] : vector<24x32xf32> to vector<24xf32>
    %478 = vector.shape_cast %477 : vector<24xf32> to vector<24x1xf32>
    %cst_151 = arith.constant 3.200000e+01 : f32
    %479 = vector.broadcast %cst_151 : f32 to vector<24x1xf32>
    %480 = arith.divf %478, %479 : vector<24x1xf32>
    %481 = vector.broadcast %480 : vector<24x1xf32> to vector<24x32xf32>
    %482 = arith.subf %474, %481 : vector<24x32xf32>
    %483 = arith.mulf %482, %482 : vector<24x32xf32>
    %cst_152 = arith.constant dense<0.000000e+00> : vector<24xf32>
    %484 = vector.multi_reduction <add>, %483, %cst_152 [1] : vector<24x32xf32> to vector<24xf32>
    %485 = vector.shape_cast %484 : vector<24xf32> to vector<24x1xf32>
    %cst_153 = arith.constant 3.200000e+01 : f32
    %486 = vector.broadcast %cst_153 : f32 to vector<24x1xf32>
    %487 = arith.divf %485, %486 : vector<24x1xf32>
    %488 = vector.broadcast %480 : vector<24x1xf32> to vector<24x32xf32>
    %489 = arith.subf %474, %488 : vector<24x32xf32>
    %cst_154 = arith.constant 9.99999974E-6 : f32
    %490 = vector.broadcast %cst_154 : f32 to vector<24x1xf32>
    %491 = arith.addf %487, %490 : vector<24x1xf32>
    %492 = math.rsqrt %491 : vector<24x1xf32>
    %493 = vector.broadcast %492 : vector<24x1xf32> to vector<24x32xf32>
    %494 = arith.mulf %489, %493 : vector<24x32xf32>
    %495 = vector.broadcast %475 : vector<1x32xf32> to vector<24x32xf32>
    %496 = arith.mulf %494, %495 : vector<24x32xf32>
    %497 = vector.broadcast %476 : vector<1x32xf32> to vector<24x32xf32>
    %498 = arith.addf %496, %497 : vector<24x32xf32>
    %c560 = arith.constant 560 : index
    %c0_155 = arith.constant 0 : index
    %499 = vector.load %arg2[%c560, %c0_155] : memref<1248x128xf32, #tpu.memory_space<vmem>>, vector<32x64xf32>
    %cst_156 = arith.constant dense<0.000000e+00> : vector<24x64xf32>
    %500 = tpu.matmul %498, %499, %cst_156 {dimension_numbers = #tpu.dot_dimension_numbers<[1], [0], [0], [1], [0, 0, 1, 1], [], []>} : vector<24x32xf32>, vector<32x64xf32>, vector<24x64xf32> -> vector<24x64xf32>
    %c592 = arith.constant 592 : index
    %c0_157 = arith.constant 0 : index
    %501 = vector.load %arg2[%c592, %c0_157] : memref<1248x128xf32, #tpu.memory_space<vmem>>, vector<1x64xf32>
    %502 = vector.broadcast %501 : vector<1x64xf32> to vector<24x64xf32>
    %503 = arith.addf %500, %502 : vector<24x64xf32>
    %cst_158 = arith.constant 0.000000e+00 : f32
    %504 = vector.broadcast %cst_158 : f32 to vector<24x64xf32>
    %505 = arith.maximumf %503, %504 : vector<24x64xf32>
    %c600 = arith.constant 600 : index
    %c0_159 = arith.constant 0 : index
    %506 = vector.load %arg2[%c600, %c0_159] : memref<1248x128xf32, #tpu.memory_space<vmem>>, vector<64x32xf32>
    %cst_160 = arith.constant dense<0.000000e+00> : vector<24x32xf32>
    %507 = tpu.matmul %505, %506, %cst_160 {dimension_numbers = #tpu.dot_dimension_numbers<[1], [0], [0], [1], [0, 0, 1, 1], [], []>} : vector<24x64xf32>, vector<64x32xf32>, vector<24x32xf32> -> vector<24x32xf32>
    %c664 = arith.constant 664 : index
    %c0_161 = arith.constant 0 : index
    %508 = vector.load %arg2[%c664, %c0_161] : memref<1248x128xf32, #tpu.memory_space<vmem>>, vector<1x32xf32>
    %509 = vector.broadcast %508 : vector<1x32xf32> to vector<24x32xf32>
    %510 = arith.addf %507, %509 : vector<24x32xf32>
    %511 = arith.addf %498, %510 : vector<24x32xf32>
    %c704 = arith.constant 704 : index
    %c0_162 = arith.constant 0 : index
    %512 = vector.load %arg2[%c704, %c0_162] : memref<1248x128xf32, #tpu.memory_space<vmem>>, vector<1x32xf32>
    %c712 = arith.constant 712 : index
    %c0_163 = arith.constant 0 : index
    %513 = vector.load %arg2[%c712, %c0_163] : memref<1248x128xf32, #tpu.memory_space<vmem>>, vector<1x32xf32>
    %cst_164 = arith.constant dense<0.000000e+00> : vector<24xf32>
    %514 = vector.multi_reduction <add>, %511, %cst_164 [1] : vector<24x32xf32> to vector<24xf32>
    %515 = vector.shape_cast %514 : vector<24xf32> to vector<24x1xf32>
    %cst_165 = arith.constant 3.200000e+01 : f32
    %516 = vector.broadcast %cst_165 : f32 to vector<24x1xf32>
    %517 = arith.divf %515, %516 : vector<24x1xf32>
    %518 = vector.broadcast %517 : vector<24x1xf32> to vector<24x32xf32>
    %519 = arith.subf %511, %518 : vector<24x32xf32>
    %520 = arith.mulf %519, %519 : vector<24x32xf32>
    %cst_166 = arith.constant dense<0.000000e+00> : vector<24xf32>
    %521 = vector.multi_reduction <add>, %520, %cst_166 [1] : vector<24x32xf32> to vector<24xf32>
    %522 = vector.shape_cast %521 : vector<24xf32> to vector<24x1xf32>
    %cst_167 = arith.constant 3.200000e+01 : f32
    %523 = vector.broadcast %cst_167 : f32 to vector<24x1xf32>
    %524 = arith.divf %522, %523 : vector<24x1xf32>
    %525 = vector.broadcast %517 : vector<24x1xf32> to vector<24x32xf32>
    %526 = arith.subf %511, %525 : vector<24x32xf32>
    %cst_168 = arith.constant 9.99999974E-6 : f32
    %527 = vector.broadcast %cst_168 : f32 to vector<24x1xf32>
    %528 = arith.addf %524, %527 : vector<24x1xf32>
    %529 = math.rsqrt %528 : vector<24x1xf32>
    %530 = vector.broadcast %529 : vector<24x1xf32> to vector<24x32xf32>
    %531 = arith.mulf %526, %530 : vector<24x32xf32>
    %532 = vector.broadcast %512 : vector<1x32xf32> to vector<24x32xf32>
    %533 = arith.mulf %531, %532 : vector<24x32xf32>
    %534 = vector.broadcast %513 : vector<1x32xf32> to vector<24x32xf32>
    %535 = arith.addf %533, %534 : vector<24x32xf32>
    %c720 = arith.constant 720 : index
    %c0_169 = arith.constant 0 : index
    %536 = vector.load %arg2[%c720, %c0_169] : memref<1248x128xf32, #tpu.memory_space<vmem>>, vector<32x96xf32>
    %cst_170 = arith.constant dense<0.000000e+00> : vector<16x96xf32>
    %537 = tpu.matmul %270, %536, %cst_170 {dimension_numbers = #tpu.dot_dimension_numbers<[1], [0], [0], [1], [0, 0, 1, 1], [], []>} : vector<16x32xf32>, vector<32x96xf32>, vector<16x96xf32> -> vector<16x96xf32>
    %c752 = arith.constant 752 : index
    %c0_171 = arith.constant 0 : index
    %538 = vector.load %arg2[%c752, %c0_171] : memref<1248x128xf32, #tpu.memory_space<vmem>>, vector<1x96xf32>
    %539 = vector.broadcast %538 : vector<1x96xf32> to vector<16x96xf32>
    %540 = arith.addf %537, %539 : vector<16x96xf32>
    %541 = vector.extract_strided_slice %540 {offsets = [0, 0], sizes = [16, 32], strides = [1, 1]} : vector<16x96xf32> to vector<16x32xf32>
    %542 = vector.extract_strided_slice %540 {offsets = [0, 32], sizes = [16, 32], strides = [1, 1]} : vector<16x96xf32> to vector<16x32xf32>
    %543 = vector.extract_strided_slice %540 {offsets = [0, 64], sizes = [16, 32], strides = [1, 1]} : vector<16x96xf32> to vector<16x32xf32>
    %c760 = arith.constant 760 : index
    %c0_172 = arith.constant 0 : index
    %544 = vector.load %arg2[%c760, %c0_172] : memref<1248x128xf32, #tpu.memory_space<vmem>>, vector<32x32xf32>
    %545 = vector.extract_strided_slice %541 {offsets = [0, 0], sizes = [16, 8], strides = [1, 1]} : vector<16x32xf32> to vector<16x8xf32>
    %546 = vector.extract_strided_slice %542 {offsets = [0, 0], sizes = [16, 8], strides = [1, 1]} : vector<16x32xf32> to vector<16x8xf32>
    "tpu.trace_start"() <{level = 10 : i32, message = "qd,kd->qk"}> : () -> ()
    %cst_173 = arith.constant dense<0.000000e+00> : vector<16x16xf32>
    %547 = tpu.matmul %545, %546, %cst_173 {dimension_numbers = #tpu.dot_dimension_numbers<[1], [1], [0], [0], [0, 0, 1, 0], [], []>} : vector<16x8xf32>, vector<16x8xf32>, vector<16x16xf32> -> vector<16x16xf32>
    "tpu.trace_stop"() : () -> ()
    %548 = arith.addf %547, %2 : vector<16x16xf32>
    %cst_174 = arith.constant dense<0xFF800000> : vector<16xf32>
    %549 = vector.multi_reduction <maximumf>, %548, %cst_174 [1] : vector<16x16xf32> to vector<16xf32>
    %550 = vector.shape_cast %549 : vector<16xf32> to vector<16x1xf32>
    %551 = vector.broadcast %550 : vector<16x1xf32> to vector<16x16xf32>
    %552 = arith.subf %548, %551 : vector<16x16xf32>
    %553 = math.exp %552 : vector<16x16xf32>
    %cst_175 = arith.constant dense<0.000000e+00> : vector<16xf32>
    %554 = vector.multi_reduction <add>, %553, %cst_175 [1] : vector<16x16xf32> to vector<16xf32>
    %555 = vector.shape_cast %554 : vector<16xf32> to vector<16x1xf32>
    %556 = tpu.reciprocal %555 {approx = true} : vector<16x1xf32> -> vector<16x1xf32>
    %557 = vector.broadcast %556 : vector<16x1xf32> to vector<16x16xf32>
    %558 = arith.mulf %553, %557 : vector<16x16xf32>
    %559 = vector.extract_strided_slice %543 {offsets = [0, 0], sizes = [16, 8], strides = [1, 1]} : vector<16x32xf32> to vector<16x8xf32>
    "tpu.trace_start"() <{level = 10 : i32, message = "qk,kd->qd"}> : () -> ()
    %cst_176 = arith.constant dense<0.000000e+00> : vector<16x8xf32>
    %560 = tpu.matmul %558, %559, %cst_176 {dimension_numbers = #tpu.dot_dimension_numbers<[1], [0], [0], [1], [0, 0, 1, 1], [], []>} : vector<16x16xf32>, vector<16x8xf32>, vector<16x8xf32> -> vector<16x8xf32>
    "tpu.trace_stop"() : () -> ()
    %561 = vector.extract_strided_slice %544 {offsets = [0, 0], sizes = [8, 32], strides = [1, 1]} : vector<32x32xf32> to vector<8x32xf32>
    %cst_177 = arith.constant dense<0.000000e+00> : vector<16x32xf32>
    %562 = tpu.matmul %560, %561, %cst_177 {dimension_numbers = #tpu.dot_dimension_numbers<[1], [0], [0], [1], [0, 0, 1, 1], [], []>} : vector<16x8xf32>, vector<8x32xf32>, vector<16x32xf32> -> vector<16x32xf32>
    %563 = vector.extract_strided_slice %541 {offsets = [0, 8], sizes = [16, 8], strides = [1, 1]} : vector<16x32xf32> to vector<16x8xf32>
    %564 = vector.extract_strided_slice %542 {offsets = [0, 8], sizes = [16, 8], strides = [1, 1]} : vector<16x32xf32> to vector<16x8xf32>
    "tpu.trace_start"() <{level = 10 : i32, message = "qd,kd->qk"}> : () -> ()
    %cst_178 = arith.constant dense<0.000000e+00> : vector<16x16xf32>
    %565 = tpu.matmul %563, %564, %cst_178 {dimension_numbers = #tpu.dot_dimension_numbers<[1], [1], [0], [0], [0, 0, 1, 0], [], []>} : vector<16x8xf32>, vector<16x8xf32>, vector<16x16xf32> -> vector<16x16xf32>
    "tpu.trace_stop"() : () -> ()
    %566 = arith.addf %565, %2 : vector<16x16xf32>
    %cst_179 = arith.constant dense<0xFF800000> : vector<16xf32>
    %567 = vector.multi_reduction <maximumf>, %566, %cst_179 [1] : vector<16x16xf32> to vector<16xf32>
    %568 = vector.shape_cast %567 : vector<16xf32> to vector<16x1xf32>
    %569 = vector.broadcast %568 : vector<16x1xf32> to vector<16x16xf32>
    %570 = arith.subf %566, %569 : vector<16x16xf32>
    %571 = math.exp %570 : vector<16x16xf32>
    %cst_180 = arith.constant dense<0.000000e+00> : vector<16xf32>
    %572 = vector.multi_reduction <add>, %571, %cst_180 [1] : vector<16x16xf32> to vector<16xf32>
    %573 = vector.shape_cast %572 : vector<16xf32> to vector<16x1xf32>
    %574 = tpu.reciprocal %573 {approx = true} : vector<16x1xf32> -> vector<16x1xf32>
    %575 = vector.broadcast %574 : vector<16x1xf32> to vector<16x16xf32>
    %576 = arith.mulf %571, %575 : vector<16x16xf32>
    %577 = vector.extract_strided_slice %543 {offsets = [0, 8], sizes = [16, 8], strides = [1, 1]} : vector<16x32xf32> to vector<16x8xf32>
    "tpu.trace_start"() <{level = 10 : i32, message = "qk,kd->qd"}> : () -> ()
    %cst_181 = arith.constant dense<0.000000e+00> : vector<16x8xf32>
    %578 = tpu.matmul %576, %577, %cst_181 {dimension_numbers = #tpu.dot_dimension_numbers<[1], [0], [0], [1], [0, 0, 1, 1], [], []>} : vector<16x16xf32>, vector<16x8xf32>, vector<16x8xf32> -> vector<16x8xf32>
    "tpu.trace_stop"() : () -> ()
    %579 = vector.extract_strided_slice %544 {offsets = [8, 0], sizes = [8, 32], strides = [1, 1]} : vector<32x32xf32> to vector<8x32xf32>
    %cst_182 = arith.constant dense<0.000000e+00> : vector<16x32xf32>
    %580 = tpu.matmul %578, %579, %cst_182 {dimension_numbers = #tpu.dot_dimension_numbers<[1], [0], [0], [1], [0, 0, 1, 1], [], []>} : vector<16x8xf32>, vector<8x32xf32>, vector<16x32xf32> -> vector<16x32xf32>
    %581 = arith.addf %562, %580 : vector<16x32xf32>
    %582 = vector.extract_strided_slice %541 {offsets = [0, 16], sizes = [16, 8], strides = [1, 1]} : vector<16x32xf32> to vector<16x8xf32>
    %583 = vector.extract_strided_slice %542 {offsets = [0, 16], sizes = [16, 8], strides = [1, 1]} : vector<16x32xf32> to vector<16x8xf32>
    "tpu.trace_start"() <{level = 10 : i32, message = "qd,kd->qk"}> : () -> ()
    %cst_183 = arith.constant dense<0.000000e+00> : vector<16x16xf32>
    %584 = tpu.matmul %582, %583, %cst_183 {dimension_numbers = #tpu.dot_dimension_numbers<[1], [1], [0], [0], [0, 0, 1, 0], [], []>} : vector<16x8xf32>, vector<16x8xf32>, vector<16x16xf32> -> vector<16x16xf32>
    "tpu.trace_stop"() : () -> ()
    %585 = arith.addf %584, %2 : vector<16x16xf32>
    %cst_184 = arith.constant dense<0xFF800000> : vector<16xf32>
    %586 = vector.multi_reduction <maximumf>, %585, %cst_184 [1] : vector<16x16xf32> to vector<16xf32>
    %587 = vector.shape_cast %586 : vector<16xf32> to vector<16x1xf32>
    %588 = vector.broadcast %587 : vector<16x1xf32> to vector<16x16xf32>
    %589 = arith.subf %585, %588 : vector<16x16xf32>
    %590 = math.exp %589 : vector<16x16xf32>
    %cst_185 = arith.constant dense<0.000000e+00> : vector<16xf32>
    %591 = vector.multi_reduction <add>, %590, %cst_185 [1] : vector<16x16xf32> to vector<16xf32>
    %592 = vector.shape_cast %591 : vector<16xf32> to vector<16x1xf32>
    %593 = tpu.reciprocal %592 {approx = true} : vector<16x1xf32> -> vector<16x1xf32>
    %594 = vector.broadcast %593 : vector<16x1xf32> to vector<16x16xf32>
    %595 = arith.mulf %590, %594 : vector<16x16xf32>
    %596 = vector.extract_strided_slice %543 {offsets = [0, 16], sizes = [16, 8], strides = [1, 1]} : vector<16x32xf32> to vector<16x8xf32>
    "tpu.trace_start"() <{level = 10 : i32, message = "qk,kd->qd"}> : () -> ()
    %cst_186 = arith.constant dense<0.000000e+00> : vector<16x8xf32>
    %597 = tpu.matmul %595, %596, %cst_186 {dimension_numbers = #tpu.dot_dimension_numbers<[1], [0], [0], [1], [0, 0, 1, 1], [], []>} : vector<16x16xf32>, vector<16x8xf32>, vector<16x8xf32> -> vector<16x8xf32>
    "tpu.trace_stop"() : () -> ()
    %598 = vector.extract_strided_slice %544 {offsets = [16, 0], sizes = [8, 32], strides = [1, 1]} : vector<32x32xf32> to vector<8x32xf32>
    %cst_187 = arith.constant dense<0.000000e+00> : vector<16x32xf32>
    %599 = tpu.matmul %597, %598, %cst_187 {dimension_numbers = #tpu.dot_dimension_numbers<[1], [0], [0], [1], [0, 0, 1, 1], [], []>} : vector<16x8xf32>, vector<8x32xf32>, vector<16x32xf32> -> vector<16x32xf32>
    %600 = arith.addf %581, %599 : vector<16x32xf32>
    %601 = vector.extract_strided_slice %541 {offsets = [0, 24], sizes = [16, 8], strides = [1, 1]} : vector<16x32xf32> to vector<16x8xf32>
    %602 = vector.extract_strided_slice %542 {offsets = [0, 24], sizes = [16, 8], strides = [1, 1]} : vector<16x32xf32> to vector<16x8xf32>
    "tpu.trace_start"() <{level = 10 : i32, message = "qd,kd->qk"}> : () -> ()
    %cst_188 = arith.constant dense<0.000000e+00> : vector<16x16xf32>
    %603 = tpu.matmul %601, %602, %cst_188 {dimension_numbers = #tpu.dot_dimension_numbers<[1], [1], [0], [0], [0, 0, 1, 0], [], []>} : vector<16x8xf32>, vector<16x8xf32>, vector<16x16xf32> -> vector<16x16xf32>
    "tpu.trace_stop"() : () -> ()
    %604 = arith.addf %603, %2 : vector<16x16xf32>
    %cst_189 = arith.constant dense<0xFF800000> : vector<16xf32>
    %605 = vector.multi_reduction <maximumf>, %604, %cst_189 [1] : vector<16x16xf32> to vector<16xf32>
    %606 = vector.shape_cast %605 : vector<16xf32> to vector<16x1xf32>
    %607 = vector.broadcast %606 : vector<16x1xf32> to vector<16x16xf32>
    %608 = arith.subf %604, %607 : vector<16x16xf32>
    %609 = math.exp %608 : vector<16x16xf32>
    %cst_190 = arith.constant dense<0.000000e+00> : vector<16xf32>
    %610 = vector.multi_reduction <add>, %609, %cst_190 [1] : vector<16x16xf32> to vector<16xf32>
    %611 = vector.shape_cast %610 : vector<16xf32> to vector<16x1xf32>
    %612 = tpu.reciprocal %611 {approx = true} : vector<16x1xf32> -> vector<16x1xf32>
    %613 = vector.broadcast %612 : vector<16x1xf32> to vector<16x16xf32>
    %614 = arith.mulf %609, %613 : vector<16x16xf32>
    %615 = vector.extract_strided_slice %543 {offsets = [0, 24], sizes = [16, 8], strides = [1, 1]} : vector<16x32xf32> to vector<16x8xf32>
    "tpu.trace_start"() <{level = 10 : i32, message = "qk,kd->qd"}> : () -> ()
    %cst_191 = arith.constant dense<0.000000e+00> : vector<16x8xf32>
    %616 = tpu.matmul %614, %615, %cst_191 {dimension_numbers = #tpu.dot_dimension_numbers<[1], [0], [0], [1], [0, 0, 1, 1], [], []>} : vector<16x16xf32>, vector<16x8xf32>, vector<16x8xf32> -> vector<16x8xf32>
    "tpu.trace_stop"() : () -> ()
    %617 = vector.extract_strided_slice %544 {offsets = [24, 0], sizes = [8, 32], strides = [1, 1]} : vector<32x32xf32> to vector<8x32xf32>
    %cst_192 = arith.constant dense<0.000000e+00> : vector<16x32xf32>
    %618 = tpu.matmul %616, %617, %cst_192 {dimension_numbers = #tpu.dot_dimension_numbers<[1], [0], [0], [1], [0, 0, 1, 1], [], []>} : vector<16x8xf32>, vector<8x32xf32>, vector<16x32xf32> -> vector<16x32xf32>
    %619 = arith.addf %600, %618 : vector<16x32xf32>
    %c792 = arith.constant 792 : index
    %c0_193 = arith.constant 0 : index
    %620 = vector.load %arg2[%c792, %c0_193] : memref<1248x128xf32, #tpu.memory_space<vmem>>, vector<1x32xf32>
    %621 = vector.broadcast %620 : vector<1x32xf32> to vector<16x32xf32>
    %622 = arith.addf %619, %621 : vector<16x32xf32>
    %623 = arith.addf %270, %622 : vector<16x32xf32>
    %c912 = arith.constant 912 : index
    %c0_194 = arith.constant 0 : index
    %624 = vector.load %arg2[%c912, %c0_194] : memref<1248x128xf32, #tpu.memory_space<vmem>>, vector<1x32xf32>
    %c920 = arith.constant 920 : index
    %c0_195 = arith.constant 0 : index
    %625 = vector.load %arg2[%c920, %c0_195] : memref<1248x128xf32, #tpu.memory_space<vmem>>, vector<1x32xf32>
    %cst_196 = arith.constant dense<0.000000e+00> : vector<16xf32>
    %626 = vector.multi_reduction <add>, %623, %cst_196 [1] : vector<16x32xf32> to vector<16xf32>
    %627 = vector.shape_cast %626 : vector<16xf32> to vector<16x1xf32>
    %cst_197 = arith.constant 3.200000e+01 : f32
    %628 = vector.broadcast %cst_197 : f32 to vector<16x1xf32>
    %629 = arith.divf %627, %628 : vector<16x1xf32>
    %630 = vector.broadcast %629 : vector<16x1xf32> to vector<16x32xf32>
    %631 = arith.subf %623, %630 : vector<16x32xf32>
    %632 = arith.mulf %631, %631 : vector<16x32xf32>
    %cst_198 = arith.constant dense<0.000000e+00> : vector<16xf32>
    %633 = vector.multi_reduction <add>, %632, %cst_198 [1] : vector<16x32xf32> to vector<16xf32>
    %634 = vector.shape_cast %633 : vector<16xf32> to vector<16x1xf32>
    %cst_199 = arith.constant 3.200000e+01 : f32
    %635 = vector.broadcast %cst_199 : f32 to vector<16x1xf32>
    %636 = arith.divf %634, %635 : vector<16x1xf32>
    %637 = vector.broadcast %629 : vector<16x1xf32> to vector<16x32xf32>
    %638 = arith.subf %623, %637 : vector<16x32xf32>
    %cst_200 = arith.constant 9.99999974E-6 : f32
    %639 = vector.broadcast %cst_200 : f32 to vector<16x1xf32>
    %640 = arith.addf %636, %639 : vector<16x1xf32>
    %641 = math.rsqrt %640 : vector<16x1xf32>
    %642 = vector.broadcast %641 : vector<16x1xf32> to vector<16x32xf32>
    %643 = arith.mulf %638, %642 : vector<16x32xf32>
    %644 = vector.broadcast %624 : vector<1x32xf32> to vector<16x32xf32>
    %645 = arith.mulf %643, %644 : vector<16x32xf32>
    %646 = vector.broadcast %625 : vector<1x32xf32> to vector<16x32xf32>
    %647 = arith.addf %645, %646 : vector<16x32xf32>
    %c800 = arith.constant 800 : index
    %c0_201 = arith.constant 0 : index
    %648 = vector.load %arg2[%c800, %c0_201] : memref<1248x128xf32, #tpu.memory_space<vmem>>, vector<32x64xf32>
    %cst_202 = arith.constant dense<0.000000e+00> : vector<16x64xf32>
    %649 = tpu.matmul %647, %648, %cst_202 {dimension_numbers = #tpu.dot_dimension_numbers<[1], [0], [0], [1], [0, 0, 1, 1], [], []>} : vector<16x32xf32>, vector<32x64xf32>, vector<16x64xf32> -> vector<16x64xf32>
    %c832 = arith.constant 832 : index
    %c0_203 = arith.constant 0 : index
    %650 = vector.load %arg2[%c832, %c0_203] : memref<1248x128xf32, #tpu.memory_space<vmem>>, vector<1x64xf32>
    %651 = vector.broadcast %650 : vector<1x64xf32> to vector<16x64xf32>
    %652 = arith.addf %649, %651 : vector<16x64xf32>
    %cst_204 = arith.constant 0.000000e+00 : f32
    %653 = vector.broadcast %cst_204 : f32 to vector<16x64xf32>
    %654 = arith.maximumf %652, %653 : vector<16x64xf32>
    %c840 = arith.constant 840 : index
    %c0_205 = arith.constant 0 : index
    %655 = vector.load %arg2[%c840, %c0_205] : memref<1248x128xf32, #tpu.memory_space<vmem>>, vector<64x32xf32>
    %cst_206 = arith.constant dense<0.000000e+00> : vector<16x32xf32>
    %656 = tpu.matmul %654, %655, %cst_206 {dimension_numbers = #tpu.dot_dimension_numbers<[1], [0], [0], [1], [0, 0, 1, 1], [], []>} : vector<16x64xf32>, vector<64x32xf32>, vector<16x32xf32> -> vector<16x32xf32>
    %c904 = arith.constant 904 : index
    %c0_207 = arith.constant 0 : index
    %657 = vector.load %arg2[%c904, %c0_207] : memref<1248x128xf32, #tpu.memory_space<vmem>>, vector<1x32xf32>
    %658 = vector.broadcast %657 : vector<1x32xf32> to vector<16x32xf32>
    %659 = arith.addf %656, %658 : vector<16x32xf32>
    %660 = arith.addf %647, %659 : vector<16x32xf32>
    %c928 = arith.constant 928 : index
    %c0_208 = arith.constant 0 : index
    %661 = vector.load %arg2[%c928, %c0_208] : memref<1248x128xf32, #tpu.memory_space<vmem>>, vector<1x32xf32>
    %c936 = arith.constant 936 : index
    %c0_209 = arith.constant 0 : index
    %662 = vector.load %arg2[%c936, %c0_209] : memref<1248x128xf32, #tpu.memory_space<vmem>>, vector<1x32xf32>
    %cst_210 = arith.constant dense<0.000000e+00> : vector<16xf32>
    %663 = vector.multi_reduction <add>, %660, %cst_210 [1] : vector<16x32xf32> to vector<16xf32>
    %664 = vector.shape_cast %663 : vector<16xf32> to vector<16x1xf32>
    %cst_211 = arith.constant 3.200000e+01 : f32
    %665 = vector.broadcast %cst_211 : f32 to vector<16x1xf32>
    %666 = arith.divf %664, %665 : vector<16x1xf32>
    %667 = vector.broadcast %666 : vector<16x1xf32> to vector<16x32xf32>
    %668 = arith.subf %660, %667 : vector<16x32xf32>
    %669 = arith.mulf %668, %668 : vector<16x32xf32>
    %cst_212 = arith.constant dense<0.000000e+00> : vector<16xf32>
    %670 = vector.multi_reduction <add>, %669, %cst_212 [1] : vector<16x32xf32> to vector<16xf32>
    %671 = vector.shape_cast %670 : vector<16xf32> to vector<16x1xf32>
    %cst_213 = arith.constant 3.200000e+01 : f32
    %672 = vector.broadcast %cst_213 : f32 to vector<16x1xf32>
    %673 = arith.divf %671, %672 : vector<16x1xf32>
    %674 = vector.broadcast %666 : vector<16x1xf32> to vector<16x32xf32>
    %675 = arith.subf %660, %674 : vector<16x32xf32>
    %cst_214 = arith.constant 9.99999974E-6 : f32
    %676 = vector.broadcast %cst_214 : f32 to vector<16x1xf32>
    %677 = arith.addf %673, %676 : vector<16x1xf32>
    %678 = math.rsqrt %677 : vector<16x1xf32>
    %679 = vector.broadcast %678 : vector<16x1xf32> to vector<16x32xf32>
    %680 = arith.mulf %675, %679 : vector<16x32xf32>
    %681 = vector.broadcast %661 : vector<1x32xf32> to vector<16x32xf32>
    %682 = arith.mulf %680, %681 : vector<16x32xf32>
    %683 = vector.broadcast %662 : vector<1x32xf32> to vector<16x32xf32>
    %684 = arith.addf %682, %683 : vector<16x32xf32>
    %c944 = arith.constant 944 : index
    %c0_215 = arith.constant 0 : index
    %685 = vector.load %arg2[%c944, %c0_215] : memref<1248x128xf32, #tpu.memory_space<vmem>>, vector<32x96xf32>
    %cst_216 = arith.constant dense<0.000000e+00> : vector<24x96xf32>
    %686 = tpu.matmul %535, %685, %cst_216 {dimension_numbers = #tpu.dot_dimension_numbers<[1], [0], [0], [1], [0, 0, 1, 1], [], []>} : vector<24x32xf32>, vector<32x96xf32>, vector<24x96xf32> -> vector<24x96xf32>
    %c976 = arith.constant 976 : index
    %c0_217 = arith.constant 0 : index
    %687 = vector.load %arg2[%c976, %c0_217] : memref<1248x128xf32, #tpu.memory_space<vmem>>, vector<1x96xf32>
    %688 = vector.broadcast %687 : vector<1x96xf32> to vector<24x96xf32>
    %689 = arith.addf %686, %688 : vector<24x96xf32>
    %690 = vector.extract_strided_slice %689 {offsets = [0, 0], sizes = [24, 32], strides = [1, 1]} : vector<24x96xf32> to vector<24x32xf32>
    %691 = vector.extract_strided_slice %689 {offsets = [0, 32], sizes = [24, 32], strides = [1, 1]} : vector<24x96xf32> to vector<24x32xf32>
    %692 = vector.extract_strided_slice %689 {offsets = [0, 64], sizes = [24, 32], strides = [1, 1]} : vector<24x96xf32> to vector<24x32xf32>
    %c984 = arith.constant 984 : index
    %c0_218 = arith.constant 0 : index
    %693 = vector.load %arg2[%c984, %c0_218] : memref<1248x128xf32, #tpu.memory_space<vmem>>, vector<32x32xf32>
    %694 = vector.extract_strided_slice %690 {offsets = [0, 0], sizes = [24, 8], strides = [1, 1]} : vector<24x32xf32> to vector<24x8xf32>
    %695 = vector.extract_strided_slice %691 {offsets = [0, 0], sizes = [24, 8], strides = [1, 1]} : vector<24x32xf32> to vector<24x8xf32>
    "tpu.trace_start"() <{level = 10 : i32, message = "qd,kd->qk"}> : () -> ()
    %cst_219 = arith.constant dense<0.000000e+00> : vector<24x24xf32>
    %696 = tpu.matmul %694, %695, %cst_219 {dimension_numbers = #tpu.dot_dimension_numbers<[1], [1], [0], [0], [0, 0, 1, 0], [], []>} : vector<24x8xf32>, vector<24x8xf32>, vector<24x24xf32> -> vector<24x24xf32>
    "tpu.trace_stop"() : () -> ()
    %697 = arith.addf %696, %4 : vector<24x24xf32>
    %cst_220 = arith.constant dense<0xFF800000> : vector<24xf32>
    %698 = vector.multi_reduction <maximumf>, %697, %cst_220 [1] : vector<24x24xf32> to vector<24xf32>
    %699 = vector.shape_cast %698 : vector<24xf32> to vector<24x1xf32>
    %700 = vector.broadcast %699 : vector<24x1xf32> to vector<24x24xf32>
    %701 = arith.subf %697, %700 : vector<24x24xf32>
    %702 = math.exp %701 : vector<24x24xf32>
    %cst_221 = arith.constant dense<0.000000e+00> : vector<24xf32>
    %703 = vector.multi_reduction <add>, %702, %cst_221 [1] : vector<24x24xf32> to vector<24xf32>
    %704 = vector.shape_cast %703 : vector<24xf32> to vector<24x1xf32>
    %705 = tpu.reciprocal %704 {approx = true} : vector<24x1xf32> -> vector<24x1xf32>
    %706 = vector.broadcast %705 : vector<24x1xf32> to vector<24x24xf32>
    %707 = arith.mulf %702, %706 : vector<24x24xf32>
    %708 = vector.extract_strided_slice %692 {offsets = [0, 0], sizes = [24, 8], strides = [1, 1]} : vector<24x32xf32> to vector<24x8xf32>
    "tpu.trace_start"() <{level = 10 : i32, message = "qk,kd->qd"}> : () -> ()
    %cst_222 = arith.constant dense<0.000000e+00> : vector<24x8xf32>
    %709 = tpu.matmul %707, %708, %cst_222 {dimension_numbers = #tpu.dot_dimension_numbers<[1], [0], [0], [1], [0, 0, 1, 1], [], []>} : vector<24x24xf32>, vector<24x8xf32>, vector<24x8xf32> -> vector<24x8xf32>
    "tpu.trace_stop"() : () -> ()
    %710 = vector.extract_strided_slice %693 {offsets = [0, 0], sizes = [8, 32], strides = [1, 1]} : vector<32x32xf32> to vector<8x32xf32>
    %cst_223 = arith.constant dense<0.000000e+00> : vector<24x32xf32>
    %711 = tpu.matmul %709, %710, %cst_223 {dimension_numbers = #tpu.dot_dimension_numbers<[1], [0], [0], [1], [0, 0, 1, 1], [], []>} : vector<24x8xf32>, vector<8x32xf32>, vector<24x32xf32> -> vector<24x32xf32>
    %712 = vector.extract_strided_slice %690 {offsets = [0, 8], sizes = [24, 8], strides = [1, 1]} : vector<24x32xf32> to vector<24x8xf32>
    %713 = vector.extract_strided_slice %691 {offsets = [0, 8], sizes = [24, 8], strides = [1, 1]} : vector<24x32xf32> to vector<24x8xf32>
    "tpu.trace_start"() <{level = 10 : i32, message = "qd,kd->qk"}> : () -> ()
    %cst_224 = arith.constant dense<0.000000e+00> : vector<24x24xf32>
    %714 = tpu.matmul %712, %713, %cst_224 {dimension_numbers = #tpu.dot_dimension_numbers<[1], [1], [0], [0], [0, 0, 1, 0], [], []>} : vector<24x8xf32>, vector<24x8xf32>, vector<24x24xf32> -> vector<24x24xf32>
    "tpu.trace_stop"() : () -> ()
    %715 = arith.addf %714, %4 : vector<24x24xf32>
    %cst_225 = arith.constant dense<0xFF800000> : vector<24xf32>
    %716 = vector.multi_reduction <maximumf>, %715, %cst_225 [1] : vector<24x24xf32> to vector<24xf32>
    %717 = vector.shape_cast %716 : vector<24xf32> to vector<24x1xf32>
    %718 = vector.broadcast %717 : vector<24x1xf32> to vector<24x24xf32>
    %719 = arith.subf %715, %718 : vector<24x24xf32>
    %720 = math.exp %719 : vector<24x24xf32>
    %cst_226 = arith.constant dense<0.000000e+00> : vector<24xf32>
    %721 = vector.multi_reduction <add>, %720, %cst_226 [1] : vector<24x24xf32> to vector<24xf32>
    %722 = vector.shape_cast %721 : vector<24xf32> to vector<24x1xf32>
    %723 = tpu.reciprocal %722 {approx = true} : vector<24x1xf32> -> vector<24x1xf32>
    %724 = vector.broadcast %723 : vector<24x1xf32> to vector<24x24xf32>
    %725 = arith.mulf %720, %724 : vector<24x24xf32>
    %726 = vector.extract_strided_slice %692 {offsets = [0, 8], sizes = [24, 8], strides = [1, 1]} : vector<24x32xf32> to vector<24x8xf32>
    "tpu.trace_start"() <{level = 10 : i32, message = "qk,kd->qd"}> : () -> ()
    %cst_227 = arith.constant dense<0.000000e+00> : vector<24x8xf32>
    %727 = tpu.matmul %725, %726, %cst_227 {dimension_numbers = #tpu.dot_dimension_numbers<[1], [0], [0], [1], [0, 0, 1, 1], [], []>} : vector<24x24xf32>, vector<24x8xf32>, vector<24x8xf32> -> vector<24x8xf32>
    "tpu.trace_stop"() : () -> ()
    %728 = vector.extract_strided_slice %693 {offsets = [8, 0], sizes = [8, 32], strides = [1, 1]} : vector<32x32xf32> to vector<8x32xf32>
    %cst_228 = arith.constant dense<0.000000e+00> : vector<24x32xf32>
    %729 = tpu.matmul %727, %728, %cst_228 {dimension_numbers = #tpu.dot_dimension_numbers<[1], [0], [0], [1], [0, 0, 1, 1], [], []>} : vector<24x8xf32>, vector<8x32xf32>, vector<24x32xf32> -> vector<24x32xf32>
    %730 = arith.addf %711, %729 : vector<24x32xf32>
    %731 = vector.extract_strided_slice %690 {offsets = [0, 16], sizes = [24, 8], strides = [1, 1]} : vector<24x32xf32> to vector<24x8xf32>
    %732 = vector.extract_strided_slice %691 {offsets = [0, 16], sizes = [24, 8], strides = [1, 1]} : vector<24x32xf32> to vector<24x8xf32>
    "tpu.trace_start"() <{level = 10 : i32, message = "qd,kd->qk"}> : () -> ()
    %cst_229 = arith.constant dense<0.000000e+00> : vector<24x24xf32>
    %733 = tpu.matmul %731, %732, %cst_229 {dimension_numbers = #tpu.dot_dimension_numbers<[1], [1], [0], [0], [0, 0, 1, 0], [], []>} : vector<24x8xf32>, vector<24x8xf32>, vector<24x24xf32> -> vector<24x24xf32>
    "tpu.trace_stop"() : () -> ()
    %734 = arith.addf %733, %4 : vector<24x24xf32>
    %cst_230 = arith.constant dense<0xFF800000> : vector<24xf32>
    %735 = vector.multi_reduction <maximumf>, %734, %cst_230 [1] : vector<24x24xf32> to vector<24xf32>
    %736 = vector.shape_cast %735 : vector<24xf32> to vector<24x1xf32>
    %737 = vector.broadcast %736 : vector<24x1xf32> to vector<24x24xf32>
    %738 = arith.subf %734, %737 : vector<24x24xf32>
    %739 = math.exp %738 : vector<24x24xf32>
    %cst_231 = arith.constant dense<0.000000e+00> : vector<24xf32>
    %740 = vector.multi_reduction <add>, %739, %cst_231 [1] : vector<24x24xf32> to vector<24xf32>
    %741 = vector.shape_cast %740 : vector<24xf32> to vector<24x1xf32>
    %742 = tpu.reciprocal %741 {approx = true} : vector<24x1xf32> -> vector<24x1xf32>
    %743 = vector.broadcast %742 : vector<24x1xf32> to vector<24x24xf32>
    %744 = arith.mulf %739, %743 : vector<24x24xf32>
    %745 = vector.extract_strided_slice %692 {offsets = [0, 16], sizes = [24, 8], strides = [1, 1]} : vector<24x32xf32> to vector<24x8xf32>
    "tpu.trace_start"() <{level = 10 : i32, message = "qk,kd->qd"}> : () -> ()
    %cst_232 = arith.constant dense<0.000000e+00> : vector<24x8xf32>
    %746 = tpu.matmul %744, %745, %cst_232 {dimension_numbers = #tpu.dot_dimension_numbers<[1], [0], [0], [1], [0, 0, 1, 1], [], []>} : vector<24x24xf32>, vector<24x8xf32>, vector<24x8xf32> -> vector<24x8xf32>
    "tpu.trace_stop"() : () -> ()
    %747 = vector.extract_strided_slice %693 {offsets = [16, 0], sizes = [8, 32], strides = [1, 1]} : vector<32x32xf32> to vector<8x32xf32>
    %cst_233 = arith.constant dense<0.000000e+00> : vector<24x32xf32>
    %748 = tpu.matmul %746, %747, %cst_233 {dimension_numbers = #tpu.dot_dimension_numbers<[1], [0], [0], [1], [0, 0, 1, 1], [], []>} : vector<24x8xf32>, vector<8x32xf32>, vector<24x32xf32> -> vector<24x32xf32>
    %749 = arith.addf %730, %748 : vector<24x32xf32>
    %750 = vector.extract_strided_slice %690 {offsets = [0, 24], sizes = [24, 8], strides = [1, 1]} : vector<24x32xf32> to vector<24x8xf32>
    %751 = vector.extract_strided_slice %691 {offsets = [0, 24], sizes = [24, 8], strides = [1, 1]} : vector<24x32xf32> to vector<24x8xf32>
    "tpu.trace_start"() <{level = 10 : i32, message = "qd,kd->qk"}> : () -> ()
    %cst_234 = arith.constant dense<0.000000e+00> : vector<24x24xf32>
    %752 = tpu.matmul %750, %751, %cst_234 {dimension_numbers = #tpu.dot_dimension_numbers<[1], [1], [0], [0], [0, 0, 1, 0], [], []>} : vector<24x8xf32>, vector<24x8xf32>, vector<24x24xf32> -> vector<24x24xf32>
    "tpu.trace_stop"() : () -> ()
    %753 = arith.addf %752, %4 : vector<24x24xf32>
    %cst_235 = arith.constant dense<0xFF800000> : vector<24xf32>
    %754 = vector.multi_reduction <maximumf>, %753, %cst_235 [1] : vector<24x24xf32> to vector<24xf32>
    %755 = vector.shape_cast %754 : vector<24xf32> to vector<24x1xf32>
    %756 = vector.broadcast %755 : vector<24x1xf32> to vector<24x24xf32>
    %757 = arith.subf %753, %756 : vector<24x24xf32>
    %758 = math.exp %757 : vector<24x24xf32>
    %cst_236 = arith.constant dense<0.000000e+00> : vector<24xf32>
    %759 = vector.multi_reduction <add>, %758, %cst_236 [1] : vector<24x24xf32> to vector<24xf32>
    %760 = vector.shape_cast %759 : vector<24xf32> to vector<24x1xf32>
    %761 = tpu.reciprocal %760 {approx = true} : vector<24x1xf32> -> vector<24x1xf32>
    %762 = vector.broadcast %761 : vector<24x1xf32> to vector<24x24xf32>
    %763 = arith.mulf %758, %762 : vector<24x24xf32>
    %764 = vector.extract_strided_slice %692 {offsets = [0, 24], sizes = [24, 8], strides = [1, 1]} : vector<24x32xf32> to vector<24x8xf32>
    "tpu.trace_start"() <{level = 10 : i32, message = "qk,kd->qd"}> : () -> ()
    %cst_237 = arith.constant dense<0.000000e+00> : vector<24x8xf32>
    %765 = tpu.matmul %763, %764, %cst_237 {dimension_numbers = #tpu.dot_dimension_numbers<[1], [0], [0], [1], [0, 0, 1, 1], [], []>} : vector<24x24xf32>, vector<24x8xf32>, vector<24x8xf32> -> vector<24x8xf32>
    "tpu.trace_stop"() : () -> ()
    %766 = vector.extract_strided_slice %693 {offsets = [24, 0], sizes = [8, 32], strides = [1, 1]} : vector<32x32xf32> to vector<8x32xf32>
    %cst_238 = arith.constant dense<0.000000e+00> : vector<24x32xf32>
    %767 = tpu.matmul %765, %766, %cst_238 {dimension_numbers = #tpu.dot_dimension_numbers<[1], [0], [0], [1], [0, 0, 1, 1], [], []>} : vector<24x8xf32>, vector<8x32xf32>, vector<24x32xf32> -> vector<24x32xf32>
    %768 = arith.addf %749, %767 : vector<24x32xf32>
    %c1016 = arith.constant 1016 : index
    %c0_239 = arith.constant 0 : index
    %769 = vector.load %arg2[%c1016, %c0_239] : memref<1248x128xf32, #tpu.memory_space<vmem>>, vector<1x32xf32>
    %770 = vector.broadcast %769 : vector<1x32xf32> to vector<24x32xf32>
    %771 = arith.addf %768, %770 : vector<24x32xf32>
    %772 = arith.addf %535, %771 : vector<24x32xf32>
    %c1136 = arith.constant 1136 : index
    %c0_240 = arith.constant 0 : index
    %773 = vector.load %arg2[%c1136, %c0_240] : memref<1248x128xf32, #tpu.memory_space<vmem>>, vector<1x32xf32>
    %c1144 = arith.constant 1144 : index
    %c0_241 = arith.constant 0 : index
    %774 = vector.load %arg2[%c1144, %c0_241] : memref<1248x128xf32, #tpu.memory_space<vmem>>, vector<1x32xf32>
    %cst_242 = arith.constant dense<0.000000e+00> : vector<24xf32>
    %775 = vector.multi_reduction <add>, %772, %cst_242 [1] : vector<24x32xf32> to vector<24xf32>
    %776 = vector.shape_cast %775 : vector<24xf32> to vector<24x1xf32>
    %cst_243 = arith.constant 3.200000e+01 : f32
    %777 = vector.broadcast %cst_243 : f32 to vector<24x1xf32>
    %778 = arith.divf %776, %777 : vector<24x1xf32>
    %779 = vector.broadcast %778 : vector<24x1xf32> to vector<24x32xf32>
    %780 = arith.subf %772, %779 : vector<24x32xf32>
    %781 = arith.mulf %780, %780 : vector<24x32xf32>
    %cst_244 = arith.constant dense<0.000000e+00> : vector<24xf32>
    %782 = vector.multi_reduction <add>, %781, %cst_244 [1] : vector<24x32xf32> to vector<24xf32>
    %783 = vector.shape_cast %782 : vector<24xf32> to vector<24x1xf32>
    %cst_245 = arith.constant 3.200000e+01 : f32
    %784 = vector.broadcast %cst_245 : f32 to vector<24x1xf32>
    %785 = arith.divf %783, %784 : vector<24x1xf32>
    %786 = vector.broadcast %778 : vector<24x1xf32> to vector<24x32xf32>
    %787 = arith.subf %772, %786 : vector<24x32xf32>
    %cst_246 = arith.constant 9.99999974E-6 : f32
    %788 = vector.broadcast %cst_246 : f32 to vector<24x1xf32>
    %789 = arith.addf %785, %788 : vector<24x1xf32>
    %790 = math.rsqrt %789 : vector<24x1xf32>
    %791 = vector.broadcast %790 : vector<24x1xf32> to vector<24x32xf32>
    %792 = arith.mulf %787, %791 : vector<24x32xf32>
    %793 = vector.broadcast %773 : vector<1x32xf32> to vector<24x32xf32>
    %794 = arith.mulf %792, %793 : vector<24x32xf32>
    %795 = vector.broadcast %774 : vector<1x32xf32> to vector<24x32xf32>
    %796 = arith.addf %794, %795 : vector<24x32xf32>
    %c1024 = arith.constant 1024 : index
    %c0_247 = arith.constant 0 : index
    %797 = vector.load %arg2[%c1024, %c0_247] : memref<1248x128xf32, #tpu.memory_space<vmem>>, vector<32x64xf32>
    %cst_248 = arith.constant dense<0.000000e+00> : vector<24x64xf32>
    %798 = tpu.matmul %796, %797, %cst_248 {dimension_numbers = #tpu.dot_dimension_numbers<[1], [0], [0], [1], [0, 0, 1, 1], [], []>} : vector<24x32xf32>, vector<32x64xf32>, vector<24x64xf32> -> vector<24x64xf32>
    %c1056 = arith.constant 1056 : index
    %c0_249 = arith.constant 0 : index
    %799 = vector.load %arg2[%c1056, %c0_249] : memref<1248x128xf32, #tpu.memory_space<vmem>>, vector<1x64xf32>
    %800 = vector.broadcast %799 : vector<1x64xf32> to vector<24x64xf32>
    %801 = arith.addf %798, %800 : vector<24x64xf32>
    %cst_250 = arith.constant 0.000000e+00 : f32
    %802 = vector.broadcast %cst_250 : f32 to vector<24x64xf32>
    %803 = arith.maximumf %801, %802 : vector<24x64xf32>
    %c1064 = arith.constant 1064 : index
    %c0_251 = arith.constant 0 : index
    %804 = vector.load %arg2[%c1064, %c0_251] : memref<1248x128xf32, #tpu.memory_space<vmem>>, vector<64x32xf32>
    %cst_252 = arith.constant dense<0.000000e+00> : vector<24x32xf32>
    %805 = tpu.matmul %803, %804, %cst_252 {dimension_numbers = #tpu.dot_dimension_numbers<[1], [0], [0], [1], [0, 0, 1, 1], [], []>} : vector<24x64xf32>, vector<64x32xf32>, vector<24x32xf32> -> vector<24x32xf32>
    %c1128 = arith.constant 1128 : index
    %c0_253 = arith.constant 0 : index
    %806 = vector.load %arg2[%c1128, %c0_253] : memref<1248x128xf32, #tpu.memory_space<vmem>>, vector<1x32xf32>
    %807 = vector.broadcast %806 : vector<1x32xf32> to vector<24x32xf32>
    %808 = arith.addf %805, %807 : vector<24x32xf32>
    %809 = arith.addf %796, %808 : vector<24x32xf32>
    %c1152 = arith.constant 1152 : index
    %c0_254 = arith.constant 0 : index
    %810 = vector.load %arg2[%c1152, %c0_254] : memref<1248x128xf32, #tpu.memory_space<vmem>>, vector<1x32xf32>
    %c1160 = arith.constant 1160 : index
    %c0_255 = arith.constant 0 : index
    %811 = vector.load %arg2[%c1160, %c0_255] : memref<1248x128xf32, #tpu.memory_space<vmem>>, vector<1x32xf32>
    %cst_256 = arith.constant dense<0.000000e+00> : vector<24xf32>
    %812 = vector.multi_reduction <add>, %809, %cst_256 [1] : vector<24x32xf32> to vector<24xf32>
    %813 = vector.shape_cast %812 : vector<24xf32> to vector<24x1xf32>
    %cst_257 = arith.constant 3.200000e+01 : f32
    %814 = vector.broadcast %cst_257 : f32 to vector<24x1xf32>
    %815 = arith.divf %813, %814 : vector<24x1xf32>
    %816 = vector.broadcast %815 : vector<24x1xf32> to vector<24x32xf32>
    %817 = arith.subf %809, %816 : vector<24x32xf32>
    %818 = arith.mulf %817, %817 : vector<24x32xf32>
    %cst_258 = arith.constant dense<0.000000e+00> : vector<24xf32>
    %819 = vector.multi_reduction <add>, %818, %cst_258 [1] : vector<24x32xf32> to vector<24xf32>
    %820 = vector.shape_cast %819 : vector<24xf32> to vector<24x1xf32>
    %cst_259 = arith.constant 3.200000e+01 : f32
    %821 = vector.broadcast %cst_259 : f32 to vector<24x1xf32>
    %822 = arith.divf %820, %821 : vector<24x1xf32>
    %823 = vector.broadcast %815 : vector<24x1xf32> to vector<24x32xf32>
    %824 = arith.subf %809, %823 : vector<24x32xf32>
    %cst_260 = arith.constant 9.99999974E-6 : f32
    %825 = vector.broadcast %cst_260 : f32 to vector<24x1xf32>
    %826 = arith.addf %822, %825 : vector<24x1xf32>
    %827 = math.rsqrt %826 : vector<24x1xf32>
    %828 = vector.broadcast %827 : vector<24x1xf32> to vector<24x32xf32>
    %829 = arith.mulf %824, %828 : vector<24x32xf32>
    %830 = vector.broadcast %810 : vector<1x32xf32> to vector<24x32xf32>
    %831 = arith.mulf %829, %830 : vector<24x32xf32>
    %832 = vector.broadcast %811 : vector<1x32xf32> to vector<24x32xf32>
    %833 = arith.addf %831, %832 : vector<24x32xf32>
    %c0_261 = arith.constant 0 : index
    %c0_262 = arith.constant 0 : index
    %834 = vector.load %arg3[%c0_261, %c0_262] : memref<16x32xf32, #tpu.memory_space<vmem>>, vector<16x32xf32>
    tpu.vector_store %arg3[%c0_261, %c0_262], %684 {strides = array<i32>} : memref<16x32xf32, #tpu.memory_space<vmem>>, vector<16x32xf32>,
    %c0_263 = arith.constant 0 : index
    %c0_264 = arith.constant 0 : index
    %835 = vector.load %arg4[%c0_263, %c0_264] : memref<24x32xf32, #tpu.memory_space<vmem>>, vector<24x32xf32>
    tpu.vector_store %arg4[%c0_263, %c0_264], %833 {strides = array<i32>} : memref<24x32xf32, #tpu.memory_space<vmem>>, vector<24x32xf32>,
    return
  }
}

</mosaic_0001>

<llo_original>
// kernel: forward.1
$region0: #{forward.1}
  #allocation0 [shape = 'u32[]', space=smem, size = 0x4, offset = 0x4, fixed_abs, tag = 'smem constant byte address 0x4 - core index']
  #allocation1 [shape = 'u32[144,128]{1,0:T(1,128)}', space=vmem, size = 0x12000, scoped, tag = 'internal scratch']
  %s0 = inlined_call_operand.vmem [shape: f32[16,32], index: 0, kind: input, shape index: {}]
  %s1 = inlined_call_operand.vmem [shape: f32[24,32], index: 1, kind: input, shape index: {}]
  %s2 = inlined_call_operand.hbm [shape: f32[1248,128], index: 2, kind: input, shape index: {}]
  %s3 = inlined_call_operand.hbm [shape: f32[16,32], index: 3, kind: output, shape index: {0}]
  %s4 = inlined_call_operand.vmem [shape: f32[24,32], index: 4, kind: output, shape index: {1}]
  %5 = xla_tuple %s3, %s4
  %s6 = sld [smem:[#allocation0]]
  $region34: #{forward.1} parent=0
    _
  %s8 = ssub.s32 1, %s6
  %s9 = scalar_select 0, %s8, %s6
  $region1: #{forward.1} parent=0
    #allocation2 [shape = 'u8[638976]{0}', space=vmem, size = 0x9c000, scoped, tag = 'input window, operand 2, single buffered']
    #allocation3 [shape = 's32[1]{0}', space=sflag, size = 0x4, scoped, tag = 'scoped memory for forward.1']
    #allocation4 [shape = 's32[1]{0}', space=sflag, size = 0x4, scoped, tag = 'scoped memory for forward.1']
    #allocation5 [shape = 'u8[8192]{0}', space=vmem, size = 0x2000, scoped, tag = 'output window, operand 0, single buffered']
    %10 = vsyncpa [#allocation3], 0
    %11 = vsyncpa [#allocation4], 0
    // Predicated region
    $region2: #{forward.1} parent=1 // pred_check
      _
    $region3: #{forward.1} parent=1 // pred_check_branch
      %13 = sbr.rel (0) target = $region5
    $region4: #{forward.1} parent=1 // pred_region
      _
    $region5: #{forward.1} parent=1 // pred_fallthru
      _
    // Predicated region
    $region6: #{forward.1} parent=1 // pred_check
      _
    $region7: #{forward.1} parent=1 // pred_check_branch
      %15 = sbr.rel (0) target = $region9
    $region8: #{forward.1} parent=1 // pred_region
      _
    $region9: #{forward.1} parent=1 // pred_fallthru
      _
    // Predicated region
    $region10: #{forward.1} parent=1 // pred_check
      _
    $region11: #{forward.1} parent=1 // pred_check_branch
      %17 = sbr.rel (0) target = $region13
    $region12: #{forward.1} parent=1 // pred_region
      %s19 = ssub.s32 19968, 19968
      %20 = vsyncadd [#allocation3], %s19
      %s21 = sshll.u32 [#allocation2], 4
      %s22 = int_to_ptr.vmem [resolvable:$true] %s21
      %27 = dma.hbm_to_vmem [thread:$0]  %s2, 19968, %s22, [#allocation3], 128, 128, 8
    $region13: #{forward.1} parent=1 // pred_fallthru
      _
    // Predicated region
    $region14: #{forward.1} parent=1 // pred_check
      _
    $region15: #{forward.1} parent=1 // pred_check_branch
      %29 = sbr.rel (0) target = $region17
    $region16: #{forward.1} parent=1 // pred_region
      %30 = dma.done [#allocation3], 19968
    $region17: #{forward.1} parent=1 // pred_fallthru
      _
    %v31 = vld [vmem:[%s0] sm:$0xff]
    %v32 = vld [vmem:[%s0 + $0x8] sm:$0xff]
    %v33 = vld [vmem:[%s1] sm:$0xff]
    %v34 = vld [vmem:[%s1 + $0x8] sm:$0xff]
    %v35 = vld [vmem:[%s1 + $0x10] sm:$0xff]
    %v36 = vld [vmem:[#allocation2 + $0x490] sm:$0xff]
    %v37 = vld [vmem:[#allocation2 + $0x498] sm:$0xff]
    %v38 = vld [vmem:[#allocation2 + $0x4a0] sm:$0xff]
    %v39 = vld [vmem:[#allocation2 + $0x4a8] sm:$0xff]
    %v40 = vld [vmem:[#allocation2 + $0x4b0] sm:$0xff]
    %v41 = vld [vmem:[#allocation2 + $0x4b8] sm:$0xff]
    %v42 = vld [vmem:[#allocation2 + $0x4c0] sm:$0xff]
    %v43 = vld [vmem:[#allocation2 + $0x4c8] sm:$0xff]
    %v44 = vld [vmem:[#allocation2 + $0x4d0] sm:$0xff]
    %v45 = vld [vmem:[#allocation2 + $0x4d8] sm:$0xff]
    %v46 = vld [vmem:[#allocation2] sm:$0xff]
    %v47 = vld [vmem:[#allocation2 + $0x8] sm:$0xff]
    %v48 = vld [vmem:[#allocation2 + $0x10] sm:$0xff]
    %v49 = vld [vmem:[#allocation2 + $0x18] sm:$0xff]
    %v50 = vld [vmem:[#allocation2 + $0x20] sm:$0x1]
    %v51 = vlaneseq
    %v52 = vshrl.u32 %v51, 7
    %v53 = vsub.s32 0, %v52
    %v54 = vrot.slane %v50, %v53
    %vm55 = vcmask 261120
    %v57 = vsel %vm55, %v31, 0
    %v60 = vsel %vm55, %v32, 0
    %62 = vmatprep.subr.mxu0 0.0
    %63 = vmatpush1.msra.mxu0 %v46
    %64 = vmatprep.subr.mxu0 0.0
    %65 = vmatpush1.msra.mxu0 %v47
    %66 = vmatprep.subr.mxu0 0.0
    %67 = vmatpush1.msra.mxu0 %v48
    %68 = vmatprep.subr.mxu0 0.0
    %69 = vmatpush1.msra.mxu0 %v49
    %70 = vmatprep.subr.mxu0 0.0
    %71 = vmatpush1.msra.mxu0 0.0
    %72 = vmatprep.subr.mxu0 0.0
    %73 = vmatpush1.msra.mxu0 0.0
    %74 = vmatprep.subr.mxu0 0.0
    %75 = vmatpush1.msra.mxu0 0.0
    %76 = vmatprep.subr.mxu0 0.0
    %77 = vmatpush1.msra.mxu0 0.0
    %78 = vmatprep.subr.mxu0 0.0
    %79 = vmatpush1.msra.mxu0 0.0
    %80 = vmatprep.subr.mxu0 0.0
    %81 = vmatpush1.msra.mxu0 0.0
    %82 = vmatprep.subr.mxu0 0.0
    %83 = vmatpush1.msra.mxu0 0.0
    %84 = vmatprep.subr.mxu0 0.0
    %85 = vmatpush1.msra.mxu0 0.0
    %86 = vmatprep.subr.mxu0 0.0
    %87 = vmatpush1.msra.mxu0 0.0
    %88 = vmatprep.subr.mxu0 0.0
    %89 = vmatpush1.msra.mxu0 0.0
    %90 = vmatprep.subr.mxu0 0.0
    %91 = vmatpush1.msra.mxu0 0.0
    %92 = vmatprep.subr.mxu0 0.0
    %93 = vmatpush1.msra.mxu0 0.0
    %94 = vmatprep.subr.mxu0 0.0
    %95 = vmatpush1.msra.mxu0 0.0
    %96 = vmatprep.subr.mxu0 0.0
    %97 = vmatpush1.msra.mxu0 0.0
    %98 = vmatprep.subr.mxu0 0.0
    %99 = vmatpush1.msra.mxu0 0.0
    %100 = vmatprep.subr.mxu0 0.0
    %101 = vmatpush1.msra.mxu0 0.0
    %102 = vmatprep.subr.mxu0 0.0
    %103 = vmatpush1.msra.mxu0 0.0
    %104 = vmatprep.subr.mxu0 0.0
    %105 = vmatpush1.msra.mxu0 0.0
    %106 = vmatprep.subr.mxu0 0.0
    %107 = vmatpush1.msra.mxu0 0.0
    %108 = vmatprep.subr.mxu0 0.0
    %109 = vmatpush1.msra.mxu0 0.0
    %110 = vmatprep.subr.mxu0 0.0
    %111 = vmatpush1.msra.mxu0 0.0
    %112 = vmatprep.subr.mxu0 0.0
    %113 = vmatpush1.msra.mxu0 0.0
    %114 = vmatprep.subr.mxu0 0.0
    %115 = vmatpush1.msra.mxu0 0.0
    %116 = vmatprep.subr.mxu0 0.0
    %117 = vmatpush1.msra.mxu0 0.0
    %118 = vmatprep.subr.mxu0 0.0
    %119 = vmatpush1.msra.mxu0 0.0
    %120 = vmatprep.subr.mxu0 0.0
    %121 = vmatpush1.msra.mxu0 0.0
    %122 = vmatprep.subr.mxu0 0.0
    %123 = vmatpush1.msra.mxu0 0.0
    %124 = vmatprep.subr.mxu0 0.0
    %125 = vmatpush1.msra.mxu0 0.0
    %126 = vmatprep.mubr.f32.mxu0 0.0
    %127 = vmatmul.mubr.f32.gmra.mrb[0].mxu0 %v57
    %v128 = vpop.f32.mrb[0].mxu0
    %v129 = vadd.f32 %v54, %v128
    %v130 = vpop.f32.mrb[0].mxu0
    %131 = vmatprep.mubr.f32.mxu0 0.0
    %132 = vmatmul.mubr.f32.gmra.mrb[0].mxu0 %v60
    %v133 = vpop.f32.mrb[0].mxu0
    %v134 = vadd.f32 %v54, %v133
    %v135 = vpop.f32.mrb[0].mxu0
    %136 = vdwg.mxu0
    %v137 = vld [vmem:[#allocation2 + $0x28] sm:$0xff]
    %v138 = vld [vmem:[#allocation2 + $0x30] sm:$0xff]
    %v139 = vld [vmem:[#allocation2 + $0x38] sm:$0xff]
    %v140 = vld [vmem:[#allocation2 + $0x40] sm:$0xff]
    %143 = vrot.lane.b32.xlu0 %v129, 96
    %v144 = vpop.permute.xlu0 %143
    %145 = vrot.lane.b32.xlu0 %v134, 96
    %v146 = vpop.permute.xlu0 %145
    %vm147 = vcmask 64512
    %v148 = vsel %vm147, %v129, 0
    %v150 = vsel %vm147, %v134, 0
    %v152 = vsel %vm147, %v144, 0
    %v154 = vsel %vm147, %v146, 0
    %156 = vmatprep.subr.mxu0 0.0
    %157 = vmatpush1.xpose.msra.mxu0 %v152
    %158 = vmatprep.subr.mxu0 0.0
    %159 = vmatpush1.xpose.msra.mxu0 %v154
    %160 = vmatprep.subr.mxu0 0.0
    %161 = vmatpush1.xpose.msra.mxu0 0.0
    %162 = vmatprep.subr.mxu0 0.0
    %163 = vmatpush1.xpose.msra.mxu0 0.0
    %164 = vmatprep.subr.mxu0 0.0
    %165 = vmatpush1.xpose.msra.mxu0 0.0
    %166 = vmatprep.subr.mxu0 0.0
    %167 = vmatpush1.xpose.msra.mxu0 0.0
    %168 = vmatprep.subr.mxu0 0.0
    %169 = vmatpush1.xpose.msra.mxu0 0.0
    %170 = vmatprep.subr.mxu0 0.0
    %171 = vmatpush1.xpose.msra.mxu0 0.0
    %172 = vmatprep.subr.mxu0 0.0
    %173 = vmatpush1.xpose.msra.mxu0 0.0
    %174 = vmatprep.subr.mxu0 0.0
    %175 = vmatpush1.xpose.msra.mxu0 0.0
    %176 = vmatprep.subr.mxu0 0.0
    %177 = vmatpush1.xpose.msra.mxu0 0.0
    %178 = vmatprep.subr.mxu0 0.0
    %179 = vmatpush1.xpose.msra.mxu0 0.0
    %180 = vmatprep.subr.mxu0 0.0
    %181 = vmatpush1.xpose.msra.mxu0 0.0
    %182 = vmatprep.subr.mxu0 0.0
    %183 = vmatpush1.xpose.msra.mxu0 0.0
    %184 = vmatprep.subr.mxu0 0.0
    %185 = vmatpush1.xpose.msra.mxu0 0.0
    %186 = vmatprep.subr.mxu0 0.0
    %187 = vmatpush1.xpose.msra.mxu0 0.0
    %188 = vmatprep.subr.mxu0 0.0
    %189 = vmatpush1.xpose.msra.mxu0 0.0
    %190 = vmatprep.subr.mxu0 0.0
    %191 = vmatpush1.xpose.msra.mxu0 0.0
    %192 = vmatprep.subr.mxu0 0.0
    %193 = vmatpush1.xpose.msra.mxu0 0.0
    %194 = vmatprep.subr.mxu0 0.0
    %195 = vmatpush1.xpose.msra.mxu0 0.0
    %196 = vmatprep.subr.mxu0 0.0
    %197 = vmatpush1.xpose.msra.mxu0 0.0
    %198 = vmatprep.subr.mxu0 0.0
    %199 = vmatpush1.xpose.msra.mxu0 0.0
    %200 = vmatprep.subr.mxu0 0.0
    %201 = vmatpush1.xpose.msra.mxu0 0.0
    %202 = vmatprep.subr.mxu0 0.0
    %203 = vmatpush1.xpose.msra.mxu0 0.0
    %204 = vmatprep.subr.mxu0 0.0
    %205 = vmatpush1.xpose.msra.mxu0 0.0
    %206 = vmatprep.subr.mxu0 0.0
    %207 = vmatpush1.xpose.msra.mxu0 0.0
    %208 = vmatprep.subr.mxu0 0.0
    %209 = vmatpush1.xpose.msra.mxu0 0.0
    %210 = vmatprep.subr.mxu0 0.0
    %211 = vmatpush1.xpose.msra.mxu0 0.0
    %212 = vmatprep.subr.mxu0 0.0
    %213 = vmatpush1.xpose.msra.mxu0 0.0
    %214 = vmatprep.subr.mxu0 0.0
    %215 = vmatpush1.xpose.msra.mxu0 0.0
    %216 = vmatprep.subr.mxu0 0.0
    %217 = vmatpush1.xpose.msra.mxu0 0.0
    %218 = vmatprep.subr.mxu0 0.0
    %219 = vmatpush1.xpose.msra.mxu0 0.0
    %220 = vmatprep.mubr.f32.mxu0 0.0
    %221 = vmatmul.mubr.f32.gmra.mrb[0].mxu0 %v148
    %v222 = vpop.f32.mrb[0].mxu0
    %v223 = vadd.f32 %v36, %v222
    %v224 = vpop.f32.mrb[0].mxu0
    %225 = vmatprep.mubr.f32.mxu0 0.0
    %226 = vmatmul.mubr.f32.gmra.mrb[0].mxu0 %v150
    %v227 = vpop.f32.mrb[0].mxu0
    %v228 = vadd.f32 %v37, %v227
    %v229 = vpop.f32.mrb[0].mxu0
    %230 = vdwg.mxu0
    %vm231 = vcmask 130048
    %v232 = vsel %vm231, %v223, -inf
    %233 = vmax.xlane.f32.xlu0 %v232
    %v234 = vpop.xlane.xlu0 %233
    %v235 = vsel %vm231, %v228, -inf
    %236 = vmax.xlane.f32.xlu0 %v235
    %v237 = vpop.xlane.xlu0 %236
    %v238 = vsub.f32 %v223, %v234
    %v239 = vsub.f32 %v228, %v237
    %v240 = vmul.f32 %v238, 1.442695
    %v241 = vpow.pop %v240
    %v242 = vmul.f32 %v239, 1.442695
    %v243 = vpow.pop %v242
    %v244 = vsel %vm231, %v241, 0.0
    %245 = vadd.xlane.f32.xlu0 %v244
    %v246 = vpop.xlane.xlu0 %245
    %v247 = vsel %vm231, %v243, 0.0
    %248 = vadd.xlane.f32.xlu0 %v247
    %v249 = vpop.xlane.xlu0 %248
    %v250 = vrcp.pop %v246
    %v251 = vrcp.pop %v249
    %v252 = vmul.f32 %v241, %v250
    %v253 = vmul.f32 %v243, %v251
    %254 = vrot.lane.b32.xlu0 %v129, 64
    %v255 = vpop.permute.xlu0 %254
    %256 = vrot.lane.b32.xlu0 %v134, 64
    %v257 = vpop.permute.xlu0 %256
    %v261 = vsel %vm231, %v252, 0
    %v264 = vsel %vm231, %v253, 0
    %266 = vmatprep.subr.mxu0 0.0
    %267 = vmatpush1.msra.mxu0 %v255
    %268 = vmatprep.subr.mxu0 0.0
    %269 = vmatpush1.msra.mxu0 %v257
    %270 = vmatprep.subr.mxu0 0.0
    %271 = vmatpush1.msra.mxu0 0.0
    %272 = vmatprep.subr.mxu0 0.0
    %273 = vmatpush1.msra.mxu0 0.0
    %274 = vmatprep.subr.mxu0 0.0
    %275 = vmatpush1.msra.mxu0 0.0
    %276 = vmatprep.subr.mxu0 0.0
    %277 = vmatpush1.msra.mxu0 0.0
    %278 = vmatprep.subr.mxu0 0.0
    %279 = vmatpush1.msra.mxu0 0.0
    %280 = vmatprep.subr.mxu0 0.0
    %281 = vmatpush1.msra.mxu0 0.0
    %282 = vmatprep.subr.mxu0 0.0
    %283 = vmatpush1.msra.mxu0 0.0
    %284 = vmatprep.subr.mxu0 0.0
    %285 = vmatpush1.msra.mxu0 0.0
    %286 = vmatprep.subr.mxu0 0.0
    %287 = vmatpush1.msra.mxu0 0.0
    %288 = vmatprep.subr.mxu0 0.0
    %289 = vmatpush1.msra.mxu0 0.0
    %290 = vmatprep.subr.mxu0 0.0
    %291 = vmatpush1.msra.mxu0 0.0
    %292 = vmatprep.subr.mxu0 0.0
    %293 = vmatpush1.msra.mxu0 0.0
    %294 = vmatprep.subr.mxu0 0.0
    %295 = vmatpush1.msra.mxu0 0.0
    %296 = vmatprep.subr.mxu0 0.0
    %297 = vmatpush1.msra.mxu0 0.0
    %298 = vmatprep.subr.mxu0 0.0
    %299 = vmatpush1.msra.mxu0 0.0
    %300 = vmatprep.subr.mxu0 0.0
    %301 = vmatpush1.msra.mxu0 0.0
    %302 = vmatprep.subr.mxu0 0.0
    %303 = vmatpush1.msra.mxu0 0.0
    %304 = vmatprep.subr.mxu0 0.0
    %305 = vmatpush1.msra.mxu0 0.0
    %306 = vmatprep.subr.mxu0 0.0
    %307 = vmatpush1.msra.mxu0 0.0
    %308 = vmatprep.subr.mxu0 0.0
    %309 = vmatpush1.msra.mxu0 0.0
    %310 = vmatprep.subr.mxu0 0.0
    %311 = vmatpush1.msra.mxu0 0.0
    %312 = vmatprep.subr.mxu0 0.0
    %313 = vmatpush1.msra.mxu0 0.0
    %314 = vmatprep.subr.mxu0 0.0
    %315 = vmatpush1.msra.mxu0 0.0
    %316 = vmatprep.subr.mxu0 0.0
    %317 = vmatpush1.msra.mxu0 0.0
    %318 = vmatprep.subr.mxu0 0.0
    %319 = vmatpush1.msra.mxu0 0.0
    %320 = vmatprep.subr.mxu0 0.0
    %321 = vmatpush1.msra.mxu0 0.0
    %322 = vmatprep.subr.mxu0 0.0
    %323 = vmatpush1.msra.mxu0 0.0
    %324 = vmatprep.subr.mxu0 0.0
    %325 = vmatpush1.msra.mxu0 0.0
    %326 = vmatprep.subr.mxu0 0.0
    %327 = vmatpush1.msra.mxu0 0.0
    %328 = vmatprep.subr.mxu0 0.0
    %329 = vmatpush1.msra.mxu0 0.0
    %330 = vmatprep.mubr.f32.mxu0 0.0
    %331 = vmatmul.mubr.f32.gmra.mrb[0].mxu0 %v261
    %v332 = vpop.f32.mrb[0].mxu0
    %v333 = vadd.f32 0.0, %v332
    %v334 = vpop.f32.mrb[0].mxu0
    %335 = vmatprep.mubr.f32.mxu0 0.0
    %336 = vmatmul.mubr.f32.gmra.mrb[0].mxu0 %v264
    %v337 = vpop.f32.mrb[0].mxu0
    %v338 = vadd.f32 0.0, %v337
    %v339 = vpop.f32.mrb[0].mxu0
    %340 = vdwg.mxu0
    %341 = vrot.lane.b32.xlu0 %v129, 120
    %v342 = vpop.permute.xlu0 %341
    %343 = vrot.lane.b32.xlu0 %v134, 120
    %v344 = vpop.permute.xlu0 %343
    %345 = vrot.lane.b32.xlu0 %v129, 88
    %v346 = vpop.permute.xlu0 %345
    %347 = vrot.lane.b32.xlu0 %v134, 88
    %v348 = vpop.permute.xlu0 %347
    %v349 = vsel %vm147, %v342, 0
    %v351 = vsel %vm147, %v344, 0
    %v353 = vsel %vm147, %v346, 0
    %v355 = vsel %vm147, %v348, 0
    %357 = vmatprep.subr.mxu0 0.0
    %358 = vmatpush1.xpose.msra.mxu0 %v353
    %359 = vmatprep.subr.mxu0 0.0
    %360 = vmatpush1.xpose.msra.mxu0 %v355
    %361 = vmatprep.subr.mxu0 0.0
    %362 = vmatpush1.xpose.msra.mxu0 0.0
    %363 = vmatprep.subr.mxu0 0.0
    %364 = vmatpush1.xpose.msra.mxu0 0.0
    %365 = vmatprep.subr.mxu0 0.0
    %366 = vmatpush1.xpose.msra.mxu0 0.0
    %367 = vmatprep.subr.mxu0 0.0
    %368 = vmatpush1.xpose.msra.mxu0 0.0
    %369 = vmatprep.subr.mxu0 0.0
    %370 = vmatpush1.xpose.msra.mxu0 0.0
    %371 = vmatprep.subr.mxu0 0.0
    %372 = vmatpush1.xpose.msra.mxu0 0.0
    %373 = vmatprep.subr.mxu0 0.0
    %374 = vmatpush1.xpose.msra.mxu0 0.0
    %375 = vmatprep.subr.mxu0 0.0
    %376 = vmatpush1.xpose.msra.mxu0 0.0
    %377 = vmatprep.subr.mxu0 0.0
    %378 = vmatpush1.xpose.msra.mxu0 0.0
    %379 = vmatprep.subr.mxu0 0.0
    %380 = vmatpush1.xpose.msra.mxu0 0.0
    %381 = vmatprep.subr.mxu0 0.0
    %382 = vmatpush1.xpose.msra.mxu0 0.0
    %383 = vmatprep.subr.mxu0 0.0
    %384 = vmatpush1.xpose.msra.mxu0 0.0
    %385 = vmatprep.subr.mxu0 0.0
    %386 = vmatpush1.xpose.msra.mxu0 0.0
    %387 = vmatprep.subr.mxu0 0.0
    %388 = vmatpush1.xpose.msra.mxu0 0.0
    %389 = vmatprep.subr.mxu0 0.0
    %390 = vmatpush1.xpose.msra.mxu0 0.0
    %391 = vmatprep.subr.mxu0 0.0
    %392 = vmatpush1.xpose.msra.mxu0 0.0
    %393 = vmatprep.subr.mxu0 0.0
    %394 = vmatpush1.xpose.msra.mxu0 0.0
    %395 = vmatprep.subr.mxu0 0.0
    %396 = vmatpush1.xpose.msra.mxu0 0.0
    %397 = vmatprep.subr.mxu0 0.0
    %398 = vmatpush1.xpose.msra.mxu0 0.0
    %399 = vmatprep.subr.mxu0 0.0
    %400 = vmatpush1.xpose.msra.mxu0 0.0
    %401 = vmatprep.subr.mxu0 0.0
    %402 = vmatpush1.xpose.msra.mxu0 0.0
    %403 = vmatprep.subr.mxu0 0.0
    %404 = vmatpush1.xpose.msra.mxu0 0.0
    %405 = vmatprep.subr.mxu0 0.0
    %406 = vmatpush1.xpose.msra.mxu0 0.0
    %407 = vmatprep.subr.mxu0 0.0
    %408 = vmatpush1.xpose.msra.mxu0 0.0
    %409 = vmatprep.subr.mxu0 0.0
    %410 = vmatpush1.xpose.msra.mxu0 0.0
    %411 = vmatprep.subr.mxu0 0.0
    %412 = vmatpush1.xpose.msra.mxu0 0.0
    %413 = vmatprep.subr.mxu0 0.0
    %414 = vmatpush1.xpose.msra.mxu0 0.0
    %415 = vmatprep.subr.mxu0 0.0
    %416 = vmatpush1.xpose.msra.mxu0 0.0
    %417 = vmatprep.subr.mxu0 0.0
    %418 = vmatpush1.xpose.msra.mxu0 0.0
    %419 = vmatprep.subr.mxu0 0.0
    %420 = vmatpush1.xpose.msra.mxu0 0.0
    %421 = vmatprep.mubr.f32.mxu0 0.0
    %422 = vmatmul.mubr.f32.gmra.mrb[0].mxu0 %v349
    %v423 = vpop.f32.mrb[0].mxu0
    %v424 = vadd.f32 %v36, %v423
    %v425 = vpop.f32.mrb[0].mxu0
    %426 = vmatprep.mubr.f32.mxu0 0.0
    %427 = vmatmul.mubr.f32.gmra.mrb[0].mxu0 %v351
    %v428 = vpop.f32.mrb[0].mxu0
    %v429 = vadd.f32 %v37, %v428
    %v430 = vpop.f32.mrb[0].mxu0
    %431 = vdwg.mxu0
    %v432 = vsel %vm231, %v424, -inf
    %433 = vmax.xlane.f32.xlu0 %v432
    %v434 = vpop.xlane.xlu0 %433
    %v435 = vsel %vm231, %v429, -inf
    %436 = vmax.xlane.f32.xlu0 %v435
    %v437 = vpop.xlane.xlu0 %436
    %v438 = vsub.f32 %v424, %v434
    %v439 = vsub.f32 %v429, %v437
    %v440 = vmul.f32 %v438, 1.442695
    %v441 = vpow.pop %v440
    %v442 = vmul.f32 %v439, 1.442695
    %v443 = vpow.pop %v442
    %v444 = vsel %vm231, %v441, 0.0
    %445 = vadd.xlane.f32.xlu0 %v444
    %v446 = vpop.xlane.xlu0 %445
    %v447 = vsel %vm231, %v443, 0.0
    %448 = vadd.xlane.f32.xlu0 %v447
    %v449 = vpop.xlane.xlu0 %448
    %v450 = vrcp.pop %v446
    %v451 = vrcp.pop %v449
    %v452 = vmul.f32 %v441, %v450
    %v453 = vmul.f32 %v443, %v451
    %454 = vrot.lane.b32.xlu0 %v129, 56
    %v455 = vpop.permute.xlu0 %454
    %456 = vrot.lane.b32.xlu0 %v134, 56
    %v457 = vpop.permute.xlu0 %456
    %v461 = vsel %vm231, %v452, 0
    %v464 = vsel %vm231, %v453, 0
    %466 = vmatprep.subr.mxu0 0.0
    %467 = vmatpush1.msra.mxu0 %v455
    %468 = vmatprep.subr.mxu0 0.0
    %469 = vmatpush1.msra.mxu0 %v457
    %470 = vmatprep.subr.mxu0 0.0
    %471 = vmatpush1.msra.mxu0 0.0
    %472 = vmatprep.subr.mxu0 0.0
    %473 = vmatpush1.msra.mxu0 0.0
    %474 = vmatprep.subr.mxu0 0.0
    %475 = vmatpush1.msra.mxu0 0.0
    %476 = vmatprep.subr.mxu0 0.0
    %477 = vmatpush1.msra.mxu0 0.0
    %478 = vmatprep.subr.mxu0 0.0
    %479 = vmatpush1.msra.mxu0 0.0
    %480 = vmatprep.subr.mxu0 0.0
    %481 = vmatpush1.msra.mxu0 0.0
    %482 = vmatprep.subr.mxu0 0.0
    %483 = vmatpush1.msra.mxu0 0.0
    %484 = vmatprep.subr.mxu0 0.0
    %485 = vmatpush1.msra.mxu0 0.0
    %486 = vmatprep.subr.mxu0 0.0
    %487 = vmatpush1.msra.mxu0 0.0
    %488 = vmatprep.subr.mxu0 0.0
    %489 = vmatpush1.msra.mxu0 0.0
    %490 = vmatprep.subr.mxu0 0.0
    %491 = vmatpush1.msra.mxu0 0.0
    %492 = vmatprep.subr.mxu0 0.0
    %493 = vmatpush1.msra.mxu0 0.0
    %494 = vmatprep.subr.mxu0 0.0
    %495 = vmatpush1.msra.mxu0 0.0
    %496 = vmatprep.subr.mxu0 0.0
    %497 = vmatpush1.msra.mxu0 0.0
    %498 = vmatprep.subr.mxu0 0.0
    %499 = vmatpush1.msra.mxu0 0.0
    %500 = vmatprep.subr.mxu0 0.0
    %501 = vmatpush1.msra.mxu0 0.0
    %502 = vmatprep.subr.mxu0 0.0
    %503 = vmatpush1.msra.mxu0 0.0
    %504 = vmatprep.subr.mxu0 0.0
    %505 = vmatpush1.msra.mxu0 0.0
    %506 = vmatprep.subr.mxu0 0.0
    %507 = vmatpush1.msra.mxu0 0.0
    %508 = vmatprep.subr.mxu0 0.0
    %509 = vmatpush1.msra.mxu0 0.0
    %510 = vmatprep.subr.mxu0 0.0
    %511 = vmatpush1.msra.mxu0 0.0
    %512 = vmatprep.subr.mxu0 0.0
    %513 = vmatpush1.msra.mxu0 0.0
    %514 = vmatprep.subr.mxu0 0.0
    %515 = vmatpush1.msra.mxu0 0.0
    %516 = vmatprep.subr.mxu0 0.0
    %517 = vmatpush1.msra.mxu0 0.0
    %518 = vmatprep.subr.mxu0 0.0
    %519 = vmatpush1.msra.mxu0 0.0
    %520 = vmatprep.subr.mxu0 0.0
    %521 = vmatpush1.msra.mxu0 0.0
    %522 = vmatprep.subr.mxu0 0.0
    %523 = vmatpush1.msra.mxu0 0.0
    %524 = vmatprep.subr.mxu0 0.0
    %525 = vmatpush1.msra.mxu0 0.0
    %526 = vmatprep.subr.mxu0 0.0
    %527 = vmatpush1.msra.mxu0 0.0
    %528 = vmatprep.subr.mxu0 0.0
    %529 = vmatpush1.msra.mxu0 0.0
    %530 = vmatprep.mubr.f32.mxu0 0.0
    %531 = vmatmul.mubr.f32.gmra.mrb[0].mxu0 %v461
    %v532 = vpop.f32.mrb[0].mxu0
    %v533 = vadd.f32 0.0, %v532
    %v534 = vpop.f32.mrb[0].mxu0
    %535 = vmatprep.mubr.f32.mxu0 0.0
    %536 = vmatmul.mubr.f32.gmra.mrb[0].mxu0 %v464
    %v537 = vpop.f32.mrb[0].mxu0
    %v538 = vadd.f32 0.0, %v537
    %v539 = vpop.f32.mrb[0].mxu0
    %540 = vdwg.mxu0
    %v542 = vsel %vm147, %v533, 0
    %v545 = vsel %vm147, %v538, 0
    %547 = vmatprep.subr.mxu0 0.0
    %548 = vmatpush1.msra.mxu0 %v138
    %549 = vmatprep.subr.mxu0 0.0
    %550 = vmatpush1.msra.mxu0 0.0
    %551 = vmatprep.subr.mxu0 0.0
    %552 = vmatpush1.msra.mxu0 0.0
    %553 = vmatprep.subr.mxu0 0.0
    %554 = vmatpush1.msra.mxu0 0.0
    %555 = vmatprep.subr.mxu0 0.0
    %556 = vmatpush1.msra.mxu0 0.0
    %557 = vmatprep.subr.mxu0 0.0
    %558 = vmatpush1.msra.mxu0 0.0
    %559 = vmatprep.subr.mxu0 0.0
    %560 = vmatpush1.msra.mxu0 0.0
    %561 = vmatprep.subr.mxu0 0.0
    %562 = vmatpush1.msra.mxu0 0.0
    %563 = vmatprep.subr.mxu0 0.0
    %564 = vmatpush1.msra.mxu0 0.0
    %565 = vmatprep.subr.mxu0 0.0
    %566 = vmatpush1.msra.mxu0 0.0
    %567 = vmatprep.subr.mxu0 0.0
    %568 = vmatpush1.msra.mxu0 0.0
    %569 = vmatprep.subr.mxu0 0.0
    %570 = vmatpush1.msra.mxu0 0.0
    %571 = vmatprep.subr.mxu0 0.0
    %572 = vmatpush1.msra.mxu0 0.0
    %573 = vmatprep.subr.mxu0 0.0
    %574 = vmatpush1.msra.mxu0 0.0
    %575 = vmatprep.subr.mxu0 0.0
    %576 = vmatpush1.msra.mxu0 0.0
    %577 = vmatprep.subr.mxu0 0.0
    %578 = vmatpush1.msra.mxu0 0.0
    %579 = vmatprep.subr.mxu0 0.0
    %580 = vmatpush1.msra.mxu0 0.0
    %581 = vmatprep.subr.mxu0 0.0
    %582 = vmatpush1.msra.mxu0 0.0
    %583 = vmatprep.subr.mxu0 0.0
    %584 = vmatpush1.msra.mxu0 0.0
    %585 = vmatprep.subr.mxu0 0.0
    %586 = vmatpush1.msra.mxu0 0.0
    %587 = vmatprep.subr.mxu0 0.0
    %588 = vmatpush1.msra.mxu0 0.0
    %589 = vmatprep.subr.mxu0 0.0
    %590 = vmatpush1.msra.mxu0 0.0
    %591 = vmatprep.subr.mxu0 0.0
    %592 = vmatpush1.msra.mxu0 0.0
    %593 = vmatprep.subr.mxu0 0.0
    %594 = vmatpush1.msra.mxu0 0.0
    %595 = vmatprep.subr.mxu0 0.0
    %596 = vmatpush1.msra.mxu0 0.0
    %597 = vmatprep.subr.mxu0 0.0
    %598 = vmatpush1.msra.mxu0 0.0
    %599 = vmatprep.subr.mxu0 0.0
    %600 = vmatpush1.msra.mxu0 0.0
    %601 = vmatprep.subr.mxu0 0.0
    %602 = vmatpush1.msra.mxu0 0.0
    %603 = vmatprep.subr.mxu0 0.0
    %604 = vmatpush1.msra.mxu0 0.0
    %605 = vmatprep.subr.mxu0 0.0
    %606 = vmatpush1.msra.mxu0 0.0
    %607 = vmatprep.subr.mxu0 0.0
    %608 = vmatpush1.msra.mxu0 0.0
    %609 = vmatprep.subr.mxu0 0.0
    %610 = vmatpush1.msra.mxu0 0.0
    %611 = vmatprep.mubr.f32.mxu0 0.0
    %612 = vmatmul.mubr.f32.gmra.mrb[0].mxu0 %v542
    %v613 = vpop.f32.mrb[0].mxu0
    %v614 = vadd.f32 0.0, %v613
    %v615 = vpop.f32.mrb[0].mxu0
    %616 = vmatprep.mubr.f32.mxu0 0.0
    %617 = vmatmul.mubr.f32.gmra.mrb[0].mxu0 %v545
    %v618 = vpop.f32.mrb[0].mxu0
    %v619 = vadd.f32 0.0, %v618
    %v620 = vpop.f32.mrb[0].mxu0
    %621 = vdwg.mxu0
    %v623 = vsel %vm147, %v333, 0
    %v626 = vsel %vm147, %v338, 0
    %628 = vmatprep.subr.mxu0 0.0
    %629 = vmatpush1.msra.mxu0 %v137
    %630 = vmatprep.subr.mxu0 0.0
    %631 = vmatpush1.msra.mxu0 0.0
    %632 = vmatprep.subr.mxu0 0.0
    %633 = vmatpush1.msra.mxu0 0.0
    %634 = vmatprep.subr.mxu0 0.0
    %635 = vmatpush1.msra.mxu0 0.0
    %636 = vmatprep.subr.mxu0 0.0
    %637 = vmatpush1.msra.mxu0 0.0
    %638 = vmatprep.subr.mxu0 0.0
    %639 = vmatpush1.msra.mxu0 0.0
    %640 = vmatprep.subr.mxu0 0.0
    %641 = vmatpush1.msra.mxu0 0.0
    %642 = vmatprep.subr.mxu0 0.0
    %643 = vmatpush1.msra.mxu0 0.0
    %644 = vmatprep.subr.mxu0 0.0
    %645 = vmatpush1.msra.mxu0 0.0
    %646 = vmatprep.subr.mxu0 0.0
    %647 = vmatpush1.msra.mxu0 0.0
    %648 = vmatprep.subr.mxu0 0.0
    %649 = vmatpush1.msra.mxu0 0.0
    %650 = vmatprep.subr.mxu0 0.0
    %651 = vmatpush1.msra.mxu0 0.0
    %652 = vmatprep.subr.mxu0 0.0
    %653 = vmatpush1.msra.mxu0 0.0
    %654 = vmatprep.subr.mxu0 0.0
    %655 = vmatpush1.msra.mxu0 0.0
    %656 = vmatprep.subr.mxu0 0.0
    %657 = vmatpush1.msra.mxu0 0.0
    %658 = vmatprep.subr.mxu0 0.0
    %659 = vmatpush1.msra.mxu0 0.0
    %660 = vmatprep.subr.mxu0 0.0
    %661 = vmatpush1.msra.mxu0 0.0
    %662 = vmatprep.subr.mxu0 0.0
    %663 = vmatpush1.msra.mxu0 0.0
    %664 = vmatprep.subr.mxu0 0.0
    %665 = vmatpush1.msra.mxu0 0.0
    %666 = vmatprep.subr.mxu0 0.0
    %667 = vmatpush1.msra.mxu0 0.0
    %668 = vmatprep.subr.mxu0 0.0
    %669 = vmatpush1.msra.mxu0 0.0
    %670 = vmatprep.subr.mxu0 0.0
    %671 = vmatpush1.msra.mxu0 0.0
    %672 = vmatprep.subr.mxu0 0.0
    %673 = vmatpush1.msra.mxu0 0.0
    %674 = vmatprep.subr.mxu0 0.0
    %675 = vmatpush1.msra.mxu0 0.0
    %676 = vmatprep.subr.mxu0 0.0
    %677 = vmatpush1.msra.mxu0 0.0
    %678 = vmatprep.subr.mxu0 0.0
    %679 = vmatpush1.msra.mxu0 0.0
    %680 = vmatprep.subr.mxu0 0.0
    %681 = vmatpush1.msra.mxu0 0.0
    %682 = vmatprep.subr.mxu0 0.0
    %683 = vmatpush1.msra.mxu0 0.0
    %684 = vmatprep.subr.mxu0 0.0
    %685 = vmatpush1.msra.mxu0 0.0
    %686 = vmatprep.subr.mxu0 0.0
    %687 = vmatpush1.msra.mxu0 0.0
    %688 = vmatprep.subr.mxu0 0.0
    %689 = vmatpush1.msra.mxu0 0.0
    %690 = vmatprep.subr.mxu0 0.0
    %691 = vmatpush1.msra.mxu0 0.0
    %692 = vmatprep.mubr.f32.mxu0 0.0
    %693 = vmatmul.mubr.f32.gmra.mrb[0].mxu0 %v623
    %v694 = vpop.f32.mrb[0].mxu0
    %v695 = vadd.f32 %v614, %v694
    %v696 = vpop.f32.mrb[0].mxu0
    %697 = vmatprep.mubr.f32.mxu0 0.0
    %698 = vmatmul.mubr.f32.gmra.mrb[0].mxu0 %v626
    %v699 = vpop.f32.mrb[0].mxu0
    %v700 = vadd.f32 %v619, %v699
    %v701 = vpop.f32.mrb[0].mxu0
    %702 = vdwg.mxu0
    %703 = vrot.lane.b32.xlu0 %v129, 112
    %v704 = vpop.permute.xlu0 %703
    %705 = vrot.lane.b32.xlu0 %v134, 112
    %v706 = vpop.permute.xlu0 %705
    %707 = vrot.lane.b32.xlu0 %v129, 80
    %v708 = vpop.permute.xlu0 %707
    %709 = vrot.lane.b32.xlu0 %v134, 80
    %v710 = vpop.permute.xlu0 %709
    %v711 = vsel %vm147, %v704, 0
    %v713 = vsel %vm147, %v706, 0
    %v715 = vsel %vm147, %v708, 0
    %v717 = vsel %vm147, %v710, 0
    %719 = vmatprep.subr.mxu0 0.0
    %720 = vmatpush1.xpose.msra.mxu0 %v715
    %721 = vmatprep.subr.mxu0 0.0
    %722 = vmatpush1.xpose.msra.mxu0 %v717
    %723 = vmatprep.subr.mxu0 0.0
    %724 = vmatpush1.xpose.msra.mxu0 0.0
    %725 = vmatprep.subr.mxu0 0.0
    %726 = vmatpush1.xpose.msra.mxu0 0.0
    %727 = vmatprep.subr.mxu0 0.0
    %728 = vmatpush1.xpose.msra.mxu0 0.0
    %729 = vmatprep.subr.mxu0 0.0
    %730 = vmatpush1.xpose.msra.mxu0 0.0
    %731 = vmatprep.subr.mxu0 0.0
    %732 = vmatpush1.xpose.msra.mxu0 0.0
    %733 = vmatprep.subr.mxu0 0.0
    %734 = vmatpush1.xpose.msra.mxu0 0.0
    %735 = vmatprep.subr.mxu0 0.0
    %736 = vmatpush1.xpose.msra.mxu0 0.0
    %737 = vmatprep.subr.mxu0 0.0
    %738 = vmatpush1.xpose.msra.mxu0 0.0
    %739 = vmatprep.subr.mxu0 0.0
    %740 = vmatpush1.xpose.msra.mxu0 0.0
    %741 = vmatprep.subr.mxu0 0.0
    %742 = vmatpush1.xpose.msra.mxu0 0.0
    %743 = vmatprep.subr.mxu0 0.0
    %744 = vmatpush1.xpose.msra.mxu0 0.0
    %745 = vmatprep.subr.mxu0 0.0
    %746 = vmatpush1.xpose.msra.mxu0 0.0
    %747 = vmatprep.subr.mxu0 0.0
    %748 = vmatpush1.xpose.msra.mxu0 0.0
    %749 = vmatprep.subr.mxu0 0.0
    %750 = vmatpush1.xpose.msra.mxu0 0.0
    %751 = vmatprep.subr.mxu0 0.0
    %752 = vmatpush1.xpose.msra.mxu0 0.0
    %753 = vmatprep.subr.mxu0 0.0
    %754 = vmatpush1.xpose.msra.mxu0 0.0
    %755 = vmatprep.subr.mxu0 0.0
    %756 = vmatpush1.xpose.msra.mxu0 0.0
    %757 = vmatprep.subr.mxu0 0.0
    %758 = vmatpush1.xpose.msra.mxu0 0.0
    %759 = vmatprep.subr.mxu0 0.0
    %760 = vmatpush1.xpose.msra.mxu0 0.0
    %761 = vmatprep.subr.mxu0 0.0
    %762 = vmatpush1.xpose.msra.mxu0 0.0
    %763 = vmatprep.subr.mxu0 0.0
    %764 = vmatpush1.xpose.msra.mxu0 0.0
    %765 = vmatprep.subr.mxu0 0.0
    %766 = vmatpush1.xpose.msra.mxu0 0.0
    %767 = vmatprep.subr.mxu0 0.0
    %768 = vmatpush1.xpose.msra.mxu0 0.0
    %769 = vmatprep.subr.mxu0 0.0
    %770 = vmatpush1.xpose.msra.mxu0 0.0
    %771 = vmatprep.subr.mxu0 0.0
    %772 = vmatpush1.xpose.msra.mxu0 0.0
    %773 = vmatprep.subr.mxu0 0.0
    %774 = vmatpush1.xpose.msra.mxu0 0.0
    %775 = vmatprep.subr.mxu0 0.0
    %776 = vmatpush1.xpose.msra.mxu0 0.0
    %777 = vmatprep.subr.mxu0 0.0
    %778 = vmatpush1.xpose.msra.mxu0 0.0
    %779 = vmatprep.subr.mxu0 0.0
    %780 = vmatpush1.xpose.msra.mxu0 0.0
    %781 = vmatprep.subr.mxu0 0.0
    %782 = vmatpush1.xpose.msra.mxu0 0.0
    %783 = vmatprep.mubr.f32.mxu0 0.0
    %784 = vmatmul.mubr.f32.gmra.mrb[0].mxu0 %v711
    %v785 = vpop.f32.mrb[0].mxu0
    %v786 = vadd.f32 %v36, %v785
    %v787 = vpop.f32.mrb[0].mxu0
    %788 = vmatprep.mubr.f32.mxu0 0.0
    %789 = vmatmul.mubr.f32.gmra.mrb[0].mxu0 %v713
    %v790 = vpop.f32.mrb[0].mxu0
    %v791 = vadd.f32 %v37, %v790
    %v792 = vpop.f32.mrb[0].mxu0
    %793 = vdwg.mxu0
    %v794 = vsel %vm231, %v786, -inf
    %795 = vmax.xlane.f32.xlu0 %v794
    %v796 = vpop.xlane.xlu0 %795
    %v797 = vsel %vm231, %v791, -inf
    %798 = vmax.xlane.f32.xlu0 %v797
    %v799 = vpop.xlane.xlu0 %798
    %v800 = vsub.f32 %v786, %v796
    %v801 = vsub.f32 %v791, %v799
    %v802 = vmul.f32 %v800, 1.442695
    %v803 = vpow.pop %v802
    %v804 = vmul.f32 %v801, 1.442695
    %v805 = vpow.pop %v804
    %v806 = vsel %vm231, %v803, 0.0
    %807 = vadd.xlane.f32.xlu0 %v806
    %v808 = vpop.xlane.xlu0 %807
    %v809 = vsel %vm231, %v805, 0.0
    %810 = vadd.xlane.f32.xlu0 %v809
    %v811 = vpop.xlane.xlu0 %810
    %v812 = vrcp.pop %v808
    %v813 = vrcp.pop %v811
    %v814 = vmul.f32 %v803, %v812
    %v815 = vmul.f32 %v805, %v813
    %816 = vrot.lane.b32.xlu0 %v129, 48
    %v817 = vpop.permute.xlu0 %816
    %818 = vrot.lane.b32.xlu0 %v134, 48
    %v819 = vpop.permute.xlu0 %818
    %v823 = vsel %vm231, %v814, 0
    %v826 = vsel %vm231, %v815, 0
    %828 = vmatprep.subr.mxu0 0.0
    %829 = vmatpush1.msra.mxu0 %v817
    %830 = vmatprep.subr.mxu0 0.0
    %831 = vmatpush1.msra.mxu0 %v819
    %832 = vmatprep.subr.mxu0 0.0
    %833 = vmatpush1.msra.mxu0 0.0
    %834 = vmatprep.subr.mxu0 0.0
    %835 = vmatpush1.msra.mxu0 0.0
    %836 = vmatprep.subr.mxu0 0.0
    %837 = vmatpush1.msra.mxu0 0.0
    %838 = vmatprep.subr.mxu0 0.0
    %839 = vmatpush1.msra.mxu0 0.0
    %840 = vmatprep.subr.mxu0 0.0
    %841 = vmatpush1.msra.mxu0 0.0
    %842 = vmatprep.subr.mxu0 0.0
    %843 = vmatpush1.msra.mxu0 0.0
    %844 = vmatprep.subr.mxu0 0.0
    %845 = vmatpush1.msra.mxu0 0.0
    %846 = vmatprep.subr.mxu0 0.0
    %847 = vmatpush1.msra.mxu0 0.0
    %848 = vmatprep.subr.mxu0 0.0
    %849 = vmatpush1.msra.mxu0 0.0
    %850 = vmatprep.subr.mxu0 0.0
    %851 = vmatpush1.msra.mxu0 0.0
    %852 = vmatprep.subr.mxu0 0.0
    %853 = vmatpush1.msra.mxu0 0.0
    %854 = vmatprep.subr.mxu0 0.0
    %855 = vmatpush1.msra.mxu0 0.0
    %856 = vmatprep.subr.mxu0 0.0
    %857 = vmatpush1.msra.mxu0 0.0
    %858 = vmatprep.subr.mxu0 0.0
    %859 = vmatpush1.msra.mxu0 0.0
    %860 = vmatprep.subr.mxu0 0.0
    %861 = vmatpush1.msra.mxu0 0.0
    %862 = vmatprep.subr.mxu0 0.0
    %863 = vmatpush1.msra.mxu0 0.0
    %864 = vmatprep.subr.mxu0 0.0
    %865 = vmatpush1.msra.mxu0 0.0
    %866 = vmatprep.subr.mxu0 0.0
    %867 = vmatpush1.msra.mxu0 0.0
    %868 = vmatprep.subr.mxu0 0.0
    %869 = vmatpush1.msra.mxu0 0.0
    %870 = vmatprep.subr.mxu0 0.0
    %871 = vmatpush1.msra.mxu0 0.0
    %872 = vmatprep.subr.mxu0 0.0
    %873 = vmatpush1.msra.mxu0 0.0
    %874 = vmatprep.subr.mxu0 0.0
    %875 = vmatpush1.msra.mxu0 0.0
    %876 = vmatprep.subr.mxu0 0.0
    %877 = vmatpush1.msra.mxu0 0.0
    %878 = vmatprep.subr.mxu0 0.0
    %879 = vmatpush1.msra.mxu0 0.0
    %880 = vmatprep.subr.mxu0 0.0
    %881 = vmatpush1.msra.mxu0 0.0
    %882 = vmatprep.subr.mxu0 0.0
    %883 = vmatpush1.msra.mxu0 0.0
    %884 = vmatprep.subr.mxu0 0.0
    %885 = vmatpush1.msra.mxu0 0.0
    %886 = vmatprep.subr.mxu0 0.0
    %887 = vmatpush1.msra.mxu0 0.0
    %888 = vmatprep.subr.mxu0 0.0
    %889 = vmatpush1.msra.mxu0 0.0
    %890 = vmatprep.subr.mxu0 0.0
    %891 = vmatpush1.msra.mxu0 0.0
    %892 = vmatprep.mubr.f32.mxu0 0.0
    %893 = vmatmul.mubr.f32.gmra.mrb[0].mxu0 %v823
    %v894 = vpop.f32.mrb[0].mxu0
    %v895 = vadd.f32 0.0, %v894
    %v896 = vpop.f32.mrb[0].mxu0
    %897 = vmatprep.mubr.f32.mxu0 0.0
    %898 = vmatmul.mubr.f32.gmra.mrb[0].mxu0 %v826
    %v899 = vpop.f32.mrb[0].mxu0
    %v900 = vadd.f32 0.0, %v899
    %v901 = vpop.f32.mrb[0].mxu0
    %902 = vdwg.mxu0
    %v904 = vsel %vm147, %v895, 0
    %v907 = vsel %vm147, %v900, 0
    %909 = vmatprep.subr.mxu0 0.0
    %910 = vmatpush1.msra.mxu0 %v139
    %911 = vmatprep.subr.mxu0 0.0
    %912 = vmatpush1.msra.mxu0 0.0
    %913 = vmatprep.subr.mxu0 0.0
    %914 = vmatpush1.msra.mxu0 0.0
    %915 = vmatprep.subr.mxu0 0.0
    %916 = vmatpush1.msra.mxu0 0.0
    %917 = vmatprep.subr.mxu0 0.0
    %918 = vmatpush1.msra.mxu0 0.0
    %919 = vmatprep.subr.mxu0 0.0
    %920 = vmatpush1.msra.mxu0 0.0
    %921 = vmatprep.subr.mxu0 0.0
    %922 = vmatpush1.msra.mxu0 0.0
    %923 = vmatprep.subr.mxu0 0.0
    %924 = vmatpush1.msra.mxu0 0.0
    %925 = vmatprep.subr.mxu0 0.0
    %926 = vmatpush1.msra.mxu0 0.0
    %927 = vmatprep.subr.mxu0 0.0
    %928 = vmatpush1.msra.mxu0 0.0
    %929 = vmatprep.subr.mxu0 0.0
    %930 = vmatpush1.msra.mxu0 0.0
    %931 = vmatprep.subr.mxu0 0.0
    %932 = vmatpush1.msra.mxu0 0.0
    %933 = vmatprep.subr.mxu0 0.0
    %934 = vmatpush1.msra.mxu0 0.0
    %935 = vmatprep.subr.mxu0 0.0
    %936 = vmatpush1.msra.mxu0 0.0
    %937 = vmatprep.subr.mxu0 0.0
    %938 = vmatpush1.msra.mxu0 0.0
    %939 = vmatprep.subr.mxu0 0.0
    %940 = vmatpush1.msra.mxu0 0.0
    %941 = vmatprep.subr.mxu0 0.0
    %942 = vmatpush1.msra.mxu0 0.0
    %943 = vmatprep.subr.mxu0 0.0
    %944 = vmatpush1.msra.mxu0 0.0
    %945 = vmatprep.subr.mxu0 0.0
    %946 = vmatpush1.msra.mxu0 0.0
    %947 = vmatprep.subr.mxu0 0.0
    %948 = vmatpush1.msra.mxu0 0.0
    %949 = vmatprep.subr.mxu0 0.0
    %950 = vmatpush1.msra.mxu0 0.0
    %951 = vmatprep.subr.mxu0 0.0
    %952 = vmatpush1.msra.mxu0 0.0
    %953 = vmatprep.subr.mxu0 0.0
    %954 = vmatpush1.msra.mxu0 0.0
    %955 = vmatprep.subr.mxu0 0.0
    %956 = vmatpush1.msra.mxu0 0.0
    %957 = vmatprep.subr.mxu0 0.0
    %958 = vmatpush1.msra.mxu0 0.0
    %959 = vmatprep.subr.mxu0 0.0
    %960 = vmatpush1.msra.mxu0 0.0
    %961 = vmatprep.subr.mxu0 0.0
    %962 = vmatpush1.msra.mxu0 0.0
    %963 = vmatprep.subr.mxu0 0.0
    %964 = vmatpush1.msra.mxu0 0.0
    %965 = vmatprep.subr.mxu0 0.0
    %966 = vmatpush1.msra.mxu0 0.0
    %967 = vmatprep.subr.mxu0 0.0
    %968 = vmatpush1.msra.mxu0 0.0
    %969 = vmatprep.subr.mxu0 0.0
    %970 = vmatpush1.msra.mxu0 0.0
    %971 = vmatprep.subr.mxu0 0.0
    %972 = vmatpush1.msra.mxu0 0.0
    %973 = vmatprep.mubr.f32.mxu0 0.0
    %974 = vmatmul.mubr.f32.gmra.mrb[0].mxu0 %v904
    %v975 = vpop.f32.mrb[0].mxu0
    %v976 = vadd.f32 0.0, %v975
    %v977 = vpop.f32.mrb[0].mxu0
    %978 = vmatprep.mubr.f32.mxu0 0.0
    %979 = vmatmul.mubr.f32.gmra.mrb[0].mxu0 %v907
    %v980 = vpop.f32.mrb[0].mxu0
    %v981 = vadd.f32 0.0, %v980
    %v982 = vpop.f32.mrb[0].mxu0
    %983 = vdwg.mxu0
    %v984 = vadd.f32 %v695, %v976
    %v985 = vadd.f32 %v700, %v981
    %986 = vrot.lane.b32.xlu0 %v129, 104
    %v987 = vpop.permute.xlu0 %986
    %988 = vrot.lane.b32.xlu0 %v134, 104
    %v989 = vpop.permute.xlu0 %988
    %990 = vrot.lane.b32.xlu0 %v129, 72
    %v991 = vpop.permute.xlu0 %990
    %992 = vrot.lane.b32.xlu0 %v134, 72
    %v993 = vpop.permute.xlu0 %992
    %v994 = vsel %vm147, %v987, 0
    %v996 = vsel %vm147, %v989, 0
    %v998 = vsel %vm147, %v991, 0
    %v1000 = vsel %vm147, %v993, 0
    %1002 = vmatprep.subr.mxu0 0.0
    %1003 = vmatpush1.xpose.msra.mxu0 %v998
    %1004 = vmatprep.subr.mxu0 0.0
    %1005 = vmatpush1.xpose.msra.mxu0 %v1000
    %1006 = vmatprep.subr.mxu0 0.0
    %1007 = vmatpush1.xpose.msra.mxu0 0.0
    %1008 = vmatprep.subr.mxu0 0.0
    %1009 = vmatpush1.xpose.msra.mxu0 0.0
    %1010 = vmatprep.subr.mxu0 0.0
    %1011 = vmatpush1.xpose.msra.mxu0 0.0
    %1012 = vmatprep.subr.mxu0 0.0
    %1013 = vmatpush1.xpose.msra.mxu0 0.0
    %1014 = vmatprep.subr.mxu0 0.0
    %1015 = vmatpush1.xpose.msra.mxu0 0.0
    %1016 = vmatprep.subr.mxu0 0.0
    %1017 = vmatpush1.xpose.msra.mxu0 0.0
    %1018 = vmatprep.subr.mxu0 0.0
    %1019 = vmatpush1.xpose.msra.mxu0 0.0
    %1020 = vmatprep.subr.mxu0 0.0
    %1021 = vmatpush1.xpose.msra.mxu0 0.0
    %1022 = vmatprep.subr.mxu0 0.0
    %1023 = vmatpush1.xpose.msra.mxu0 0.0
    %1024 = vmatprep.subr.mxu0 0.0
    %1025 = vmatpush1.xpose.msra.mxu0 0.0
    %1026 = vmatprep.subr.mxu0 0.0
    %1027 = vmatpush1.xpose.msra.mxu0 0.0
    %1028 = vmatprep.subr.mxu0 0.0
    %1029 = vmatpush1.xpose.msra.mxu0 0.0
    %1030 = vmatprep.subr.mxu0 0.0
    %1031 = vmatpush1.xpose.msra.mxu0 0.0
    %1032 = vmatprep.subr.mxu0 0.0
    %1033 = vmatpush1.xpose.msra.mxu0 0.0
    %1034 = vmatprep.subr.mxu0 0.0
    %1035 = vmatpush1.xpose.msra.mxu0 0.0
    %1036 = vmatprep.subr.mxu0 0.0
    %1037 = vmatpush1.xpose.msra.mxu0 0.0
    %1038 = vmatprep.subr.mxu0 0.0
    %1039 = vmatpush1.xpose.msra.mxu0 0.0
    %1040 = vmatprep.subr.mxu0 0.0
    %1041 = vmatpush1.xpose.msra.mxu0 0.0
    %1042 = vmatprep.subr.mxu0 0.0
    %1043 = vmatpush1.xpose.msra.mxu0 0.0
    %1044 = vmatprep.subr.mxu0 0.0
    %1045 = vmatpush1.xpose.msra.mxu0 0.0
    %1046 = vmatprep.subr.mxu0 0.0
    %1047 = vmatpush1.xpose.msra.mxu0 0.0
    %1048 = vmatprep.subr.mxu0 0.0
    %1049 = vmatpush1.xpose.msra.mxu0 0.0
    %1050 = vmatprep.subr.mxu0 0.0
    %1051 = vmatpush1.xpose.msra.mxu0 0.0
    %1052 = vmatprep.subr.mxu0 0.0
    %1053 = vmatpush1.xpose.msra.mxu0 0.0
    %1054 = vmatprep.subr.mxu0 0.0
    %1055 = vmatpush1.xpose.msra.mxu0 0.0
    %1056 = vmatprep.subr.mxu0 0.0
    %1057 = vmatpush1.xpose.msra.mxu0 0.0
    %1058 = vmatprep.subr.mxu0 0.0
    %1059 = vmatpush1.xpose.msra.mxu0 0.0
    %1060 = vmatprep.subr.mxu0 0.0
    %1061 = vmatpush1.xpose.msra.mxu0 0.0
    %1062 = vmatprep.subr.mxu0 0.0
    %1063 = vmatpush1.xpose.msra.mxu0 0.0
    %1064 = vmatprep.subr.mxu0 0.0
    %1065 = vmatpush1.xpose.msra.mxu0 0.0
    %1066 = vmatprep.mubr.f32.mxu0 0.0
    %1067 = vmatmul.mubr.f32.gmra.mrb[0].mxu0 %v994
    %v1068 = vpop.f32.mrb[0].mxu0
    %v1069 = vadd.f32 %v36, %v1068
    %v1070 = vpop.f32.mrb[0].mxu0
    %1071 = vmatprep.mubr.f32.mxu0 0.0
    %1072 = vmatmul.mubr.f32.gmra.mrb[0].mxu0 %v996
    %v1073 = vpop.f32.mrb[0].mxu0
    %v1074 = vadd.f32 %v37, %v1073
    %v1075 = vpop.f32.mrb[0].mxu0
    %1076 = vdwg.mxu0
    %v1077 = vsel %vm231, %v1069, -inf
    %1078 = vmax.xlane.f32.xlu0 %v1077
    %v1079 = vpop.xlane.xlu0 %1078
    %v1080 = vsel %vm231, %v1074, -inf
    %1081 = vmax.xlane.f32.xlu0 %v1080
    %v1082 = vpop.xlane.xlu0 %1081
    %v1083 = vsub.f32 %v1069, %v1079
    %v1084 = vsub.f32 %v1074, %v1082
    %v1085 = vmul.f32 %v1083, 1.442695
    %v1086 = vpow.pop %v1085
    %v1087 = vmul.f32 %v1084, 1.442695
    %v1088 = vpow.pop %v1087
    %v1089 = vsel %vm231, %v1086, 0.0
    %1090 = vadd.xlane.f32.xlu0 %v1089
    %v1091 = vpop.xlane.xlu0 %1090
    %v1092 = vsel %vm231, %v1088, 0.0
    %1093 = vadd.xlane.f32.xlu0 %v1092
    %v1094 = vpop.xlane.xlu0 %1093
    %v1095 = vrcp.pop %v1091
    %v1096 = vrcp.pop %v1094
    %v1097 = vmul.f32 %v1086, %v1095
    %v1098 = vmul.f32 %v1088, %v1096
    %1099 = vrot.lane.b32.xlu0 %v129, 40
    %v1100 = vpop.permute.xlu0 %1099
    %1101 = vrot.lane.b32.xlu0 %v134, 40
    %v1102 = vpop.permute.xlu0 %1101
    %v1106 = vsel %vm231, %v1097, 0
    %v1109 = vsel %vm231, %v1098, 0
    %1111 = vmatprep.subr.mxu0 0.0
    %1112 = vmatpush1.msra.mxu0 %v1100
    %1113 = vmatprep.subr.mxu0 0.0
    %1114 = vmatpush1.msra.mxu0 %v1102
    %1115 = vmatprep.subr.mxu0 0.0
    %1116 = vmatpush1.msra.mxu0 0.0
    %1117 = vmatprep.subr.mxu0 0.0
    %1118 = vmatpush1.msra.mxu0 0.0
    %1119 = vmatprep.subr.mxu0 0.0
    %1120 = vmatpush1.msra.mxu0 0.0
    %1121 = vmatprep.subr.mxu0 0.0
    %1122 = vmatpush1.msra.mxu0 0.0
    %1123 = vmatprep.subr.mxu0 0.0
    %1124 = vmatpush1.msra.mxu0 0.0
    %1125 = vmatprep.subr.mxu0 0.0
    %1126 = vmatpush1.msra.mxu0 0.0
    %1127 = vmatprep.subr.mxu0 0.0
    %1128 = vmatpush1.msra.mxu0 0.0
    %1129 = vmatprep.subr.mxu0 0.0
    %1130 = vmatpush1.msra.mxu0 0.0
    %1131 = vmatprep.subr.mxu0 0.0
    %1132 = vmatpush1.msra.mxu0 0.0
    %1133 = vmatprep.subr.mxu0 0.0
    %1134 = vmatpush1.msra.mxu0 0.0
    %1135 = vmatprep.subr.mxu0 0.0
    %1136 = vmatpush1.msra.mxu0 0.0
    %1137 = vmatprep.subr.mxu0 0.0
    %1138 = vmatpush1.msra.mxu0 0.0
    %1139 = vmatprep.subr.mxu0 0.0
    %1140 = vmatpush1.msra.mxu0 0.0
    %1141 = vmatprep.subr.mxu0 0.0
    %1142 = vmatpush1.msra.mxu0 0.0
    %1143 = vmatprep.subr.mxu0 0.0
    %1144 = vmatpush1.msra.mxu0 0.0
    %1145 = vmatprep.subr.mxu0 0.0
    %1146 = vmatpush1.msra.mxu0 0.0
    %1147 = vmatprep.subr.mxu0 0.0
    %1148 = vmatpush1.msra.mxu0 0.0
    %1149 = vmatprep.subr.mxu0 0.0
    %1150 = vmatpush1.msra.mxu0 0.0
    %1151 = vmatprep.subr.mxu0 0.0
    %1152 = vmatpush1.msra.mxu0 0.0
    %1153 = vmatprep.subr.mxu0 0.0
    %1154 = vmatpush1.msra.mxu0 0.0
    %1155 = vmatprep.subr.mxu0 0.0
    %1156 = vmatpush1.msra.mxu0 0.0
    %1157 = vmatprep.subr.mxu0 0.0
    %1158 = vmatpush1.msra.mxu0 0.0
    %1159 = vmatprep.subr.mxu0 0.0
    %1160 = vmatpush1.msra.mxu0 0.0
    %1161 = vmatprep.subr.mxu0 0.0
    %1162 = vmatpush1.msra.mxu0 0.0
    %1163 = vmatprep.subr.mxu0 0.0
    %1164 = vmatpush1.msra.mxu0 0.0
    %1165 = vmatprep.subr.mxu0 0.0
    %1166 = vmatpush1.msra.mxu0 0.0
    %1167 = vmatprep.subr.mxu0 0.0
    %1168 = vmatpush1.msra.mxu0 0.0
    %1169 = vmatprep.subr.mxu0 0.0
    %1170 = vmatpush1.msra.mxu0 0.0
    %1171 = vmatprep.subr.mxu0 0.0
    %1172 = vmatpush1.msra.mxu0 0.0
    %1173 = vmatprep.subr.mxu0 0.0
    %1174 = vmatpush1.msra.mxu0 0.0
    %1175 = vmatprep.mubr.f32.mxu0 0.0
    %1176 = vmatmul.mubr.f32.gmra.mrb[0].mxu0 %v1106
    %v1177 = vpop.f32.mrb[0].mxu0
    %v1178 = vadd.f32 0.0, %v1177
    %v1179 = vpop.f32.mrb[0].mxu0
    %1180 = vmatprep.mubr.f32.mxu0 0.0
    %1181 = vmatmul.mubr.f32.gmra.mrb[0].mxu0 %v1109
    %v1182 = vpop.f32.mrb[0].mxu0
    %v1183 = vadd.f32 0.0, %v1182
    %v1184 = vpop.f32.mrb[0].mxu0
    %1185 = vdwg.mxu0
    %v1187 = vsel %vm147, %v1178, 0
    %v1190 = vsel %vm147, %v1183, 0
    %1192 = vmatprep.subr.mxu0 0.0
    %1193 = vmatpush1.msra.mxu0 %v140
    %1194 = vmatprep.subr.mxu0 0.0
    %1195 = vmatpush1.msra.mxu0 0.0
    %1196 = vmatprep.subr.mxu0 0.0
    %1197 = vmatpush1.msra.mxu0 0.0
    %1198 = vmatprep.subr.mxu0 0.0
    %1199 = vmatpush1.msra.mxu0 0.0
    %1200 = vmatprep.subr.mxu0 0.0
    %1201 = vmatpush1.msra.mxu0 0.0
    %1202 = vmatprep.subr.mxu0 0.0
    %1203 = vmatpush1.msra.mxu0 0.0
    %1204 = vmatprep.subr.mxu0 0.0
    %1205 = vmatpush1.msra.mxu0 0.0
    %1206 = vmatprep.subr.mxu0 0.0
    %1207 = vmatpush1.msra.mxu0 0.0
    %1208 = vmatprep.subr.mxu0 0.0
    %1209 = vmatpush1.msra.mxu0 0.0
    %1210 = vmatprep.subr.mxu0 0.0
    %1211 = vmatpush1.msra.mxu0 0.0
    %1212 = vmatprep.subr.mxu0 0.0
    %1213 = vmatpush1.msra.mxu0 0.0
    %1214 = vmatprep.subr.mxu0 0.0
    %1215 = vmatpush1.msra.mxu0 0.0
    %1216 = vmatprep.subr.mxu0 0.0
    %1217 = vmatpush1.msra.mxu0 0.0
    %1218 = vmatprep.subr.mxu0 0.0
    %1219 = vmatpush1.msra.mxu0 0.0
    %1220 = vmatprep.subr.mxu0 0.0
    %1221 = vmatpush1.msra.mxu0 0.0
    %1222 = vmatprep.subr.mxu0 0.0
    %1223 = vmatpush1.msra.mxu0 0.0
    %1224 = vmatprep.subr.mxu0 0.0
    %1225 = vmatpush1.msra.mxu0 0.0
    %1226 = vmatprep.subr.mxu0 0.0
    %1227 = vmatpush1.msra.mxu0 0.0
    %1228 = vmatprep.subr.mxu0 0.0
    %1229 = vmatpush1.msra.mxu0 0.0
    %1230 = vmatprep.subr.mxu0 0.0
    %1231 = vmatpush1.msra.mxu0 0.0
    %1232 = vmatprep.subr.mxu0 0.0
    %1233 = vmatpush1.msra.mxu0 0.0
    %1234 = vmatprep.subr.mxu0 0.0
    %1235 = vmatpush1.msra.mxu0 0.0
    %1236 = vmatprep.subr.mxu0 0.0
    %1237 = vmatpush1.msra.mxu0 0.0
    %1238 = vmatprep.subr.mxu0 0.0
    %1239 = vmatpush1.msra.mxu0 0.0
    %1240 = vmatprep.subr.mxu0 0.0
    %1241 = vmatpush1.msra.mxu0 0.0
    %1242 = vmatprep.subr.mxu0 0.0
    %1243 = vmatpush1.msra.mxu0 0.0
    %1244 = vmatprep.subr.mxu0 0.0
    %1245 = vmatpush1.msra.mxu0 0.0
    %1246 = vmatprep.subr.mxu0 0.0
    %1247 = vmatpush1.msra.mxu0 0.0
    %1248 = vmatprep.subr.mxu0 0.0
    %1249 = vmatpush1.msra.mxu0 0.0
    %1250 = vmatprep.subr.mxu0 0.0
    %1251 = vmatpush1.msra.mxu0 0.0
    %1252 = vmatprep.subr.mxu0 0.0
    %1253 = vmatpush1.msra.mxu0 0.0
    %1254 = vmatprep.subr.mxu0 0.0
    %1255 = vmatpush1.msra.mxu0 0.0
    %1256 = vmatprep.mubr.f32.mxu0 0.0
    %1257 = vmatmul.mubr.f32.gmra.mrb[0].mxu0 %v1187
    %v1258 = vpop.f32.mrb[0].mxu0
    %v1259 = vadd.f32 0.0, %v1258
    %v1260 = vpop.f32.mrb[0].mxu0
    %1261 = vmatprep.mubr.f32.mxu0 0.0
    %1262 = vmatmul.mubr.f32.gmra.mrb[0].mxu0 %v1190
    %v1263 = vpop.f32.mrb[0].mxu0
    %v1264 = vadd.f32 0.0, %v1263
    %v1265 = vpop.f32.mrb[0].mxu0
    %1266 = vdwg.mxu0
    %v1267 = vadd.f32 %v984, %v1259
    %v1268 = vadd.f32 %v985, %v1264
    %v1269 = vld [vmem:[#allocation2 + $0x48] sm:$0x1]
    %v1270 = vlaneseq
    %v1271 = vshrl.u32 %v1270, 7
    %v1272 = vsub.s32 0, %v1271
    %v1273 = vrot.slane %v1269, %v1272
    %v1274 = vadd.f32 %v1267, %v1273
    %v1275 = vadd.f32 %v1268, %v1273
    %v1276 = vadd.f32 %v31, %v1274
    %v1277 = vadd.f32 %v32, %v1275
    %v1278 = vld [vmem:[#allocation2 + $0x138] sm:$0x1]
    %v1279 = vld [vmem:[#allocation2 + $0x140] sm:$0x1]
    %v1280 = vsel %vm55, %v1276, 0.0
    %1281 = vadd.xlane.f32.xlu0 %v1280
    %v1282 = vpop.xlane.xlu0 %1281
    %v1283 = vsel %vm55, %v1277, 0.0
    %1284 = vadd.xlane.f32.xlu0 %v1283
    %v1285 = vpop.xlane.xlu0 %1284
    %v1286 = vrcp.pop 32.0
    %v1287 = vmul.f32 %v1282, %v1286
    %v1288 = vmul.f32 %v1285, %v1286
    %v1289 = vsub.f32 %v1276, %v1287
    %v1290 = vsub.f32 %v1277, %v1288
    %v1291 = vmul.f32 %v1289, %v1289
    %v1292 = vmul.f32 %v1290, %v1290
    %v1293 = vsel %vm55, %v1291, 0.0
    %1294 = vadd.xlane.f32.xlu0 %v1293
    %v1295 = vpop.xlane.xlu0 %1294
    %v1296 = vsel %vm55, %v1292, 0.0
    %1297 = vadd.xlane.f32.xlu0 %v1296
    %v1298 = vpop.xlane.xlu0 %1297
    %v1299 = vmul.f32 %v1295, %v1286
    %v1300 = vmul.f32 %v1298, %v1286
    %v1301 = vadd.f32 %v1299, 1e-05
    %v1302 = vadd.f32 %v1300, 1e-05
    %v1303 = vrsqrt.pop %v1301
    %v1304 = vrsqrt.pop %v1302
    %v1305 = vmul.f32 %v1289, %v1303
    %v1306 = vmul.f32 %v1290, %v1304
    %v1307 = vlaneseq
    %v1308 = vshrl.u32 %v1307, 7
    %v1309 = vsub.s32 0, %v1308
    %v1310 = vrot.slane %v1278, %v1309
    %v1311 = vmul.f32 %v1305, %v1310
    %v1312 = vmul.f32 %v1306, %v1310
    %v1313 = vlaneseq
    %v1314 = vshrl.u32 %v1313, 7
    %v1315 = vsub.s32 0, %v1314
    %v1316 = vrot.slane %v1279, %v1315
    %v1317 = vadd.f32 %v1311, %v1316
    %v1318 = vadd.f32 %v1312, %v1316
    %v1319 = vld [vmem:[#allocation2 + $0x50] sm:$0xff]
    %v1320 = vld [vmem:[#allocation2 + $0x58] sm:$0xff]
    %v1321 = vld [vmem:[#allocation2 + $0x60] sm:$0xff]
    %v1322 = vld [vmem:[#allocation2 + $0x68] sm:$0xff]
    %v1323 = vld [vmem:[#allocation2 + $0x70] sm:$0x1]
    %v1324 = vlaneseq
    %v1325 = vshrl.u32 %v1324, 7
    %v1326 = vsub.s32 0, %v1325
    %v1327 = vrot.slane %v1323, %v1326
    %v1329 = vsel %vm55, %v1317, 0
    %v1332 = vsel %vm55, %v1318, 0
    %1334 = vmatprep.subr.mxu0 0.0
    %1335 = vmatpush1.msra.mxu0 %v1319
    %1336 = vmatprep.subr.mxu0 0.0
    %1337 = vmatpush1.msra.mxu0 %v1320
    %1338 = vmatprep.subr.mxu0 0.0
    %1339 = vmatpush1.msra.mxu0 %v1321
    %1340 = vmatprep.subr.mxu0 0.0
    %1341 = vmatpush1.msra.mxu0 %v1322
    %1342 = vmatprep.subr.mxu0 0.0
    %1343 = vmatpush1.msra.mxu0 0.0
    %1344 = vmatprep.subr.mxu0 0.0
    %1345 = vmatpush1.msra.mxu0 0.0
    %1346 = vmatprep.subr.mxu0 0.0
    %1347 = vmatpush1.msra.mxu0 0.0
    %1348 = vmatprep.subr.mxu0 0.0
    %1349 = vmatpush1.msra.mxu0 0.0
    %1350 = vmatprep.subr.mxu0 0.0
    %1351 = vmatpush1.msra.mxu0 0.0
    %1352 = vmatprep.subr.mxu0 0.0
    %1353 = vmatpush1.msra.mxu0 0.0
    %1354 = vmatprep.subr.mxu0 0.0
    %1355 = vmatpush1.msra.mxu0 0.0
    %1356 = vmatprep.subr.mxu0 0.0
    %1357 = vmatpush1.msra.mxu0 0.0
    %1358 = vmatprep.subr.mxu0 0.0
    %1359 = vmatpush1.msra.mxu0 0.0
    %1360 = vmatprep.subr.mxu0 0.0
    %1361 = vmatpush1.msra.mxu0 0.0
    %1362 = vmatprep.subr.mxu0 0.0
    %1363 = vmatpush1.msra.mxu0 0.0
    %1364 = vmatprep.subr.mxu0 0.0
    %1365 = vmatpush1.msra.mxu0 0.0
    %1366 = vmatprep.subr.mxu0 0.0
    %1367 = vmatpush1.msra.mxu0 0.0
    %1368 = vmatprep.subr.mxu0 0.0
    %1369 = vmatpush1.msra.mxu0 0.0
    %1370 = vmatprep.subr.mxu0 0.0
    %1371 = vmatpush1.msra.mxu0 0.0
    %1372 = vmatprep.subr.mxu0 0.0
    %1373 = vmatpush1.msra.mxu0 0.0
    %1374 = vmatprep.subr.mxu0 0.0
    %1375 = vmatpush1.msra.mxu0 0.0
    %1376 = vmatprep.subr.mxu0 0.0
    %1377 = vmatpush1.msra.mxu0 0.0
    %1378 = vmatprep.subr.mxu0 0.0
    %1379 = vmatpush1.msra.mxu0 0.0
    %1380 = vmatprep.subr.mxu0 0.0
    %1381 = vmatpush1.msra.mxu0 0.0
    %1382 = vmatprep.subr.mxu0 0.0
    %1383 = vmatpush1.msra.mxu0 0.0
    %1384 = vmatprep.subr.mxu0 0.0
    %1385 = vmatpush1.msra.mxu0 0.0
    %1386 = vmatprep.subr.mxu0 0.0
    %1387 = vmatpush1.msra.mxu0 0.0
    %1388 = vmatprep.subr.mxu0 0.0
    %1389 = vmatpush1.msra.mxu0 0.0
    %1390 = vmatprep.subr.mxu0 0.0
    %1391 = vmatpush1.msra.mxu0 0.0
    %1392 = vmatprep.subr.mxu0 0.0
    %1393 = vmatpush1.msra.mxu0 0.0
    %1394 = vmatprep.subr.mxu0 0.0
    %1395 = vmatpush1.msra.mxu0 0.0
    %1396 = vmatprep.subr.mxu0 0.0
    %1397 = vmatpush1.msra.mxu0 0.0
    %1398 = vmatprep.mubr.f32.mxu0 0.0
    %1399 = vmatmul.mubr.f32.gmra.mrb[0].mxu0 %v1329
    %v1400 = vpop.f32.mrb[0].mxu0
    %v1401 = vadd.f32 %v1327, %v1400
    %v1402 = vpop.f32.mrb[0].mxu0
    %1403 = vmatprep.mubr.f32.mxu0 0.0
    %1404 = vmatmul.mubr.f32.gmra.mrb[0].mxu0 %v1332
    %v1405 = vpop.f32.mrb[0].mxu0
    %v1406 = vadd.f32 %v1327, %v1405
    %v1407 = vpop.f32.mrb[0].mxu0
    %1408 = vdwg.mxu0
    %v1409 = vld [vmem:[#allocation2 + $0x78] sm:$0xff]
    %v1410 = vld [vmem:[#allocation2 + $0x80] sm:$0xff]
    %v1411 = vld [vmem:[#allocation2 + $0x88] sm:$0xff]
    %v1412 = vld [vmem:[#allocation2 + $0x90] sm:$0xff]
    %v1413 = vld [vmem:[#allocation2 + $0x98] sm:$0x1]
    %v1414 = vlaneseq
    %v1415 = vshrl.u32 %v1414, 7
    %v1416 = vsub.s32 0, %v1415
    %v1417 = vrot.slane %v1413, %v1416
    %v1419 = vsel %vm55, %v33, 0
    %v1422 = vsel %vm55, %v34, 0
    %v1425 = vsel %vm55, %v35, 0
    %1427 = vmatprep.subr.mxu0 0.0
    %1428 = vmatpush1.msra.mxu0 %v1409
    %1429 = vmatprep.subr.mxu0 0.0
    %1430 = vmatpush1.msra.mxu0 %v1410
    %1431 = vmatprep.subr.mxu0 0.0
    %1432 = vmatpush1.msra.mxu0 %v1411
    %1433 = vmatprep.subr.mxu0 0.0
    %1434 = vmatpush1.msra.mxu0 %v1412
    %1435 = vmatprep.subr.mxu0 0.0
    %1436 = vmatpush1.msra.mxu0 0.0
    %1437 = vmatprep.subr.mxu0 0.0
    %1438 = vmatpush1.msra.mxu0 0.0
    %1439 = vmatprep.subr.mxu0 0.0
    %1440 = vmatpush1.msra.mxu0 0.0
    %1441 = vmatprep.subr.mxu0 0.0
    %1442 = vmatpush1.msra.mxu0 0.0
    %1443 = vmatprep.subr.mxu0 0.0
    %1444 = vmatpush1.msra.mxu0 0.0
    %1445 = vmatprep.subr.mxu0 0.0
    %1446 = vmatpush1.msra.mxu0 0.0
    %1447 = vmatprep.subr.mxu0 0.0
    %1448 = vmatpush1.msra.mxu0 0.0
    %1449 = vmatprep.subr.mxu0 0.0
    %1450 = vmatpush1.msra.mxu0 0.0
    %1451 = vmatprep.subr.mxu0 0.0
    %1452 = vmatpush1.msra.mxu0 0.0
    %1453 = vmatprep.subr.mxu0 0.0
    %1454 = vmatpush1.msra.mxu0 0.0
    %1455 = vmatprep.subr.mxu0 0.0
    %1456 = vmatpush1.msra.mxu0 0.0
    %1457 = vmatprep.subr.mxu0 0.0
    %1458 = vmatpush1.msra.mxu0 0.0
    %1459 = vmatprep.subr.mxu0 0.0
    %1460 = vmatpush1.msra.mxu0 0.0
    %1461 = vmatprep.subr.mxu0 0.0
    %1462 = vmatpush1.msra.mxu0 0.0
    %1463 = vmatprep.subr.mxu0 0.0
    %1464 = vmatpush1.msra.mxu0 0.0
    %1465 = vmatprep.subr.mxu0 0.0
    %1466 = vmatpush1.msra.mxu0 0.0
    %1467 = vmatprep.subr.mxu0 0.0
    %1468 = vmatpush1.msra.mxu0 0.0
    %1469 = vmatprep.subr.mxu0 0.0
    %1470 = vmatpush1.msra.mxu0 0.0
    %1471 = vmatprep.subr.mxu0 0.0
    %1472 = vmatpush1.msra.mxu0 0.0
    %1473 = vmatprep.subr.mxu0 0.0
    %1474 = vmatpush1.msra.mxu0 0.0
    %1475 = vmatprep.subr.mxu0 0.0
    %1476 = vmatpush1.msra.mxu0 0.0
    %1477 = vmatprep.subr.mxu0 0.0
    %1478 = vmatpush1.msra.mxu0 0.0
    %1479 = vmatprep.subr.mxu0 0.0
    %1480 = vmatpush1.msra.mxu0 0.0
    %1481 = vmatprep.subr.mxu0 0.0
    %1482 = vmatpush1.msra.mxu0 0.0
    %1483 = vmatprep.subr.mxu0 0.0
    %1484 = vmatpush1.msra.mxu0 0.0
    %1485 = vmatprep.subr.mxu0 0.0
    %1486 = vmatpush1.msra.mxu0 0.0
    %1487 = vmatprep.subr.mxu0 0.0
    %1488 = vmatpush1.msra.mxu0 0.0
    %1489 = vmatprep.subr.mxu0 0.0
    %1490 = vmatpush1.msra.mxu0 0.0
    %1491 = vmatprep.mubr.f32.mxu0 0.0
    %1492 = vmatmul.mubr.f32.gmra.mrb[0].mxu0 %v1419
    %v1493 = vpop.f32.mrb[0].mxu0
    %v1494 = vadd.f32 %v1417, %v1493
    %v1495 = vpop.f32.mrb[0].mxu0
    %1496 = vmatprep.mubr.f32.mxu0 0.0
    %1497 = vmatmul.mubr.f32.gmra.mrb[0].mxu0 %v1422
    %v1498 = vpop.f32.mrb[0].mxu0
    %v1499 = vadd.f32 %v1417, %v1498
    %v1500 = vpop.f32.mrb[0].mxu0
    %1501 = vmatprep.mubr.f32.mxu0 0.0
    %1502 = vmatmul.mubr.f32.gmra.mrb[0].mxu0 %v1425
    %v1503 = vpop.f32.mrb[0].mxu0
    %v1504 = vadd.f32 %v1417, %v1503
    %v1505 = vpop.f32.mrb[0].mxu0
    %1506 = vdwg.mxu0
    %v1507 = vld [vmem:[#allocation2 + $0xa0] sm:$0xff]
    %v1508 = vld [vmem:[#allocation2 + $0xa8] sm:$0xff]
    %v1509 = vld [vmem:[#allocation2 + $0xb0] sm:$0xff]
    %v1510 = vld [vmem:[#allocation2 + $0xb8] sm:$0xff]
    %v1512 = vsel %vm147, %v1401, 0
    %v1515 = vsel %vm147, %v1406, 0
    %v1518 = vsel %vm147, %v1494, 0
    %v1521 = vsel %vm147, %v1499, 0
    %v1524 = vsel %vm147, %v1504, 0
    %1526 = vmatprep.subr.mxu0 0.0
    %1527 = vmatpush1.xpose.msra.mxu0 %v1518
    %1528 = vmatprep.subr.mxu0 0.0
    %1529 = vmatpush1.xpose.msra.mxu0 %v1521
    %1530 = vmatprep.subr.mxu0 0.0
    %1531 = vmatpush1.xpose.msra.mxu0 %v1524
    %1532 = vmatprep.subr.mxu0 0.0
    %1533 = vmatpush1.xpose.msra.mxu0 0.0
    %1534 = vmatprep.subr.mxu0 0.0
    %1535 = vmatpush1.xpose.msra.mxu0 0.0
    %1536 = vmatprep.subr.mxu0 0.0
    %1537 = vmatpush1.xpose.msra.mxu0 0.0
    %1538 = vmatprep.subr.mxu0 0.0
    %1539 = vmatpush1.xpose.msra.mxu0 0.0
    %1540 = vmatprep.subr.mxu0 0.0
    %1541 = vmatpush1.xpose.msra.mxu0 0.0
    %1542 = vmatprep.subr.mxu0 0.0
    %1543 = vmatpush1.xpose.msra.mxu0 0.0
    %1544 = vmatprep.subr.mxu0 0.0
    %1545 = vmatpush1.xpose.msra.mxu0 0.0
    %1546 = vmatprep.subr.mxu0 0.0
    %1547 = vmatpush1.xpose.msra.mxu0 0.0
    %1548 = vmatprep.subr.mxu0 0.0
    %1549 = vmatpush1.xpose.msra.mxu0 0.0
    %1550 = vmatprep.subr.mxu0 0.0
    %1551 = vmatpush1.xpose.msra.mxu0 0.0
    %1552 = vmatprep.subr.mxu0 0.0
    %1553 = vmatpush1.xpose.msra.mxu0 0.0
    %1554 = vmatprep.subr.mxu0 0.0
    %1555 = vmatpush1.xpose.msra.mxu0 0.0
    %1556 = vmatprep.subr.mxu0 0.0
    %1557 = vmatpush1.xpose.msra.mxu0 0.0
    %1558 = vmatprep.subr.mxu0 0.0
    %1559 = vmatpush1.xpose.msra.mxu0 0.0
    %1560 = vmatprep.subr.mxu0 0.0
    %1561 = vmatpush1.xpose.msra.mxu0 0.0
    %1562 = vmatprep.subr.mxu0 0.0
    %1563 = vmatpush1.xpose.msra.mxu0 0.0
    %1564 = vmatprep.subr.mxu0 0.0
    %1565 = vmatpush1.xpose.msra.mxu0 0.0
    %1566 = vmatprep.subr.mxu0 0.0
    %1567 = vmatpush1.xpose.msra.mxu0 0.0
    %1568 = vmatprep.subr.mxu0 0.0
    %1569 = vmatpush1.xpose.msra.mxu0 0.0
    %1570 = vmatprep.subr.mxu0 0.0
    %1571 = vmatpush1.xpose.msra.mxu0 0.0
    %1572 = vmatprep.subr.mxu0 0.0
    %1573 = vmatpush1.xpose.msra.mxu0 0.0
    %1574 = vmatprep.subr.mxu0 0.0
    %1575 = vmatpush1.xpose.msra.mxu0 0.0
    %1576 = vmatprep.subr.mxu0 0.0
    %1577 = vmatpush1.xpose.msra.mxu0 0.0
    %1578 = vmatprep.subr.mxu0 0.0
    %1579 = vmatpush1.xpose.msra.mxu0 0.0
    %1580 = vmatprep.subr.mxu0 0.0
    %1581 = vmatpush1.xpose.msra.mxu0 0.0
    %1582 = vmatprep.subr.mxu0 0.0
    %1583 = vmatpush1.xpose.msra.mxu0 0.0
    %1584 = vmatprep.subr.mxu0 0.0
    %1585 = vmatpush1.xpose.msra.mxu0 0.0
    %1586 = vmatprep.subr.mxu0 0.0
    %1587 = vmatpush1.xpose.msra.mxu0 0.0
    %1588 = vmatprep.subr.mxu0 0.0
    %1589 = vmatpush1.xpose.msra.mxu0 0.0
    %1590 = vmatprep.mubr.f32.mxu0 0.0
    %1591 = vmatmul.mubr.f32.gmra.mrb[0].mxu0 %v1512
    %v1592 = vpop.f32.mrb[0].mxu0
    %v1593 = vadd.f32 %v38, %v1592
    %v1594 = vpop.f32.mrb[0].mxu0
    %1595 = vmatprep.mubr.f32.mxu0 0.0
    %1596 = vmatmul.mubr.f32.gmra.mrb[0].mxu0 %v1515
    %v1597 = vpop.f32.mrb[0].mxu0
    %v1598 = vadd.f32 %v39, %v1597
    %v1599 = vpop.f32.mrb[0].mxu0
    %1600 = vdwg.mxu0
    %vm1601 = vcmask 195584
    %v1602 = vsel %vm1601, %v1593, -inf
    %1603 = vmax.xlane.f32.xlu0 %v1602
    %v1604 = vpop.xlane.xlu0 %1603
    %v1605 = vsel %vm1601, %v1598, -inf
    %1606 = vmax.xlane.f32.xlu0 %v1605
    %v1607 = vpop.xlane.xlu0 %1606
    %v1608 = vsub.f32 %v1593, %v1604
    %v1609 = vsub.f32 %v1598, %v1607
    %v1610 = vmul.f32 %v1608, 1.442695
    %v1611 = vpow.pop %v1610
    %v1612 = vmul.f32 %v1609, 1.442695
    %v1613 = vpow.pop %v1612
    %v1614 = vsel %vm1601, %v1611, 0.0
    %1615 = vadd.xlane.f32.xlu0 %v1614
    %v1616 = vpop.xlane.xlu0 %1615
    %v1617 = vsel %vm1601, %v1613, 0.0
    %1618 = vadd.xlane.f32.xlu0 %v1617
    %v1619 = vpop.xlane.xlu0 %1618
    %v1620 = vrcp.pop %v1616
    %v1621 = vrcp.pop %v1619
    %v1622 = vmul.f32 %v1611, %v1620
    %v1623 = vmul.f32 %v1613, %v1621
    %1624 = vrot.lane.b32.xlu0 %v1494, 96
    %v1625 = vpop.permute.xlu0 %1624
    %1626 = vrot.lane.b32.xlu0 %v1499, 96
    %v1627 = vpop.permute.xlu0 %1626
    %1628 = vrot.lane.b32.xlu0 %v1504, 96
    %v1629 = vpop.permute.xlu0 %1628
    %v1634 = vsel %vm1601, %v1622, 0
    %v1637 = vsel %vm1601, %v1623, 0
    %1639 = vmatprep.subr.mxu0 0.0
    %1640 = vmatpush1.msra.mxu0 %v1625
    %1641 = vmatprep.subr.mxu0 0.0
    %1642 = vmatpush1.msra.mxu0 %v1627
    %1643 = vmatprep.subr.mxu0 0.0
    %1644 = vmatpush1.msra.mxu0 %v1629
    %1645 = vmatprep.subr.mxu0 0.0
    %1646 = vmatpush1.msra.mxu0 0.0
    %1647 = vmatprep.subr.mxu0 0.0
    %1648 = vmatpush1.msra.mxu0 0.0
    %1649 = vmatprep.subr.mxu0 0.0
    %1650 = vmatpush1.msra.mxu0 0.0
    %1651 = vmatprep.subr.mxu0 0.0
    %1652 = vmatpush1.msra.mxu0 0.0
    %1653 = vmatprep.subr.mxu0 0.0
    %1654 = vmatpush1.msra.mxu0 0.0
    %1655 = vmatprep.subr.mxu0 0.0
    %1656 = vmatpush1.msra.mxu0 0.0
    %1657 = vmatprep.subr.mxu0 0.0
    %1658 = vmatpush1.msra.mxu0 0.0
    %1659 = vmatprep.subr.mxu0 0.0
    %1660 = vmatpush1.msra.mxu0 0.0
    %1661 = vmatprep.subr.mxu0 0.0
    %1662 = vmatpush1.msra.mxu0 0.0
    %1663 = vmatprep.subr.mxu0 0.0
    %1664 = vmatpush1.msra.mxu0 0.0
    %1665 = vmatprep.subr.mxu0 0.0
    %1666 = vmatpush1.msra.mxu0 0.0
    %1667 = vmatprep.subr.mxu0 0.0
    %1668 = vmatpush1.msra.mxu0 0.0
    %1669 = vmatprep.subr.mxu0 0.0
    %1670 = vmatpush1.msra.mxu0 0.0
    %1671 = vmatprep.subr.mxu0 0.0
    %1672 = vmatpush1.msra.mxu0 0.0
    %1673 = vmatprep.subr.mxu0 0.0
    %1674 = vmatpush1.msra.mxu0 0.0
    %1675 = vmatprep.subr.mxu0 0.0
    %1676 = vmatpush1.msra.mxu0 0.0
    %1677 = vmatprep.subr.mxu0 0.0
    %1678 = vmatpush1.msra.mxu0 0.0
    %1679 = vmatprep.subr.mxu0 0.0
    %1680 = vmatpush1.msra.mxu0 0.0
    %1681 = vmatprep.subr.mxu0 0.0
    %1682 = vmatpush1.msra.mxu0 0.0
    %1683 = vmatprep.subr.mxu0 0.0
    %1684 = vmatpush1.msra.mxu0 0.0
    %1685 = vmatprep.subr.mxu0 0.0
    %1686 = vmatpush1.msra.mxu0 0.0
    %1687 = vmatprep.subr.mxu0 0.0
    %1688 = vmatpush1.msra.mxu0 0.0
    %1689 = vmatprep.subr.mxu0 0.0
    %1690 = vmatpush1.msra.mxu0 0.0
    %1691 = vmatprep.subr.mxu0 0.0
    %1692 = vmatpush1.msra.mxu0 0.0
    %1693 = vmatprep.subr.mxu0 0.0
    %1694 = vmatpush1.msra.mxu0 0.0
    %1695 = vmatprep.subr.mxu0 0.0
    %1696 = vmatpush1.msra.mxu0 0.0
    %1697 = vmatprep.subr.mxu0 0.0
    %1698 = vmatpush1.msra.mxu0 0.0
    %1699 = vmatprep.subr.mxu0 0.0
    %1700 = vmatpush1.msra.mxu0 0.0
    %1701 = vmatprep.subr.mxu0 0.0
    %1702 = vmatpush1.msra.mxu0 0.0
    %1703 = vmatprep.mubr.f32.mxu0 0.0
    %1704 = vmatmul.mubr.f32.gmra.mrb[0].mxu0 %v1634
    %v1705 = vpop.f32.mrb[0].mxu0
    %v1706 = vadd.f32 0.0, %v1705
    %v1707 = vpop.f32.mrb[0].mxu0
    %1708 = vmatprep.mubr.f32.mxu0 0.0
    %1709 = vmatmul.mubr.f32.gmra.mrb[0].mxu0 %v1637
    %v1710 = vpop.f32.mrb[0].mxu0
    %v1711 = vadd.f32 0.0, %v1710
    %v1712 = vpop.f32.mrb[0].mxu0
    %1713 = vdwg.mxu0
    %1714 = vrot.lane.b32.xlu0 %v1401, 120
    %v1715 = vpop.permute.xlu0 %1714
    %1716 = vrot.lane.b32.xlu0 %v1406, 120
    %v1717 = vpop.permute.xlu0 %1716
    %1718 = vrot.lane.b32.xlu0 %v1494, 120
    %v1719 = vpop.permute.xlu0 %1718
    %1720 = vrot.lane.b32.xlu0 %v1499, 120
    %v1721 = vpop.permute.xlu0 %1720
    %1722 = vrot.lane.b32.xlu0 %v1504, 120
    %v1723 = vpop.permute.xlu0 %1722
    %v1724 = vsel %vm147, %v1715, 0
    %v1726 = vsel %vm147, %v1717, 0
    %v1728 = vsel %vm147, %v1719, 0
    %v1730 = vsel %vm147, %v1721, 0
    %v1732 = vsel %vm147, %v1723, 0
    %1734 = vmatprep.subr.mxu0 0.0
    %1735 = vmatpush1.xpose.msra.mxu0 %v1728
    %1736 = vmatprep.subr.mxu0 0.0
    %1737 = vmatpush1.xpose.msra.mxu0 %v1730
    %1738 = vmatprep.subr.mxu0 0.0
    %1739 = vmatpush1.xpose.msra.mxu0 %v1732
    %1740 = vmatprep.subr.mxu0 0.0
    %1741 = vmatpush1.xpose.msra.mxu0 0.0
    %1742 = vmatprep.subr.mxu0 0.0
    %1743 = vmatpush1.xpose.msra.mxu0 0.0
    %1744 = vmatprep.subr.mxu0 0.0
    %1745 = vmatpush1.xpose.msra.mxu0 0.0
    %1746 = vmatprep.subr.mxu0 0.0
    %1747 = vmatpush1.xpose.msra.mxu0 0.0
    %1748 = vmatprep.subr.mxu0 0.0
    %1749 = vmatpush1.xpose.msra.mxu0 0.0
    %1750 = vmatprep.subr.mxu0 0.0
    %1751 = vmatpush1.xpose.msra.mxu0 0.0
    %1752 = vmatprep.subr.mxu0 0.0
    %1753 = vmatpush1.xpose.msra.mxu0 0.0
    %1754 = vmatprep.subr.mxu0 0.0
    %1755 = vmatpush1.xpose.msra.mxu0 0.0
    %1756 = vmatprep.subr.mxu0 0.0
    %1757 = vmatpush1.xpose.msra.mxu0 0.0
    %1758 = vmatprep.subr.mxu0 0.0
    %1759 = vmatpush1.xpose.msra.mxu0 0.0
    %1760 = vmatprep.subr.mxu0 0.0
    %1761 = vmatpush1.xpose.msra.mxu0 0.0
    %1762 = vmatprep.subr.mxu0 0.0
    %1763 = vmatpush1.xpose.msra.mxu0 0.0
    %1764 = vmatprep.subr.mxu0 0.0
    %1765 = vmatpush1.xpose.msra.mxu0 0.0
    %1766 = vmatprep.subr.mxu0 0.0
    %1767 = vmatpush1.xpose.msra.mxu0 0.0
    %1768 = vmatprep.subr.mxu0 0.0
    %1769 = vmatpush1.xpose.msra.mxu0 0.0
    %1770 = vmatprep.subr.mxu0 0.0
    %1771 = vmatpush1.xpose.msra.mxu0 0.0
    %1772 = vmatprep.subr.mxu0 0.0
    %1773 = vmatpush1.xpose.msra.mxu0 0.0
    %1774 = vmatprep.subr.mxu0 0.0
    %1775 = vmatpush1.xpose.msra.mxu0 0.0
    %1776 = vmatprep.subr.mxu0 0.0
    %1777 = vmatpush1.xpose.msra.mxu0 0.0
    %1778 = vmatprep.subr.mxu0 0.0
    %1779 = vmatpush1.xpose.msra.mxu0 0.0
    %1780 = vmatprep.subr.mxu0 0.0
    %1781 = vmatpush1.xpose.msra.mxu0 0.0
    %1782 = vmatprep.subr.mxu0 0.0
    %1783 = vmatpush1.xpose.msra.mxu0 0.0
    %1784 = vmatprep.subr.mxu0 0.0
    %1785 = vmatpush1.xpose.msra.mxu0 0.0
    %1786 = vmatprep.subr.mxu0 0.0
    %1787 = vmatpush1.xpose.msra.mxu0 0.0
    %1788 = vmatprep.subr.mxu0 0.0
    %1789 = vmatpush1.xpose.msra.mxu0 0.0
    %1790 = vmatprep.subr.mxu0 0.0
    %1791 = vmatpush1.xpose.msra.mxu0 0.0
    %1792 = vmatprep.subr.mxu0 0.0
    %1793 = vmatpush1.xpose.msra.mxu0 0.0
    %1794 = vmatprep.subr.mxu0 0.0
    %1795 = vmatpush1.xpose.msra.mxu0 0.0
    %1796 = vmatprep.subr.mxu0 0.0
    %1797 = vmatpush1.xpose.msra.mxu0 0.0
    %1798 = vmatprep.mubr.f32.mxu0 0.0
    %1799 = vmatmul.mubr.f32.gmra.mrb[0].mxu0 %v1724
    %v1800 = vpop.f32.mrb[0].mxu0
    %v1801 = vadd.f32 %v38, %v1800
    %v1802 = vpop.f32.mrb[0].mxu0
    %1803 = vmatprep.mubr.f32.mxu0 0.0
    %1804 = vmatmul.mubr.f32.gmra.mrb[0].mxu0 %v1726
    %v1805 = vpop.f32.mrb[0].mxu0
    %v1806 = vadd.f32 %v39, %v1805
    %v1807 = vpop.f32.mrb[0].mxu0
    %1808 = vdwg.mxu0
    %v1809 = vsel %vm1601, %v1801, -inf
    %1810 = vmax.xlane.f32.xlu0 %v1809
    %v1811 = vpop.xlane.xlu0 %1810
    %v1812 = vsel %vm1601, %v1806, -inf
    %1813 = vmax.xlane.f32.xlu0 %v1812
    %v1814 = vpop.xlane.xlu0 %1813
    %v1815 = vsub.f32 %v1801, %v1811
    %v1816 = vsub.f32 %v1806, %v1814
    %v1817 = vmul.f32 %v1815, 1.442695
    %v1818 = vpow.pop %v1817
    %v1819 = vmul.f32 %v1816, 1.442695
    %v1820 = vpow.pop %v1819
    %v1821 = vsel %vm1601, %v1818, 0.0
    %1822 = vadd.xlane.f32.xlu0 %v1821
    %v1823 = vpop.xlane.xlu0 %1822
    %v1824 = vsel %vm1601, %v1820, 0.0
    %1825 = vadd.xlane.f32.xlu0 %v1824
    %v1826 = vpop.xlane.xlu0 %1825
    %v1827 = vrcp.pop %v1823
    %v1828 = vrcp.pop %v1826
    %v1829 = vmul.f32 %v1818, %v1827
    %v1830 = vmul.f32 %v1820, %v1828
    %1831 = vrot.lane.b32.xlu0 %v1494, 88
    %v1832 = vpop.permute.xlu0 %1831
    %1833 = vrot.lane.b32.xlu0 %v1499, 88
    %v1834 = vpop.permute.xlu0 %1833
    %1835 = vrot.lane.b32.xlu0 %v1504, 88
    %v1836 = vpop.permute.xlu0 %1835
    %v1841 = vsel %vm1601, %v1829, 0
    %v1844 = vsel %vm1601, %v1830, 0
    %1846 = vmatprep.subr.mxu0 0.0
    %1847 = vmatpush1.msra.mxu0 %v1832
    %1848 = vmatprep.subr.mxu0 0.0
    %1849 = vmatpush1.msra.mxu0 %v1834
    %1850 = vmatprep.subr.mxu0 0.0
    %1851 = vmatpush1.msra.mxu0 %v1836
    %1852 = vmatprep.subr.mxu0 0.0
    %1853 = vmatpush1.msra.mxu0 0.0
    %1854 = vmatprep.subr.mxu0 0.0
    %1855 = vmatpush1.msra.mxu0 0.0
    %1856 = vmatprep.subr.mxu0 0.0
    %1857 = vmatpush1.msra.mxu0 0.0
    %1858 = vmatprep.subr.mxu0 0.0
    %1859 = vmatpush1.msra.mxu0 0.0
    %1860 = vmatprep.subr.mxu0 0.0
    %1861 = vmatpush1.msra.mxu0 0.0
    %1862 = vmatprep.subr.mxu0 0.0
    %1863 = vmatpush1.msra.mxu0 0.0
    %1864 = vmatprep.subr.mxu0 0.0
    %1865 = vmatpush1.msra.mxu0 0.0
    %1866 = vmatprep.subr.mxu0 0.0
    %1867 = vmatpush1.msra.mxu0 0.0
    %1868 = vmatprep.subr.mxu0 0.0
    %1869 = vmatpush1.msra.mxu0 0.0
    %1870 = vmatprep.subr.mxu0 0.0
    %1871 = vmatpush1.msra.mxu0 0.0
    %1872 = vmatprep.subr.mxu0 0.0
    %1873 = vmatpush1.msra.mxu0 0.0
    %1874 = vmatprep.subr.mxu0 0.0
    %1875 = vmatpush1.msra.mxu0 0.0
    %1876 = vmatprep.subr.mxu0 0.0
    %1877 = vmatpush1.msra.mxu0 0.0
    %1878 = vmatprep.subr.mxu0 0.0
    %1879 = vmatpush1.msra.mxu0 0.0
    %1880 = vmatprep.subr.mxu0 0.0
    %1881 = vmatpush1.msra.mxu0 0.0
    %1882 = vmatprep.subr.mxu0 0.0
    %1883 = vmatpush1.msra.mxu0 0.0
    %1884 = vmatprep.subr.mxu0 0.0
    %1885 = vmatpush1.msra.mxu0 0.0
    %1886 = vmatprep.subr.mxu0 0.0
    %1887 = vmatpush1.msra.mxu0 0.0
    %1888 = vmatprep.subr.mxu0 0.0
    %1889 = vmatpush1.msra.mxu0 0.0
    %1890 = vmatprep.subr.mxu0 0.0
    %1891 = vmatpush1.msra.mxu0 0.0
    %1892 = vmatprep.subr.mxu0 0.0
    %1893 = vmatpush1.msra.mxu0 0.0
    %1894 = vmatprep.subr.mxu0 0.0
    %1895 = vmatpush1.msra.mxu0 0.0
    %1896 = vmatprep.subr.mxu0 0.0
    %1897 = vmatpush1.msra.mxu0 0.0
    %1898 = vmatprep.subr.mxu0 0.0
    %1899 = vmatpush1.msra.mxu0 0.0
    %1900 = vmatprep.subr.mxu0 0.0
    %1901 = vmatpush1.msra.mxu0 0.0
    %1902 = vmatprep.subr.mxu0 0.0
    %1903 = vmatpush1.msra.mxu0 0.0
    %1904 = vmatprep.subr.mxu0 0.0
    %1905 = vmatpush1.msra.mxu0 0.0
    %1906 = vmatprep.subr.mxu0 0.0
    %1907 = vmatpush1.msra.mxu0 0.0
    %1908 = vmatprep.subr.mxu0 0.0
    %1909 = vmatpush1.msra.mxu0 0.0
    %1910 = vmatprep.mubr.f32.mxu0 0.0
    %1911 = vmatmul.mubr.f32.gmra.mrb[0].mxu0 %v1841
    %v1912 = vpop.f32.mrb[0].mxu0
    %v1913 = vadd.f32 0.0, %v1912
    %v1914 = vpop.f32.mrb[0].mxu0
    %1915 = vmatprep.mubr.f32.mxu0 0.0
    %1916 = vmatmul.mubr.f32.gmra.mrb[0].mxu0 %v1844
    %v1917 = vpop.f32.mrb[0].mxu0
    %v1918 = vadd.f32 0.0, %v1917
    %v1919 = vpop.f32.mrb[0].mxu0
    %1920 = vdwg.mxu0
    %v1922 = vsel %vm147, %v1913, 0
    %v1925 = vsel %vm147, %v1918, 0
    %1927 = vmatprep.subr.mxu0 0.0
    %1928 = vmatpush1.msra.mxu0 %v1508
    %1929 = vmatprep.subr.mxu0 0.0
    %1930 = vmatpush1.msra.mxu0 0.0
    %1931 = vmatprep.subr.mxu0 0.0
    %1932 = vmatpush1.msra.mxu0 0.0
    %1933 = vmatprep.subr.mxu0 0.0
    %1934 = vmatpush1.msra.mxu0 0.0
    %1935 = vmatprep.subr.mxu0 0.0
    %1936 = vmatpush1.msra.mxu0 0.0
    %1937 = vmatprep.subr.mxu0 0.0
    %1938 = vmatpush1.msra.mxu0 0.0
    %1939 = vmatprep.subr.mxu0 0.0
    %1940 = vmatpush1.msra.mxu0 0.0
    %1941 = vmatprep.subr.mxu0 0.0
    %1942 = vmatpush1.msra.mxu0 0.0
    %1943 = vmatprep.subr.mxu0 0.0
    %1944 = vmatpush1.msra.mxu0 0.0
    %1945 = vmatprep.subr.mxu0 0.0
    %1946 = vmatpush1.msra.mxu0 0.0
    %1947 = vmatprep.subr.mxu0 0.0
    %1948 = vmatpush1.msra.mxu0 0.0
    %1949 = vmatprep.subr.mxu0 0.0
    %1950 = vmatpush1.msra.mxu0 0.0
    %1951 = vmatprep.subr.mxu0 0.0
    %1952 = vmatpush1.msra.mxu0 0.0
    %1953 = vmatprep.subr.mxu0 0.0
    %1954 = vmatpush1.msra.mxu0 0.0
    %1955 = vmatprep.subr.mxu0 0.0
    %1956 = vmatpush1.msra.mxu0 0.0
    %1957 = vmatprep.subr.mxu0 0.0
    %1958 = vmatpush1.msra.mxu0 0.0
    %1959 = vmatprep.subr.mxu0 0.0
    %1960 = vmatpush1.msra.mxu0 0.0
    %1961 = vmatprep.subr.mxu0 0.0
    %1962 = vmatpush1.msra.mxu0 0.0
    %1963 = vmatprep.subr.mxu0 0.0
    %1964 = vmatpush1.msra.mxu0 0.0
    %1965 = vmatprep.subr.mxu0 0.0
    %1966 = vmatpush1.msra.mxu0 0.0
    %1967 = vmatprep.subr.mxu0 0.0
    %1968 = vmatpush1.msra.mxu0 0.0
    %1969 = vmatprep.subr.mxu0 0.0
    %1970 = vmatpush1.msra.mxu0 0.0
    %1971 = vmatprep.subr.mxu0 0.0
    %1972 = vmatpush1.msra.mxu0 0.0
    %1973 = vmatprep.subr.mxu0 0.0
    %1974 = vmatpush1.msra.mxu0 0.0
    %1975 = vmatprep.subr.mxu0 0.0
    %1976 = vmatpush1.msra.mxu0 0.0
    %1977 = vmatprep.subr.mxu0 0.0
    %1978 = vmatpush1.msra.mxu0 0.0
    %1979 = vmatprep.subr.mxu0 0.0
    %1980 = vmatpush1.msra.mxu0 0.0
    %1981 = vmatprep.subr.mxu0 0.0
    %1982 = vmatpush1.msra.mxu0 0.0
    %1983 = vmatprep.subr.mxu0 0.0
    %1984 = vmatpush1.msra.mxu0 0.0
    %1985 = vmatprep.subr.mxu0 0.0
    %1986 = vmatpush1.msra.mxu0 0.0
    %1987 = vmatprep.subr.mxu0 0.0
    %1988 = vmatpush1.msra.mxu0 0.0
    %1989 = vmatprep.subr.mxu0 0.0
    %1990 = vmatpush1.msra.mxu0 0.0
    %1991 = vmatprep.mubr.f32.mxu0 0.0
    %1992 = vmatmul.mubr.f32.gmra.mrb[0].mxu0 %v1922
    %v1993 = vpop.f32.mrb[0].mxu0
    %v1994 = vadd.f32 0.0, %v1993
    %v1995 = vpop.f32.mrb[0].mxu0
    %1996 = vmatprep.mubr.f32.mxu0 0.0
    %1997 = vmatmul.mubr.f32.gmra.mrb[0].mxu0 %v1925
    %v1998 = vpop.f32.mrb[0].mxu0
    %v1999 = vadd.f32 0.0, %v1998
    %v2000 = vpop.f32.mrb[0].mxu0
    %2001 = vdwg.mxu0
    %v2003 = vsel %vm147, %v1706, 0
    %v2006 = vsel %vm147, %v1711, 0
    %2008 = vmatprep.subr.mxu0 0.0
    %2009 = vmatpush1.msra.mxu0 %v1507
    %2010 = vmatprep.subr.mxu0 0.0
    %2011 = vmatpush1.msra.mxu0 0.0
    %2012 = vmatprep.subr.mxu0 0.0
    %2013 = vmatpush1.msra.mxu0 0.0
    %2014 = vmatprep.subr.mxu0 0.0
    %2015 = vmatpush1.msra.mxu0 0.0
    %2016 = vmatprep.subr.mxu0 0.0
    %2017 = vmatpush1.msra.mxu0 0.0
    %2018 = vmatprep.subr.mxu0 0.0
    %2019 = vmatpush1.msra.mxu0 0.0
    %2020 = vmatprep.subr.mxu0 0.0
    %2021 = vmatpush1.msra.mxu0 0.0
    %2022 = vmatprep.subr.mxu0 0.0
    %2023 = vmatpush1.msra.mxu0 0.0
    %2024 = vmatprep.subr.mxu0 0.0
    %2025 = vmatpush1.msra.mxu0 0.0
    %2026 = vmatprep.subr.mxu0 0.0
    %2027 = vmatpush1.msra.mxu0 0.0
    %2028 = vmatprep.subr.mxu0 0.0
    %2029 = vmatpush1.msra.mxu0 0.0
    %2030 = vmatprep.subr.mxu0 0.0
    %2031 = vmatpush1.msra.mxu0 0.0
    %2032 = vmatprep.subr.mxu0 0.0
    %2033 = vmatpush1.msra.mxu0 0.0
    %2034 = vmatprep.subr.mxu0 0.0
    %2035 = vmatpush1.msra.mxu0 0.0
    %2036 = vmatprep.subr.mxu0 0.0
    %2037 = vmatpush1.msra.mxu0 0.0
    %2038 = vmatprep.subr.mxu0 0.0
    %2039 = vmatpush1.msra.mxu0 0.0
    %2040 = vmatprep.subr.mxu0 0.0
    %2041 = vmatpush1.msra.mxu0 0.0
    %2042 = vmatprep.subr.mxu0 0.0
    %2043 = vmatpush1.msra.mxu0 0.0
    %2044 = vmatprep.subr.mxu0 0.0
    %2045 = vmatpush1.msra.mxu0 0.0
    %2046 = vmatprep.subr.mxu0 0.0
    %2047 = vmatpush1.msra.mxu0 0.0
    %2048 = vmatprep.subr.mxu0 0.0
    %2049 = vmatpush1.msra.mxu0 0.0
    %2050 = vmatprep.subr.mxu0 0.0
    %2051 = vmatpush1.msra.mxu0 0.0
    %2052 = vmatprep.subr.mxu0 0.0
    %2053 = vmatpush1.msra.mxu0 0.0
    %2054 = vmatprep.subr.mxu0 0.0
    %2055 = vmatpush1.msra.mxu0 0.0
    %2056 = vmatprep.subr.mxu0 0.0
    %2057 = vmatpush1.msra.mxu0 0.0
    %2058 = vmatprep.subr.mxu0 0.0
    %2059 = vmatpush1.msra.mxu0 0.0
    %2060 = vmatprep.subr.mxu0 0.0
    %2061 = vmatpush1.msra.mxu0 0.0
    %2062 = vmatprep.subr.mxu0 0.0
    %2063 = vmatpush1.msra.mxu0 0.0
    %2064 = vmatprep.subr.mxu0 0.0
    %2065 = vmatpush1.msra.mxu0 0.0
    %2066 = vmatprep.subr.mxu0 0.0
    %2067 = vmatpush1.msra.mxu0 0.0
    %2068 = vmatprep.subr.mxu0 0.0
    %2069 = vmatpush1.msra.mxu0 0.0
    %2070 = vmatprep.subr.mxu0 0.0
    %2071 = vmatpush1.msra.mxu0 0.0
    %2072 = vmatprep.mubr.f32.mxu0 0.0
    %2073 = vmatmul.mubr.f32.gmra.mrb[0].mxu0 %v2003
    %v2074 = vpop.f32.mrb[0].mxu0
    %v2075 = vadd.f32 %v1994, %v2074
    %v2076 = vpop.f32.mrb[0].mxu0
    %2077 = vmatprep.mubr.f32.mxu0 0.0
    %2078 = vmatmul.mubr.f32.gmra.mrb[0].mxu0 %v2006
    %v2079 = vpop.f32.mrb[0].mxu0
    %v2080 = vadd.f32 %v1999, %v2079
    %v2081 = vpop.f32.mrb[0].mxu0
    %2082 = vdwg.mxu0
    %2083 = vrot.lane.b32.xlu0 %v1401, 112
    %v2084 = vpop.permute.xlu0 %2083
    %2085 = vrot.lane.b32.xlu0 %v1406, 112
    %v2086 = vpop.permute.xlu0 %2085
    %2087 = vrot.lane.b32.xlu0 %v1494, 112
    %v2088 = vpop.permute.xlu0 %2087
    %2089 = vrot.lane.b32.xlu0 %v1499, 112
    %v2090 = vpop.permute.xlu0 %2089
    %2091 = vrot.lane.b32.xlu0 %v1504, 112
    %v2092 = vpop.permute.xlu0 %2091
    %v2093 = vsel %vm147, %v2084, 0
    %v2095 = vsel %vm147, %v2086, 0
    %v2097 = vsel %vm147, %v2088, 0
    %v2099 = vsel %vm147, %v2090, 0
    %v2101 = vsel %vm147, %v2092, 0
    %2103 = vmatprep.subr.mxu0 0.0
    %2104 = vmatpush1.xpose.msra.mxu0 %v2097
    %2105 = vmatprep.subr.mxu0 0.0
    %2106 = vmatpush1.xpose.msra.mxu0 %v2099
    %2107 = vmatprep.subr.mxu0 0.0
    %2108 = vmatpush1.xpose.msra.mxu0 %v2101
    %2109 = vmatprep.subr.mxu0 0.0
    %2110 = vmatpush1.xpose.msra.mxu0 0.0
    %2111 = vmatprep.subr.mxu0 0.0
    %2112 = vmatpush1.xpose.msra.mxu0 0.0
    %2113 = vmatprep.subr.mxu0 0.0
    %2114 = vmatpush1.xpose.msra.mxu0 0.0
    %2115 = vmatprep.subr.mxu0 0.0
    %2116 = vmatpush1.xpose.msra.mxu0 0.0
    %2117 = vmatprep.subr.mxu0 0.0
    %2118 = vmatpush1.xpose.msra.mxu0 0.0
    %2119 = vmatprep.subr.mxu0 0.0
    %2120 = vmatpush1.xpose.msra.mxu0 0.0
    %2121 = vmatprep.subr.mxu0 0.0
    %2122 = vmatpush1.xpose.msra.mxu0 0.0
    %2123 = vmatprep.subr.mxu0 0.0
    %2124 = vmatpush1.xpose.msra.mxu0 0.0
    %2125 = vmatprep.subr.mxu0 0.0
    %2126 = vmatpush1.xpose.msra.mxu0 0.0
    %2127 = vmatprep.subr.mxu0 0.0
    %2128 = vmatpush1.xpose.msra.mxu0 0.0
    %2129 = vmatprep.subr.mxu0 0.0
    %2130 = vmatpush1.xpose.msra.mxu0 0.0
    %2131 = vmatprep.subr.mxu0 0.0
    %2132 = vmatpush1.xpose.msra.mxu0 0.0
    %2133 = vmatprep.subr.mxu0 0.0
    %2134 = vmatpush1.xpose.msra.mxu0 0.0
    %2135 = vmatprep.subr.mxu0 0.0
    %2136 = vmatpush1.xpose.msra.mxu0 0.0
    %2137 = vmatprep.subr.mxu0 0.0
    %2138 = vmatpush1.xpose.msra.mxu0 0.0
    %2139 = vmatprep.subr.mxu0 0.0
    %2140 = vmatpush1.xpose.msra.mxu0 0.0
    %2141 = vmatprep.subr.mxu0 0.0
    %2142 = vmatpush1.xpose.msra.mxu0 0.0
    %2143 = vmatprep.subr.mxu0 0.0
    %2144 = vmatpush1.xpose.msra.mxu0 0.0
    %2145 = vmatprep.subr.mxu0 0.0
    %2146 = vmatpush1.xpose.msra.mxu0 0.0
    %2147 = vmatprep.subr.mxu0 0.0
    %2148 = vmatpush1.xpose.msra.mxu0 0.0
    %2149 = vmatprep.subr.mxu0 0.0
    %2150 = vmatpush1.xpose.msra.mxu0 0.0
    %2151 = vmatprep.subr.mxu0 0.0
    %2152 = vmatpush1.xpose.msra.mxu0 0.0
    %2153 = vmatprep.subr.mxu0 0.0
    %2154 = vmatpush1.xpose.msra.mxu0 0.0
    %2155 = vmatprep.subr.mxu0 0.0
    %2156 = vmatpush1.xpose.msra.mxu0 0.0
    %2157 = vmatprep.subr.mxu0 0.0
    %2158 = vmatpush1.xpose.msra.mxu0 0.0
    %2159 = vmatprep.subr.mxu0 0.0
    %2160 = vmatpush1.xpose.msra.mxu0 0.0
    %2161 = vmatprep.subr.mxu0 0.0
    %2162 = vmatpush1.xpose.msra.mxu0 0.0
    %2163 = vmatprep.subr.mxu0 0.0
    %2164 = vmatpush1.xpose.msra.mxu0 0.0
    %2165 = vmatprep.subr.mxu0 0.0
    %2166 = vmatpush1.xpose.msra.mxu0 0.0
    %2167 = vmatprep.mubr.f32.mxu0 0.0
    %2168 = vmatmul.mubr.f32.gmra.mrb[0].mxu0 %v2093
    %v2169 = vpop.f32.mrb[0].mxu0
    %v2170 = vadd.f32 %v38, %v2169
    %v2171 = vpop.f32.mrb[0].mxu0
    %2172 = vmatprep.mubr.f32.mxu0 0.0
    %2173 = vmatmul.mubr.f32.gmra.mrb[0].mxu0 %v2095
    %v2174 = vpop.f32.mrb[0].mxu0
    %v2175 = vadd.f32 %v39, %v2174
    %v2176 = vpop.f32.mrb[0].mxu0
    %2177 = vdwg.mxu0
    %v2178 = vsel %vm1601, %v2170, -inf
    %2179 = vmax.xlane.f32.xlu0 %v2178
    %v2180 = vpop.xlane.xlu0 %2179
    %v2181 = vsel %vm1601, %v2175, -inf
    %2182 = vmax.xlane.f32.xlu0 %v2181
    %v2183 = vpop.xlane.xlu0 %2182
    %v2184 = vsub.f32 %v2170, %v2180
    %v2185 = vsub.f32 %v2175, %v2183
    %v2186 = vmul.f32 %v2184, 1.442695
    %v2187 = vpow.pop %v2186
    %v2188 = vmul.f32 %v2185, 1.442695
    %v2189 = vpow.pop %v2188
    %v2190 = vsel %vm1601, %v2187, 0.0
    %2191 = vadd.xlane.f32.xlu0 %v2190
    %v2192 = vpop.xlane.xlu0 %2191
    %v2193 = vsel %vm1601, %v2189, 0.0
    %2194 = vadd.xlane.f32.xlu0 %v2193
    %v2195 = vpop.xlane.xlu0 %2194
    %v2196 = vrcp.pop %v2192
    %v2197 = vrcp.pop %v2195
    %v2198 = vmul.f32 %v2187, %v2196
    %v2199 = vmul.f32 %v2189, %v2197
    %2200 = vrot.lane.b32.xlu0 %v1494, 80
    %v2201 = vpop.permute.xlu0 %2200
    %2202 = vrot.lane.b32.xlu0 %v1499, 80
    %v2203 = vpop.permute.xlu0 %2202
    %2204 = vrot.lane.b32.xlu0 %v1504, 80
    %v2205 = vpop.permute.xlu0 %2204
    %v2210 = vsel %vm1601, %v2198, 0
    %v2213 = vsel %vm1601, %v2199, 0
    %2215 = vmatprep.subr.mxu0 0.0
    %2216 = vmatpush1.msra.mxu0 %v2201
    %2217 = vmatprep.subr.mxu0 0.0
    %2218 = vmatpush1.msra.mxu0 %v2203
    %2219 = vmatprep.subr.mxu0 0.0
    %2220 = vmatpush1.msra.mxu0 %v2205
    %2221 = vmatprep.subr.mxu0 0.0
    %2222 = vmatpush1.msra.mxu0 0.0
    %2223 = vmatprep.subr.mxu0 0.0
    %2224 = vmatpush1.msra.mxu0 0.0
    %2225 = vmatprep.subr.mxu0 0.0
    %2226 = vmatpush1.msra.mxu0 0.0
    %2227 = vmatprep.subr.mxu0 0.0
    %2228 = vmatpush1.msra.mxu0 0.0
    %2229 = vmatprep.subr.mxu0 0.0
    %2230 = vmatpush1.msra.mxu0 0.0
    %2231 = vmatprep.subr.mxu0 0.0
    %2232 = vmatpush1.msra.mxu0 0.0
    %2233 = vmatprep.subr.mxu0 0.0
    %2234 = vmatpush1.msra.mxu0 0.0
    %2235 = vmatprep.subr.mxu0 0.0
    %2236 = vmatpush1.msra.mxu0 0.0
    %2237 = vmatprep.subr.mxu0 0.0
    %2238 = vmatpush1.msra.mxu0 0.0
    %2239 = vmatprep.subr.mxu0 0.0
    %2240 = vmatpush1.msra.mxu0 0.0
    %2241 = vmatprep.subr.mxu0 0.0
    %2242 = vmatpush1.msra.mxu0 0.0
    %2243 = vmatprep.subr.mxu0 0.0
    %2244 = vmatpush1.msra.mxu0 0.0
    %2245 = vmatprep.subr.mxu0 0.0
    %2246 = vmatpush1.msra.mxu0 0.0
    %2247 = vmatprep.subr.mxu0 0.0
    %2248 = vmatpush1.msra.mxu0 0.0
    %2249 = vmatprep.subr.mxu0 0.0
    %2250 = vmatpush1.msra.mxu0 0.0
    %2251 = vmatprep.subr.mxu0 0.0
    %2252 = vmatpush1.msra.mxu0 0.0
    %2253 = vmatprep.subr.mxu0 0.0
    %2254 = vmatpush1.msra.mxu0 0.0
    %2255 = vmatprep.subr.mxu0 0.0
    %2256 = vmatpush1.msra.mxu0 0.0
    %2257 = vmatprep.subr.mxu0 0.0
    %2258 = vmatpush1.msra.mxu0 0.0
    %2259 = vmatprep.subr.mxu0 0.0
    %2260 = vmatpush1.msra.mxu0 0.0
    %2261 = vmatprep.subr.mxu0 0.0
    %2262 = vmatpush1.msra.mxu0 0.0
    %2263 = vmatprep.subr.mxu0 0.0
    %2264 = vmatpush1.msra.mxu0 0.0
    %2265 = vmatprep.subr.mxu0 0.0
    %2266 = vmatpush1.msra.mxu0 0.0
    %2267 = vmatprep.subr.mxu0 0.0
    %2268 = vmatpush1.msra.mxu0 0.0
    %2269 = vmatprep.subr.mxu0 0.0
    %2270 = vmatpush1.msra.mxu0 0.0
    %2271 = vmatprep.subr.mxu0 0.0
    %2272 = vmatpush1.msra.mxu0 0.0
    %2273 = vmatprep.subr.mxu0 0.0
    %2274 = vmatpush1.msra.mxu0 0.0
    %2275 = vmatprep.subr.mxu0 0.0
    %2276 = vmatpush1.msra.mxu0 0.0
    %2277 = vmatprep.subr.mxu0 0.0
    %2278 = vmatpush1.msra.mxu0 0.0
    %2279 = vmatprep.mubr.f32.mxu0 0.0
    %2280 = vmatmul.mubr.f32.gmra.mrb[0].mxu0 %v2210
    %v2281 = vpop.f32.mrb[0].mxu0
    %v2282 = vadd.f32 0.0, %v2281
    %v2283 = vpop.f32.mrb[0].mxu0
    %2284 = vmatprep.mubr.f32.mxu0 0.0
    %2285 = vmatmul.mubr.f32.gmra.mrb[0].mxu0 %v2213
    %v2286 = vpop.f32.mrb[0].mxu0
    %v2287 = vadd.f32 0.0, %v2286
    %v2288 = vpop.f32.mrb[0].mxu0
    %2289 = vdwg.mxu0
    %v2291 = vsel %vm147, %v2282, 0
    %v2294 = vsel %vm147, %v2287, 0
    %2296 = vmatprep.subr.mxu0 0.0
    %2297 = vmatpush1.msra.mxu0 %v1509
    %2298 = vmatprep.subr.mxu0 0.0
    %2299 = vmatpush1.msra.mxu0 0.0
    %2300 = vmatprep.subr.mxu0 0.0
    %2301 = vmatpush1.msra.mxu0 0.0
    %2302 = vmatprep.subr.mxu0 0.0
    %2303 = vmatpush1.msra.mxu0 0.0
    %2304 = vmatprep.subr.mxu0 0.0
    %2305 = vmatpush1.msra.mxu0 0.0
    %2306 = vmatprep.subr.mxu0 0.0
    %2307 = vmatpush1.msra.mxu0 0.0
    %2308 = vmatprep.subr.mxu0 0.0
    %2309 = vmatpush1.msra.mxu0 0.0
    %2310 = vmatprep.subr.mxu0 0.0
    %2311 = vmatpush1.msra.mxu0 0.0
    %2312 = vmatprep.subr.mxu0 0.0
    %2313 = vmatpush1.msra.mxu0 0.0
    %2314 = vmatprep.subr.mxu0 0.0
    %2315 = vmatpush1.msra.mxu0 0.0
    %2316 = vmatprep.subr.mxu0 0.0
    %2317 = vmatpush1.msra.mxu0 0.0
    %2318 = vmatprep.subr.mxu0 0.0
    %2319 = vmatpush1.msra.mxu0 0.0
    %2320 = vmatprep.subr.mxu0 0.0
    %2321 = vmatpush1.msra.mxu0 0.0
    %2322 = vmatprep.subr.mxu0 0.0
    %2323 = vmatpush1.msra.mxu0 0.0
    %2324 = vmatprep.subr.mxu0 0.0
    %2325 = vmatpush1.msra.mxu0 0.0
    %2326 = vmatprep.subr.mxu0 0.0
    %2327 = vmatpush1.msra.mxu0 0.0
    %2328 = vmatprep.subr.mxu0 0.0
    %2329 = vmatpush1.msra.mxu0 0.0
    %2330 = vmatprep.subr.mxu0 0.0
    %2331 = vmatpush1.msra.mxu0 0.0
    %2332 = vmatprep.subr.mxu0 0.0
    %2333 = vmatpush1.msra.mxu0 0.0
    %2334 = vmatprep.subr.mxu0 0.0
    %2335 = vmatpush1.msra.mxu0 0.0
    %2336 = vmatprep.subr.mxu0 0.0
    %2337 = vmatpush1.msra.mxu0 0.0
    %2338 = vmatprep.subr.mxu0 0.0
    %2339 = vmatpush1.msra.mxu0 0.0
    %2340 = vmatprep.subr.mxu0 0.0
    %2341 = vmatpush1.msra.mxu0 0.0
    %2342 = vmatprep.subr.mxu0 0.0
    %2343 = vmatpush1.msra.mxu0 0.0
    %2344 = vmatprep.subr.mxu0 0.0
    %2345 = vmatpush1.msra.mxu0 0.0
    %2346 = vmatprep.subr.mxu0 0.0
    %2347 = vmatpush1.msra.mxu0 0.0
    %2348 = vmatprep.subr.mxu0 0.0
    %2349 = vmatpush1.msra.mxu0 0.0
    %2350 = vmatprep.subr.mxu0 0.0
    %2351 = vmatpush1.msra.mxu0 0.0
    %2352 = vmatprep.subr.mxu0 0.0
    %2353 = vmatpush1.msra.mxu0 0.0
    %2354 = vmatprep.subr.mxu0 0.0
    %2355 = vmatpush1.msra.mxu0 0.0
    %2356 = vmatprep.subr.mxu0 0.0
    %2357 = vmatpush1.msra.mxu0 0.0
    %2358 = vmatprep.subr.mxu0 0.0
    %2359 = vmatpush1.msra.mxu0 0.0
    %2360 = vmatprep.mubr.f32.mxu0 0.0
    %2361 = vmatmul.mubr.f32.gmra.mrb[0].mxu0 %v2291
    %v2362 = vpop.f32.mrb[0].mxu0
    %v2363 = vadd.f32 0.0, %v2362
    %v2364 = vpop.f32.mrb[0].mxu0
    %2365 = vmatprep.mubr.f32.mxu0 0.0
    %2366 = vmatmul.mubr.f32.gmra.mrb[0].mxu0 %v2294
    %v2367 = vpop.f32.mrb[0].mxu0
    %v2368 = vadd.f32 0.0, %v2367
    %v2369 = vpop.f32.mrb[0].mxu0
    %2370 = vdwg.mxu0
    %v2371 = vadd.f32 %v2075, %v2363
    %v2372 = vadd.f32 %v2080, %v2368
    %2373 = vrot.lane.b32.xlu0 %v1401, 104
    %v2374 = vpop.permute.xlu0 %2373
    %2375 = vrot.lane.b32.xlu0 %v1406, 104
    %v2376 = vpop.permute.xlu0 %2375
    %2377 = vrot.lane.b32.xlu0 %v1494, 104
    %v2378 = vpop.permute.xlu0 %2377
    %2379 = vrot.lane.b32.xlu0 %v1499, 104
    %v2380 = vpop.permute.xlu0 %2379
    %2381 = vrot.lane.b32.xlu0 %v1504, 104
    %v2382 = vpop.permute.xlu0 %2381
    %v2383 = vsel %vm147, %v2374, 0
    %v2385 = vsel %vm147, %v2376, 0
    %v2387 = vsel %vm147, %v2378, 0
    %v2389 = vsel %vm147, %v2380, 0
    %v2391 = vsel %vm147, %v2382, 0
    %2393 = vmatprep.subr.mxu0 0.0
    %2394 = vmatpush1.xpose.msra.mxu0 %v2387
    %2395 = vmatprep.subr.mxu0 0.0
    %2396 = vmatpush1.xpose.msra.mxu0 %v2389
    %2397 = vmatprep.subr.mxu0 0.0
    %2398 = vmatpush1.xpose.msra.mxu0 %v2391
    %2399 = vmatprep.subr.mxu0 0.0
    %2400 = vmatpush1.xpose.msra.mxu0 0.0
    %2401 = vmatprep.subr.mxu0 0.0
    %2402 = vmatpush1.xpose.msra.mxu0 0.0
    %2403 = vmatprep.subr.mxu0 0.0
    %2404 = vmatpush1.xpose.msra.mxu0 0.0
    %2405 = vmatprep.subr.mxu0 0.0
    %2406 = vmatpush1.xpose.msra.mxu0 0.0
    %2407 = vmatprep.subr.mxu0 0.0
    %2408 = vmatpush1.xpose.msra.mxu0 0.0
    %2409 = vmatprep.subr.mxu0 0.0
    %2410 = vmatpush1.xpose.msra.mxu0 0.0
    %2411 = vmatprep.subr.mxu0 0.0
    %2412 = vmatpush1.xpose.msra.mxu0 0.0
    %2413 = vmatprep.subr.mxu0 0.0
    %2414 = vmatpush1.xpose.msra.mxu0 0.0
    %2415 = vmatprep.subr.mxu0 0.0
    %2416 = vmatpush1.xpose.msra.mxu0 0.0
    %2417 = vmatprep.subr.mxu0 0.0
    %2418 = vmatpush1.xpose.msra.mxu0 0.0
    %2419 = vmatprep.subr.mxu0 0.0
    %2420 = vmatpush1.xpose.msra.mxu0 0.0
    %2421 = vmatprep.subr.mxu0 0.0
    %2422 = vmatpush1.xpose.msra.mxu0 0.0
    %2423 = vmatprep.subr.mxu0 0.0
    %2424 = vmatpush1.xpose.msra.mxu0 0.0
    %2425 = vmatprep.subr.mxu0 0.0
    %2426 = vmatpush1.xpose.msra.mxu0 0.0
    %2427 = vmatprep.subr.mxu0 0.0
    %2428 = vmatpush1.xpose.msra.mxu0 0.0
    %2429 = vmatprep.subr.mxu0 0.0
    %2430 = vmatpush1.xpose.msra.mxu0 0.0
    %2431 = vmatprep.subr.mxu0 0.0
    %2432 = vmatpush1.xpose.msra.mxu0 0.0
    %2433 = vmatprep.subr.mxu0 0.0
    %2434 = vmatpush1.xpose.msra.mxu0 0.0
    %2435 = vmatprep.subr.mxu0 0.0
    %2436 = vmatpush1.xpose.msra.mxu0 0.0
    %2437 = vmatprep.subr.mxu0 0.0
    %2438 = vmatpush1.xpose.msra.mxu0 0.0
    %2439 = vmatprep.subr.mxu0 0.0
    %2440 = vmatpush1.xpose.msra.mxu0 0.0
    %2441 = vmatprep.subr.mxu0 0.0
    %2442 = vmatpush1.xpose.msra.mxu0 0.0
    %2443 = vmatprep.subr.mxu0 0.0
    %2444 = vmatpush1.xpose.msra.mxu0 0.0
    %2445 = vmatprep.subr.mxu0 0.0
    %2446 = vmatpush1.xpose.msra.mxu0 0.0
    %2447 = vmatprep.subr.mxu0 0.0
    %2448 = vmatpush1.xpose.msra.mxu0 0.0
    %2449 = vmatprep.subr.mxu0 0.0
    %2450 = vmatpush1.xpose.msra.mxu0 0.0
    %2451 = vmatprep.subr.mxu0 0.0
    %2452 = vmatpush1.xpose.msra.mxu0 0.0
    %2453 = vmatprep.subr.mxu0 0.0
    %2454 = vmatpush1.xpose.msra.mxu0 0.0
    %2455 = vmatprep.subr.mxu0 0.0
    %2456 = vmatpush1.xpose.msra.mxu0 0.0
    %2457 = vmatprep.mubr.f32.mxu0 0.0
    %2458 = vmatmul.mubr.f32.gmra.mrb[0].mxu0 %v2383
    %v2459 = vpop.f32.mrb[0].mxu0
    %v2460 = vadd.f32 %v38, %v2459
    %v2461 = vpop.f32.mrb[0].mxu0
    %2462 = vmatprep.mubr.f32.mxu0 0.0
    %2463 = vmatmul.mubr.f32.gmra.mrb[0].mxu0 %v2385
    %v2464 = vpop.f32.mrb[0].mxu0
    %v2465 = vadd.f32 %v39, %v2464
    %v2466 = vpop.f32.mrb[0].mxu0
    %2467 = vdwg.mxu0
    %v2468 = vsel %vm1601, %v2460, -inf
    %2469 = vmax.xlane.f32.xlu0 %v2468
    %v2470 = vpop.xlane.xlu0 %2469
    %v2471 = vsel %vm1601, %v2465, -inf
    %2472 = vmax.xlane.f32.xlu0 %v2471
    %v2473 = vpop.xlane.xlu0 %2472
    %v2474 = vsub.f32 %v2460, %v2470
    %v2475 = vsub.f32 %v2465, %v2473
    %v2476 = vmul.f32 %v2474, 1.442695
    %v2477 = vpow.pop %v2476
    %v2478 = vmul.f32 %v2475, 1.442695
    %v2479 = vpow.pop %v2478
    %v2480 = vsel %vm1601, %v2477, 0.0
    %2481 = vadd.xlane.f32.xlu0 %v2480
    %v2482 = vpop.xlane.xlu0 %2481
    %v2483 = vsel %vm1601, %v2479, 0.0
    %2484 = vadd.xlane.f32.xlu0 %v2483
    %v2485 = vpop.xlane.xlu0 %2484
    %v2486 = vrcp.pop %v2482
    %v2487 = vrcp.pop %v2485
    %v2488 = vmul.f32 %v2477, %v2486
    %v2489 = vmul.f32 %v2479, %v2487
    %2490 = vrot.lane.b32.xlu0 %v1494, 72
    %v2491 = vpop.permute.xlu0 %2490
    %2492 = vrot.lane.b32.xlu0 %v1499, 72
    %v2493 = vpop.permute.xlu0 %2492
    %2494 = vrot.lane.b32.xlu0 %v1504, 72
    %v2495 = vpop.permute.xlu0 %2494
    %v2500 = vsel %vm1601, %v2488, 0
    %v2503 = vsel %vm1601, %v2489, 0
    %2505 = vmatprep.subr.mxu0 0.0
    %2506 = vmatpush1.msra.mxu0 %v2491
    %2507 = vmatprep.subr.mxu0 0.0
    %2508 = vmatpush1.msra.mxu0 %v2493
    %2509 = vmatprep.subr.mxu0 0.0
    %2510 = vmatpush1.msra.mxu0 %v2495
    %2511 = vmatprep.subr.mxu0 0.0
    %2512 = vmatpush1.msra.mxu0 0.0
    %2513 = vmatprep.subr.mxu0 0.0
    %2514 = vmatpush1.msra.mxu0 0.0
    %2515 = vmatprep.subr.mxu0 0.0
    %2516 = vmatpush1.msra.mxu0 0.0
    %2517 = vmatprep.subr.mxu0 0.0
    %2518 = vmatpush1.msra.mxu0 0.0
    %2519 = vmatprep.subr.mxu0 0.0
    %2520 = vmatpush1.msra.mxu0 0.0
    %2521 = vmatprep.subr.mxu0 0.0
    %2522 = vmatpush1.msra.mxu0 0.0
    %2523 = vmatprep.subr.mxu0 0.0
    %2524 = vmatpush1.msra.mxu0 0.0
    %2525 = vmatprep.subr.mxu0 0.0
    %2526 = vmatpush1.msra.mxu0 0.0
    %2527 = vmatprep.subr.mxu0 0.0
    %2528 = vmatpush1.msra.mxu0 0.0
    %2529 = vmatprep.subr.mxu0 0.0
    %2530 = vmatpush1.msra.mxu0 0.0
    %2531 = vmatprep.subr.mxu0 0.0
    %2532 = vmatpush1.msra.mxu0 0.0
    %2533 = vmatprep.subr.mxu0 0.0
    %2534 = vmatpush1.msra.mxu0 0.0
    %2535 = vmatprep.subr.mxu0 0.0
    %2536 = vmatpush1.msra.mxu0 0.0
    %2537 = vmatprep.subr.mxu0 0.0
    %2538 = vmatpush1.msra.mxu0 0.0
    %2539 = vmatprep.subr.mxu0 0.0
    %2540 = vmatpush1.msra.mxu0 0.0
    %2541 = vmatprep.subr.mxu0 0.0
    %2542 = vmatpush1.msra.mxu0 0.0
    %2543 = vmatprep.subr.mxu0 0.0
    %2544 = vmatpush1.msra.mxu0 0.0
    %2545 = vmatprep.subr.mxu0 0.0
    %2546 = vmatpush1.msra.mxu0 0.0
    %2547 = vmatprep.subr.mxu0 0.0
    %2548 = vmatpush1.msra.mxu0 0.0
    %2549 = vmatprep.subr.mxu0 0.0
    %2550 = vmatpush1.msra.mxu0 0.0
    %2551 = vmatprep.subr.mxu0 0.0
    %2552 = vmatpush1.msra.mxu0 0.0
    %2553 = vmatprep.subr.mxu0 0.0
    %2554 = vmatpush1.msra.mxu0 0.0
    %2555 = vmatprep.subr.mxu0 0.0
    %2556 = vmatpush1.msra.mxu0 0.0
    %2557 = vmatprep.subr.mxu0 0.0
    %2558 = vmatpush1.msra.mxu0 0.0
    %2559 = vmatprep.subr.mxu0 0.0
    %2560 = vmatpush1.msra.mxu0 0.0
    %2561 = vmatprep.subr.mxu0 0.0
    %2562 = vmatpush1.msra.mxu0 0.0
    %2563 = vmatprep.subr.mxu0 0.0
    %2564 = vmatpush1.msra.mxu0 0.0
    %2565 = vmatprep.subr.mxu0 0.0
    %2566 = vmatpush1.msra.mxu0 0.0
    %2567 = vmatprep.subr.mxu0 0.0
    %2568 = vmatpush1.msra.mxu0 0.0
    %2569 = vmatprep.mubr.f32.mxu0 0.0
    %2570 = vmatmul.mubr.f32.gmra.mrb[0].mxu0 %v2500
    %v2571 = vpop.f32.mrb[0].mxu0
    %v2572 = vadd.f32 0.0, %v2571
    %v2573 = vpop.f32.mrb[0].mxu0
    %2574 = vmatprep.mubr.f32.mxu0 0.0
    %2575 = vmatmul.mubr.f32.gmra.mrb[0].mxu0 %v2503
    %v2576 = vpop.f32.mrb[0].mxu0
    %v2577 = vadd.f32 0.0, %v2576
    %v2578 = vpop.f32.mrb[0].mxu0
    %2579 = vdwg.mxu0
    %v2581 = vsel %vm147, %v2572, 0
    %v2584 = vsel %vm147, %v2577, 0
    %2586 = vmatprep.subr.mxu0 0.0
    %2587 = vmatpush1.msra.mxu0 %v1510
    %2588 = vmatprep.subr.mxu0 0.0
    %2589 = vmatpush1.msra.mxu0 0.0
    %2590 = vmatprep.subr.mxu0 0.0
    %2591 = vmatpush1.msra.mxu0 0.0
    %2592 = vmatprep.subr.mxu0 0.0
    %2593 = vmatpush1.msra.mxu0 0.0
    %2594 = vmatprep.subr.mxu0 0.0
    %2595 = vmatpush1.msra.mxu0 0.0
    %2596 = vmatprep.subr.mxu0 0.0
    %2597 = vmatpush1.msra.mxu0 0.0
    %2598 = vmatprep.subr.mxu0 0.0
    %2599 = vmatpush1.msra.mxu0 0.0
    %2600 = vmatprep.subr.mxu0 0.0
    %2601 = vmatpush1.msra.mxu0 0.0
    %2602 = vmatprep.subr.mxu0 0.0
    %2603 = vmatpush1.msra.mxu0 0.0
    %2604 = vmatprep.subr.mxu0 0.0
    %2605 = vmatpush1.msra.mxu0 0.0
    %2606 = vmatprep.subr.mxu0 0.0
    %2607 = vmatpush1.msra.mxu0 0.0
    %2608 = vmatprep.subr.mxu0 0.0
    %2609 = vmatpush1.msra.mxu0 0.0
    %2610 = vmatprep.subr.mxu0 0.0
    %2611 = vmatpush1.msra.mxu0 0.0
    %2612 = vmatprep.subr.mxu0 0.0
    %2613 = vmatpush1.msra.mxu0 0.0
    %2614 = vmatprep.subr.mxu0 0.0
    %2615 = vmatpush1.msra.mxu0 0.0
    %2616 = vmatprep.subr.mxu0 0.0
    %2617 = vmatpush1.msra.mxu0 0.0
    %2618 = vmatprep.subr.mxu0 0.0
    %2619 = vmatpush1.msra.mxu0 0.0
    %2620 = vmatprep.subr.mxu0 0.0
    %2621 = vmatpush1.msra.mxu0 0.0
    %2622 = vmatprep.subr.mxu0 0.0
    %2623 = vmatpush1.msra.mxu0 0.0
    %2624 = vmatprep.subr.mxu0 0.0
    %2625 = vmatpush1.msra.mxu0 0.0
    %2626 = vmatprep.subr.mxu0 0.0
    %2627 = vmatpush1.msra.mxu0 0.0
    %2628 = vmatprep.subr.mxu0 0.0
    %2629 = vmatpush1.msra.mxu0 0.0
    %2630 = vmatprep.subr.mxu0 0.0
    %2631 = vmatpush1.msra.mxu0 0.0
    %2632 = vmatprep.subr.mxu0 0.0
    %2633 = vmatpush1.msra.mxu0 0.0
    %2634 = vmatprep.subr.mxu0 0.0
    %2635 = vmatpush1.msra.mxu0 0.0
    %2636 = vmatprep.subr.mxu0 0.0
    %2637 = vmatpush1.msra.mxu0 0.0
    %2638 = vmatprep.subr.mxu0 0.0
    %2639 = vmatpush1.msra.mxu0 0.0
    %2640 = vmatprep.subr.mxu0 0.0
    %2641 = vmatpush1.msra.mxu0 0.0
    %2642 = vmatprep.subr.mxu0 0.0
    %2643 = vmatpush1.msra.mxu0 0.0
    %2644 = vmatprep.subr.mxu0 0.0
    %2645 = vmatpush1.msra.mxu0 0.0
    %2646 = vmatprep.subr.mxu0 0.0
    %2647 = vmatpush1.msra.mxu0 0.0
    %2648 = vmatprep.subr.mxu0 0.0
    %2649 = vmatpush1.msra.mxu0 0.0
    %2650 = vmatprep.mubr.f32.mxu0 0.0
    %2651 = vmatmul.mubr.f32.gmra.mrb[0].mxu0 %v2581
    %v2652 = vpop.f32.mrb[0].mxu0
    %v2653 = vadd.f32 0.0, %v2652
    %v2654 = vpop.f32.mrb[0].mxu0
    %2655 = vmatprep.mubr.f32.mxu0 0.0
    %2656 = vmatmul.mubr.f32.gmra.mrb[0].mxu0 %v2584
    %v2657 = vpop.f32.mrb[0].mxu0
    %v2658 = vadd.f32 0.0, %v2657
    %v2659 = vpop.f32.mrb[0].mxu0
    %2660 = vdwg.mxu0
    %v2661 = vadd.f32 %v2371, %v2653
    %v2662 = vadd.f32 %v2372, %v2658
    %v2663 = vld [vmem:[#allocation2 + $0xc0] sm:$0x1]
    %v2664 = vlaneseq
    %v2665 = vshrl.u32 %v2664, 7
    %v2666 = vsub.s32 0, %v2665
    %v2667 = vrot.slane %v2663, %v2666
    %v2668 = vadd.f32 %v2661, %v2667
    %v2669 = vadd.f32 %v2662, %v2667
    %v2670 = vadd.f32 %v1317, %v2668
    %v2671 = vadd.f32 %v1318, %v2669
    %v2672 = vld [vmem:[#allocation2 + $0x148] sm:$0x1]
    %v2673 = vld [vmem:[#allocation2 + $0x150] sm:$0x1]
    %v2674 = vsel %vm55, %v2670, 0.0
    %2675 = vadd.xlane.f32.xlu0 %v2674
    %v2676 = vpop.xlane.xlu0 %2675
    %v2677 = vsel %vm55, %v2671, 0.0
    %2678 = vadd.xlane.f32.xlu0 %v2677
    %v2679 = vpop.xlane.xlu0 %2678
    %v2680 = vmul.f32 %v2676, %v1286
    %v2681 = vmul.f32 %v2679, %v1286
    %v2682 = vsub.f32 %v2670, %v2680
    %v2683 = vsub.f32 %v2671, %v2681
    %v2684 = vmul.f32 %v2682, %v2682
    %v2685 = vmul.f32 %v2683, %v2683
    %v2686 = vsel %vm55, %v2684, 0.0
    %2687 = vadd.xlane.f32.xlu0 %v2686
    %v2688 = vpop.xlane.xlu0 %2687
    %v2689 = vsel %vm55, %v2685, 0.0
    %2690 = vadd.xlane.f32.xlu0 %v2689
    %v2691 = vpop.xlane.xlu0 %2690
    %v2692 = vmul.f32 %v2688, %v1286
    %v2693 = vmul.f32 %v2691, %v1286
    %v2694 = vadd.f32 %v2692, 1e-05
    %v2695 = vadd.f32 %v2693, 1e-05
    %v2696 = vrsqrt.pop %v2694
    %v2697 = vrsqrt.pop %v2695
    %v2698 = vmul.f32 %v2682, %v2696
    %v2699 = vmul.f32 %v2683, %v2697
    %v2700 = vlaneseq
    %v2701 = vshrl.u32 %v2700, 7
    %v2702 = vsub.s32 0, %v2701
    %v2703 = vrot.slane %v2672, %v2702
    %v2704 = vmul.f32 %v2698, %v2703
    %v2705 = vmul.f32 %v2699, %v2703
    %v2706 = vlaneseq
    %v2707 = vshrl.u32 %v2706, 7
    %v2708 = vsub.s32 0, %v2707
    %v2709 = vrot.slane %v2673, %v2708
    %v2710 = vadd.f32 %v2704, %v2709
    %v2711 = vadd.f32 %v2705, %v2709
    %v2712 = vld [vmem:[#allocation2 + $0xc8] sm:$0xff]
    %v2713 = vld [vmem:[#allocation2 + $0xd0] sm:$0xff]
    %v2714 = vld [vmem:[#allocation2 + $0xd8] sm:$0xff]
    %v2715 = vld [vmem:[#allocation2 + $0xe0] sm:$0xff]
    %v2716 = vld [vmem:[#allocation2 + $0xe8] sm:$0x1]
    %v2717 = vlaneseq
    %v2718 = vshrl.u32 %v2717, 7
    %v2719 = vsub.s32 0, %v2718
    %v2720 = vrot.slane %v2716, %v2719
    %v2722 = vsel %vm55, %v2710, 0
    %v2725 = vsel %vm55, %v2711, 0
    %2727 = vmatprep.subr.mxu0 0.0
    %2728 = vmatpush1.msra.mxu0 %v2712
    %2729 = vmatprep.subr.mxu0 0.0
    %2730 = vmatpush1.msra.mxu0 %v2713
    %2731 = vmatprep.subr.mxu0 0.0
    %2732 = vmatpush1.msra.mxu0 %v2714
    %2733 = vmatprep.subr.mxu0 0.0
    %2734 = vmatpush1.msra.mxu0 %v2715
    %2735 = vmatprep.subr.mxu0 0.0
    %2736 = vmatpush1.msra.mxu0 0.0
    %2737 = vmatprep.subr.mxu0 0.0
    %2738 = vmatpush1.msra.mxu0 0.0
    %2739 = vmatprep.subr.mxu0 0.0
    %2740 = vmatpush1.msra.mxu0 0.0
    %2741 = vmatprep.subr.mxu0 0.0
    %2742 = vmatpush1.msra.mxu0 0.0
    %2743 = vmatprep.subr.mxu0 0.0
    %2744 = vmatpush1.msra.mxu0 0.0
    %2745 = vmatprep.subr.mxu0 0.0
    %2746 = vmatpush1.msra.mxu0 0.0
    %2747 = vmatprep.subr.mxu0 0.0
    %2748 = vmatpush1.msra.mxu0 0.0
    %2749 = vmatprep.subr.mxu0 0.0
    %2750 = vmatpush1.msra.mxu0 0.0
    %2751 = vmatprep.subr.mxu0 0.0
    %2752 = vmatpush1.msra.mxu0 0.0
    %2753 = vmatprep.subr.mxu0 0.0
    %2754 = vmatpush1.msra.mxu0 0.0
    %2755 = vmatprep.subr.mxu0 0.0
    %2756 = vmatpush1.msra.mxu0 0.0
    %2757 = vmatprep.subr.mxu0 0.0
    %2758 = vmatpush1.msra.mxu0 0.0
    %2759 = vmatprep.subr.mxu0 0.0
    %2760 = vmatpush1.msra.mxu0 0.0
    %2761 = vmatprep.subr.mxu0 0.0
    %2762 = vmatpush1.msra.mxu0 0.0
    %2763 = vmatprep.subr.mxu0 0.0
    %2764 = vmatpush1.msra.mxu0 0.0
    %2765 = vmatprep.subr.mxu0 0.0
    %2766 = vmatpush1.msra.mxu0 0.0
    %2767 = vmatprep.subr.mxu0 0.0
    %2768 = vmatpush1.msra.mxu0 0.0
    %2769 = vmatprep.subr.mxu0 0.0
    %2770 = vmatpush1.msra.mxu0 0.0
    %2771 = vmatprep.subr.mxu0 0.0
    %2772 = vmatpush1.msra.mxu0 0.0
    %2773 = vmatprep.subr.mxu0 0.0
    %2774 = vmatpush1.msra.mxu0 0.0
    %2775 = vmatprep.subr.mxu0 0.0
    %2776 = vmatpush1.msra.mxu0 0.0
    %2777 = vmatprep.subr.mxu0 0.0
    %2778 = vmatpush1.msra.mxu0 0.0
    %2779 = vmatprep.subr.mxu0 0.0
    %2780 = vmatpush1.msra.mxu0 0.0
    %2781 = vmatprep.subr.mxu0 0.0
    %2782 = vmatpush1.msra.mxu0 0.0
    %2783 = vmatprep.subr.mxu0 0.0
    %2784 = vmatpush1.msra.mxu0 0.0
    %2785 = vmatprep.subr.mxu0 0.0
    %2786 = vmatpush1.msra.mxu0 0.0
    %2787 = vmatprep.subr.mxu0 0.0
    %2788 = vmatpush1.msra.mxu0 0.0
    %2789 = vmatprep.subr.mxu0 0.0
    %2790 = vmatpush1.msra.mxu0 0.0
    %2791 = vmatprep.mubr.f32.mxu0 0.0
    %2792 = vmatmul.mubr.f32.gmra.mrb[0].mxu0 %v2722
    %v2793 = vpop.f32.mrb[0].mxu0
    %v2794 = vadd.f32 %v2720, %v2793
    %v2795 = vpop.f32.mrb[0].mxu0
    %2796 = vmatprep.mubr.f32.mxu0 0.0
    %2797 = vmatmul.mubr.f32.gmra.mrb[0].mxu0 %v2725
    %v2798 = vpop.f32.mrb[0].mxu0
    %v2799 = vadd.f32 %v2720, %v2798
    %v2800 = vpop.f32.mrb[0].mxu0
    %2801 = vdwg.mxu0
    %v2802 = vmax.f32 %v2794, 0.0
    %v2803 = vmax.f32 %v2799, 0.0
    %v2804 = vld [vmem:[#allocation2 + $0xf0] sm:$0xff]
    %v2805 = vld [vmem:[#allocation2 + $0xf8] sm:$0xff]
    %v2806 = vld [vmem:[#allocation2 + $0x100] sm:$0xff]
    %v2807 = vld [vmem:[#allocation2 + $0x108] sm:$0xff]
    %v2808 = vld [vmem:[#allocation2 + $0x110] sm:$0xff]
    %v2809 = vld [vmem:[#allocation2 + $0x118] sm:$0xff]
    %v2810 = vld [vmem:[#allocation2 + $0x120] sm:$0xff]
    %v2811 = vld [vmem:[#allocation2 + $0x128] sm:$0xff]
    %v2812 = vld [vmem:[#allocation2 + $0x130] sm:$0x1]
    %v2813 = vlaneseq
    %v2814 = vshrl.u32 %v2813, 7
    %v2815 = vsub.s32 0, %v2814
    %v2816 = vrot.slane %v2812, %v2815
    %vm2817 = vcmask 523264
    %v2819 = vsel %vm2817, %v2802, 0
    %v2822 = vsel %vm2817, %v2803, 0
    %2824 = vmatprep.subr.mxu0 0.0
    %2825 = vmatpush1.msra.mxu0 %v2804
    %2826 = vmatprep.subr.mxu0 0.0
    %2827 = vmatpush1.msra.mxu0 %v2805
    %2828 = vmatprep.subr.mxu0 0.0
    %2829 = vmatpush1.msra.mxu0 %v2806
    %2830 = vmatprep.subr.mxu0 0.0
    %2831 = vmatpush1.msra.mxu0 %v2807
    %2832 = vmatprep.subr.mxu0 0.0
    %2833 = vmatpush1.msra.mxu0 %v2808
    %2834 = vmatprep.subr.mxu0 0.0
    %2835 = vmatpush1.msra.mxu0 %v2809
    %2836 = vmatprep.subr.mxu0 0.0
    %2837 = vmatpush1.msra.mxu0 %v2810
    %2838 = vmatprep.subr.mxu0 0.0
    %2839 = vmatpush1.msra.mxu0 %v2811
    %2840 = vmatprep.subr.mxu0 0.0
    %2841 = vmatpush1.msra.mxu0 0.0
    %2842 = vmatprep.subr.mxu0 0.0
    %2843 = vmatpush1.msra.mxu0 0.0
    %2844 = vmatprep.subr.mxu0 0.0
    %2845 = vmatpush1.msra.mxu0 0.0
    %2846 = vmatprep.subr.mxu0 0.0
    %2847 = vmatpush1.msra.mxu0 0.0
    %2848 = vmatprep.subr.mxu0 0.0
    %2849 = vmatpush1.msra.mxu0 0.0
    %2850 = vmatprep.subr.mxu0 0.0
    %2851 = vmatpush1.msra.mxu0 0.0
    %2852 = vmatprep.subr.mxu0 0.0
    %2853 = vmatpush1.msra.mxu0 0.0
    %2854 = vmatprep.subr.mxu0 0.0
    %2855 = vmatpush1.msra.mxu0 0.0
    %2856 = vmatprep.subr.mxu0 0.0
    %2857 = vmatpush1.msra.mxu0 0.0
    %2858 = vmatprep.subr.mxu0 0.0
    %2859 = vmatpush1.msra.mxu0 0.0
    %2860 = vmatprep.subr.mxu0 0.0
    %2861 = vmatpush1.msra.mxu0 0.0
    %2862 = vmatprep.subr.mxu0 0.0
    %2863 = vmatpush1.msra.mxu0 0.0
    %2864 = vmatprep.subr.mxu0 0.0
    %2865 = vmatpush1.msra.mxu0 0.0
    %2866 = vmatprep.subr.mxu0 0.0
    %2867 = vmatpush1.msra.mxu0 0.0
    %2868 = vmatprep.subr.mxu0 0.0
    %2869 = vmatpush1.msra.mxu0 0.0
    %2870 = vmatprep.subr.mxu0 0.0
    %2871 = vmatpush1.msra.mxu0 0.0
    %2872 = vmatprep.subr.mxu0 0.0
    %2873 = vmatpush1.msra.mxu0 0.0
    %2874 = vmatprep.subr.mxu0 0.0
    %2875 = vmatpush1.msra.mxu0 0.0
    %2876 = vmatprep.subr.mxu0 0.0
    %2877 = vmatpush1.msra.mxu0 0.0
    %2878 = vmatprep.subr.mxu0 0.0
    %2879 = vmatpush1.msra.mxu0 0.0
    %2880 = vmatprep.subr.mxu0 0.0
    %2881 = vmatpush1.msra.mxu0 0.0
    %2882 = vmatprep.subr.mxu0 0.0
    %2883 = vmatpush1.msra.mxu0 0.0
    %2884 = vmatprep.subr.mxu0 0.0
    %2885 = vmatpush1.msra.mxu0 0.0
    %2886 = vmatprep.subr.mxu0 0.0
    %2887 = vmatpush1.msra.mxu0 0.0
    %2888 = vmatprep.mubr.f32.mxu0 0.0
    %2889 = vmatmul.mubr.f32.gmra.mrb[0].mxu0 %v2819
    %v2890 = vpop.f32.mrb[0].mxu0
    %v2891 = vadd.f32 %v2816, %v2890
    %v2892 = vpop.f32.mrb[0].mxu0
    %2893 = vmatprep.mubr.f32.mxu0 0.0
    %2894 = vmatmul.mubr.f32.gmra.mrb[0].mxu0 %v2822
    %v2895 = vpop.f32.mrb[0].mxu0
    %v2896 = vadd.f32 %v2816, %v2895
    %v2897 = vpop.f32.mrb[0].mxu0
    %2898 = vdwg.mxu0
    %v2899 = vadd.f32 %v2710, %v2891
    %v2900 = vadd.f32 %v2711, %v2896
    %v2901 = vld [vmem:[#allocation2 + $0x158] sm:$0x1]
    %v2902 = vld [vmem:[#allocation2 + $0x160] sm:$0x1]
    %v2903 = vsel %vm55, %v2899, 0.0
    %2904 = vadd.xlane.f32.xlu0 %v2903
    %v2905 = vpop.xlane.xlu0 %2904
    %v2906 = vsel %vm55, %v2900, 0.0
    %2907 = vadd.xlane.f32.xlu0 %v2906
    %v2908 = vpop.xlane.xlu0 %2907
    %v2909 = vmul.f32 %v2905, %v1286
    %v2910 = vmul.f32 %v2908, %v1286
    %v2911 = vsub.f32 %v2899, %v2909
    %v2912 = vsub.f32 %v2900, %v2910
    %v2913 = vmul.f32 %v2911, %v2911
    %v2914 = vmul.f32 %v2912, %v2912
    %v2915 = vsel %vm55, %v2913, 0.0
    %2916 = vadd.xlane.f32.xlu0 %v2915
    %v2917 = vpop.xlane.xlu0 %2916
    %v2918 = vsel %vm55, %v2914, 0.0
    %2919 = vadd.xlane.f32.xlu0 %v2918
    %v2920 = vpop.xlane.xlu0 %2919
    %v2921 = vmul.f32 %v2917, %v1286
    %v2922 = vmul.f32 %v2920, %v1286
    %v2923 = vadd.f32 %v2921, 1e-05
    %v2924 = vadd.f32 %v2922, 1e-05
    %v2925 = vrsqrt.pop %v2923
    %v2926 = vrsqrt.pop %v2924
    %v2927 = vmul.f32 %v2911, %v2925
    %v2928 = vmul.f32 %v2912, %v2926
    %v2929 = vlaneseq
    %v2930 = vshrl.u32 %v2929, 7
    %v2931 = vsub.s32 0, %v2930
    %v2932 = vrot.slane %v2901, %v2931
    %v2933 = vmul.f32 %v2927, %v2932
    %v2934 = vmul.f32 %v2928, %v2932
    %v2935 = vlaneseq
    %v2936 = vshrl.u32 %v2935, 7
    %v2937 = vsub.s32 0, %v2936
    %v2938 = vrot.slane %v2902, %v2937
    %v2939 = vadd.f32 %v2933, %v2938
    %v2940 = vadd.f32 %v2934, %v2938
    %v2941 = vld [vmem:[#allocation2 + $0x168] sm:$0xff]
    %v2942 = vld [vmem:[#allocation2 + $0x170] sm:$0xff]
    %v2943 = vld [vmem:[#allocation2 + $0x178] sm:$0xff]
    %v2944 = vld [vmem:[#allocation2 + $0x180] sm:$0xff]
    %v2945 = vld [vmem:[#allocation2 + $0x188] sm:$0x1]
    %v2946 = vlaneseq
    %v2947 = vshrl.u32 %v2946, 7
    %v2948 = vsub.s32 0, %v2947
    %v2949 = vrot.slane %v2945, %v2948
    %2950 = vmatprep.subr.mxu0 0.0
    %2951 = vmatpush1.msra.mxu0 %v2941
    %2952 = vmatprep.subr.mxu0 0.0
    %2953 = vmatpush1.msra.mxu0 %v2942
    %2954 = vmatprep.subr.mxu0 0.0
    %2955 = vmatpush1.msra.mxu0 %v2943
    %2956 = vmatprep.subr.mxu0 0.0
    %2957 = vmatpush1.msra.mxu0 %v2944
    %2958 = vmatprep.subr.mxu0 0.0
    %2959 = vmatpush1.msra.mxu0 0.0
    %2960 = vmatprep.subr.mxu0 0.0
    %2961 = vmatpush1.msra.mxu0 0.0
    %2962 = vmatprep.subr.mxu0 0.0
    %2963 = vmatpush1.msra.mxu0 0.0
    %2964 = vmatprep.subr.mxu0 0.0
    %2965 = vmatpush1.msra.mxu0 0.0
    %2966 = vmatprep.subr.mxu0 0.0
    %2967 = vmatpush1.msra.mxu0 0.0
    %2968 = vmatprep.subr.mxu0 0.0
    %2969 = vmatpush1.msra.mxu0 0.0
    %2970 = vmatprep.subr.mxu0 0.0
    %2971 = vmatpush1.msra.mxu0 0.0
    %2972 = vmatprep.subr.mxu0 0.0
    %2973 = vmatpush1.msra.mxu0 0.0
    %2974 = vmatprep.subr.mxu0 0.0
    %2975 = vmatpush1.msra.mxu0 0.0
    %2976 = vmatprep.subr.mxu0 0.0
    %2977 = vmatpush1.msra.mxu0 0.0
    %2978 = vmatprep.subr.mxu0 0.0
    %2979 = vmatpush1.msra.mxu0 0.0
    %2980 = vmatprep.subr.mxu0 0.0
    %2981 = vmatpush1.msra.mxu0 0.0
    %2982 = vmatprep.subr.mxu0 0.0
    %2983 = vmatpush1.msra.mxu0 0.0
    %2984 = vmatprep.subr.mxu0 0.0
    %2985 = vmatpush1.msra.mxu0 0.0
    %2986 = vmatprep.subr.mxu0 0.0
    %2987 = vmatpush1.msra.mxu0 0.0
    %2988 = vmatprep.subr.mxu0 0.0
    %2989 = vmatpush1.msra.mxu0 0.0
    %2990 = vmatprep.subr.mxu0 0.0
    %2991 = vmatpush1.msra.mxu0 0.0
    %2992 = vmatprep.subr.mxu0 0.0
    %2993 = vmatpush1.msra.mxu0 0.0
    %2994 = vmatprep.subr.mxu0 0.0
    %2995 = vmatpush1.msra.mxu0 0.0
    %2996 = vmatprep.subr.mxu0 0.0
    %2997 = vmatpush1.msra.mxu0 0.0
    %2998 = vmatprep.subr.mxu0 0.0
    %2999 = vmatpush1.msra.mxu0 0.0
    %3000 = vmatprep.subr.mxu0 0.0
    %3001 = vmatpush1.msra.mxu0 0.0
    %3002 = vmatprep.subr.mxu0 0.0
    %3003 = vmatpush1.msra.mxu0 0.0
    %3004 = vmatprep.subr.mxu0 0.0
    %3005 = vmatpush1.msra.mxu0 0.0
    %3006 = vmatprep.subr.mxu0 0.0
    %3007 = vmatpush1.msra.mxu0 0.0
    %3008 = vmatprep.subr.mxu0 0.0
    %3009 = vmatpush1.msra.mxu0 0.0
    %3010 = vmatprep.subr.mxu0 0.0
    %3011 = vmatpush1.msra.mxu0 0.0
    %3012 = vmatprep.subr.mxu0 0.0
    %3013 = vmatpush1.msra.mxu0 0.0
    %3014 = vmatprep.mubr.f32.mxu0 0.0
    %3015 = vmatmul.mubr.f32.gmra.mrb[0].mxu0 %v1419
    %v3016 = vpop.f32.mrb[0].mxu0
    %v3017 = vadd.f32 %v2949, %v3016
    %v3018 = vpop.f32.mrb[0].mxu0
    %3019 = vmatprep.mubr.f32.mxu0 0.0
    %3020 = vmatmul.mubr.f32.gmra.mrb[0].mxu0 %v1422
    %v3021 = vpop.f32.mrb[0].mxu0
    %v3022 = vadd.f32 %v2949, %v3021
    %v3023 = vpop.f32.mrb[0].mxu0
    %3024 = vmatprep.mubr.f32.mxu0 0.0
    %3025 = vmatmul.mubr.f32.gmra.mrb[0].mxu0 %v1425
    %v3026 = vpop.f32.mrb[0].mxu0
    %v3027 = vadd.f32 %v2949, %v3026
    %v3028 = vpop.f32.mrb[0].mxu0
    %3029 = vdwg.mxu0
    %v3030 = vld [vmem:[#allocation2 + $0x190] sm:$0xff]
    %v3031 = vld [vmem:[#allocation2 + $0x198] sm:$0xff]
    %v3032 = vld [vmem:[#allocation2 + $0x1a0] sm:$0xff]
    %v3033 = vld [vmem:[#allocation2 + $0x1a8] sm:$0xff]
    %3037 = vrot.lane.b32.xlu0 %v3017, 96
    %v3038 = vpop.permute.xlu0 %3037
    %3039 = vrot.lane.b32.xlu0 %v3022, 96
    %v3040 = vpop.permute.xlu0 %3039
    %3041 = vrot.lane.b32.xlu0 %v3027, 96
    %v3042 = vpop.permute.xlu0 %3041
    %v3043 = vsel %vm147, %v3017, 0
    %v3045 = vsel %vm147, %v3022, 0
    %v3047 = vsel %vm147, %v3027, 0
    %v3049 = vsel %vm147, %v3038, 0
    %v3051 = vsel %vm147, %v3040, 0
    %v3053 = vsel %vm147, %v3042, 0
    %3055 = vmatprep.subr.mxu0 0.0
    %3056 = vmatpush1.xpose.msra.mxu0 %v3049
    %3057 = vmatprep.subr.mxu0 0.0
    %3058 = vmatpush1.xpose.msra.mxu0 %v3051
    %3059 = vmatprep.subr.mxu0 0.0
    %3060 = vmatpush1.xpose.msra.mxu0 %v3053
    %3061 = vmatprep.subr.mxu0 0.0
    %3062 = vmatpush1.xpose.msra.mxu0 0.0
    %3063 = vmatprep.subr.mxu0 0.0
    %3064 = vmatpush1.xpose.msra.mxu0 0.0
    %3065 = vmatprep.subr.mxu0 0.0
    %3066 = vmatpush1.xpose.msra.mxu0 0.0
    %3067 = vmatprep.subr.mxu0 0.0
    %3068 = vmatpush1.xpose.msra.mxu0 0.0
    %3069 = vmatprep.subr.mxu0 0.0
    %3070 = vmatpush1.xpose.msra.mxu0 0.0
    %3071 = vmatprep.subr.mxu0 0.0
    %3072 = vmatpush1.xpose.msra.mxu0 0.0
    %3073 = vmatprep.subr.mxu0 0.0
    %3074 = vmatpush1.xpose.msra.mxu0 0.0
    %3075 = vmatprep.subr.mxu0 0.0
    %3076 = vmatpush1.xpose.msra.mxu0 0.0
    %3077 = vmatprep.subr.mxu0 0.0
    %3078 = vmatpush1.xpose.msra.mxu0 0.0
    %3079 = vmatprep.subr.mxu0 0.0
    %3080 = vmatpush1.xpose.msra.mxu0 0.0
    %3081 = vmatprep.subr.mxu0 0.0
    %3082 = vmatpush1.xpose.msra.mxu0 0.0
    %3083 = vmatprep.subr.mxu0 0.0
    %3084 = vmatpush1.xpose.msra.mxu0 0.0
    %3085 = vmatprep.subr.mxu0 0.0
    %3086 = vmatpush1.xpose.msra.mxu0 0.0
    %3087 = vmatprep.subr.mxu0 0.0
    %3088 = vmatpush1.xpose.msra.mxu0 0.0
    %3089 = vmatprep.subr.mxu0 0.0
    %3090 = vmatpush1.xpose.msra.mxu0 0.0
    %3091 = vmatprep.subr.mxu0 0.0
    %3092 = vmatpush1.xpose.msra.mxu0 0.0
    %3093 = vmatprep.subr.mxu0 0.0
    %3094 = vmatpush1.xpose.msra.mxu0 0.0
    %3095 = vmatprep.subr.mxu0 0.0
    %3096 = vmatpush1.xpose.msra.mxu0 0.0
    %3097 = vmatprep.subr.mxu0 0.0
    %3098 = vmatpush1.xpose.msra.mxu0 0.0
    %3099 = vmatprep.subr.mxu0 0.0
    %3100 = vmatpush1.xpose.msra.mxu0 0.0
    %3101 = vmatprep.subr.mxu0 0.0
    %3102 = vmatpush1.xpose.msra.mxu0 0.0
    %3103 = vmatprep.subr.mxu0 0.0
    %3104 = vmatpush1.xpose.msra.mxu0 0.0
    %3105 = vmatprep.subr.mxu0 0.0
    %3106 = vmatpush1.xpose.msra.mxu0 0.0
    %3107 = vmatprep.subr.mxu0 0.0
    %3108 = vmatpush1.xpose.msra.mxu0 0.0
    %3109 = vmatprep.subr.mxu0 0.0
    %3110 = vmatpush1.xpose.msra.mxu0 0.0
    %3111 = vmatprep.subr.mxu0 0.0
    %3112 = vmatpush1.xpose.msra.mxu0 0.0
    %3113 = vmatprep.subr.mxu0 0.0
    %3114 = vmatpush1.xpose.msra.mxu0 0.0
    %3115 = vmatprep.subr.mxu0 0.0
    %3116 = vmatpush1.xpose.msra.mxu0 0.0
    %3117 = vmatprep.subr.mxu0 0.0
    %3118 = vmatpush1.xpose.msra.mxu0 0.0
    %3119 = vmatprep.mubr.f32.mxu0 0.0
    %3120 = vmatmul.mubr.f32.gmra.mrb[0].mxu0 %v3043
    %v3121 = vpop.f32.mrb[0].mxu0
    %v3122 = vadd.f32 %v40, %v3121
    %v3123 = vpop.f32.mrb[0].mxu0
    %3124 = vmatprep.mubr.f32.mxu0 0.0
    %3125 = vmatmul.mubr.f32.gmra.mrb[0].mxu0 %v3045
    %v3126 = vpop.f32.mrb[0].mxu0
    %v3127 = vadd.f32 %v41, %v3126
    %v3128 = vpop.f32.mrb[0].mxu0
    %3129 = vmatprep.mubr.f32.mxu0 0.0
    %3130 = vmatmul.mubr.f32.gmra.mrb[0].mxu0 %v3047
    %v3131 = vpop.f32.mrb[0].mxu0
    %v3132 = vadd.f32 %v42, %v3131
    %v3133 = vpop.f32.mrb[0].mxu0
    %3134 = vdwg.mxu0
    %v3135 = vsel %vm1601, %v3122, -inf
    %3136 = vmax.xlane.f32.xlu0 %v3135
    %v3137 = vpop.xlane.xlu0 %3136
    %v3138 = vsel %vm1601, %v3127, -inf
    %3139 = vmax.xlane.f32.xlu0 %v3138
    %v3140 = vpop.xlane.xlu0 %3139
    %v3141 = vsel %vm1601, %v3132, -inf
    %3142 = vmax.xlane.f32.xlu0 %v3141
    %v3143 = vpop.xlane.xlu0 %3142
    %v3144 = vsub.f32 %v3122, %v3137
    %v3145 = vsub.f32 %v3127, %v3140
    %v3146 = vsub.f32 %v3132, %v3143
    %v3147 = vmul.f32 %v3144, 1.442695
    %v3148 = vpow.pop %v3147
    %v3149 = vmul.f32 %v3145, 1.442695
    %v3150 = vpow.pop %v3149
    %v3151 = vmul.f32 %v3146, 1.442695
    %v3152 = vpow.pop %v3151
    %v3153 = vsel %vm1601, %v3148, 0.0
    %3154 = vadd.xlane.f32.xlu0 %v3153
    %v3155 = vpop.xlane.xlu0 %3154
    %v3156 = vsel %vm1601, %v3150, 0.0
    %3157 = vadd.xlane.f32.xlu0 %v3156
    %v3158 = vpop.xlane.xlu0 %3157
    %v3159 = vsel %vm1601, %v3152, 0.0
    %3160 = vadd.xlane.f32.xlu0 %v3159
    %v3161 = vpop.xlane.xlu0 %3160
    %v3162 = vrcp.pop %v3155
    %v3163 = vrcp.pop %v3158
    %v3164 = vrcp.pop %v3161
    %v3165 = vmul.f32 %v3148, %v3162
    %v3166 = vmul.f32 %v3150, %v3163
    %v3167 = vmul.f32 %v3152, %v3164
    %3168 = vrot.lane.b32.xlu0 %v3017, 64
    %v3169 = vpop.permute.xlu0 %3168
    %3170 = vrot.lane.b32.xlu0 %v3022, 64
    %v3171 = vpop.permute.xlu0 %3170
    %3172 = vrot.lane.b32.xlu0 %v3027, 64
    %v3173 = vpop.permute.xlu0 %3172
    %v3178 = vsel %vm1601, %v3165, 0
    %v3181 = vsel %vm1601, %v3166, 0
    %v3184 = vsel %vm1601, %v3167, 0
    %3186 = vmatprep.subr.mxu0 0.0
    %3187 = vmatpush1.msra.mxu0 %v3169
    %3188 = vmatprep.subr.mxu0 0.0
    %3189 = vmatpush1.msra.mxu0 %v3171
    %3190 = vmatprep.subr.mxu0 0.0
    %3191 = vmatpush1.msra.mxu0 %v3173
    %3192 = vmatprep.subr.mxu0 0.0
    %3193 = vmatpush1.msra.mxu0 0.0
    %3194 = vmatprep.subr.mxu0 0.0
    %3195 = vmatpush1.msra.mxu0 0.0
    %3196 = vmatprep.subr.mxu0 0.0
    %3197 = vmatpush1.msra.mxu0 0.0
    %3198 = vmatprep.subr.mxu0 0.0
    %3199 = vmatpush1.msra.mxu0 0.0
    %3200 = vmatprep.subr.mxu0 0.0
    %3201 = vmatpush1.msra.mxu0 0.0
    %3202 = vmatprep.subr.mxu0 0.0
    %3203 = vmatpush1.msra.mxu0 0.0
    %3204 = vmatprep.subr.mxu0 0.0
    %3205 = vmatpush1.msra.mxu0 0.0
    %3206 = vmatprep.subr.mxu0 0.0
    %3207 = vmatpush1.msra.mxu0 0.0
    %3208 = vmatprep.subr.mxu0 0.0
    %3209 = vmatpush1.msra.mxu0 0.0
    %3210 = vmatprep.subr.mxu0 0.0
    %3211 = vmatpush1.msra.mxu0 0.0
    %3212 = vmatprep.subr.mxu0 0.0
    %3213 = vmatpush1.msra.mxu0 0.0
    %3214 = vmatprep.subr.mxu0 0.0
    %3215 = vmatpush1.msra.mxu0 0.0
    %3216 = vmatprep.subr.mxu0 0.0
    %3217 = vmatpush1.msra.mxu0 0.0
    %3218 = vmatprep.subr.mxu0 0.0
    %3219 = vmatpush1.msra.mxu0 0.0
    %3220 = vmatprep.subr.mxu0 0.0
    %3221 = vmatpush1.msra.mxu0 0.0
    %3222 = vmatprep.subr.mxu0 0.0
    %3223 = vmatpush1.msra.mxu0 0.0
    %3224 = vmatprep.subr.mxu0 0.0
    %3225 = vmatpush1.msra.mxu0 0.0
    %3226 = vmatprep.subr.mxu0 0.0
    %3227 = vmatpush1.msra.mxu0 0.0
    %3228 = vmatprep.subr.mxu0 0.0
    %3229 = vmatpush1.msra.mxu0 0.0
    %3230 = vmatprep.subr.mxu0 0.0
    %3231 = vmatpush1.msra.mxu0 0.0
    %3232 = vmatprep.subr.mxu0 0.0
    %3233 = vmatpush1.msra.mxu0 0.0
    %3234 = vmatprep.subr.mxu0 0.0
    %3235 = vmatpush1.msra.mxu0 0.0
    %3236 = vmatprep.subr.mxu0 0.0
    %3237 = vmatpush1.msra.mxu0 0.0
    %3238 = vmatprep.subr.mxu0 0.0
    %3239 = vmatpush1.msra.mxu0 0.0
    %3240 = vmatprep.subr.mxu0 0.0
    %3241 = vmatpush1.msra.mxu0 0.0
    %3242 = vmatprep.subr.mxu0 0.0
    %3243 = vmatpush1.msra.mxu0 0.0
    %3244 = vmatprep.subr.mxu0 0.0
    %3245 = vmatpush1.msra.mxu0 0.0
    %3246 = vmatprep.subr.mxu0 0.0
    %3247 = vmatpush1.msra.mxu0 0.0
    %3248 = vmatprep.subr.mxu0 0.0
    %3249 = vmatpush1.msra.mxu0 0.0
    %3250 = vmatprep.mubr.f32.mxu0 0.0
    %3251 = vmatmul.mubr.f32.gmra.mrb[0].mxu0 %v3178
    %v3252 = vpop.f32.mrb[0].mxu0
    %v3253 = vadd.f32 0.0, %v3252
    %v3254 = vpop.f32.mrb[0].mxu0
    %3255 = vmatprep.mubr.f32.mxu0 0.0
    %3256 = vmatmul.mubr.f32.gmra.mrb[0].mxu0 %v3181
    %v3257 = vpop.f32.mrb[0].mxu0
    %v3258 = vadd.f32 0.0, %v3257
    %v3259 = vpop.f32.mrb[0].mxu0
    %3260 = vmatprep.mubr.f32.mxu0 0.0
    %3261 = vmatmul.mubr.f32.gmra.mrb[0].mxu0 %v3184
    %v3262 = vpop.f32.mrb[0].mxu0
    %v3263 = vadd.f32 0.0, %v3262
    %v3264 = vpop.f32.mrb[0].mxu0
    %3265 = vdwg.mxu0
    %3266 = vrot.lane.b32.xlu0 %v3017, 120
    %v3267 = vpop.permute.xlu0 %3266
    %3268 = vrot.lane.b32.xlu0 %v3022, 120
    %v3269 = vpop.permute.xlu0 %3268
    %3270 = vrot.lane.b32.xlu0 %v3027, 120
    %v3271 = vpop.permute.xlu0 %3270
    %3272 = vrot.lane.b32.xlu0 %v3017, 88
    %v3273 = vpop.permute.xlu0 %3272
    %3274 = vrot.lane.b32.xlu0 %v3022, 88
    %v3275 = vpop.permute.xlu0 %3274
    %3276 = vrot.lane.b32.xlu0 %v3027, 88
    %v3277 = vpop.permute.xlu0 %3276
    %v3278 = vsel %vm147, %v3267, 0
    %v3280 = vsel %vm147, %v3269, 0
    %v3282 = vsel %vm147, %v3271, 0
    %v3284 = vsel %vm147, %v3273, 0
    %v3286 = vsel %vm147, %v3275, 0
    %v3288 = vsel %vm147, %v3277, 0
    %3290 = vmatprep.subr.mxu0 0.0
    %3291 = vmatpush1.xpose.msra.mxu0 %v3284
    %3292 = vmatprep.subr.mxu0 0.0
    %3293 = vmatpush1.xpose.msra.mxu0 %v3286
    %3294 = vmatprep.subr.mxu0 0.0
    %3295 = vmatpush1.xpose.msra.mxu0 %v3288
    %3296 = vmatprep.subr.mxu0 0.0
    %3297 = vmatpush1.xpose.msra.mxu0 0.0
    %3298 = vmatprep.subr.mxu0 0.0
    %3299 = vmatpush1.xpose.msra.mxu0 0.0
    %3300 = vmatprep.subr.mxu0 0.0
    %3301 = vmatpush1.xpose.msra.mxu0 0.0
    %3302 = vmatprep.subr.mxu0 0.0
    %3303 = vmatpush1.xpose.msra.mxu0 0.0
    %3304 = vmatprep.subr.mxu0 0.0
    %3305 = vmatpush1.xpose.msra.mxu0 0.0
    %3306 = vmatprep.subr.mxu0 0.0
    %3307 = vmatpush1.xpose.msra.mxu0 0.0
    %3308 = vmatprep.subr.mxu0 0.0
    %3309 = vmatpush1.xpose.msra.mxu0 0.0
    %3310 = vmatprep.subr.mxu0 0.0
    %3311 = vmatpush1.xpose.msra.mxu0 0.0
    %3312 = vmatprep.subr.mxu0 0.0
    %3313 = vmatpush1.xpose.msra.mxu0 0.0
    %3314 = vmatprep.subr.mxu0 0.0
    %3315 = vmatpush1.xpose.msra.mxu0 0.0
    %3316 = vmatprep.subr.mxu0 0.0
    %3317 = vmatpush1.xpose.msra.mxu0 0.0
    %3318 = vmatprep.subr.mxu0 0.0
    %3319 = vmatpush1.xpose.msra.mxu0 0.0
    %3320 = vmatprep.subr.mxu0 0.0
    %3321 = vmatpush1.xpose.msra.mxu0 0.0
    %3322 = vmatprep.subr.mxu0 0.0
    %3323 = vmatpush1.xpose.msra.mxu0 0.0
    %3324 = vmatprep.subr.mxu0 0.0
    %3325 = vmatpush1.xpose.msra.mxu0 0.0
    %3326 = vmatprep.subr.mxu0 0.0
    %3327 = vmatpush1.xpose.msra.mxu0 0.0
    %3328 = vmatprep.subr.mxu0 0.0
    %3329 = vmatpush1.xpose.msra.mxu0 0.0
    %3330 = vmatprep.subr.mxu0 0.0
    %3331 = vmatpush1.xpose.msra.mxu0 0.0
    %3332 = vmatprep.subr.mxu0 0.0
    %3333 = vmatpush1.xpose.msra.mxu0 0.0
    %3334 = vmatprep.subr.mxu0 0.0
    %3335 = vmatpush1.xpose.msra.mxu0 0.0
    %3336 = vmatprep.subr.mxu0 0.0
    %3337 = vmatpush1.xpose.msra.mxu0 0.0
    %3338 = vmatprep.subr.mxu0 0.0
    %3339 = vmatpush1.xpose.msra.mxu0 0.0
    %3340 = vmatprep.subr.mxu0 0.0
    %3341 = vmatpush1.xpose.msra.mxu0 0.0
    %3342 = vmatprep.subr.mxu0 0.0
    %3343 = vmatpush1.xpose.msra.mxu0 0.0
    %3344 = vmatprep.subr.mxu0 0.0
    %3345 = vmatpush1.xpose.msra.mxu0 0.0
    %3346 = vmatprep.subr.mxu0 0.0
    %3347 = vmatpush1.xpose.msra.mxu0 0.0
    %3348 = vmatprep.subr.mxu0 0.0
    %3349 = vmatpush1.xpose.msra.mxu0 0.0
    %3350 = vmatprep.subr.mxu0 0.0
    %3351 = vmatpush1.xpose.msra.mxu0 0.0
    %3352 = vmatprep.subr.mxu0 0.0
    %3353 = vmatpush1.xpose.msra.mxu0 0.0
    %3354 = vmatprep.mubr.f32.mxu0 0.0
    %3355 = vmatmul.mubr.f32.gmra.mrb[0].mxu0 %v3278
    %v3356 = vpop.f32.mrb[0].mxu0
    %v3357 = vadd.f32 %v40, %v3356
    %v3358 = vpop.f32.mrb[0].mxu0
    %3359 = vmatprep.mubr.f32.mxu0 0.0
    %3360 = vmatmul.mubr.f32.gmra.mrb[0].mxu0 %v3280
    %v3361 = vpop.f32.mrb[0].mxu0
    %v3362 = vadd.f32 %v41, %v3361
    %v3363 = vpop.f32.mrb[0].mxu0
    %3364 = vmatprep.mubr.f32.mxu0 0.0
    %3365 = vmatmul.mubr.f32.gmra.mrb[0].mxu0 %v3282
    %v3366 = vpop.f32.mrb[0].mxu0
    %v3367 = vadd.f32 %v42, %v3366
    %v3368 = vpop.f32.mrb[0].mxu0
    %3369 = vdwg.mxu0
    %v3370 = vsel %vm1601, %v3357, -inf
    %3371 = vmax.xlane.f32.xlu0 %v3370
    %v3372 = vpop.xlane.xlu0 %3371
    %v3373 = vsel %vm1601, %v3362, -inf
    %3374 = vmax.xlane.f32.xlu0 %v3373
    %v3375 = vpop.xlane.xlu0 %3374
    %v3376 = vsel %vm1601, %v3367, -inf
    %3377 = vmax.xlane.f32.xlu0 %v3376
    %v3378 = vpop.xlane.xlu0 %3377
    %v3379 = vsub.f32 %v3357, %v3372
    %v3380 = vsub.f32 %v3362, %v3375
    %v3381 = vsub.f32 %v3367, %v3378
    %v3382 = vmul.f32 %v3379, 1.442695
    %v3383 = vpow.pop %v3382
    %v3384 = vmul.f32 %v3380, 1.442695
    %v3385 = vpow.pop %v3384
    %v3386 = vmul.f32 %v3381, 1.442695
    %v3387 = vpow.pop %v3386
    %v3388 = vsel %vm1601, %v3383, 0.0
    %3389 = vadd.xlane.f32.xlu0 %v3388
    %v3390 = vpop.xlane.xlu0 %3389
    %v3391 = vsel %vm1601, %v3385, 0.0
    %3392 = vadd.xlane.f32.xlu0 %v3391
    %v3393 = vpop.xlane.xlu0 %3392
    %v3394 = vsel %vm1601, %v3387, 0.0
    %3395 = vadd.xlane.f32.xlu0 %v3394
    %v3396 = vpop.xlane.xlu0 %3395
    %v3397 = vrcp.pop %v3390
    %v3398 = vrcp.pop %v3393
    %v3399 = vrcp.pop %v3396
    %v3400 = vmul.f32 %v3383, %v3397
    %v3401 = vmul.f32 %v3385, %v3398
    %v3402 = vmul.f32 %v3387, %v3399
    %3403 = vrot.lane.b32.xlu0 %v3017, 56
    %v3404 = vpop.permute.xlu0 %3403
    %3405 = vrot.lane.b32.xlu0 %v3022, 56
    %v3406 = vpop.permute.xlu0 %3405
    %3407 = vrot.lane.b32.xlu0 %v3027, 56
    %v3408 = vpop.permute.xlu0 %3407
    %v3413 = vsel %vm1601, %v3400, 0
    %v3416 = vsel %vm1601, %v3401, 0
    %v3419 = vsel %vm1601, %v3402, 0
    %3421 = vmatprep.subr.mxu0 0.0
    %3422 = vmatpush1.msra.mxu0 %v3404
    %3423 = vmatprep.subr.mxu0 0.0
    %3424 = vmatpush1.msra.mxu0 %v3406
    %3425 = vmatprep.subr.mxu0 0.0
    %3426 = vmatpush1.msra.mxu0 %v3408
    %3427 = vmatprep.subr.mxu0 0.0
    %3428 = vmatpush1.msra.mxu0 0.0
    %3429 = vmatprep.subr.mxu0 0.0
    %3430 = vmatpush1.msra.mxu0 0.0
    %3431 = vmatprep.subr.mxu0 0.0
    %3432 = vmatpush1.msra.mxu0 0.0
    %3433 = vmatprep.subr.mxu0 0.0
    %3434 = vmatpush1.msra.mxu0 0.0
    %3435 = vmatprep.subr.mxu0 0.0
    %3436 = vmatpush1.msra.mxu0 0.0
    %3437 = vmatprep.subr.mxu0 0.0
    %3438 = vmatpush1.msra.mxu0 0.0
    %3439 = vmatprep.subr.mxu0 0.0
    %3440 = vmatpush1.msra.mxu0 0.0
    %3441 = vmatprep.subr.mxu0 0.0
    %3442 = vmatpush1.msra.mxu0 0.0
    %3443 = vmatprep.subr.mxu0 0.0
    %3444 = vmatpush1.msra.mxu0 0.0
    %3445 = vmatprep.subr.mxu0 0.0
    %3446 = vmatpush1.msra.mxu0 0.0
    %3447 = vmatprep.subr.mxu0 0.0
    %3448 = vmatpush1.msra.mxu0 0.0
    %3449 = vmatprep.subr.mxu0 0.0
    %3450 = vmatpush1.msra.mxu0 0.0
    %3451 = vmatprep.subr.mxu0 0.0
    %3452 = vmatpush1.msra.mxu0 0.0
    %3453 = vmatprep.subr.mxu0 0.0
    %3454 = vmatpush1.msra.mxu0 0.0
    %3455 = vmatprep.subr.mxu0 0.0
    %3456 = vmatpush1.msra.mxu0 0.0
    %3457 = vmatprep.subr.mxu0 0.0
    %3458 = vmatpush1.msra.mxu0 0.0
    %3459 = vmatprep.subr.mxu0 0.0
    %3460 = vmatpush1.msra.mxu0 0.0
    %3461 = vmatprep.subr.mxu0 0.0
    %3462 = vmatpush1.msra.mxu0 0.0
    %3463 = vmatprep.subr.mxu0 0.0
    %3464 = vmatpush1.msra.mxu0 0.0
    %3465 = vmatprep.subr.mxu0 0.0
    %3466 = vmatpush1.msra.mxu0 0.0
    %3467 = vmatprep.subr.mxu0 0.0
    %3468 = vmatpush1.msra.mxu0 0.0
    %3469 = vmatprep.subr.mxu0 0.0
    %3470 = vmatpush1.msra.mxu0 0.0
    %3471 = vmatprep.subr.mxu0 0.0
    %3472 = vmatpush1.msra.mxu0 0.0
    %3473 = vmatprep.subr.mxu0 0.0
    %3474 = vmatpush1.msra.mxu0 0.0
    %3475 = vmatprep.subr.mxu0 0.0
    %3476 = vmatpush1.msra.mxu0 0.0
    %3477 = vmatprep.subr.mxu0 0.0
    %3478 = vmatpush1.msra.mxu0 0.0
    %3479 = vmatprep.subr.mxu0 0.0
    %3480 = vmatpush1.msra.mxu0 0.0
    %3481 = vmatprep.subr.mxu0 0.0
    %3482 = vmatpush1.msra.mxu0 0.0
    %3483 = vmatprep.subr.mxu0 0.0
    %3484 = vmatpush1.msra.mxu0 0.0
    %3485 = vmatprep.mubr.f32.mxu0 0.0
    %3486 = vmatmul.mubr.f32.gmra.mrb[0].mxu0 %v3413
    %v3487 = vpop.f32.mrb[0].mxu0
    %v3488 = vadd.f32 0.0, %v3487
    %v3489 = vpop.f32.mrb[0].mxu0
    %3490 = vmatprep.mubr.f32.mxu0 0.0
    %3491 = vmatmul.mubr.f32.gmra.mrb[0].mxu0 %v3416
    %v3492 = vpop.f32.mrb[0].mxu0
    %v3493 = vadd.f32 0.0, %v3492
    %v3494 = vpop.f32.mrb[0].mxu0
    %3495 = vmatprep.mubr.f32.mxu0 0.0
    %3496 = vmatmul.mubr.f32.gmra.mrb[0].mxu0 %v3419
    %v3497 = vpop.f32.mrb[0].mxu0
    %v3498 = vadd.f32 0.0, %v3497
    %v3499 = vpop.f32.mrb[0].mxu0
    %3500 = vdwg.mxu0
    %v3502 = vsel %vm147, %v3488, 0
    %v3505 = vsel %vm147, %v3493, 0
    %v3508 = vsel %vm147, %v3498, 0
    %3510 = vmatprep.subr.mxu0 0.0
    %3511 = vmatpush1.msra.mxu0 %v3031
    %3512 = vmatprep.subr.mxu0 0.0
    %3513 = vmatpush1.msra.mxu0 0.0
    %3514 = vmatprep.subr.mxu0 0.0
    %3515 = vmatpush1.msra.mxu0 0.0
    %3516 = vmatprep.subr.mxu0 0.0
    %3517 = vmatpush1.msra.mxu0 0.0
    %3518 = vmatprep.subr.mxu0 0.0
    %3519 = vmatpush1.msra.mxu0 0.0
    %3520 = vmatprep.subr.mxu0 0.0
    %3521 = vmatpush1.msra.mxu0 0.0
    %3522 = vmatprep.subr.mxu0 0.0
    %3523 = vmatpush1.msra.mxu0 0.0
    %3524 = vmatprep.subr.mxu0 0.0
    %3525 = vmatpush1.msra.mxu0 0.0
    %3526 = vmatprep.subr.mxu0 0.0
    %3527 = vmatpush1.msra.mxu0 0.0
    %3528 = vmatprep.subr.mxu0 0.0
    %3529 = vmatpush1.msra.mxu0 0.0
    %3530 = vmatprep.subr.mxu0 0.0
    %3531 = vmatpush1.msra.mxu0 0.0
    %3532 = vmatprep.subr.mxu0 0.0
    %3533 = vmatpush1.msra.mxu0 0.0
    %3534 = vmatprep.subr.mxu0 0.0
    %3535 = vmatpush1.msra.mxu0 0.0
    %3536 = vmatprep.subr.mxu0 0.0
    %3537 = vmatpush1.msra.mxu0 0.0
    %3538 = vmatprep.subr.mxu0 0.0
    %3539 = vmatpush1.msra.mxu0 0.0
    %3540 = vmatprep.subr.mxu0 0.0
    %3541 = vmatpush1.msra.mxu0 0.0
    %3542 = vmatprep.subr.mxu0 0.0
    %3543 = vmatpush1.msra.mxu0 0.0
    %3544 = vmatprep.subr.mxu0 0.0
    %3545 = vmatpush1.msra.mxu0 0.0
    %3546 = vmatprep.subr.mxu0 0.0
    %3547 = vmatpush1.msra.mxu0 0.0
    %3548 = vmatprep.subr.mxu0 0.0
    %3549 = vmatpush1.msra.mxu0 0.0
    %3550 = vmatprep.subr.mxu0 0.0
    %3551 = vmatpush1.msra.mxu0 0.0
    %3552 = vmatprep.subr.mxu0 0.0
    %3553 = vmatpush1.msra.mxu0 0.0
    %3554 = vmatprep.subr.mxu0 0.0
    %3555 = vmatpush1.msra.mxu0 0.0
    %3556 = vmatprep.subr.mxu0 0.0
    %3557 = vmatpush1.msra.mxu0 0.0
    %3558 = vmatprep.subr.mxu0 0.0
    %3559 = vmatpush1.msra.mxu0 0.0
    %3560 = vmatprep.subr.mxu0 0.0
    %3561 = vmatpush1.msra.mxu0 0.0
    %3562 = vmatprep.subr.mxu0 0.0
    %3563 = vmatpush1.msra.mxu0 0.0
    %3564 = vmatprep.subr.mxu0 0.0
    %3565 = vmatpush1.msra.mxu0 0.0
    %3566 = vmatprep.subr.mxu0 0.0
    %3567 = vmatpush1.msra.mxu0 0.0
    %3568 = vmatprep.subr.mxu0 0.0
    %3569 = vmatpush1.msra.mxu0 0.0
    %3570 = vmatprep.subr.mxu0 0.0
    %3571 = vmatpush1.msra.mxu0 0.0
    %3572 = vmatprep.subr.mxu0 0.0
    %3573 = vmatpush1.msra.mxu0 0.0
    %3574 = vmatprep.mubr.f32.mxu0 0.0
    %3575 = vmatmul.mubr.f32.gmra.mrb[0].mxu0 %v3502
    %v3576 = vpop.f32.mrb[0].mxu0
    %v3577 = vadd.f32 0.0, %v3576
    %v3578 = vpop.f32.mrb[0].mxu0
    %3579 = vmatprep.mubr.f32.mxu0 0.0
    %3580 = vmatmul.mubr.f32.gmra.mrb[0].mxu0 %v3505
    %v3581 = vpop.f32.mrb[0].mxu0
    %v3582 = vadd.f32 0.0, %v3581
    %v3583 = vpop.f32.mrb[0].mxu0
    %3584 = vmatprep.mubr.f32.mxu0 0.0
    %3585 = vmatmul.mubr.f32.gmra.mrb[0].mxu0 %v3508
    %v3586 = vpop.f32.mrb[0].mxu0
    %v3587 = vadd.f32 0.0, %v3586
    %v3588 = vpop.f32.mrb[0].mxu0
    %3589 = vdwg.mxu0
    %v3591 = vsel %vm147, %v3253, 0
    %v3594 = vsel %vm147, %v3258, 0
    %v3597 = vsel %vm147, %v3263, 0
    %3599 = vmatprep.subr.mxu0 0.0
    %3600 = vmatpush1.msra.mxu0 %v3030
    %3601 = vmatprep.subr.mxu0 0.0
    %3602 = vmatpush1.msra.mxu0 0.0
    %3603 = vmatprep.subr.mxu0 0.0
    %3604 = vmatpush1.msra.mxu0 0.0
    %3605 = vmatprep.subr.mxu0 0.0
    %3606 = vmatpush1.msra.mxu0 0.0
    %3607 = vmatprep.subr.mxu0 0.0
    %3608 = vmatpush1.msra.mxu0 0.0
    %3609 = vmatprep.subr.mxu0 0.0
    %3610 = vmatpush1.msra.mxu0 0.0
    %3611 = vmatprep.subr.mxu0 0.0
    %3612 = vmatpush1.msra.mxu0 0.0
    %3613 = vmatprep.subr.mxu0 0.0
    %3614 = vmatpush1.msra.mxu0 0.0
    %3615 = vmatprep.subr.mxu0 0.0
    %3616 = vmatpush1.msra.mxu0 0.0
    %3617 = vmatprep.subr.mxu0 0.0
    %3618 = vmatpush1.msra.mxu0 0.0
    %3619 = vmatprep.subr.mxu0 0.0
    %3620 = vmatpush1.msra.mxu0 0.0
    %3621 = vmatprep.subr.mxu0 0.0
    %3622 = vmatpush1.msra.mxu0 0.0
    %3623 = vmatprep.subr.mxu0 0.0
    %3624 = vmatpush1.msra.mxu0 0.0
    %3625 = vmatprep.subr.mxu0 0.0
    %3626 = vmatpush1.msra.mxu0 0.0
    %3627 = vmatprep.subr.mxu0 0.0
    %3628 = vmatpush1.msra.mxu0 0.0
    %3629 = vmatprep.subr.mxu0 0.0
    %3630 = vmatpush1.msra.mxu0 0.0
    %3631 = vmatprep.subr.mxu0 0.0
    %3632 = vmatpush1.msra.mxu0 0.0
    %3633 = vmatprep.subr.mxu0 0.0
    %3634 = vmatpush1.msra.mxu0 0.0
    %3635 = vmatprep.subr.mxu0 0.0
    %3636 = vmatpush1.msra.mxu0 0.0
    %3637 = vmatprep.subr.mxu0 0.0
    %3638 = vmatpush1.msra.mxu0 0.0
    %3639 = vmatprep.subr.mxu0 0.0
    %3640 = vmatpush1.msra.mxu0 0.0
    %3641 = vmatprep.subr.mxu0 0.0
    %3642 = vmatpush1.msra.mxu0 0.0
    %3643 = vmatprep.subr.mxu0 0.0
    %3644 = vmatpush1.msra.mxu0 0.0
    %3645 = vmatprep.subr.mxu0 0.0
    %3646 = vmatpush1.msra.mxu0 0.0
    %3647 = vmatprep.subr.mxu0 0.0
    %3648 = vmatpush1.msra.mxu0 0.0
    %3649 = vmatprep.subr.mxu0 0.0
    %3650 = vmatpush1.msra.mxu0 0.0
    %3651 = vmatprep.subr.mxu0 0.0
    %3652 = vmatpush1.msra.mxu0 0.0
    %3653 = vmatprep.subr.mxu0 0.0
    %3654 = vmatpush1.msra.mxu0 0.0
    %3655 = vmatprep.subr.mxu0 0.0
    %3656 = vmatpush1.msra.mxu0 0.0
    %3657 = vmatprep.subr.mxu0 0.0
    %3658 = vmatpush1.msra.mxu0 0.0
    %3659 = vmatprep.subr.mxu0 0.0
    %3660 = vmatpush1.msra.mxu0 0.0
    %3661 = vmatprep.subr.mxu0 0.0
    %3662 = vmatpush1.msra.mxu0 0.0
    %3663 = vmatprep.mubr.f32.mxu0 0.0
    %3664 = vmatmul.mubr.f32.gmra.mrb[0].mxu0 %v3591
    %v3665 = vpop.f32.mrb[0].mxu0
    %v3666 = vadd.f32 %v3577, %v3665
    %v3667 = vpop.f32.mrb[0].mxu0
    %3668 = vmatprep.mubr.f32.mxu0 0.0
    %3669 = vmatmul.mubr.f32.gmra.mrb[0].mxu0 %v3594
    %v3670 = vpop.f32.mrb[0].mxu0
    %v3671 = vadd.f32 %v3582, %v3670
    %v3672 = vpop.f32.mrb[0].mxu0
    %3673 = vmatprep.mubr.f32.mxu0 0.0
    %3674 = vmatmul.mubr.f32.gmra.mrb[0].mxu0 %v3597
    %v3675 = vpop.f32.mrb[0].mxu0
    %v3676 = vadd.f32 %v3587, %v3675
    %v3677 = vpop.f32.mrb[0].mxu0
    %3678 = vdwg.mxu0
    %3679 = vrot.lane.b32.xlu0 %v3017, 112
    %v3680 = vpop.permute.xlu0 %3679
    %3681 = vrot.lane.b32.xlu0 %v3022, 112
    %v3682 = vpop.permute.xlu0 %3681
    %3683 = vrot.lane.b32.xlu0 %v3027, 112
    %v3684 = vpop.permute.xlu0 %3683
    %3685 = vrot.lane.b32.xlu0 %v3017, 80
    %v3686 = vpop.permute.xlu0 %3685
    %3687 = vrot.lane.b32.xlu0 %v3022, 80
    %v3688 = vpop.permute.xlu0 %3687
    %3689 = vrot.lane.b32.xlu0 %v3027, 80
    %v3690 = vpop.permute.xlu0 %3689
    %v3691 = vsel %vm147, %v3680, 0
    %v3693 = vsel %vm147, %v3682, 0
    %v3695 = vsel %vm147, %v3684, 0
    %v3697 = vsel %vm147, %v3686, 0
    %v3699 = vsel %vm147, %v3688, 0
    %v3701 = vsel %vm147, %v3690, 0
    %3703 = vmatprep.subr.mxu0 0.0
    %3704 = vmatpush1.xpose.msra.mxu0 %v3697
    %3705 = vmatprep.subr.mxu0 0.0
    %3706 = vmatpush1.xpose.msra.mxu0 %v3699
    %3707 = vmatprep.subr.mxu0 0.0
    %3708 = vmatpush1.xpose.msra.mxu0 %v3701
    %3709 = vmatprep.subr.mxu0 0.0
    %3710 = vmatpush1.xpose.msra.mxu0 0.0
    %3711 = vmatprep.subr.mxu0 0.0
    %3712 = vmatpush1.xpose.msra.mxu0 0.0
    %3713 = vmatprep.subr.mxu0 0.0
    %3714 = vmatpush1.xpose.msra.mxu0 0.0
    %3715 = vmatprep.subr.mxu0 0.0
    %3716 = vmatpush1.xpose.msra.mxu0 0.0
    %3717 = vmatprep.subr.mxu0 0.0
    %3718 = vmatpush1.xpose.msra.mxu0 0.0
    %3719 = vmatprep.subr.mxu0 0.0
    %3720 = vmatpush1.xpose.msra.mxu0 0.0
    %3721 = vmatprep.subr.mxu0 0.0
    %3722 = vmatpush1.xpose.msra.mxu0 0.0
    %3723 = vmatprep.subr.mxu0 0.0
    %3724 = vmatpush1.xpose.msra.mxu0 0.0
    %3725 = vmatprep.subr.mxu0 0.0
    %3726 = vmatpush1.xpose.msra.mxu0 0.0
    %3727 = vmatprep.subr.mxu0 0.0
    %3728 = vmatpush1.xpose.msra.mxu0 0.0
    %3729 = vmatprep.subr.mxu0 0.0
    %3730 = vmatpush1.xpose.msra.mxu0 0.0
    %3731 = vmatprep.subr.mxu0 0.0
    %3732 = vmatpush1.xpose.msra.mxu0 0.0
    %3733 = vmatprep.subr.mxu0 0.0
    %3734 = vmatpush1.xpose.msra.mxu0 0.0
    %3735 = vmatprep.subr.mxu0 0.0
    %3736 = vmatpush1.xpose.msra.mxu0 0.0
    %3737 = vmatprep.subr.mxu0 0.0
    %3738 = vmatpush1.xpose.msra.mxu0 0.0
    %3739 = vmatprep.subr.mxu0 0.0
    %3740 = vmatpush1.xpose.msra.mxu0 0.0
    %3741 = vmatprep.subr.mxu0 0.0
    %3742 = vmatpush1.xpose.msra.mxu0 0.0
    %3743 = vmatprep.subr.mxu0 0.0
    %3744 = vmatpush1.xpose.msra.mxu0 0.0
    %3745 = vmatprep.subr.mxu0 0.0
    %3746 = vmatpush1.xpose.msra.mxu0 0.0
    %3747 = vmatprep.subr.mxu0 0.0
    %3748 = vmatpush1.xpose.msra.mxu0 0.0
    %3749 = vmatprep.subr.mxu0 0.0
    %3750 = vmatpush1.xpose.msra.mxu0 0.0
    %3751 = vmatprep.subr.mxu0 0.0
    %3752 = vmatpush1.xpose.msra.mxu0 0.0
    %3753 = vmatprep.subr.mxu0 0.0
    %3754 = vmatpush1.xpose.msra.mxu0 0.0
    %3755 = vmatprep.subr.mxu0 0.0
    %3756 = vmatpush1.xpose.msra.mxu0 0.0
    %3757 = vmatprep.subr.mxu0 0.0
    %3758 = vmatpush1.xpose.msra.mxu0 0.0
    %3759 = vmatprep.subr.mxu0 0.0
    %3760 = vmatpush1.xpose.msra.mxu0 0.0
    %3761 = vmatprep.subr.mxu0 0.0
    %3762 = vmatpush1.xpose.msra.mxu0 0.0
    %3763 = vmatprep.subr.mxu0 0.0
    %3764 = vmatpush1.xpose.msra.mxu0 0.0
    %3765 = vmatprep.subr.mxu0 0.0
    %3766 = vmatpush1.xpose.msra.mxu0 0.0
    %3767 = vmatprep.mubr.f32.mxu0 0.0
    %3768 = vmatmul.mubr.f32.gmra.mrb[0].mxu0 %v3691
    %v3769 = vpop.f32.mrb[0].mxu0
    %v3770 = vadd.f32 %v40, %v3769
    %v3771 = vpop.f32.mrb[0].mxu0
    %3772 = vmatprep.mubr.f32.mxu0 0.0
    %3773 = vmatmul.mubr.f32.gmra.mrb[0].mxu0 %v3693
    %v3774 = vpop.f32.mrb[0].mxu0
    %v3775 = vadd.f32 %v41, %v3774
    %v3776 = vpop.f32.mrb[0].mxu0
    %3777 = vmatprep.mubr.f32.mxu0 0.0
    %3778 = vmatmul.mubr.f32.gmra.mrb[0].mxu0 %v3695
    %v3779 = vpop.f32.mrb[0].mxu0
    %v3780 = vadd.f32 %v42, %v3779
    %v3781 = vpop.f32.mrb[0].mxu0
    %3782 = vdwg.mxu0
    %v3783 = vsel %vm1601, %v3770, -inf
    %3784 = vmax.xlane.f32.xlu0 %v3783
    %v3785 = vpop.xlane.xlu0 %3784
    %v3786 = vsel %vm1601, %v3775, -inf
    %3787 = vmax.xlane.f32.xlu0 %v3786
    %v3788 = vpop.xlane.xlu0 %3787
    %v3789 = vsel %vm1601, %v3780, -inf
    %3790 = vmax.xlane.f32.xlu0 %v3789
    %v3791 = vpop.xlane.xlu0 %3790
    %v3792 = vsub.f32 %v3770, %v3785
    %v3793 = vsub.f32 %v3775, %v3788
    %v3794 = vsub.f32 %v3780, %v3791
    %v3795 = vmul.f32 %v3792, 1.442695
    %v3796 = vpow.pop %v3795
    %v3797 = vmul.f32 %v3793, 1.442695
    %v3798 = vpow.pop %v3797
    %v3799 = vmul.f32 %v3794, 1.442695
    %v3800 = vpow.pop %v3799
    %v3801 = vsel %vm1601, %v3796, 0.0
    %3802 = vadd.xlane.f32.xlu0 %v3801
    %v3803 = vpop.xlane.xlu0 %3802
    %v3804 = vsel %vm1601, %v3798, 0.0
    %3805 = vadd.xlane.f32.xlu0 %v3804
    %v3806 = vpop.xlane.xlu0 %3805
    %v3807 = vsel %vm1601, %v3800, 0.0
    %3808 = vadd.xlane.f32.xlu0 %v3807
    %v3809 = vpop.xlane.xlu0 %3808
    %v3810 = vrcp.pop %v3803
    %v3811 = vrcp.pop %v3806
    %v3812 = vrcp.pop %v3809
    %v3813 = vmul.f32 %v3796, %v3810
    %v3814 = vmul.f32 %v3798, %v3811
    %v3815 = vmul.f32 %v3800, %v3812
    %3816 = vrot.lane.b32.xlu0 %v3017, 48
    %v3817 = vpop.permute.xlu0 %3816
    %3818 = vrot.lane.b32.xlu0 %v3022, 48
    %v3819 = vpop.permute.xlu0 %3818
    %3820 = vrot.lane.b32.xlu0 %v3027, 48
    %v3821 = vpop.permute.xlu0 %3820
    %v3826 = vsel %vm1601, %v3813, 0
    %v3829 = vsel %vm1601, %v3814, 0
    %v3832 = vsel %vm1601, %v3815, 0
    %3834 = vmatprep.subr.mxu0 0.0
    %3835 = vmatpush1.msra.mxu0 %v3817
    %3836 = vmatprep.subr.mxu0 0.0
    %3837 = vmatpush1.msra.mxu0 %v3819
    %3838 = vmatprep.subr.mxu0 0.0
    %3839 = vmatpush1.msra.mxu0 %v3821
    %3840 = vmatprep.subr.mxu0 0.0
    %3841 = vmatpush1.msra.mxu0 0.0
    %3842 = vmatprep.subr.mxu0 0.0
    %3843 = vmatpush1.msra.mxu0 0.0
    %3844 = vmatprep.subr.mxu0 0.0
    %3845 = vmatpush1.msra.mxu0 0.0
    %3846 = vmatprep.subr.mxu0 0.0
    %3847 = vmatpush1.msra.mxu0 0.0
    %3848 = vmatprep.subr.mxu0 0.0
    %3849 = vmatpush1.msra.mxu0 0.0
    %3850 = vmatprep.subr.mxu0 0.0
    %3851 = vmatpush1.msra.mxu0 0.0
    %3852 = vmatprep.subr.mxu0 0.0
    %3853 = vmatpush1.msra.mxu0 0.0
    %3854 = vmatprep.subr.mxu0 0.0
    %3855 = vmatpush1.msra.mxu0 0.0
    %3856 = vmatprep.subr.mxu0 0.0
    %3857 = vmatpush1.msra.mxu0 0.0
    %3858 = vmatprep.subr.mxu0 0.0
    %3859 = vmatpush1.msra.mxu0 0.0
    %3860 = vmatprep.subr.mxu0 0.0
    %3861 = vmatpush1.msra.mxu0 0.0
    %3862 = vmatprep.subr.mxu0 0.0
    %3863 = vmatpush1.msra.mxu0 0.0
    %3864 = vmatprep.subr.mxu0 0.0
    %3865 = vmatpush1.msra.mxu0 0.0
    %3866 = vmatprep.subr.mxu0 0.0
    %3867 = vmatpush1.msra.mxu0 0.0
    %3868 = vmatprep.subr.mxu0 0.0
    %3869 = vmatpush1.msra.mxu0 0.0
    %3870 = vmatprep.subr.mxu0 0.0
    %3871 = vmatpush1.msra.mxu0 0.0
    %3872 = vmatprep.subr.mxu0 0.0
    %3873 = vmatpush1.msra.mxu0 0.0
    %3874 = vmatprep.subr.mxu0 0.0
    %3875 = vmatpush1.msra.mxu0 0.0
    %3876 = vmatprep.subr.mxu0 0.0
    %3877 = vmatpush1.msra.mxu0 0.0
    %3878 = vmatprep.subr.mxu0 0.0
    %3879 = vmatpush1.msra.mxu0 0.0
    %3880 = vmatprep.subr.mxu0 0.0
    %3881 = vmatpush1.msra.mxu0 0.0
    %3882 = vmatprep.subr.mxu0 0.0
    %3883 = vmatpush1.msra.mxu0 0.0
    %3884 = vmatprep.subr.mxu0 0.0
    %3885 = vmatpush1.msra.mxu0 0.0
    %3886 = vmatprep.subr.mxu0 0.0
    %3887 = vmatpush1.msra.mxu0 0.0
    %3888 = vmatprep.subr.mxu0 0.0
    %3889 = vmatpush1.msra.mxu0 0.0
    %3890 = vmatprep.subr.mxu0 0.0
    %3891 = vmatpush1.msra.mxu0 0.0
    %3892 = vmatprep.subr.mxu0 0.0
    %3893 = vmatpush1.msra.mxu0 0.0
    %3894 = vmatprep.subr.mxu0 0.0
    %3895 = vmatpush1.msra.mxu0 0.0
    %3896 = vmatprep.subr.mxu0 0.0
    %3897 = vmatpush1.msra.mxu0 0.0
    %3898 = vmatprep.mubr.f32.mxu0 0.0
    %3899 = vmatmul.mubr.f32.gmra.mrb[0].mxu0 %v3826
    %v3900 = vpop.f32.mrb[0].mxu0
    %v3901 = vadd.f32 0.0, %v3900
    %v3902 = vpop.f32.mrb[0].mxu0
    %3903 = vmatprep.mubr.f32.mxu0 0.0
    %3904 = vmatmul.mubr.f32.gmra.mrb[0].mxu0 %v3829
    %v3905 = vpop.f32.mrb[0].mxu0
    %v3906 = vadd.f32 0.0, %v3905
    %v3907 = vpop.f32.mrb[0].mxu0
    %3908 = vmatprep.mubr.f32.mxu0 0.0
    %3909 = vmatmul.mubr.f32.gmra.mrb[0].mxu0 %v3832
    %v3910 = vpop.f32.mrb[0].mxu0
    %v3911 = vadd.f32 0.0, %v3910
    %v3912 = vpop.f32.mrb[0].mxu0
    %3913 = vdwg.mxu0
    %v3915 = vsel %vm147, %v3901, 0
    %v3918 = vsel %vm147, %v3906, 0
    %v3921 = vsel %vm147, %v3911, 0
    %3923 = vmatprep.subr.mxu0 0.0
    %3924 = vmatpush1.msra.mxu0 %v3032
    %3925 = vmatprep.subr.mxu0 0.0
    %3926 = vmatpush1.msra.mxu0 0.0
    %3927 = vmatprep.subr.mxu0 0.0
    %3928 = vmatpush1.msra.mxu0 0.0
    %3929 = vmatprep.subr.mxu0 0.0
    %3930 = vmatpush1.msra.mxu0 0.0
    %3931 = vmatprep.subr.mxu0 0.0
    %3932 = vmatpush1.msra.mxu0 0.0
    %3933 = vmatprep.subr.mxu0 0.0
    %3934 = vmatpush1.msra.mxu0 0.0
    %3935 = vmatprep.subr.mxu0 0.0
    %3936 = vmatpush1.msra.mxu0 0.0
    %3937 = vmatprep.subr.mxu0 0.0
    %3938 = vmatpush1.msra.mxu0 0.0
    %3939 = vmatprep.subr.mxu0 0.0
    %3940 = vmatpush1.msra.mxu0 0.0
    %3941 = vmatprep.subr.mxu0 0.0
    %3942 = vmatpush1.msra.mxu0 0.0
    %3943 = vmatprep.subr.mxu0 0.0
    %3944 = vmatpush1.msra.mxu0 0.0
    %3945 = vmatprep.subr.mxu0 0.0
    %3946 = vmatpush1.msra.mxu0 0.0
    %3947 = vmatprep.subr.mxu0 0.0
    %3948 = vmatpush1.msra.mxu0 0.0
    %3949 = vmatprep.subr.mxu0 0.0
    %3950 = vmatpush1.msra.mxu0 0.0
    %3951 = vmatprep.subr.mxu0 0.0
    %3952 = vmatpush1.msra.mxu0 0.0
    %3953 = vmatprep.subr.mxu0 0.0
    %3954 = vmatpush1.msra.mxu0 0.0
    %3955 = vmatprep.subr.mxu0 0.0
    %3956 = vmatpush1.msra.mxu0 0.0
    %3957 = vmatprep.subr.mxu0 0.0
    %3958 = vmatpush1.msra.mxu0 0.0
    %3959 = vmatprep.subr.mxu0 0.0
    %3960 = vmatpush1.msra.mxu0 0.0
    %3961 = vmatprep.subr.mxu0 0.0
    %3962 = vmatpush1.msra.mxu0 0.0
    %3963 = vmatprep.subr.mxu0 0.0
    %3964 = vmatpush1.msra.mxu0 0.0
    %3965 = vmatprep.subr.mxu0 0.0
    %3966 = vmatpush1.msra.mxu0 0.0
    %3967 = vmatprep.subr.mxu0 0.0
    %3968 = vmatpush1.msra.mxu0 0.0
    %3969 = vmatprep.subr.mxu0 0.0
    %3970 = vmatpush1.msra.mxu0 0.0
    %3971 = vmatprep.subr.mxu0 0.0
    %3972 = vmatpush1.msra.mxu0 0.0
    %3973 = vmatprep.subr.mxu0 0.0
    %3974 = vmatpush1.msra.mxu0 0.0
    %3975 = vmatprep.subr.mxu0 0.0
    %3976 = vmatpush1.msra.mxu0 0.0
    %3977 = vmatprep.subr.mxu0 0.0
    %3978 = vmatpush1.msra.mxu0 0.0
    %3979 = vmatprep.subr.mxu0 0.0
    %3980 = vmatpush1.msra.mxu0 0.0
    %3981 = vmatprep.subr.mxu0 0.0
    %3982 = vmatpush1.msra.mxu0 0.0
    %3983 = vmatprep.subr.mxu0 0.0
    %3984 = vmatpush1.msra.mxu0 0.0
    %3985 = vmatprep.subr.mxu0 0.0
    %3986 = vmatpush1.msra.mxu0 0.0
    %3987 = vmatprep.mubr.f32.mxu0 0.0
    %3988 = vmatmul.mubr.f32.gmra.mrb[0].mxu0 %v3915
    %v3989 = vpop.f32.mrb[0].mxu0
    %v3990 = vadd.f32 0.0, %v3989
    %v3991 = vpop.f32.mrb[0].mxu0
    %3992 = vmatprep.mubr.f32.mxu0 0.0
    %3993 = vmatmul.mubr.f32.gmra.mrb[0].mxu0 %v3918
    %v3994 = vpop.f32.mrb[0].mxu0
    %v3995 = vadd.f32 0.0, %v3994
    %v3996 = vpop.f32.mrb[0].mxu0
    %3997 = vmatprep.mubr.f32.mxu0 0.0
    %3998 = vmatmul.mubr.f32.gmra.mrb[0].mxu0 %v3921
    %v3999 = vpop.f32.mrb[0].mxu0
    %v4000 = vadd.f32 0.0, %v3999
    %v4001 = vpop.f32.mrb[0].mxu0
    %4002 = vdwg.mxu0
    %v4003 = vadd.f32 %v3666, %v3990
    %v4004 = vadd.f32 %v3671, %v3995
    %v4005 = vadd.f32 %v3676, %v4000
    %4006 = vrot.lane.b32.xlu0 %v3017, 104
    %v4007 = vpop.permute.xlu0 %4006
    %4008 = vrot.lane.b32.xlu0 %v3022, 104
    %v4009 = vpop.permute.xlu0 %4008
    %4010 = vrot.lane.b32.xlu0 %v3027, 104
    %v4011 = vpop.permute.xlu0 %4010
    %4012 = vrot.lane.b32.xlu0 %v3017, 72
    %v4013 = vpop.permute.xlu0 %4012
    %4014 = vrot.lane.b32.xlu0 %v3022, 72
    %v4015 = vpop.permute.xlu0 %4014
    %4016 = vrot.lane.b32.xlu0 %v3027, 72
    %v4017 = vpop.permute.xlu0 %4016
    %v4018 = vsel %vm147, %v4007, 0
    %v4020 = vsel %vm147, %v4009, 0
    %v4022 = vsel %vm147, %v4011, 0
    %v4024 = vsel %vm147, %v4013, 0
    %v4026 = vsel %vm147, %v4015, 0
    %v4028 = vsel %vm147, %v4017, 0
    %4030 = vmatprep.subr.mxu0 0.0
    %4031 = vmatpush1.xpose.msra.mxu0 %v4024
    %4032 = vmatprep.subr.mxu0 0.0
    %4033 = vmatpush1.xpose.msra.mxu0 %v4026
    %4034 = vmatprep.subr.mxu0 0.0
    %4035 = vmatpush1.xpose.msra.mxu0 %v4028
    %4036 = vmatprep.subr.mxu0 0.0
    %4037 = vmatpush1.xpose.msra.mxu0 0.0
    %4038 = vmatprep.subr.mxu0 0.0
    %4039 = vmatpush1.xpose.msra.mxu0 0.0
    %4040 = vmatprep.subr.mxu0 0.0
    %4041 = vmatpush1.xpose.msra.mxu0 0.0
    %4042 = vmatprep.subr.mxu0 0.0
    %4043 = vmatpush1.xpose.msra.mxu0 0.0
    %4044 = vmatprep.subr.mxu0 0.0
    %4045 = vmatpush1.xpose.msra.mxu0 0.0
    %4046 = vmatprep.subr.mxu0 0.0
    %4047 = vmatpush1.xpose.msra.mxu0 0.0
    %4048 = vmatprep.subr.mxu0 0.0
    %4049 = vmatpush1.xpose.msra.mxu0 0.0
    %4050 = vmatprep.subr.mxu0 0.0
    %4051 = vmatpush1.xpose.msra.mxu0 0.0
    %4052 = vmatprep.subr.mxu0 0.0
    %4053 = vmatpush1.xpose.msra.mxu0 0.0
    %4054 = vmatprep.subr.mxu0 0.0
    %4055 = vmatpush1.xpose.msra.mxu0 0.0
    %4056 = vmatprep.subr.mxu0 0.0
    %4057 = vmatpush1.xpose.msra.mxu0 0.0
    %4058 = vmatprep.subr.mxu0 0.0
    %4059 = vmatpush1.xpose.msra.mxu0 0.0
    %4060 = vmatprep.subr.mxu0 0.0
    %4061 = vmatpush1.xpose.msra.mxu0 0.0
    %4062 = vmatprep.subr.mxu0 0.0
    %4063 = vmatpush1.xpose.msra.mxu0 0.0
    %4064 = vmatprep.subr.mxu0 0.0
    %4065 = vmatpush1.xpose.msra.mxu0 0.0
    %4066 = vmatprep.subr.mxu0 0.0
    %4067 = vmatpush1.xpose.msra.mxu0 0.0
    %4068 = vmatprep.subr.mxu0 0.0
    %4069 = vmatpush1.xpose.msra.mxu0 0.0
    %4070 = vmatprep.subr.mxu0 0.0
    %4071 = vmatpush1.xpose.msra.mxu0 0.0
    %4072 = vmatprep.subr.mxu0 0.0
    %4073 = vmatpush1.xpose.msra.mxu0 0.0
    %4074 = vmatprep.subr.mxu0 0.0
    %4075 = vmatpush1.xpose.msra.mxu0 0.0
    %4076 = vmatprep.subr.mxu0 0.0
    %4077 = vmatpush1.xpose.msra.mxu0 0.0
    %4078 = vmatprep.subr.mxu0 0.0
    %4079 = vmatpush1.xpose.msra.mxu0 0.0
    %4080 = vmatprep.subr.mxu0 0.0
    %4081 = vmatpush1.xpose.msra.mxu0 0.0
    %4082 = vmatprep.subr.mxu0 0.0
    %4083 = vmatpush1.xpose.msra.mxu0 0.0
    %4084 = vmatprep.subr.mxu0 0.0
    %4085 = vmatpush1.xpose.msra.mxu0 0.0
    %4086 = vmatprep.subr.mxu0 0.0
    %4087 = vmatpush1.xpose.msra.mxu0 0.0
    %4088 = vmatprep.subr.mxu0 0.0
    %4089 = vmatpush1.xpose.msra.mxu0 0.0
    %4090 = vmatprep.subr.mxu0 0.0
    %4091 = vmatpush1.xpose.msra.mxu0 0.0
    %4092 = vmatprep.subr.mxu0 0.0
    %4093 = vmatpush1.xpose.msra.mxu0 0.0
    %4094 = vmatprep.mubr.f32.mxu0 0.0
    %4095 = vmatmul.mubr.f32.gmra.mrb[0].mxu0 %v4018
    %v4096 = vpop.f32.mrb[0].mxu0
    %v4097 = vadd.f32 %v40, %v4096
    %v4098 = vpop.f32.mrb[0].mxu0
    %4099 = vmatprep.mubr.f32.mxu0 0.0
    %4100 = vmatmul.mubr.f32.gmra.mrb[0].mxu0 %v4020
    %v4101 = vpop.f32.mrb[0].mxu0
    %v4102 = vadd.f32 %v41, %v4101
    %v4103 = vpop.f32.mrb[0].mxu0
    %4104 = vmatprep.mubr.f32.mxu0 0.0
    %4105 = vmatmul.mubr.f32.gmra.mrb[0].mxu0 %v4022
    %v4106 = vpop.f32.mrb[0].mxu0
    %v4107 = vadd.f32 %v42, %v4106
    %v4108 = vpop.f32.mrb[0].mxu0
    %4109 = vdwg.mxu0
    %v4110 = vsel %vm1601, %v4097, -inf
    %4111 = vmax.xlane.f32.xlu0 %v4110
    %v4112 = vpop.xlane.xlu0 %4111
    %v4113 = vsel %vm1601, %v4102, -inf
    %4114 = vmax.xlane.f32.xlu0 %v4113
    %v4115 = vpop.xlane.xlu0 %4114
    %v4116 = vsel %vm1601, %v4107, -inf
    %4117 = vmax.xlane.f32.xlu0 %v4116
    %v4118 = vpop.xlane.xlu0 %4117
    %v4119 = vsub.f32 %v4097, %v4112
    %v4120 = vsub.f32 %v4102, %v4115
    %v4121 = vsub.f32 %v4107, %v4118
    %v4122 = vmul.f32 %v4119, 1.442695
    %v4123 = vpow.pop %v4122
    %v4124 = vmul.f32 %v4120, 1.442695
    %v4125 = vpow.pop %v4124
    %v4126 = vmul.f32 %v4121, 1.442695
    %v4127 = vpow.pop %v4126
    %v4128 = vsel %vm1601, %v4123, 0.0
    %4129 = vadd.xlane.f32.xlu0 %v4128
    %v4130 = vpop.xlane.xlu0 %4129
    %v4131 = vsel %vm1601, %v4125, 0.0
    %4132 = vadd.xlane.f32.xlu0 %v4131
    %v4133 = vpop.xlane.xlu0 %4132
    %v4134 = vsel %vm1601, %v4127, 0.0
    %4135 = vadd.xlane.f32.xlu0 %v4134
    %v4136 = vpop.xlane.xlu0 %4135
    %v4137 = vrcp.pop %v4130
    %v4138 = vrcp.pop %v4133
    %v4139 = vrcp.pop %v4136
    %v4140 = vmul.f32 %v4123, %v4137
    %v4141 = vmul.f32 %v4125, %v4138
    %v4142 = vmul.f32 %v4127, %v4139
    %4143 = vrot.lane.b32.xlu0 %v3017, 40
    %v4144 = vpop.permute.xlu0 %4143
    %4145 = vrot.lane.b32.xlu0 %v3022, 40
    %v4146 = vpop.permute.xlu0 %4145
    %4147 = vrot.lane.b32.xlu0 %v3027, 40
    %v4148 = vpop.permute.xlu0 %4147
    %v4153 = vsel %vm1601, %v4140, 0
    %v4156 = vsel %vm1601, %v4141, 0
    %v4159 = vsel %vm1601, %v4142, 0
    %4161 = vmatprep.subr.mxu0 0.0
    %4162 = vmatpush1.msra.mxu0 %v4144
    %4163 = vmatprep.subr.mxu0 0.0
    %4164 = vmatpush1.msra.mxu0 %v4146
    %4165 = vmatprep.subr.mxu0 0.0
    %4166 = vmatpush1.msra.mxu0 %v4148
    %4167 = vmatprep.subr.mxu0 0.0
    %4168 = vmatpush1.msra.mxu0 0.0
    %4169 = vmatprep.subr.mxu0 0.0
    %4170 = vmatpush1.msra.mxu0 0.0
    %4171 = vmatprep.subr.mxu0 0.0
    %4172 = vmatpush1.msra.mxu0 0.0
    %4173 = vmatprep.subr.mxu0 0.0
    %4174 = vmatpush1.msra.mxu0 0.0
    %4175 = vmatprep.subr.mxu0 0.0
    %4176 = vmatpush1.msra.mxu0 0.0
    %4177 = vmatprep.subr.mxu0 0.0
    %4178 = vmatpush1.msra.mxu0 0.0
    %4179 = vmatprep.subr.mxu0 0.0
    %4180 = vmatpush1.msra.mxu0 0.0
    %4181 = vmatprep.subr.mxu0 0.0
    %4182 = vmatpush1.msra.mxu0 0.0
    %4183 = vmatprep.subr.mxu0 0.0
    %4184 = vmatpush1.msra.mxu0 0.0
    %4185 = vmatprep.subr.mxu0 0.0
    %4186 = vmatpush1.msra.mxu0 0.0
    %4187 = vmatprep.subr.mxu0 0.0
    %4188 = vmatpush1.msra.mxu0 0.0
    %4189 = vmatprep.subr.mxu0 0.0
    %4190 = vmatpush1.msra.mxu0 0.0
    %4191 = vmatprep.subr.mxu0 0.0
    %4192 = vmatpush1.msra.mxu0 0.0
    %4193 = vmatprep.subr.mxu0 0.0
    %4194 = vmatpush1.msra.mxu0 0.0
    %4195 = vmatprep.subr.mxu0 0.0
    %4196 = vmatpush1.msra.mxu0 0.0
    %4197 = vmatprep.subr.mxu0 0.0
    %4198 = vmatpush1.msra.mxu0 0.0
    %4199 = vmatprep.subr.mxu0 0.0
    %4200 = vmatpush1.msra.mxu0 0.0
    %4201 = vmatprep.subr.mxu0 0.0
    %4202 = vmatpush1.msra.mxu0 0.0
    %4203 = vmatprep.subr.mxu0 0.0
    %4204 = vmatpush1.msra.mxu0 0.0
    %4205 = vmatprep.subr.mxu0 0.0
    %4206 = vmatpush1.msra.mxu0 0.0
    %4207 = vmatprep.subr.mxu0 0.0
    %4208 = vmatpush1.msra.mxu0 0.0
    %4209 = vmatprep.subr.mxu0 0.0
    %4210 = vmatpush1.msra.mxu0 0.0
    %4211 = vmatprep.subr.mxu0 0.0
    %4212 = vmatpush1.msra.mxu0 0.0
    %4213 = vmatprep.subr.mxu0 0.0
    %4214 = vmatpush1.msra.mxu0 0.0
    %4215 = vmatprep.subr.mxu0 0.0
    %4216 = vmatpush1.msra.mxu0 0.0
    %4217 = vmatprep.subr.mxu0 0.0
    %4218 = vmatpush1.msra.mxu0 0.0
    %4219 = vmatprep.subr.mxu0 0.0
    %4220 = vmatpush1.msra.mxu0 0.0
    %4221 = vmatprep.subr.mxu0 0.0
    %4222 = vmatpush1.msra.mxu0 0.0
    %4223 = vmatprep.subr.mxu0 0.0
    %4224 = vmatpush1.msra.mxu0 0.0
    %4225 = vmatprep.mubr.f32.mxu0 0.0
    %4226 = vmatmul.mubr.f32.gmra.mrb[0].mxu0 %v4153
    %v4227 = vpop.f32.mrb[0].mxu0
    %v4228 = vadd.f32 0.0, %v4227
    %v4229 = vpop.f32.mrb[0].mxu0
    %4230 = vmatprep.mubr.f32.mxu0 0.0
    %4231 = vmatmul.mubr.f32.gmra.mrb[0].mxu0 %v4156
    %v4232 = vpop.f32.mrb[0].mxu0
    %v4233 = vadd.f32 0.0, %v4232
    %v4234 = vpop.f32.mrb[0].mxu0
    %4235 = vmatprep.mubr.f32.mxu0 0.0
    %4236 = vmatmul.mubr.f32.gmra.mrb[0].mxu0 %v4159
    %v4237 = vpop.f32.mrb[0].mxu0
    %v4238 = vadd.f32 0.0, %v4237
    %v4239 = vpop.f32.mrb[0].mxu0
    %4240 = vdwg.mxu0
    %v4242 = vsel %vm147, %v4228, 0
    %v4245 = vsel %vm147, %v4233, 0
    %v4248 = vsel %vm147, %v4238, 0
    %4250 = vmatprep.subr.mxu0 0.0
    %4251 = vmatpush1.msra.mxu0 %v3033
    %4252 = vmatprep.subr.mxu0 0.0
    %4253 = vmatpush1.msra.mxu0 0.0
    %4254 = vmatprep.subr.mxu0 0.0
    %4255 = vmatpush1.msra.mxu0 0.0
    %4256 = vmatprep.subr.mxu0 0.0
    %4257 = vmatpush1.msra.mxu0 0.0
    %4258 = vmatprep.subr.mxu0 0.0
    %4259 = vmatpush1.msra.mxu0 0.0
    %4260 = vmatprep.subr.mxu0 0.0
    %4261 = vmatpush1.msra.mxu0 0.0
    %4262 = vmatprep.subr.mxu0 0.0
    %4263 = vmatpush1.msra.mxu0 0.0
    %4264 = vmatprep.subr.mxu0 0.0
    %4265 = vmatpush1.msra.mxu0 0.0
    %4266 = vmatprep.subr.mxu0 0.0
    %4267 = vmatpush1.msra.mxu0 0.0
    %4268 = vmatprep.subr.mxu0 0.0
    %4269 = vmatpush1.msra.mxu0 0.0
    %4270 = vmatprep.subr.mxu0 0.0
    %4271 = vmatpush1.msra.mxu0 0.0
    %4272 = vmatprep.subr.mxu0 0.0
    %4273 = vmatpush1.msra.mxu0 0.0
    %4274 = vmatprep.subr.mxu0 0.0
    %4275 = vmatpush1.msra.mxu0 0.0
    %4276 = vmatprep.subr.mxu0 0.0
    %4277 = vmatpush1.msra.mxu0 0.0
    %4278 = vmatprep.subr.mxu0 0.0
    %4279 = vmatpush1.msra.mxu0 0.0
    %4280 = vmatprep.subr.mxu0 0.0
    %4281 = vmatpush1.msra.mxu0 0.0
    %4282 = vmatprep.subr.mxu0 0.0
    %4283 = vmatpush1.msra.mxu0 0.0
    %4284 = vmatprep.subr.mxu0 0.0
    %4285 = vmatpush1.msra.mxu0 0.0
    %4286 = vmatprep.subr.mxu0 0.0
    %4287 = vmatpush1.msra.mxu0 0.0
    %4288 = vmatprep.subr.mxu0 0.0
    %4289 = vmatpush1.msra.mxu0 0.0
    %4290 = vmatprep.subr.mxu0 0.0
    %4291 = vmatpush1.msra.mxu0 0.0
    %4292 = vmatprep.subr.mxu0 0.0
    %4293 = vmatpush1.msra.mxu0 0.0
    %4294 = vmatprep.subr.mxu0 0.0
    %4295 = vmatpush1.msra.mxu0 0.0
    %4296 = vmatprep.subr.mxu0 0.0
    %4297 = vmatpush1.msra.mxu0 0.0
    %4298 = vmatprep.subr.mxu0 0.0
    %4299 = vmatpush1.msra.mxu0 0.0
    %4300 = vmatprep.subr.mxu0 0.0
    %4301 = vmatpush1.msra.mxu0 0.0
    %4302 = vmatprep.subr.mxu0 0.0
    %4303 = vmatpush1.msra.mxu0 0.0
    %4304 = vmatprep.subr.mxu0 0.0
    %4305 = vmatpush1.msra.mxu0 0.0
    %4306 = vmatprep.subr.mxu0 0.0
    %4307 = vmatpush1.msra.mxu0 0.0
    %4308 = vmatprep.subr.mxu0 0.0
    %4309 = vmatpush1.msra.mxu0 0.0
    %4310 = vmatprep.subr.mxu0 0.0
    %4311 = vmatpush1.msra.mxu0 0.0
    %4312 = vmatprep.subr.mxu0 0.0
    %4313 = vmatpush1.msra.mxu0 0.0
    %4314 = vmatprep.mubr.f32.mxu0 0.0
    %4315 = vmatmul.mubr.f32.gmra.mrb[0].mxu0 %v4242
    %v4316 = vpop.f32.mrb[0].mxu0
    %v4317 = vadd.f32 0.0, %v4316
    %v4318 = vpop.f32.mrb[0].mxu0
    %4319 = vmatprep.mubr.f32.mxu0 0.0
    %4320 = vmatmul.mubr.f32.gmra.mrb[0].mxu0 %v4245
    %v4321 = vpop.f32.mrb[0].mxu0
    %v4322 = vadd.f32 0.0, %v4321
    %v4323 = vpop.f32.mrb[0].mxu0
    %4324 = vmatprep.mubr.f32.mxu0 0.0
    %4325 = vmatmul.mubr.f32.gmra.mrb[0].mxu0 %v4248
    %v4326 = vpop.f32.mrb[0].mxu0
    %v4327 = vadd.f32 0.0, %v4326
    %v4328 = vpop.f32.mrb[0].mxu0
    %4329 = vdwg.mxu0
    %v4330 = vadd.f32 %v4003, %v4317
    %v4331 = vadd.f32 %v4004, %v4322
    %v4332 = vadd.f32 %v4005, %v4327
    %v4333 = vld [vmem:[#allocation2 + $0x1b0] sm:$0x1]
    %v4334 = vlaneseq
    %v4335 = vshrl.u32 %v4334, 7
    %v4336 = vsub.s32 0, %v4335
    %v4337 = vrot.slane %v4333, %v4336
    %v4338 = vadd.f32 %v4330, %v4337
    %v4339 = vadd.f32 %v4331, %v4337
    %v4340 = vadd.f32 %v4332, %v4337
    %v4341 = vadd.f32 %v33, %v4338
    %v4342 = vadd.f32 %v34, %v4339
    %v4343 = vadd.f32 %v35, %v4340
    %v4344 = vld [vmem:[#allocation2 + $0x2a0] sm:$0x1]
    %v4345 = vld [vmem:[#allocation2 + $0x2a8] sm:$0x1]
    %v4346 = vsel %vm55, %v4341, 0.0
    %4347 = vadd.xlane.f32.xlu0 %v4346
    %v4348 = vpop.xlane.xlu0 %4347
    %v4349 = vsel %vm55, %v4342, 0.0
    %4350 = vadd.xlane.f32.xlu0 %v4349
    %v4351 = vpop.xlane.xlu0 %4350
    %v4352 = vsel %vm55, %v4343, 0.0
    %4353 = vadd.xlane.f32.xlu0 %v4352
    %v4354 = vpop.xlane.xlu0 %4353
    %v4355 = vmul.f32 %v4348, %v1286
    %v4356 = vmul.f32 %v4351, %v1286
    %v4357 = vmul.f32 %v4354, %v1286
    %v4358 = vsub.f32 %v4341, %v4355
    %v4359 = vsub.f32 %v4342, %v4356
    %v4360 = vsub.f32 %v4343, %v4357
    %v4361 = vmul.f32 %v4358, %v4358
    %v4362 = vmul.f32 %v4359, %v4359
    %v4363 = vmul.f32 %v4360, %v4360
    %v4364 = vsel %vm55, %v4361, 0.0
    %4365 = vadd.xlane.f32.xlu0 %v4364
    %v4366 = vpop.xlane.xlu0 %4365
    %v4367 = vsel %vm55, %v4362, 0.0
    %4368 = vadd.xlane.f32.xlu0 %v4367
    %v4369 = vpop.xlane.xlu0 %4368
    %v4370 = vsel %vm55, %v4363, 0.0
    %4371 = vadd.xlane.f32.xlu0 %v4370
    %v4372 = vpop.xlane.xlu0 %4371
    %v4373 = vmul.f32 %v4366, %v1286
    %v4374 = vmul.f32 %v4369, %v1286
    %v4375 = vmul.f32 %v4372, %v1286
    %v4376 = vadd.f32 %v4373, 1e-05
    %v4377 = vadd.f32 %v4374, 1e-05
    %v4378 = vadd.f32 %v4375, 1e-05
    %v4379 = vrsqrt.pop %v4376
    %v4380 = vrsqrt.pop %v4377
    %v4381 = vrsqrt.pop %v4378
    %v4382 = vmul.f32 %v4358, %v4379
    %v4383 = vmul.f32 %v4359, %v4380
    %v4384 = vmul.f32 %v4360, %v4381
    %v4385 = vlaneseq
    %v4386 = vshrl.u32 %v4385, 7
    %v4387 = vsub.s32 0, %v4386
    %v4388 = vrot.slane %v4344, %v4387
    %v4389 = vmul.f32 %v4382, %v4388
    %v4390 = vmul.f32 %v4383, %v4388
    %v4391 = vmul.f32 %v4384, %v4388
    %v4392 = vlaneseq
    %v4393 = vshrl.u32 %v4392, 7
    %v4394 = vsub.s32 0, %v4393
    %v4395 = vrot.slane %v4345, %v4394
    %v4396 = vadd.f32 %v4389, %v4395
    %v4397 = vadd.f32 %v4390, %v4395
    %v4398 = vadd.f32 %v4391, %v4395
    %v4399 = vld [vmem:[#allocation2 + $0x1b8] sm:$0xff]
    %v4400 = vld [vmem:[#allocation2 + $0x1c0] sm:$0xff]
    %v4401 = vld [vmem:[#allocation2 + $0x1c8] sm:$0xff]
    %v4402 = vld [vmem:[#allocation2 + $0x1d0] sm:$0xff]
    %v4403 = vld [vmem:[#allocation2 + $0x1d8] sm:$0x1]
    %v4404 = vlaneseq
    %v4405 = vshrl.u32 %v4404, 7
    %v4406 = vsub.s32 0, %v4405
    %v4407 = vrot.slane %v4403, %v4406
    %v4409 = vsel %vm55, %v4396, 0
    %v4412 = vsel %vm55, %v4397, 0
    %v4415 = vsel %vm55, %v4398, 0
    %4417 = vmatprep.subr.mxu0 0.0
    %4418 = vmatpush1.msra.mxu0 %v4399
    %4419 = vmatprep.subr.mxu0 0.0
    %4420 = vmatpush1.msra.mxu0 %v4400
    %4421 = vmatprep.subr.mxu0 0.0
    %4422 = vmatpush1.msra.mxu0 %v4401
    %4423 = vmatprep.subr.mxu0 0.0
    %4424 = vmatpush1.msra.mxu0 %v4402
    %4425 = vmatprep.subr.mxu0 0.0
    %4426 = vmatpush1.msra.mxu0 0.0
    %4427 = vmatprep.subr.mxu0 0.0
    %4428 = vmatpush1.msra.mxu0 0.0
    %4429 = vmatprep.subr.mxu0 0.0
    %4430 = vmatpush1.msra.mxu0 0.0
    %4431 = vmatprep.subr.mxu0 0.0
    %4432 = vmatpush1.msra.mxu0 0.0
    %4433 = vmatprep.subr.mxu0 0.0
    %4434 = vmatpush1.msra.mxu0 0.0
    %4435 = vmatprep.subr.mxu0 0.0
    %4436 = vmatpush1.msra.mxu0 0.0
    %4437 = vmatprep.subr.mxu0 0.0
    %4438 = vmatpush1.msra.mxu0 0.0
    %4439 = vmatprep.subr.mxu0 0.0
    %4440 = vmatpush1.msra.mxu0 0.0
    %4441 = vmatprep.subr.mxu0 0.0
    %4442 = vmatpush1.msra.mxu0 0.0
    %4443 = vmatprep.subr.mxu0 0.0
    %4444 = vmatpush1.msra.mxu0 0.0
    %4445 = vmatprep.subr.mxu0 0.0
    %4446 = vmatpush1.msra.mxu0 0.0
    %4447 = vmatprep.subr.mxu0 0.0
    %4448 = vmatpush1.msra.mxu0 0.0
    %4449 = vmatprep.subr.mxu0 0.0
    %4450 = vmatpush1.msra.mxu0 0.0
    %4451 = vmatprep.subr.mxu0 0.0
    %4452 = vmatpush1.msra.mxu0 0.0
    %4453 = vmatprep.subr.mxu0 0.0
    %4454 = vmatpush1.msra.mxu0 0.0
    %4455 = vmatprep.subr.mxu0 0.0
    %4456 = vmatpush1.msra.mxu0 0.0
    %4457 = vmatprep.subr.mxu0 0.0
    %4458 = vmatpush1.msra.mxu0 0.0
    %4459 = vmatprep.subr.mxu0 0.0
    %4460 = vmatpush1.msra.mxu0 0.0
    %4461 = vmatprep.subr.mxu0 0.0
    %4462 = vmatpush1.msra.mxu0 0.0
    %4463 = vmatprep.subr.mxu0 0.0
    %4464 = vmatpush1.msra.mxu0 0.0
    %4465 = vmatprep.subr.mxu0 0.0
    %4466 = vmatpush1.msra.mxu0 0.0
    %4467 = vmatprep.subr.mxu0 0.0
    %4468 = vmatpush1.msra.mxu0 0.0
    %4469 = vmatprep.subr.mxu0 0.0
    %4470 = vmatpush1.msra.mxu0 0.0
    %4471 = vmatprep.subr.mxu0 0.0
    %4472 = vmatpush1.msra.mxu0 0.0
    %4473 = vmatprep.subr.mxu0 0.0
    %4474 = vmatpush1.msra.mxu0 0.0
    %4475 = vmatprep.subr.mxu0 0.0
    %4476 = vmatpush1.msra.mxu0 0.0
    %4477 = vmatprep.subr.mxu0 0.0
    %4478 = vmatpush1.msra.mxu0 0.0
    %4479 = vmatprep.subr.mxu0 0.0
    %4480 = vmatpush1.msra.mxu0 0.0
    %4481 = vmatprep.mubr.f32.mxu0 0.0
    %4482 = vmatmul.mubr.f32.gmra.mrb[0].mxu0 %v4409
    %v4483 = vpop.f32.mrb[0].mxu0
    %v4484 = vadd.f32 %v4407, %v4483
    %v4485 = vpop.f32.mrb[0].mxu0
    %4486 = vmatprep.mubr.f32.mxu0 0.0
    %4487 = vmatmul.mubr.f32.gmra.mrb[0].mxu0 %v4412
    %v4488 = vpop.f32.mrb[0].mxu0
    %v4489 = vadd.f32 %v4407, %v4488
    %v4490 = vpop.f32.mrb[0].mxu0
    %4491 = vmatprep.mubr.f32.mxu0 0.0
    %4492 = vmatmul.mubr.f32.gmra.mrb[0].mxu0 %v4415
    %v4493 = vpop.f32.mrb[0].mxu0
    %v4494 = vadd.f32 %v4407, %v4493
    %v4495 = vpop.f32.mrb[0].mxu0
    %4496 = vdwg.mxu0
    %v4497 = vld [vmem:[#allocation2 + $0x1e0] sm:$0xff]
    %v4498 = vld [vmem:[#allocation2 + $0x1e8] sm:$0xff]
    %v4499 = vld [vmem:[#allocation2 + $0x1f0] sm:$0xff]
    %v4500 = vld [vmem:[#allocation2 + $0x1f8] sm:$0xff]
    %v4501 = vld [vmem:[#allocation2 + $0x200] sm:$0x1]
    %v4502 = vlaneseq
    %v4503 = vshrl.u32 %v4502, 7
    %v4504 = vsub.s32 0, %v4503
    %v4505 = vrot.slane %v4501, %v4504
    %4506 = vmatprep.subr.mxu0 0.0
    %4507 = vmatpush1.msra.mxu0 %v4497
    %4508 = vmatprep.subr.mxu0 0.0
    %4509 = vmatpush1.msra.mxu0 %v4498
    %4510 = vmatprep.subr.mxu0 0.0
    %4511 = vmatpush1.msra.mxu0 %v4499
    %4512 = vmatprep.subr.mxu0 0.0
    %4513 = vmatpush1.msra.mxu0 %v4500
    %4514 = vmatprep.subr.mxu0 0.0
    %4515 = vmatpush1.msra.mxu0 0.0
    %4516 = vmatprep.subr.mxu0 0.0
    %4517 = vmatpush1.msra.mxu0 0.0
    %4518 = vmatprep.subr.mxu0 0.0
    %4519 = vmatpush1.msra.mxu0 0.0
    %4520 = vmatprep.subr.mxu0 0.0
    %4521 = vmatpush1.msra.mxu0 0.0
    %4522 = vmatprep.subr.mxu0 0.0
    %4523 = vmatpush1.msra.mxu0 0.0
    %4524 = vmatprep.subr.mxu0 0.0
    %4525 = vmatpush1.msra.mxu0 0.0
    %4526 = vmatprep.subr.mxu0 0.0
    %4527 = vmatpush1.msra.mxu0 0.0
    %4528 = vmatprep.subr.mxu0 0.0
    %4529 = vmatpush1.msra.mxu0 0.0
    %4530 = vmatprep.subr.mxu0 0.0
    %4531 = vmatpush1.msra.mxu0 0.0
    %4532 = vmatprep.subr.mxu0 0.0
    %4533 = vmatpush1.msra.mxu0 0.0
    %4534 = vmatprep.subr.mxu0 0.0
    %4535 = vmatpush1.msra.mxu0 0.0
    %4536 = vmatprep.subr.mxu0 0.0
    %4537 = vmatpush1.msra.mxu0 0.0
    %4538 = vmatprep.subr.mxu0 0.0
    %4539 = vmatpush1.msra.mxu0 0.0
    %4540 = vmatprep.subr.mxu0 0.0
    %4541 = vmatpush1.msra.mxu0 0.0
    %4542 = vmatprep.subr.mxu0 0.0
    %4543 = vmatpush1.msra.mxu0 0.0
    %4544 = vmatprep.subr.mxu0 0.0
    %4545 = vmatpush1.msra.mxu0 0.0
    %4546 = vmatprep.subr.mxu0 0.0
    %4547 = vmatpush1.msra.mxu0 0.0
    %4548 = vmatprep.subr.mxu0 0.0
    %4549 = vmatpush1.msra.mxu0 0.0
    %4550 = vmatprep.subr.mxu0 0.0
    %4551 = vmatpush1.msra.mxu0 0.0
    %4552 = vmatprep.subr.mxu0 0.0
    %4553 = vmatpush1.msra.mxu0 0.0
    %4554 = vmatprep.subr.mxu0 0.0
    %4555 = vmatpush1.msra.mxu0 0.0
    %4556 = vmatprep.subr.mxu0 0.0
    %4557 = vmatpush1.msra.mxu0 0.0
    %4558 = vmatprep.subr.mxu0 0.0
    %4559 = vmatpush1.msra.mxu0 0.0
    %4560 = vmatprep.subr.mxu0 0.0
    %4561 = vmatpush1.msra.mxu0 0.0
    %4562 = vmatprep.subr.mxu0 0.0
    %4563 = vmatpush1.msra.mxu0 0.0
    %4564 = vmatprep.subr.mxu0 0.0
    %4565 = vmatpush1.msra.mxu0 0.0
    %4566 = vmatprep.subr.mxu0 0.0
    %4567 = vmatpush1.msra.mxu0 0.0
    %4568 = vmatprep.subr.mxu0 0.0
    %4569 = vmatpush1.msra.mxu0 0.0
    %4570 = vmatprep.mubr.f32.mxu0 0.0
    %4571 = vmatmul.mubr.f32.gmra.mrb[0].mxu0 %v57
    %v4572 = vpop.f32.mrb[0].mxu0
    %v4573 = vadd.f32 %v4505, %v4572
    %v4574 = vpop.f32.mrb[0].mxu0
    %4575 = vmatprep.mubr.f32.mxu0 0.0
    %4576 = vmatmul.mubr.f32.gmra.mrb[0].mxu0 %v60
    %v4577 = vpop.f32.mrb[0].mxu0
    %v4578 = vadd.f32 %v4505, %v4577
    %v4579 = vpop.f32.mrb[0].mxu0
    %4580 = vdwg.mxu0
    %v4581 = vld [vmem:[#allocation2 + $0x208] sm:$0xff]
    %v4582 = vld [vmem:[#allocation2 + $0x210] sm:$0xff]
    %v4583 = vld [vmem:[#allocation2 + $0x218] sm:$0xff]
    %v4584 = vld [vmem:[#allocation2 + $0x220] sm:$0xff]
    %v4586 = vsel %vm147, %v4484, 0
    %v4589 = vsel %vm147, %v4489, 0
    %v4592 = vsel %vm147, %v4494, 0
    %v4595 = vsel %vm147, %v4573, 0
    %v4598 = vsel %vm147, %v4578, 0
    %4600 = vmatprep.subr.mxu0 0.0
    %4601 = vmatpush1.xpose.msra.mxu0 %v4595
    %4602 = vmatprep.subr.mxu0 0.0
    %4603 = vmatpush1.xpose.msra.mxu0 %v4598
    %4604 = vmatprep.subr.mxu0 0.0
    %4605 = vmatpush1.xpose.msra.mxu0 0.0
    %4606 = vmatprep.subr.mxu0 0.0
    %4607 = vmatpush1.xpose.msra.mxu0 0.0
    %4608 = vmatprep.subr.mxu0 0.0
    %4609 = vmatpush1.xpose.msra.mxu0 0.0
    %4610 = vmatprep.subr.mxu0 0.0
    %4611 = vmatpush1.xpose.msra.mxu0 0.0
    %4612 = vmatprep.subr.mxu0 0.0
    %4613 = vmatpush1.xpose.msra.mxu0 0.0
    %4614 = vmatprep.subr.mxu0 0.0
    %4615 = vmatpush1.xpose.msra.mxu0 0.0
    %4616 = vmatprep.subr.mxu0 0.0
    %4617 = vmatpush1.xpose.msra.mxu0 0.0
    %4618 = vmatprep.subr.mxu0 0.0
    %4619 = vmatpush1.xpose.msra.mxu0 0.0
    %4620 = vmatprep.subr.mxu0 0.0
    %4621 = vmatpush1.xpose.msra.mxu0 0.0
    %4622 = vmatprep.subr.mxu0 0.0
    %4623 = vmatpush1.xpose.msra.mxu0 0.0
    %4624 = vmatprep.subr.mxu0 0.0
    %4625 = vmatpush1.xpose.msra.mxu0 0.0
    %4626 = vmatprep.subr.mxu0 0.0
    %4627 = vmatpush1.xpose.msra.mxu0 0.0
    %4628 = vmatprep.subr.mxu0 0.0
    %4629 = vmatpush1.xpose.msra.mxu0 0.0
    %4630 = vmatprep.subr.mxu0 0.0
    %4631 = vmatpush1.xpose.msra.mxu0 0.0
    %4632 = vmatprep.subr.mxu0 0.0
    %4633 = vmatpush1.xpose.msra.mxu0 0.0
    %4634 = vmatprep.subr.mxu0 0.0
    %4635 = vmatpush1.xpose.msra.mxu0 0.0
    %4636 = vmatprep.subr.mxu0 0.0
    %4637 = vmatpush1.xpose.msra.mxu0 0.0
    %4638 = vmatprep.subr.mxu0 0.0
    %4639 = vmatpush1.xpose.msra.mxu0 0.0
    %4640 = vmatprep.subr.mxu0 0.0
    %4641 = vmatpush1.xpose.msra.mxu0 0.0
    %4642 = vmatprep.subr.mxu0 0.0
    %4643 = vmatpush1.xpose.msra.mxu0 0.0
    %4644 = vmatprep.subr.mxu0 0.0
    %4645 = vmatpush1.xpose.msra.mxu0 0.0
    %4646 = vmatprep.subr.mxu0 0.0
    %4647 = vmatpush1.xpose.msra.mxu0 0.0
    %4648 = vmatprep.subr.mxu0 0.0
    %4649 = vmatpush1.xpose.msra.mxu0 0.0
    %4650 = vmatprep.subr.mxu0 0.0
    %4651 = vmatpush1.xpose.msra.mxu0 0.0
    %4652 = vmatprep.subr.mxu0 0.0
    %4653 = vmatpush1.xpose.msra.mxu0 0.0
    %4654 = vmatprep.subr.mxu0 0.0
    %4655 = vmatpush1.xpose.msra.mxu0 0.0
    %4656 = vmatprep.subr.mxu0 0.0
    %4657 = vmatpush1.xpose.msra.mxu0 0.0
    %4658 = vmatprep.subr.mxu0 0.0
    %4659 = vmatpush1.xpose.msra.mxu0 0.0
    %4660 = vmatprep.subr.mxu0 0.0
    %4661 = vmatpush1.xpose.msra.mxu0 0.0
    %4662 = vmatprep.subr.mxu0 0.0
    %4663 = vmatpush1.xpose.msra.mxu0 0.0
    %4664 = vmatprep.mubr.f32.mxu0 0.0
    %4665 = vmatmul.mubr.f32.gmra.mrb[0].mxu0 %v4586
    %v4666 = vpop.f32.mrb[0].mxu0
    %v4667 = vadd.f32 %v43, %v4666
    %v4668 = vpop.f32.mrb[0].mxu0
    %4669 = vmatprep.mubr.f32.mxu0 0.0
    %4670 = vmatmul.mubr.f32.gmra.mrb[0].mxu0 %v4589
    %v4671 = vpop.f32.mrb[0].mxu0
    %v4672 = vadd.f32 %v44, %v4671
    %v4673 = vpop.f32.mrb[0].mxu0
    %4674 = vmatprep.mubr.f32.mxu0 0.0
    %4675 = vmatmul.mubr.f32.gmra.mrb[0].mxu0 %v4592
    %v4676 = vpop.f32.mrb[0].mxu0
    %v4677 = vadd.f32 %v45, %v4676
    %v4678 = vpop.f32.mrb[0].mxu0
    %4679 = vdwg.mxu0
    %v4680 = vsel %vm231, %v4667, -inf
    %4681 = vmax.xlane.f32.xlu0 %v4680
    %v4682 = vpop.xlane.xlu0 %4681
    %v4683 = vsel %vm231, %v4672, -inf
    %4684 = vmax.xlane.f32.xlu0 %v4683
    %v4685 = vpop.xlane.xlu0 %4684
    %v4686 = vsel %vm231, %v4677, -inf
    %4687 = vmax.xlane.f32.xlu0 %v4686
    %v4688 = vpop.xlane.xlu0 %4687
    %v4689 = vsub.f32 %v4667, %v4682
    %v4690 = vsub.f32 %v4672, %v4685
    %v4691 = vsub.f32 %v4677, %v4688
    %v4692 = vmul.f32 %v4689, 1.442695
    %v4693 = vpow.pop %v4692
    %v4694 = vmul.f32 %v4690, 1.442695
    %v4695 = vpow.pop %v4694
    %v4696 = vmul.f32 %v4691, 1.442695
    %v4697 = vpow.pop %v4696
    %v4698 = vsel %vm231, %v4693, 0.0
    %4699 = vadd.xlane.f32.xlu0 %v4698
    %v4700 = vpop.xlane.xlu0 %4699
    %v4701 = vsel %vm231, %v4695, 0.0
    %4702 = vadd.xlane.f32.xlu0 %v4701
    %v4703 = vpop.xlane.xlu0 %4702
    %v4704 = vsel %vm231, %v4697, 0.0
    %4705 = vadd.xlane.f32.xlu0 %v4704
    %v4706 = vpop.xlane.xlu0 %4705
    %v4707 = vrcp.pop %v4700
    %v4708 = vrcp.pop %v4703
    %v4709 = vrcp.pop %v4706
    %v4710 = vmul.f32 %v4693, %v4707
    %v4711 = vmul.f32 %v4695, %v4708
    %v4712 = vmul.f32 %v4697, %v4709
    %4713 = vrot.lane.b32.xlu0 %v4573, 96
    %v4714 = vpop.permute.xlu0 %4713
    %4715 = vrot.lane.b32.xlu0 %v4578, 96
    %v4716 = vpop.permute.xlu0 %4715
    %v4720 = vsel %vm231, %v4710, 0
    %v4723 = vsel %vm231, %v4711, 0
    %v4726 = vsel %vm231, %v4712, 0
    %4728 = vmatprep.subr.mxu0 0.0
    %4729 = vmatpush1.msra.mxu0 %v4714
    %4730 = vmatprep.subr.mxu0 0.0
    %4731 = vmatpush1.msra.mxu0 %v4716
    %4732 = vmatprep.subr.mxu0 0.0
    %4733 = vmatpush1.msra.mxu0 0.0
    %4734 = vmatprep.subr.mxu0 0.0
    %4735 = vmatpush1.msra.mxu0 0.0
    %4736 = vmatprep.subr.mxu0 0.0
    %4737 = vmatpush1.msra.mxu0 0.0
    %4738 = vmatprep.subr.mxu0 0.0
    %4739 = vmatpush1.msra.mxu0 0.0
    %4740 = vmatprep.subr.mxu0 0.0
    %4741 = vmatpush1.msra.mxu0 0.0
    %4742 = vmatprep.subr.mxu0 0.0
    %4743 = vmatpush1.msra.mxu0 0.0
    %4744 = vmatprep.subr.mxu0 0.0
    %4745 = vmatpush1.msra.mxu0 0.0
    %4746 = vmatprep.subr.mxu0 0.0
    %4747 = vmatpush1.msra.mxu0 0.0
    %4748 = vmatprep.subr.mxu0 0.0
    %4749 = vmatpush1.msra.mxu0 0.0
    %4750 = vmatprep.subr.mxu0 0.0
    %4751 = vmatpush1.msra.mxu0 0.0
    %4752 = vmatprep.subr.mxu0 0.0
    %4753 = vmatpush1.msra.mxu0 0.0
    %4754 = vmatprep.subr.mxu0 0.0
    %4755 = vmatpush1.msra.mxu0 0.0
    %4756 = vmatprep.subr.mxu0 0.0
    %4757 = vmatpush1.msra.mxu0 0.0
    %4758 = vmatprep.subr.mxu0 0.0
    %4759 = vmatpush1.msra.mxu0 0.0
    %4760 = vmatprep.subr.mxu0 0.0
    %4761 = vmatpush1.msra.mxu0 0.0
    %4762 = vmatprep.subr.mxu0 0.0
    %4763 = vmatpush1.msra.mxu0 0.0
    %4764 = vmatprep.subr.mxu0 0.0
    %4765 = vmatpush1.msra.mxu0 0.0
    %4766 = vmatprep.subr.mxu0 0.0
    %4767 = vmatpush1.msra.mxu0 0.0
    %4768 = vmatprep.subr.mxu0 0.0
    %4769 = vmatpush1.msra.mxu0 0.0
    %4770 = vmatprep.subr.mxu0 0.0
    %4771 = vmatpush1.msra.mxu0 0.0
    %4772 = vmatprep.subr.mxu0 0.0
    %4773 = vmatpush1.msra.mxu0 0.0
    %4774 = vmatprep.subr.mxu0 0.0
    %4775 = vmatpush1.msra.mxu0 0.0
    %4776 = vmatprep.subr.mxu0 0.0
    %4777 = vmatpush1.msra.mxu0 0.0
    %4778 = vmatprep.subr.mxu0 0.0
    %4779 = vmatpush1.msra.mxu0 0.0
    %4780 = vmatprep.subr.mxu0 0.0
    %4781 = vmatpush1.msra.mxu0 0.0
    %4782 = vmatprep.subr.mxu0 0.0
    %4783 = vmatpush1.msra.mxu0 0.0
    %4784 = vmatprep.subr.mxu0 0.0
    %4785 = vmatpush1.msra.mxu0 0.0
    %4786 = vmatprep.subr.mxu0 0.0
    %4787 = vmatpush1.msra.mxu0 0.0
    %4788 = vmatprep.subr.mxu0 0.0
    %4789 = vmatpush1.msra.mxu0 0.0
    %4790 = vmatprep.subr.mxu0 0.0
    %4791 = vmatpush1.msra.mxu0 0.0
    %4792 = vmatprep.mubr.f32.mxu0 0.0
    %4793 = vmatmul.mubr.f32.gmra.mrb[0].mxu0 %v4720
    %v4794 = vpop.f32.mrb[0].mxu0
    %v4795 = vadd.f32 0.0, %v4794
    %v4796 = vpop.f32.mrb[0].mxu0
    %4797 = vmatprep.mubr.f32.mxu0 0.0
    %4798 = vmatmul.mubr.f32.gmra.mrb[0].mxu0 %v4723
    %v4799 = vpop.f32.mrb[0].mxu0
    %v4800 = vadd.f32 0.0, %v4799
    %v4801 = vpop.f32.mrb[0].mxu0
    %4802 = vmatprep.mubr.f32.mxu0 0.0
    %4803 = vmatmul.mubr.f32.gmra.mrb[0].mxu0 %v4726
    %v4804 = vpop.f32.mrb[0].mxu0
    %v4805 = vadd.f32 0.0, %v4804
    %v4806 = vpop.f32.mrb[0].mxu0
    %4807 = vdwg.mxu0
    %4808 = vrot.lane.b32.xlu0 %v4484, 120
    %v4809 = vpop.permute.xlu0 %4808
    %4810 = vrot.lane.b32.xlu0 %v4489, 120
    %v4811 = vpop.permute.xlu0 %4810
    %4812 = vrot.lane.b32.xlu0 %v4494, 120
    %v4813 = vpop.permute.xlu0 %4812
    %4814 = vrot.lane.b32.xlu0 %v4573, 120
    %v4815 = vpop.permute.xlu0 %4814
    %4816 = vrot.lane.b32.xlu0 %v4578, 120
    %v4817 = vpop.permute.xlu0 %4816
    %v4818 = vsel %vm147, %v4809, 0
    %v4820 = vsel %vm147, %v4811, 0
    %v4822 = vsel %vm147, %v4813, 0
    %v4824 = vsel %vm147, %v4815, 0
    %v4826 = vsel %vm147, %v4817, 0
    %4828 = vmatprep.subr.mxu0 0.0
    %4829 = vmatpush1.xpose.msra.mxu0 %v4824
    %4830 = vmatprep.subr.mxu0 0.0
    %4831 = vmatpush1.xpose.msra.mxu0 %v4826
    %4832 = vmatprep.subr.mxu0 0.0
    %4833 = vmatpush1.xpose.msra.mxu0 0.0
    %4834 = vmatprep.subr.mxu0 0.0
    %4835 = vmatpush1.xpose.msra.mxu0 0.0
    %4836 = vmatprep.subr.mxu0 0.0
    %4837 = vmatpush1.xpose.msra.mxu0 0.0
    %4838 = vmatprep.subr.mxu0 0.0
    %4839 = vmatpush1.xpose.msra.mxu0 0.0
    %4840 = vmatprep.subr.mxu0 0.0
    %4841 = vmatpush1.xpose.msra.mxu0 0.0
    %4842 = vmatprep.subr.mxu0 0.0
    %4843 = vmatpush1.xpose.msra.mxu0 0.0
    %4844 = vmatprep.subr.mxu0 0.0
    %4845 = vmatpush1.xpose.msra.mxu0 0.0
    %4846 = vmatprep.subr.mxu0 0.0
    %4847 = vmatpush1.xpose.msra.mxu0 0.0
    %4848 = vmatprep.subr.mxu0 0.0
    %4849 = vmatpush1.xpose.msra.mxu0 0.0
    %4850 = vmatprep.subr.mxu0 0.0
    %4851 = vmatpush1.xpose.msra.mxu0 0.0
    %4852 = vmatprep.subr.mxu0 0.0
    %4853 = vmatpush1.xpose.msra.mxu0 0.0
    %4854 = vmatprep.subr.mxu0 0.0
    %4855 = vmatpush1.xpose.msra.mxu0 0.0
    %4856 = vmatprep.subr.mxu0 0.0
    %4857 = vmatpush1.xpose.msra.mxu0 0.0
    %4858 = vmatprep.subr.mxu0 0.0
    %4859 = vmatpush1.xpose.msra.mxu0 0.0
    %4860 = vmatprep.subr.mxu0 0.0
    %4861 = vmatpush1.xpose.msra.mxu0 0.0
    %4862 = vmatprep.subr.mxu0 0.0
    %4863 = vmatpush1.xpose.msra.mxu0 0.0
    %4864 = vmatprep.subr.mxu0 0.0
    %4865 = vmatpush1.xpose.msra.mxu0 0.0
    %4866 = vmatprep.subr.mxu0 0.0
    %4867 = vmatpush1.xpose.msra.mxu0 0.0
    %4868 = vmatprep.subr.mxu0 0.0
    %4869 = vmatpush1.xpose.msra.mxu0 0.0
    %4870 = vmatprep.subr.mxu0 0.0
    %4871 = vmatpush1.xpose.msra.mxu0 0.0
    %4872 = vmatprep.subr.mxu0 0.0
    %4873 = vmatpush1.xpose.msra.mxu0 0.0
    %4874 = vmatprep.subr.mxu0 0.0
    %4875 = vmatpush1.xpose.msra.mxu0 0.0
    %4876 = vmatprep.subr.mxu0 0.0
    %4877 = vmatpush1.xpose.msra.mxu0 0.0
    %4878 = vmatprep.subr.mxu0 0.0
    %4879 = vmatpush1.xpose.msra.mxu0 0.0
    %4880 = vmatprep.subr.mxu0 0.0
    %4881 = vmatpush1.xpose.msra.mxu0 0.0
    %4882 = vmatprep.subr.mxu0 0.0
    %4883 = vmatpush1.xpose.msra.mxu0 0.0
    %4884 = vmatprep.subr.mxu0 0.0
    %4885 = vmatpush1.xpose.msra.mxu0 0.0
    %4886 = vmatprep.subr.mxu0 0.0
    %4887 = vmatpush1.xpose.msra.mxu0 0.0
    %4888 = vmatprep.subr.mxu0 0.0
    %4889 = vmatpush1.xpose.msra.mxu0 0.0
    %4890 = vmatprep.subr.mxu0 0.0
    %4891 = vmatpush1.xpose.msra.mxu0 0.0
    %4892 = vmatprep.mubr.f32.mxu0 0.0
    %4893 = vmatmul.mubr.f32.gmra.mrb[0].mxu0 %v4818
    %v4894 = vpop.f32.mrb[0].mxu0
    %v4895 = vadd.f32 %v43, %v4894
    %v4896 = vpop.f32.mrb[0].mxu0
    %4897 = vmatprep.mubr.f32.mxu0 0.0
    %4898 = vmatmul.mubr.f32.gmra.mrb[0].mxu0 %v4820
    %v4899 = vpop.f32.mrb[0].mxu0
    %v4900 = vadd.f32 %v44, %v4899
    %v4901 = vpop.f32.mrb[0].mxu0
    %4902 = vmatprep.mubr.f32.mxu0 0.0
    %4903 = vmatmul.mubr.f32.gmra.mrb[0].mxu0 %v4822
    %v4904 = vpop.f32.mrb[0].mxu0
    %v4905 = vadd.f32 %v45, %v4904
    %v4906 = vpop.f32.mrb[0].mxu0
    %4907 = vdwg.mxu0
    %v4908 = vsel %vm231, %v4895, -inf
    %4909 = vmax.xlane.f32.xlu0 %v4908
    %v4910 = vpop.xlane.xlu0 %4909
    %v4911 = vsel %vm231, %v4900, -inf
    %4912 = vmax.xlane.f32.xlu0 %v4911
    %v4913 = vpop.xlane.xlu0 %4912
    %v4914 = vsel %vm231, %v4905, -inf
    %4915 = vmax.xlane.f32.xlu0 %v4914
    %v4916 = vpop.xlane.xlu0 %4915
    %v4917 = vsub.f32 %v4895, %v4910
    %v4918 = vsub.f32 %v4900, %v4913
    %v4919 = vsub.f32 %v4905, %v4916
    %v4920 = vmul.f32 %v4917, 1.442695
    %v4921 = vpow.pop %v4920
    %v4922 = vmul.f32 %v4918, 1.442695
    %v4923 = vpow.pop %v4922
    %v4924 = vmul.f32 %v4919, 1.442695
    %v4925 = vpow.pop %v4924
    %v4926 = vsel %vm231, %v4921, 0.0
    %4927 = vadd.xlane.f32.xlu0 %v4926
    %v4928 = vpop.xlane.xlu0 %4927
    %v4929 = vsel %vm231, %v4923, 0.0
    %4930 = vadd.xlane.f32.xlu0 %v4929
    %v4931 = vpop.xlane.xlu0 %4930
    %v4932 = vsel %vm231, %v4925, 0.0
    %4933 = vadd.xlane.f32.xlu0 %v4932
    %v4934 = vpop.xlane.xlu0 %4933
    %v4935 = vrcp.pop %v4928
    %v4936 = vrcp.pop %v4931
    %v4937 = vrcp.pop %v4934
    %v4938 = vmul.f32 %v4921, %v4935
    %v4939 = vmul.f32 %v4923, %v4936
    %v4940 = vmul.f32 %v4925, %v4937
    %4941 = vrot.lane.b32.xlu0 %v4573, 88
    %v4942 = vpop.permute.xlu0 %4941
    %4943 = vrot.lane.b32.xlu0 %v4578, 88
    %v4944 = vpop.permute.xlu0 %4943
    %v4948 = vsel %vm231, %v4938, 0
    %v4951 = vsel %vm231, %v4939, 0
    %v4954 = vsel %vm231, %v4940, 0
    %4956 = vmatprep.subr.mxu0 0.0
    %4957 = vmatpush1.msra.mxu0 %v4942
    %4958 = vmatprep.subr.mxu0 0.0
    %4959 = vmatpush1.msra.mxu0 %v4944
    %4960 = vmatprep.subr.mxu0 0.0
    %4961 = vmatpush1.msra.mxu0 0.0
    %4962 = vmatprep.subr.mxu0 0.0
    %4963 = vmatpush1.msra.mxu0 0.0
    %4964 = vmatprep.subr.mxu0 0.0
    %4965 = vmatpush1.msra.mxu0 0.0
    %4966 = vmatprep.subr.mxu0 0.0
    %4967 = vmatpush1.msra.mxu0 0.0
    %4968 = vmatprep.subr.mxu0 0.0
    %4969 = vmatpush1.msra.mxu0 0.0
    %4970 = vmatprep.subr.mxu0 0.0
    %4971 = vmatpush1.msra.mxu0 0.0
    %4972 = vmatprep.subr.mxu0 0.0
    %4973 = vmatpush1.msra.mxu0 0.0
    %4974 = vmatprep.subr.mxu0 0.0
    %4975 = vmatpush1.msra.mxu0 0.0
    %4976 = vmatprep.subr.mxu0 0.0
    %4977 = vmatpush1.msra.mxu0 0.0
    %4978 = vmatprep.subr.mxu0 0.0
    %4979 = vmatpush1.msra.mxu0 0.0
    %4980 = vmatprep.subr.mxu0 0.0
    %4981 = vmatpush1.msra.mxu0 0.0
    %4982 = vmatprep.subr.mxu0 0.0
    %4983 = vmatpush1.msra.mxu0 0.0
    %4984 = vmatprep.subr.mxu0 0.0
    %4985 = vmatpush1.msra.mxu0 0.0
    %4986 = vmatprep.subr.mxu0 0.0
    %4987 = vmatpush1.msra.mxu0 0.0
    %4988 = vmatprep.subr.mxu0 0.0
    %4989 = vmatpush1.msra.mxu0 0.0
    %4990 = vmatprep.subr.mxu0 0.0
    %4991 = vmatpush1.msra.mxu0 0.0
    %4992 = vmatprep.subr.mxu0 0.0
    %4993 = vmatpush1.msra.mxu0 0.0
    %4994 = vmatprep.subr.mxu0 0.0
    %4995 = vmatpush1.msra.mxu0 0.0
    %4996 = vmatprep.subr.mxu0 0.0
    %4997 = vmatpush1.msra.mxu0 0.0
    %4998 = vmatprep.subr.mxu0 0.0
    %4999 = vmatpush1.msra.mxu0 0.0
    %5000 = vmatprep.subr.mxu0 0.0
    %5001 = vmatpush1.msra.mxu0 0.0
    %5002 = vmatprep.subr.mxu0 0.0
    %5003 = vmatpush1.msra.mxu0 0.0
    %5004 = vmatprep.subr.mxu0 0.0
    %5005 = vmatpush1.msra.mxu0 0.0
    %5006 = vmatprep.subr.mxu0 0.0
    %5007 = vmatpush1.msra.mxu0 0.0
    %5008 = vmatprep.subr.mxu0 0.0
    %5009 = vmatpush1.msra.mxu0 0.0
    %5010 = vmatprep.subr.mxu0 0.0
    %5011 = vmatpush1.msra.mxu0 0.0
    %5012 = vmatprep.subr.mxu0 0.0
    %5013 = vmatpush1.msra.mxu0 0.0
    %5014 = vmatprep.subr.mxu0 0.0
    %5015 = vmatpush1.msra.mxu0 0.0
    %5016 = vmatprep.subr.mxu0 0.0
    %5017 = vmatpush1.msra.mxu0 0.0
    %5018 = vmatprep.subr.mxu0 0.0
    %5019 = vmatpush1.msra.mxu0 0.0
    %5020 = vmatprep.mubr.f32.mxu0 0.0
    %5021 = vmatmul.mubr.f32.gmra.mrb[0].mxu0 %v4948
    %v5022 = vpop.f32.mrb[0].mxu0
    %v5023 = vadd.f32 0.0, %v5022
    %v5024 = vpop.f32.mrb[0].mxu0
    %5025 = vmatprep.mubr.f32.mxu0 0.0
    %5026 = vmatmul.mubr.f32.gmra.mrb[0].mxu0 %v4951
    %v5027 = vpop.f32.mrb[0].mxu0
    %v5028 = vadd.f32 0.0, %v5027
    %v5029 = vpop.f32.mrb[0].mxu0
    %5030 = vmatprep.mubr.f32.mxu0 0.0
    %5031 = vmatmul.mubr.f32.gmra.mrb[0].mxu0 %v4954
    %v5032 = vpop.f32.mrb[0].mxu0
    %v5033 = vadd.f32 0.0, %v5032
    %v5034 = vpop.f32.mrb[0].mxu0
    %5035 = vdwg.mxu0
    %v5037 = vsel %vm147, %v5023, 0
    %v5040 = vsel %vm147, %v5028, 0
    %v5043 = vsel %vm147, %v5033, 0
    %5045 = vmatprep.subr.mxu0 0.0
    %5046 = vmatpush1.msra.mxu0 %v4582
    %5047 = vmatprep.subr.mxu0 0.0
    %5048 = vmatpush1.msra.mxu0 0.0
    %5049 = vmatprep.subr.mxu0 0.0
    %5050 = vmatpush1.msra.mxu0 0.0
    %5051 = vmatprep.subr.mxu0 0.0
    %5052 = vmatpush1.msra.mxu0 0.0
    %5053 = vmatprep.subr.mxu0 0.0
    %5054 = vmatpush1.msra.mxu0 0.0
    %5055 = vmatprep.subr.mxu0 0.0
    %5056 = vmatpush1.msra.mxu0 0.0
    %5057 = vmatprep.subr.mxu0 0.0
    %5058 = vmatpush1.msra.mxu0 0.0
    %5059 = vmatprep.subr.mxu0 0.0
    %5060 = vmatpush1.msra.mxu0 0.0
    %5061 = vmatprep.subr.mxu0 0.0
    %5062 = vmatpush1.msra.mxu0 0.0
    %5063 = vmatprep.subr.mxu0 0.0
    %5064 = vmatpush1.msra.mxu0 0.0
    %5065 = vmatprep.subr.mxu0 0.0
    %5066 = vmatpush1.msra.mxu0 0.0
    %5067 = vmatprep.subr.mxu0 0.0
    %5068 = vmatpush1.msra.mxu0 0.0
    %5069 = vmatprep.subr.mxu0 0.0
    %5070 = vmatpush1.msra.mxu0 0.0
    %5071 = vmatprep.subr.mxu0 0.0
    %5072 = vmatpush1.msra.mxu0 0.0
    %5073 = vmatprep.subr.mxu0 0.0
    %5074 = vmatpush1.msra.mxu0 0.0
    %5075 = vmatprep.subr.mxu0 0.0
    %5076 = vmatpush1.msra.mxu0 0.0
    %5077 = vmatprep.subr.mxu0 0.0
    %5078 = vmatpush1.msra.mxu0 0.0
    %5079 = vmatprep.subr.mxu0 0.0
    %5080 = vmatpush1.msra.mxu0 0.0
    %5081 = vmatprep.subr.mxu0 0.0
    %5082 = vmatpush1.msra.mxu0 0.0
    %5083 = vmatprep.subr.mxu0 0.0
    %5084 = vmatpush1.msra.mxu0 0.0
    %5085 = vmatprep.subr.mxu0 0.0
    %5086 = vmatpush1.msra.mxu0 0.0
    %5087 = vmatprep.subr.mxu0 0.0
    %5088 = vmatpush1.msra.mxu0 0.0
    %5089 = vmatprep.subr.mxu0 0.0
    %5090 = vmatpush1.msra.mxu0 0.0
    %5091 = vmatprep.subr.mxu0 0.0
    %5092 = vmatpush1.msra.mxu0 0.0
    %5093 = vmatprep.subr.mxu0 0.0
    %5094 = vmatpush1.msra.mxu0 0.0
    %5095 = vmatprep.subr.mxu0 0.0
    %5096 = vmatpush1.msra.mxu0 0.0
    %5097 = vmatprep.subr.mxu0 0.0
    %5098 = vmatpush1.msra.mxu0 0.0
    %5099 = vmatprep.subr.mxu0 0.0
    %5100 = vmatpush1.msra.mxu0 0.0
    %5101 = vmatprep.subr.mxu0 0.0
    %5102 = vmatpush1.msra.mxu0 0.0
    %5103 = vmatprep.subr.mxu0 0.0
    %5104 = vmatpush1.msra.mxu0 0.0
    %5105 = vmatprep.subr.mxu0 0.0
    %5106 = vmatpush1.msra.mxu0 0.0
    %5107 = vmatprep.subr.mxu0 0.0
    %5108 = vmatpush1.msra.mxu0 0.0
    %5109 = vmatprep.mubr.f32.mxu0 0.0
    %5110 = vmatmul.mubr.f32.gmra.mrb[0].mxu0 %v5037
    %v5111 = vpop.f32.mrb[0].mxu0
    %v5112 = vadd.f32 0.0, %v5111
    %v5113 = vpop.f32.mrb[0].mxu0
    %5114 = vmatprep.mubr.f32.mxu0 0.0
    %5115 = vmatmul.mubr.f32.gmra.mrb[0].mxu0 %v5040
    %v5116 = vpop.f32.mrb[0].mxu0
    %v5117 = vadd.f32 0.0, %v5116
    %v5118 = vpop.f32.mrb[0].mxu0
    %5119 = vmatprep.mubr.f32.mxu0 0.0
    %5120 = vmatmul.mubr.f32.gmra.mrb[0].mxu0 %v5043
    %v5121 = vpop.f32.mrb[0].mxu0
    %v5122 = vadd.f32 0.0, %v5121
    %v5123 = vpop.f32.mrb[0].mxu0
    %5124 = vdwg.mxu0
    %v5126 = vsel %vm147, %v4795, 0
    %v5129 = vsel %vm147, %v4800, 0
    %v5132 = vsel %vm147, %v4805, 0
    %5134 = vmatprep.subr.mxu0 0.0
    %5135 = vmatpush1.msra.mxu0 %v4581
    %5136 = vmatprep.subr.mxu0 0.0
    %5137 = vmatpush1.msra.mxu0 0.0
    %5138 = vmatprep.subr.mxu0 0.0
    %5139 = vmatpush1.msra.mxu0 0.0
    %5140 = vmatprep.subr.mxu0 0.0
    %5141 = vmatpush1.msra.mxu0 0.0
    %5142 = vmatprep.subr.mxu0 0.0
    %5143 = vmatpush1.msra.mxu0 0.0
    %5144 = vmatprep.subr.mxu0 0.0
    %5145 = vmatpush1.msra.mxu0 0.0
    %5146 = vmatprep.subr.mxu0 0.0
    %5147 = vmatpush1.msra.mxu0 0.0
    %5148 = vmatprep.subr.mxu0 0.0
    %5149 = vmatpush1.msra.mxu0 0.0
    %5150 = vmatprep.subr.mxu0 0.0
    %5151 = vmatpush1.msra.mxu0 0.0
    %5152 = vmatprep.subr.mxu0 0.0
    %5153 = vmatpush1.msra.mxu0 0.0
    %5154 = vmatprep.subr.mxu0 0.0
    %5155 = vmatpush1.msra.mxu0 0.0
    %5156 = vmatprep.subr.mxu0 0.0
    %5157 = vmatpush1.msra.mxu0 0.0
    %5158 = vmatprep.subr.mxu0 0.0
    %5159 = vmatpush1.msra.mxu0 0.0
    %5160 = vmatprep.subr.mxu0 0.0
    %5161 = vmatpush1.msra.mxu0 0.0
    %5162 = vmatprep.subr.mxu0 0.0
    %5163 = vmatpush1.msra.mxu0 0.0
    %5164 = vmatprep.subr.mxu0 0.0
    %5165 = vmatpush1.msra.mxu0 0.0
    %5166 = vmatprep.subr.mxu0 0.0
    %5167 = vmatpush1.msra.mxu0 0.0
    %5168 = vmatprep.subr.mxu0 0.0
    %5169 = vmatpush1.msra.mxu0 0.0
    %5170 = vmatprep.subr.mxu0 0.0
    %5171 = vmatpush1.msra.mxu0 0.0
    %5172 = vmatprep.subr.mxu0 0.0
    %5173 = vmatpush1.msra.mxu0 0.0
    %5174 = vmatprep.subr.mxu0 0.0
    %5175 = vmatpush1.msra.mxu0 0.0
    %5176 = vmatprep.subr.mxu0 0.0
    %5177 = vmatpush1.msra.mxu0 0.0
    %5178 = vmatprep.subr.mxu0 0.0
    %5179 = vmatpush1.msra.mxu0 0.0
    %5180 = vmatprep.subr.mxu0 0.0
    %5181 = vmatpush1.msra.mxu0 0.0
    %5182 = vmatprep.subr.mxu0 0.0
    %5183 = vmatpush1.msra.mxu0 0.0
    %5184 = vmatprep.subr.mxu0 0.0
    %5185 = vmatpush1.msra.mxu0 0.0
    %5186 = vmatprep.subr.mxu0 0.0
    %5187 = vmatpush1.msra.mxu0 0.0
    %5188 = vmatprep.subr.mxu0 0.0
    %5189 = vmatpush1.msra.mxu0 0.0
    %5190 = vmatprep.subr.mxu0 0.0
    %5191 = vmatpush1.msra.mxu0 0.0
    %5192 = vmatprep.subr.mxu0 0.0
    %5193 = vmatpush1.msra.mxu0 0.0
    %5194 = vmatprep.subr.mxu0 0.0
    %5195 = vmatpush1.msra.mxu0 0.0
    %5196 = vmatprep.subr.mxu0 0.0
    %5197 = vmatpush1.msra.mxu0 0.0
    %5198 = vmatprep.mubr.f32.mxu0 0.0
    %5199 = vmatmul.mubr.f32.gmra.mrb[0].mxu0 %v5126
    %v5200 = vpop.f32.mrb[0].mxu0
    %v5201 = vadd.f32 %v5112, %v5200
    %v5202 = vpop.f32.mrb[0].mxu0
    %5203 = vmatprep.mubr.f32.mxu0 0.0
    %5204 = vmatmul.mubr.f32.gmra.mrb[0].mxu0 %v5129
    %v5205 = vpop.f32.mrb[0].mxu0
    %v5206 = vadd.f32 %v5117, %v5205
    %v5207 = vpop.f32.mrb[0].mxu0
    %5208 = vmatprep.mubr.f32.mxu0 0.0
    %5209 = vmatmul.mubr.f32.gmra.mrb[0].mxu0 %v5132
    %v5210 = vpop.f32.mrb[0].mxu0
    %v5211 = vadd.f32 %v5122, %v5210
    %v5212 = vpop.f32.mrb[0].mxu0
    %5213 = vdwg.mxu0
    %5214 = vrot.lane.b32.xlu0 %v4484, 112
    %v5215 = vpop.permute.xlu0 %5214
    %5216 = vrot.lane.b32.xlu0 %v4489, 112
    %v5217 = vpop.permute.xlu0 %5216
    %5218 = vrot.lane.b32.xlu0 %v4494, 112
    %v5219 = vpop.permute.xlu0 %5218
    %5220 = vrot.lane.b32.xlu0 %v4573, 112
    %v5221 = vpop.permute.xlu0 %5220
    %5222 = vrot.lane.b32.xlu0 %v4578, 112
    %v5223 = vpop.permute.xlu0 %5222
    %v5224 = vsel %vm147, %v5215, 0
    %v5226 = vsel %vm147, %v5217, 0
    %v5228 = vsel %vm147, %v5219, 0
    %v5230 = vsel %vm147, %v5221, 0
    %v5232 = vsel %vm147, %v5223, 0
    %5234 = vmatprep.subr.mxu0 0.0
    %5235 = vmatpush1.xpose.msra.mxu0 %v5230
    %5236 = vmatprep.subr.mxu0 0.0
    %5237 = vmatpush1.xpose.msra.mxu0 %v5232
    %5238 = vmatprep.subr.mxu0 0.0
    %5239 = vmatpush1.xpose.msra.mxu0 0.0
    %5240 = vmatprep.subr.mxu0 0.0
    %5241 = vmatpush1.xpose.msra.mxu0 0.0
    %5242 = vmatprep.subr.mxu0 0.0
    %5243 = vmatpush1.xpose.msra.mxu0 0.0
    %5244 = vmatprep.subr.mxu0 0.0
    %5245 = vmatpush1.xpose.msra.mxu0 0.0
    %5246 = vmatprep.subr.mxu0 0.0
    %5247 = vmatpush1.xpose.msra.mxu0 0.0
    %5248 = vmatprep.subr.mxu0 0.0
    %5249 = vmatpush1.xpose.msra.mxu0 0.0
    %5250 = vmatprep.subr.mxu0 0.0
    %5251 = vmatpush1.xpose.msra.mxu0 0.0
    %5252 = vmatprep.subr.mxu0 0.0
    %5253 = vmatpush1.xpose.msra.mxu0 0.0
    %5254 = vmatprep.subr.mxu0 0.0
    %5255 = vmatpush1.xpose.msra.mxu0 0.0
    %5256 = vmatprep.subr.mxu0 0.0
    %5257 = vmatpush1.xpose.msra.mxu0 0.0
    %5258 = vmatprep.subr.mxu0 0.0
    %5259 = vmatpush1.xpose.msra.mxu0 0.0
    %5260 = vmatprep.subr.mxu0 0.0
    %5261 = vmatpush1.xpose.msra.mxu0 0.0
    %5262 = vmatprep.subr.mxu0 0.0
    %5263 = vmatpush1.xpose.msra.mxu0 0.0
    %5264 = vmatprep.subr.mxu0 0.0
    %5265 = vmatpush1.xpose.msra.mxu0 0.0
    %5266 = vmatprep.subr.mxu0 0.0
    %5267 = vmatpush1.xpose.msra.mxu0 0.0
    %5268 = vmatprep.subr.mxu0 0.0
    %5269 = vmatpush1.xpose.msra.mxu0 0.0
    %5270 = vmatprep.subr.mxu0 0.0
    %5271 = vmatpush1.xpose.msra.mxu0 0.0
    %5272 = vmatprep.subr.mxu0 0.0
    %5273 = vmatpush1.xpose.msra.mxu0 0.0
    %5274 = vmatprep.subr.mxu0 0.0
    %5275 = vmatpush1.xpose.msra.mxu0 0.0
    %5276 = vmatprep.subr.mxu0 0.0
    %5277 = vmatpush1.xpose.msra.mxu0 0.0
    %5278 = vmatprep.subr.mxu0 0.0
    %5279 = vmatpush1.xpose.msra.mxu0 0.0
    %5280 = vmatprep.subr.mxu0 0.0
    %5281 = vmatpush1.xpose.msra.mxu0 0.0
    %5282 = vmatprep.subr.mxu0 0.0
    %5283 = vmatpush1.xpose.msra.mxu0 0.0
    %5284 = vmatprep.subr.mxu0 0.0
    %5285 = vmatpush1.xpose.msra.mxu0 0.0
    %5286 = vmatprep.subr.mxu0 0.0
    %5287 = vmatpush1.xpose.msra.mxu0 0.0
    %5288 = vmatprep.subr.mxu0 0.0
    %5289 = vmatpush1.xpose.msra.mxu0 0.0
    %5290 = vmatprep.subr.mxu0 0.0
    %5291 = vmatpush1.xpose.msra.mxu0 0.0
    %5292 = vmatprep.subr.mxu0 0.0
    %5293 = vmatpush1.xpose.msra.mxu0 0.0
    %5294 = vmatprep.subr.mxu0 0.0
    %5295 = vmatpush1.xpose.msra.mxu0 0.0
    %5296 = vmatprep.subr.mxu0 0.0
    %5297 = vmatpush1.xpose.msra.mxu0 0.0
    %5298 = vmatprep.mubr.f32.mxu0 0.0
    %5299 = vmatmul.mubr.f32.gmra.mrb[0].mxu0 %v5224
    %v5300 = vpop.f32.mrb[0].mxu0
    %v5301 = vadd.f32 %v43, %v5300
    %v5302 = vpop.f32.mrb[0].mxu0
    %5303 = vmatprep.mubr.f32.mxu0 0.0
    %5304 = vmatmul.mubr.f32.gmra.mrb[0].mxu0 %v5226
    %v5305 = vpop.f32.mrb[0].mxu0
    %v5306 = vadd.f32 %v44, %v5305
    %v5307 = vpop.f32.mrb[0].mxu0
    %5308 = vmatprep.mubr.f32.mxu0 0.0
    %5309 = vmatmul.mubr.f32.gmra.mrb[0].mxu0 %v5228
    %v5310 = vpop.f32.mrb[0].mxu0
    %v5311 = vadd.f32 %v45, %v5310
    %v5312 = vpop.f32.mrb[0].mxu0
    %5313 = vdwg.mxu0
    %v5314 = vsel %vm231, %v5301, -inf
    %5315 = vmax.xlane.f32.xlu0 %v5314
    %v5316 = vpop.xlane.xlu0 %5315
    %v5317 = vsel %vm231, %v5306, -inf
    %5318 = vmax.xlane.f32.xlu0 %v5317
    %v5319 = vpop.xlane.xlu0 %5318
    %v5320 = vsel %vm231, %v5311, -inf
    %5321 = vmax.xlane.f32.xlu0 %v5320
    %v5322 = vpop.xlane.xlu0 %5321
    %v5323 = vsub.f32 %v5301, %v5316
    %v5324 = vsub.f32 %v5306, %v5319
    %v5325 = vsub.f32 %v5311, %v5322
    %v5326 = vmul.f32 %v5323, 1.442695
    %v5327 = vpow.pop %v5326
    %v5328 = vmul.f32 %v5324, 1.442695
    %v5329 = vpow.pop %v5328
    %v5330 = vmul.f32 %v5325, 1.442695
    %v5331 = vpow.pop %v5330
    %v5332 = vsel %vm231, %v5327, 0.0
    %5333 = vadd.xlane.f32.xlu0 %v5332
    %v5334 = vpop.xlane.xlu0 %5333
    %v5335 = vsel %vm231, %v5329, 0.0
    %5336 = vadd.xlane.f32.xlu0 %v5335
    %v5337 = vpop.xlane.xlu0 %5336
    %v5338 = vsel %vm231, %v5331, 0.0
    %5339 = vadd.xlane.f32.xlu0 %v5338
    %v5340 = vpop.xlane.xlu0 %5339
    %v5341 = vrcp.pop %v5334
    %v5342 = vrcp.pop %v5337
    %v5343 = vrcp.pop %v5340
    %v5344 = vmul.f32 %v5327, %v5341
    %v5345 = vmul.f32 %v5329, %v5342
    %v5346 = vmul.f32 %v5331, %v5343
    %5347 = vrot.lane.b32.xlu0 %v4573, 80
    %v5348 = vpop.permute.xlu0 %5347
    %5349 = vrot.lane.b32.xlu0 %v4578, 80
    %v5350 = vpop.permute.xlu0 %5349
    %v5354 = vsel %vm231, %v5344, 0
    %v5357 = vsel %vm231, %v5345, 0
    %v5360 = vsel %vm231, %v5346, 0
    %5362 = vmatprep.subr.mxu0 0.0
    %5363 = vmatpush1.msra.mxu0 %v5348
    %5364 = vmatprep.subr.mxu0 0.0
    %5365 = vmatpush1.msra.mxu0 %v5350
    %5366 = vmatprep.subr.mxu0 0.0
    %5367 = vmatpush1.msra.mxu0 0.0
    %5368 = vmatprep.subr.mxu0 0.0
    %5369 = vmatpush1.msra.mxu0 0.0
    %5370 = vmatprep.subr.mxu0 0.0
    %5371 = vmatpush1.msra.mxu0 0.0
    %5372 = vmatprep.subr.mxu0 0.0
    %5373 = vmatpush1.msra.mxu0 0.0
    %5374 = vmatprep.subr.mxu0 0.0
    %5375 = vmatpush1.msra.mxu0 0.0
    %5376 = vmatprep.subr.mxu0 0.0
    %5377 = vmatpush1.msra.mxu0 0.0
    %5378 = vmatprep.subr.mxu0 0.0
    %5379 = vmatpush1.msra.mxu0 0.0
    %5380 = vmatprep.subr.mxu0 0.0
    %5381 = vmatpush1.msra.mxu0 0.0
    %5382 = vmatprep.subr.mxu0 0.0
    %5383 = vmatpush1.msra.mxu0 0.0
    %5384 = vmatprep.subr.mxu0 0.0
    %5385 = vmatpush1.msra.mxu0 0.0
    %5386 = vmatprep.subr.mxu0 0.0
    %5387 = vmatpush1.msra.mxu0 0.0
    %5388 = vmatprep.subr.mxu0 0.0
    %5389 = vmatpush1.msra.mxu0 0.0
    %5390 = vmatprep.subr.mxu0 0.0
    %5391 = vmatpush1.msra.mxu0 0.0
    %5392 = vmatprep.subr.mxu0 0.0
    %5393 = vmatpush1.msra.mxu0 0.0
    %5394 = vmatprep.subr.mxu0 0.0
    %5395 = vmatpush1.msra.mxu0 0.0
    %5396 = vmatprep.subr.mxu0 0.0
    %5397 = vmatpush1.msra.mxu0 0.0
    %5398 = vmatprep.subr.mxu0 0.0
    %5399 = vmatpush1.msra.mxu0 0.0
    %5400 = vmatprep.subr.mxu0 0.0
    %5401 = vmatpush1.msra.mxu0 0.0
    %5402 = vmatprep.subr.mxu0 0.0
    %5403 = vmatpush1.msra.mxu0 0.0
    %5404 = vmatprep.subr.mxu0 0.0
    %5405 = vmatpush1.msra.mxu0 0.0
    %5406 = vmatprep.subr.mxu0 0.0
    %5407 = vmatpush1.msra.mxu0 0.0
    %5408 = vmatprep.subr.mxu0 0.0
    %5409 = vmatpush1.msra.mxu0 0.0
    %5410 = vmatprep.subr.mxu0 0.0
    %5411 = vmatpush1.msra.mxu0 0.0
    %5412 = vmatprep.subr.mxu0 0.0
    %5413 = vmatpush1.msra.mxu0 0.0
    %5414 = vmatprep.subr.mxu0 0.0
    %5415 = vmatpush1.msra.mxu0 0.0
    %5416 = vmatprep.subr.mxu0 0.0
    %5417 = vmatpush1.msra.mxu0 0.0
    %5418 = vmatprep.subr.mxu0 0.0
    %5419 = vmatpush1.msra.mxu0 0.0
    %5420 = vmatprep.subr.mxu0 0.0
    %5421 = vmatpush1.msra.mxu0 0.0
    %5422 = vmatprep.subr.mxu0 0.0
    %5423 = vmatpush1.msra.mxu0 0.0
    %5424 = vmatprep.subr.mxu0 0.0
    %5425 = vmatpush1.msra.mxu0 0.0
    %5426 = vmatprep.mubr.f32.mxu0 0.0
    %5427 = vmatmul.mubr.f32.gmra.mrb[0].mxu0 %v5354
    %v5428 = vpop.f32.mrb[0].mxu0
    %v5429 = vadd.f32 0.0, %v5428
    %v5430 = vpop.f32.mrb[0].mxu0
    %5431 = vmatprep.mubr.f32.mxu0 0.0
    %5432 = vmatmul.mubr.f32.gmra.mrb[0].mxu0 %v5357
    %v5433 = vpop.f32.mrb[0].mxu0
    %v5434 = vadd.f32 0.0, %v5433
    %v5435 = vpop.f32.mrb[0].mxu0
    %5436 = vmatprep.mubr.f32.mxu0 0.0
    %5437 = vmatmul.mubr.f32.gmra.mrb[0].mxu0 %v5360
    %v5438 = vpop.f32.mrb[0].mxu0
    %v5439 = vadd.f32 0.0, %v5438
    %v5440 = vpop.f32.mrb[0].mxu0
    %5441 = vdwg.mxu0
    %v5443 = vsel %vm147, %v5429, 0
    %v5446 = vsel %vm147, %v5434, 0
    %v5449 = vsel %vm147, %v5439, 0
    %5451 = vmatprep.subr.mxu0 0.0
    %5452 = vmatpush1.msra.mxu0 %v4583
    %5453 = vmatprep.subr.mxu0 0.0
    %5454 = vmatpush1.msra.mxu0 0.0
    %5455 = vmatprep.subr.mxu0 0.0
    %5456 = vmatpush1.msra.mxu0 0.0
    %5457 = vmatprep.subr.mxu0 0.0
    %5458 = vmatpush1.msra.mxu0 0.0
    %5459 = vmatprep.subr.mxu0 0.0
    %5460 = vmatpush1.msra.mxu0 0.0
    %5461 = vmatprep.subr.mxu0 0.0
    %5462 = vmatpush1.msra.mxu0 0.0
    %5463 = vmatprep.subr.mxu0 0.0
    %5464 = vmatpush1.msra.mxu0 0.0
    %5465 = vmatprep.subr.mxu0 0.0
    %5466 = vmatpush1.msra.mxu0 0.0
    %5467 = vmatprep.subr.mxu0 0.0
    %5468 = vmatpush1.msra.mxu0 0.0
    %5469 = vmatprep.subr.mxu0 0.0
    %5470 = vmatpush1.msra.mxu0 0.0
    %5471 = vmatprep.subr.mxu0 0.0
    %5472 = vmatpush1.msra.mxu0 0.0
    %5473 = vmatprep.subr.mxu0 0.0
    %5474 = vmatpush1.msra.mxu0 0.0
    %5475 = vmatprep.subr.mxu0 0.0
    %5476 = vmatpush1.msra.mxu0 0.0
    %5477 = vmatprep.subr.mxu0 0.0
    %5478 = vmatpush1.msra.mxu0 0.0
    %5479 = vmatprep.subr.mxu0 0.0
    %5480 = vmatpush1.msra.mxu0 0.0
    %5481 = vmatprep.subr.mxu0 0.0
    %5482 = vmatpush1.msra.mxu0 0.0
    %5483 = vmatprep.subr.mxu0 0.0
    %5484 = vmatpush1.msra.mxu0 0.0
    %5485 = vmatprep.subr.mxu0 0.0
    %5486 = vmatpush1.msra.mxu0 0.0
    %5487 = vmatprep.subr.mxu0 0.0
    %5488 = vmatpush1.msra.mxu0 0.0
    %5489 = vmatprep.subr.mxu0 0.0
    %5490 = vmatpush1.msra.mxu0 0.0
    %5491 = vmatprep.subr.mxu0 0.0
    %5492 = vmatpush1.msra.mxu0 0.0
    %5493 = vmatprep.subr.mxu0 0.0
    %5494 = vmatpush1.msra.mxu0 0.0
    %5495 = vmatprep.subr.mxu0 0.0
    %5496 = vmatpush1.msra.mxu0 0.0
    %5497 = vmatprep.subr.mxu0 0.0
    %5498 = vmatpush1.msra.mxu0 0.0
    %5499 = vmatprep.subr.mxu0 0.0
    %5500 = vmatpush1.msra.mxu0 0.0
    %5501 = vmatprep.subr.mxu0 0.0
    %5502 = vmatpush1.msra.mxu0 0.0
    %5503 = vmatprep.subr.mxu0 0.0
    %5504 = vmatpush1.msra.mxu0 0.0
    %5505 = vmatprep.subr.mxu0 0.0
    %5506 = vmatpush1.msra.mxu0 0.0
    %5507 = vmatprep.subr.mxu0 0.0
    %5508 = vmatpush1.msra.mxu0 0.0
    %5509 = vmatprep.subr.mxu0 0.0
    %5510 = vmatpush1.msra.mxu0 0.0
    %5511 = vmatprep.subr.mxu0 0.0
    %5512 = vmatpush1.msra.mxu0 0.0
    %5513 = vmatprep.subr.mxu0 0.0
    %5514 = vmatpush1.msra.mxu0 0.0
    %5515 = vmatprep.mubr.f32.mxu0 0.0
    %5516 = vmatmul.mubr.f32.gmra.mrb[0].mxu0 %v5443
    %v5517 = vpop.f32.mrb[0].mxu0
    %v5518 = vadd.f32 0.0, %v5517
    %v5519 = vpop.f32.mrb[0].mxu0
    %5520 = vmatprep.mubr.f32.mxu0 0.0
    %5521 = vmatmul.mubr.f32.gmra.mrb[0].mxu0 %v5446
    %v5522 = vpop.f32.mrb[0].mxu0
    %v5523 = vadd.f32 0.0, %v5522
    %v5524 = vpop.f32.mrb[0].mxu0
    %5525 = vmatprep.mubr.f32.mxu0 0.0
    %5526 = vmatmul.mubr.f32.gmra.mrb[0].mxu0 %v5449
    %v5527 = vpop.f32.mrb[0].mxu0
    %v5528 = vadd.f32 0.0, %v5527
    %v5529 = vpop.f32.mrb[0].mxu0
    %5530 = vdwg.mxu0
    %v5531 = vadd.f32 %v5201, %v5518
    %v5532 = vadd.f32 %v5206, %v5523
    %v5533 = vadd.f32 %v5211, %v5528
    %5534 = vrot.lane.b32.xlu0 %v4484, 104
    %v5535 = vpop.permute.xlu0 %5534
    %5536 = vrot.lane.b32.xlu0 %v4489, 104
    %v5537 = vpop.permute.xlu0 %5536
    %5538 = vrot.lane.b32.xlu0 %v4494, 104
    %v5539 = vpop.permute.xlu0 %5538
    %5540 = vrot.lane.b32.xlu0 %v4573, 104
    %v5541 = vpop.permute.xlu0 %5540
    %5542 = vrot.lane.b32.xlu0 %v4578, 104
    %v5543 = vpop.permute.xlu0 %5542
    %v5544 = vsel %vm147, %v5535, 0
    %v5546 = vsel %vm147, %v5537, 0
    %v5548 = vsel %vm147, %v5539, 0
    %v5550 = vsel %vm147, %v5541, 0
    %v5552 = vsel %vm147, %v5543, 0
    %5554 = vmatprep.subr.mxu0 0.0
    %5555 = vmatpush1.xpose.msra.mxu0 %v5550
    %5556 = vmatprep.subr.mxu0 0.0
    %5557 = vmatpush1.xpose.msra.mxu0 %v5552
    %5558 = vmatprep.subr.mxu0 0.0
    %5559 = vmatpush1.xpose.msra.mxu0 0.0
    %5560 = vmatprep.subr.mxu0 0.0
    %5561 = vmatpush1.xpose.msra.mxu0 0.0
    %5562 = vmatprep.subr.mxu0 0.0
    %5563 = vmatpush1.xpose.msra.mxu0 0.0
    %5564 = vmatprep.subr.mxu0 0.0
    %5565 = vmatpush1.xpose.msra.mxu0 0.0
    %5566 = vmatprep.subr.mxu0 0.0
    %5567 = vmatpush1.xpose.msra.mxu0 0.0
    %5568 = vmatprep.subr.mxu0 0.0
    %5569 = vmatpush1.xpose.msra.mxu0 0.0
    %5570 = vmatprep.subr.mxu0 0.0
    %5571 = vmatpush1.xpose.msra.mxu0 0.0
    %5572 = vmatprep.subr.mxu0 0.0
    %5573 = vmatpush1.xpose.msra.mxu0 0.0
    %5574 = vmatprep.subr.mxu0 0.0
    %5575 = vmatpush1.xpose.msra.mxu0 0.0
    %5576 = vmatprep.subr.mxu0 0.0
    %5577 = vmatpush1.xpose.msra.mxu0 0.0
    %5578 = vmatprep.subr.mxu0 0.0
    %5579 = vmatpush1.xpose.msra.mxu0 0.0
    %5580 = vmatprep.subr.mxu0 0.0
    %5581 = vmatpush1.xpose.msra.mxu0 0.0
    %5582 = vmatprep.subr.mxu0 0.0
    %5583 = vmatpush1.xpose.msra.mxu0 0.0
    %5584 = vmatprep.subr.mxu0 0.0
    %5585 = vmatpush1.xpose.msra.mxu0 0.0
    %5586 = vmatprep.subr.mxu0 0.0
    %5587 = vmatpush1.xpose.msra.mxu0 0.0
    %5588 = vmatprep.subr.mxu0 0.0
    %5589 = vmatpush1.xpose.msra.mxu0 0.0
    %5590 = vmatprep.subr.mxu0 0.0
    %5591 = vmatpush1.xpose.msra.mxu0 0.0
    %5592 = vmatprep.subr.mxu0 0.0
    %5593 = vmatpush1.xpose.msra.mxu0 0.0
    %5594 = vmatprep.subr.mxu0 0.0
    %5595 = vmatpush1.xpose.msra.mxu0 0.0
    %5596 = vmatprep.subr.mxu0 0.0
    %5597 = vmatpush1.xpose.msra.mxu0 0.0
    %5598 = vmatprep.subr.mxu0 0.0
    %5599 = vmatpush1.xpose.msra.mxu0 0.0
    %5600 = vmatprep.subr.mxu0 0.0
    %5601 = vmatpush1.xpose.msra.mxu0 0.0
    %5602 = vmatprep.subr.mxu0 0.0
    %5603 = vmatpush1.xpose.msra.mxu0 0.0
    %5604 = vmatprep.subr.mxu0 0.0
    %5605 = vmatpush1.xpose.msra.mxu0 0.0
    %5606 = vmatprep.subr.mxu0 0.0
    %5607 = vmatpush1.xpose.msra.mxu0 0.0
    %5608 = vmatprep.subr.mxu0 0.0
    %5609 = vmatpush1.xpose.msra.mxu0 0.0
    %5610 = vmatprep.subr.mxu0 0.0
    %5611 = vmatpush1.xpose.msra.mxu0 0.0
    %5612 = vmatprep.subr.mxu0 0.0
    %5613 = vmatpush1.xpose.msra.mxu0 0.0
    %5614 = vmatprep.subr.mxu0 0.0
    %5615 = vmatpush1.xpose.msra.mxu0 0.0
    %5616 = vmatprep.subr.mxu0 0.0
    %5617 = vmatpush1.xpose.msra.mxu0 0.0
    %5618 = vmatprep.mubr.f32.mxu0 0.0
    %5619 = vmatmul.mubr.f32.gmra.mrb[0].mxu0 %v5544
    %v5620 = vpop.f32.mrb[0].mxu0
    %v5621 = vadd.f32 %v43, %v5620
    %v5622 = vpop.f32.mrb[0].mxu0
    %5623 = vmatprep.mubr.f32.mxu0 0.0
    %5624 = vmatmul.mubr.f32.gmra.mrb[0].mxu0 %v5546
    %v5625 = vpop.f32.mrb[0].mxu0
    %v5626 = vadd.f32 %v44, %v5625
    %v5627 = vpop.f32.mrb[0].mxu0
    %5628 = vmatprep.mubr.f32.mxu0 0.0
    %5629 = vmatmul.mubr.f32.gmra.mrb[0].mxu0 %v5548
    %v5630 = vpop.f32.mrb[0].mxu0
    %v5631 = vadd.f32 %v45, %v5630
    %v5632 = vpop.f32.mrb[0].mxu0
    %5633 = vdwg.mxu0
    %v5634 = vsel %vm231, %v5621, -inf
    %5635 = vmax.xlane.f32.xlu0 %v5634
    %v5636 = vpop.xlane.xlu0 %5635
    %v5637 = vsel %vm231, %v5626, -inf
    %5638 = vmax.xlane.f32.xlu0 %v5637
    %v5639 = vpop.xlane.xlu0 %5638
    %v5640 = vsel %vm231, %v5631, -inf
    %5641 = vmax.xlane.f32.xlu0 %v5640
    %v5642 = vpop.xlane.xlu0 %5641
    %v5643 = vsub.f32 %v5621, %v5636
    %v5644 = vsub.f32 %v5626, %v5639
    %v5645 = vsub.f32 %v5631, %v5642
    %v5646 = vmul.f32 %v5643, 1.442695
    %v5647 = vpow.pop %v5646
    %v5648 = vmul.f32 %v5644, 1.442695
    %v5649 = vpow.pop %v5648
    %v5650 = vmul.f32 %v5645, 1.442695
    %v5651 = vpow.pop %v5650
    %v5652 = vsel %vm231, %v5647, 0.0
    %5653 = vadd.xlane.f32.xlu0 %v5652
    %v5654 = vpop.xlane.xlu0 %5653
    %v5655 = vsel %vm231, %v5649, 0.0
    %5656 = vadd.xlane.f32.xlu0 %v5655
    %v5657 = vpop.xlane.xlu0 %5656
    %v5658 = vsel %vm231, %v5651, 0.0
    %5659 = vadd.xlane.f32.xlu0 %v5658
    %v5660 = vpop.xlane.xlu0 %5659
    %v5661 = vrcp.pop %v5654
    %v5662 = vrcp.pop %v5657
    %v5663 = vrcp.pop %v5660
    %v5664 = vmul.f32 %v5647, %v5661
    %v5665 = vmul.f32 %v5649, %v5662
    %v5666 = vmul.f32 %v5651, %v5663
    %5667 = vrot.lane.b32.xlu0 %v4573, 72
    %v5668 = vpop.permute.xlu0 %5667
    %5669 = vrot.lane.b32.xlu0 %v4578, 72
    %v5670 = vpop.permute.xlu0 %5669
    %v5674 = vsel %vm231, %v5664, 0
    %v5677 = vsel %vm231, %v5665, 0
    %v5680 = vsel %vm231, %v5666, 0
    %5682 = vmatprep.subr.mxu0 0.0
    %5683 = vmatpush1.msra.mxu0 %v5668
    %5684 = vmatprep.subr.mxu0 0.0
    %5685 = vmatpush1.msra.mxu0 %v5670
    %5686 = vmatprep.subr.mxu0 0.0
    %5687 = vmatpush1.msra.mxu0 0.0
    %5688 = vmatprep.subr.mxu0 0.0
    %5689 = vmatpush1.msra.mxu0 0.0
    %5690 = vmatprep.subr.mxu0 0.0
    %5691 = vmatpush1.msra.mxu0 0.0
    %5692 = vmatprep.subr.mxu0 0.0
    %5693 = vmatpush1.msra.mxu0 0.0
    %5694 = vmatprep.subr.mxu0 0.0
    %5695 = vmatpush1.msra.mxu0 0.0
    %5696 = vmatprep.subr.mxu0 0.0
    %5697 = vmatpush1.msra.mxu0 0.0
    %5698 = vmatprep.subr.mxu0 0.0
    %5699 = vmatpush1.msra.mxu0 0.0
    %5700 = vmatprep.subr.mxu0 0.0
    %5701 = vmatpush1.msra.mxu0 0.0
    %5702 = vmatprep.subr.mxu0 0.0
    %5703 = vmatpush1.msra.mxu0 0.0
    %5704 = vmatprep.subr.mxu0 0.0
    %5705 = vmatpush1.msra.mxu0 0.0
    %5706 = vmatprep.subr.mxu0 0.0
    %5707 = vmatpush1.msra.mxu0 0.0
    %5708 = vmatprep.subr.mxu0 0.0
    %5709 = vmatpush1.msra.mxu0 0.0
    %5710 = vmatprep.subr.mxu0 0.0
    %5711 = vmatpush1.msra.mxu0 0.0
    %5712 = vmatprep.subr.mxu0 0.0
    %5713 = vmatpush1.msra.mxu0 0.0
    %5714 = vmatprep.subr.mxu0 0.0
    %5715 = vmatpush1.msra.mxu0 0.0
    %5716 = vmatprep.subr.mxu0 0.0
    %5717 = vmatpush1.msra.mxu0 0.0
    %5718 = vmatprep.subr.mxu0 0.0
    %5719 = vmatpush1.msra.mxu0 0.0
    %5720 = vmatprep.subr.mxu0 0.0
    %5721 = vmatpush1.msra.mxu0 0.0
    %5722 = vmatprep.subr.mxu0 0.0
    %5723 = vmatpush1.msra.mxu0 0.0
    %5724 = vmatprep.subr.mxu0 0.0
    %5725 = vmatpush1.msra.mxu0 0.0
    %5726 = vmatprep.subr.mxu0 0.0
    %5727 = vmatpush1.msra.mxu0 0.0
    %5728 = vmatprep.subr.mxu0 0.0
    %5729 = vmatpush1.msra.mxu0 0.0
    %5730 = vmatprep.subr.mxu0 0.0
    %5731 = vmatpush1.msra.mxu0 0.0
    %5732 = vmatprep.subr.mxu0 0.0
    %5733 = vmatpush1.msra.mxu0 0.0
    %5734 = vmatprep.subr.mxu0 0.0
    %5735 = vmatpush1.msra.mxu0 0.0
    %5736 = vmatprep.subr.mxu0 0.0
    %5737 = vmatpush1.msra.mxu0 0.0
    %5738 = vmatprep.subr.mxu0 0.0
    %5739 = vmatpush1.msra.mxu0 0.0
    %5740 = vmatprep.subr.mxu0 0.0
    %5741 = vmatpush1.msra.mxu0 0.0
    %5742 = vmatprep.subr.mxu0 0.0
    %5743 = vmatpush1.msra.mxu0 0.0
    %5744 = vmatprep.subr.mxu0 0.0
    %5745 = vmatpush1.msra.mxu0 0.0
    %5746 = vmatprep.mubr.f32.mxu0 0.0
    %5747 = vmatmul.mubr.f32.gmra.mrb[0].mxu0 %v5674
    %v5748 = vpop.f32.mrb[0].mxu0
    %v5749 = vadd.f32 0.0, %v5748
    %v5750 = vpop.f32.mrb[0].mxu0
    %5751 = vmatprep.mubr.f32.mxu0 0.0
    %5752 = vmatmul.mubr.f32.gmra.mrb[0].mxu0 %v5677
    %v5753 = vpop.f32.mrb[0].mxu0
    %v5754 = vadd.f32 0.0, %v5753
    %v5755 = vpop.f32.mrb[0].mxu0
    %5756 = vmatprep.mubr.f32.mxu0 0.0
    %5757 = vmatmul.mubr.f32.gmra.mrb[0].mxu0 %v5680
    %v5758 = vpop.f32.mrb[0].mxu0
    %v5759 = vadd.f32 0.0, %v5758
    %v5760 = vpop.f32.mrb[0].mxu0
    %5761 = vdwg.mxu0
    %v5763 = vsel %vm147, %v5749, 0
    %v5766 = vsel %vm147, %v5754, 0
    %v5769 = vsel %vm147, %v5759, 0
    %5771 = vmatprep.subr.mxu0 0.0
    %5772 = vmatpush1.msra.mxu0 %v4584
    %5773 = vmatprep.subr.mxu0 0.0
    %5774 = vmatpush1.msra.mxu0 0.0
    %5775 = vmatprep.subr.mxu0 0.0
    %5776 = vmatpush1.msra.mxu0 0.0
    %5777 = vmatprep.subr.mxu0 0.0
    %5778 = vmatpush1.msra.mxu0 0.0
    %5779 = vmatprep.subr.mxu0 0.0
    %5780 = vmatpush1.msra.mxu0 0.0
    %5781 = vmatprep.subr.mxu0 0.0
    %5782 = vmatpush1.msra.mxu0 0.0
    %5783 = vmatprep.subr.mxu0 0.0
    %5784 = vmatpush1.msra.mxu0 0.0
    %5785 = vmatprep.subr.mxu0 0.0
    %5786 = vmatpush1.msra.mxu0 0.0
    %5787 = vmatprep.subr.mxu0 0.0
    %5788 = vmatpush1.msra.mxu0 0.0
    %5789 = vmatprep.subr.mxu0 0.0
    %5790 = vmatpush1.msra.mxu0 0.0
    %5791 = vmatprep.subr.mxu0 0.0
    %5792 = vmatpush1.msra.mxu0 0.0
    %5793 = vmatprep.subr.mxu0 0.0
    %5794 = vmatpush1.msra.mxu0 0.0
    %5795 = vmatprep.subr.mxu0 0.0
    %5796 = vmatpush1.msra.mxu0 0.0
    %5797 = vmatprep.subr.mxu0 0.0
    %5798 = vmatpush1.msra.mxu0 0.0
    %5799 = vmatprep.subr.mxu0 0.0
    %5800 = vmatpush1.msra.mxu0 0.0
    %5801 = vmatprep.subr.mxu0 0.0
    %5802 = vmatpush1.msra.mxu0 0.0
    %5803 = vmatprep.subr.mxu0 0.0
    %5804 = vmatpush1.msra.mxu0 0.0
    %5805 = vmatprep.subr.mxu0 0.0
    %5806 = vmatpush1.msra.mxu0 0.0
    %5807 = vmatprep.subr.mxu0 0.0
    %5808 = vmatpush1.msra.mxu0 0.0
    %5809 = vmatprep.subr.mxu0 0.0
    %5810 = vmatpush1.msra.mxu0 0.0
    %5811 = vmatprep.subr.mxu0 0.0
    %5812 = vmatpush1.msra.mxu0 0.0
    %5813 = vmatprep.subr.mxu0 0.0
    %5814 = vmatpush1.msra.mxu0 0.0
    %5815 = vmatprep.subr.mxu0 0.0
    %5816 = vmatpush1.msra.mxu0 0.0
    %5817 = vmatprep.subr.mxu0 0.0
    %5818 = vmatpush1.msra.mxu0 0.0
    %5819 = vmatprep.subr.mxu0 0.0
    %5820 = vmatpush1.msra.mxu0 0.0
    %5821 = vmatprep.subr.mxu0 0.0
    %5822 = vmatpush1.msra.mxu0 0.0
    %5823 = vmatprep.subr.mxu0 0.0
    %5824 = vmatpush1.msra.mxu0 0.0
    %5825 = vmatprep.subr.mxu0 0.0
    %5826 = vmatpush1.msra.mxu0 0.0
    %5827 = vmatprep.subr.mxu0 0.0
    %5828 = vmatpush1.msra.mxu0 0.0
    %5829 = vmatprep.subr.mxu0 0.0
    %5830 = vmatpush1.msra.mxu0 0.0
    %5831 = vmatprep.subr.mxu0 0.0
    %5832 = vmatpush1.msra.mxu0 0.0
    %5833 = vmatprep.subr.mxu0 0.0
    %5834 = vmatpush1.msra.mxu0 0.0
    %5835 = vmatprep.mubr.f32.mxu0 0.0
    %5836 = vmatmul.mubr.f32.gmra.mrb[0].mxu0 %v5763
    %v5837 = vpop.f32.mrb[0].mxu0
    %v5838 = vadd.f32 0.0, %v5837
    %v5839 = vpop.f32.mrb[0].mxu0
    %5840 = vmatprep.mubr.f32.mxu0 0.0
    %5841 = vmatmul.mubr.f32.gmra.mrb[0].mxu0 %v5766
    %v5842 = vpop.f32.mrb[0].mxu0
    %v5843 = vadd.f32 0.0, %v5842
    %v5844 = vpop.f32.mrb[0].mxu0
    %5845 = vmatprep.mubr.f32.mxu0 0.0
    %5846 = vmatmul.mubr.f32.gmra.mrb[0].mxu0 %v5769
    %v5847 = vpop.f32.mrb[0].mxu0
    %v5848 = vadd.f32 0.0, %v5847
    %v5849 = vpop.f32.mrb[0].mxu0
    %5850 = vdwg.mxu0
    %v5851 = vadd.f32 %v5531, %v5838
    %v5852 = vadd.f32 %v5532, %v5843
    %v5853 = vadd.f32 %v5533, %v5848
    %v5854 = vld [vmem:[#allocation2 + $0x228] sm:$0x1]
    %v5855 = vlaneseq
    %v5856 = vshrl.u32 %v5855, 7
    %v5857 = vsub.s32 0, %v5856
    %v5858 = vrot.slane %v5854, %v5857
    %v5859 = vadd.f32 %v5851, %v5858
    %v5860 = vadd.f32 %v5852, %v5858
    %v5861 = vadd.f32 %v5853, %v5858
    %v5862 = vadd.f32 %v4396, %v5859
    %v5863 = vadd.f32 %v4397, %v5860
    %v5864 = vadd.f32 %v4398, %v5861
    %v5865 = vld [vmem:[#allocation2 + $0x2b0] sm:$0x1]
    %v5866 = vld [vmem:[#allocation2 + $0x2b8] sm:$0x1]
    %v5867 = vsel %vm55, %v5862, 0.0
    %5868 = vadd.xlane.f32.xlu0 %v5867
    %v5869 = vpop.xlane.xlu0 %5868
    %v5870 = vsel %vm55, %v5863, 0.0
    %5871 = vadd.xlane.f32.xlu0 %v5870
    %v5872 = vpop.xlane.xlu0 %5871
    %v5873 = vsel %vm55, %v5864, 0.0
    %5874 = vadd.xlane.f32.xlu0 %v5873
    %v5875 = vpop.xlane.xlu0 %5874
    %v5876 = vmul.f32 %v5869, %v1286
    %v5877 = vmul.f32 %v5872, %v1286
    %v5878 = vmul.f32 %v5875, %v1286
    %v5879 = vsub.f32 %v5862, %v5876
    %v5880 = vsub.f32 %v5863, %v5877
    %v5881 = vsub.f32 %v5864, %v5878
    %v5882 = vmul.f32 %v5879, %v5879
    %v5883 = vmul.f32 %v5880, %v5880
    %v5884 = vmul.f32 %v5881, %v5881
    %v5885 = vsel %vm55, %v5882, 0.0
    %5886 = vadd.xlane.f32.xlu0 %v5885
    %v5887 = vpop.xlane.xlu0 %5886
    %v5888 = vsel %vm55, %v5883, 0.0
    %5889 = vadd.xlane.f32.xlu0 %v5888
    %v5890 = vpop.xlane.xlu0 %5889
    %v5891 = vsel %vm55, %v5884, 0.0
    %5892 = vadd.xlane.f32.xlu0 %v5891
    %v5893 = vpop.xlane.xlu0 %5892
    %v5894 = vmul.f32 %v5887, %v1286
    %v5895 = vmul.f32 %v5890, %v1286
    %v5896 = vmul.f32 %v5893, %v1286
    %v5897 = vadd.f32 %v5894, 1e-05
    %v5898 = vadd.f32 %v5895, 1e-05
    %v5899 = vadd.f32 %v5896, 1e-05
    %v5900 = vrsqrt.pop %v5897
    %v5901 = vrsqrt.pop %v5898
    %v5902 = vrsqrt.pop %v5899
    %v5903 = vmul.f32 %v5879, %v5900
    %v5904 = vmul.f32 %v5880, %v5901
    %v5905 = vmul.f32 %v5881, %v5902
    %v5906 = vlaneseq
    %v5907 = vshrl.u32 %v5906, 7
    %v5908 = vsub.s32 0, %v5907
    %v5909 = vrot.slane %v5865, %v5908
    %v5910 = vmul.f32 %v5903, %v5909
    %v5911 = vmul.f32 %v5904, %v5909
    %v5912 = vmul.f32 %v5905, %v5909
    %v5913 = vlaneseq
    %v5914 = vshrl.u32 %v5913, 7
    %v5915 = vsub.s32 0, %v5914
    %v5916 = vrot.slane %v5866, %v5915
    %v5917 = vadd.f32 %v5910, %v5916
    %v5918 = vadd.f32 %v5911, %v5916
    %v5919 = vadd.f32 %v5912, %v5916
    %v5920 = vld [vmem:[#allocation2 + $0x230] sm:$0xff]
    %v5921 = vld [vmem:[#allocation2 + $0x238] sm:$0xff]
    %v5922 = vld [vmem:[#allocation2 + $0x240] sm:$0xff]
    %v5923 = vld [vmem:[#allocation2 + $0x248] sm:$0xff]
    %v5924 = vld [vmem:[#allocation2 + $0x250] sm:$0x1]
    %v5925 = vlaneseq
    %v5926 = vshrl.u32 %v5925, 7
    %v5927 = vsub.s32 0, %v5926
    %v5928 = vrot.slane %v5924, %v5927
    %v5930 = vsel %vm55, %v5917, 0
    %v5933 = vsel %vm55, %v5918, 0
    %v5936 = vsel %vm55, %v5919, 0
    %5938 = vmatprep.subr.mxu0 0.0
    %5939 = vmatpush1.msra.mxu0 %v5920
    %5940 = vmatprep.subr.mxu0 0.0
    %5941 = vmatpush1.msra.mxu0 %v5921
    %5942 = vmatprep.subr.mxu0 0.0
    %5943 = vmatpush1.msra.mxu0 %v5922
    %5944 = vmatprep.subr.mxu0 0.0
    %5945 = vmatpush1.msra.mxu0 %v5923
    %5946 = vmatprep.subr.mxu0 0.0
    %5947 = vmatpush1.msra.mxu0 0.0
    %5948 = vmatprep.subr.mxu0 0.0
    %5949 = vmatpush1.msra.mxu0 0.0
    %5950 = vmatprep.subr.mxu0 0.0
    %5951 = vmatpush1.msra.mxu0 0.0
    %5952 = vmatprep.subr.mxu0 0.0
    %5953 = vmatpush1.msra.mxu0 0.0
    %5954 = vmatprep.subr.mxu0 0.0
    %5955 = vmatpush1.msra.mxu0 0.0
    %5956 = vmatprep.subr.mxu0 0.0
    %5957 = vmatpush1.msra.mxu0 0.0
    %5958 = vmatprep.subr.mxu0 0.0
    %5959 = vmatpush1.msra.mxu0 0.0
    %5960 = vmatprep.subr.mxu0 0.0
    %5961 = vmatpush1.msra.mxu0 0.0
    %5962 = vmatprep.subr.mxu0 0.0
    %5963 = vmatpush1.msra.mxu0 0.0
    %5964 = vmatprep.subr.mxu0 0.0
    %5965 = vmatpush1.msra.mxu0 0.0
    %5966 = vmatprep.subr.mxu0 0.0
    %5967 = vmatpush1.msra.mxu0 0.0
    %5968 = vmatprep.subr.mxu0 0.0
    %5969 = vmatpush1.msra.mxu0 0.0
    %5970 = vmatprep.subr.mxu0 0.0
    %5971 = vmatpush1.msra.mxu0 0.0
    %5972 = vmatprep.subr.mxu0 0.0
    %5973 = vmatpush1.msra.mxu0 0.0
    %5974 = vmatprep.subr.mxu0 0.0
    %5975 = vmatpush1.msra.mxu0 0.0
    %5976 = vmatprep.subr.mxu0 0.0
    %5977 = vmatpush1.msra.mxu0 0.0
    %5978 = vmatprep.subr.mxu0 0.0
    %5979 = vmatpush1.msra.mxu0 0.0
    %5980 = vmatprep.subr.mxu0 0.0
    %5981 = vmatpush1.msra.mxu0 0.0
    %5982 = vmatprep.subr.mxu0 0.0
    %5983 = vmatpush1.msra.mxu0 0.0
    %5984 = vmatprep.subr.mxu0 0.0
    %5985 = vmatpush1.msra.mxu0 0.0
    %5986 = vmatprep.subr.mxu0 0.0
    %5987 = vmatpush1.msra.mxu0 0.0
    %5988 = vmatprep.subr.mxu0 0.0
    %5989 = vmatpush1.msra.mxu0 0.0
    %5990 = vmatprep.subr.mxu0 0.0
    %5991 = vmatpush1.msra.mxu0 0.0
    %5992 = vmatprep.subr.mxu0 0.0
    %5993 = vmatpush1.msra.mxu0 0.0
    %5994 = vmatprep.subr.mxu0 0.0
    %5995 = vmatpush1.msra.mxu0 0.0
    %5996 = vmatprep.subr.mxu0 0.0
    %5997 = vmatpush1.msra.mxu0 0.0
    %5998 = vmatprep.subr.mxu0 0.0
    %5999 = vmatpush1.msra.mxu0 0.0
    %6000 = vmatprep.subr.mxu0 0.0
    %6001 = vmatpush1.msra.mxu0 0.0
    %6002 = vmatprep.mubr.f32.mxu0 0.0
    %6003 = vmatmul.mubr.f32.gmra.mrb[0].mxu0 %v5930
    %v6004 = vpop.f32.mrb[0].mxu0
    %v6005 = vadd.f32 %v5928, %v6004
    %v6006 = vpop.f32.mrb[0].mxu0
    %6007 = vmatprep.mubr.f32.mxu0 0.0
    %6008 = vmatmul.mubr.f32.gmra.mrb[0].mxu0 %v5933
    %v6009 = vpop.f32.mrb[0].mxu0
    %v6010 = vadd.f32 %v5928, %v6009
    %v6011 = vpop.f32.mrb[0].mxu0
    %6012 = vmatprep.mubr.f32.mxu0 0.0
    %6013 = vmatmul.mubr.f32.gmra.mrb[0].mxu0 %v5936
    %v6014 = vpop.f32.mrb[0].mxu0
    %v6015 = vadd.f32 %v5928, %v6014
    %v6016 = vpop.f32.mrb[0].mxu0
    %6017 = vdwg.mxu0
    %v6018 = vmax.f32 %v6005, 0.0
    %v6019 = vmax.f32 %v6010, 0.0
    %v6020 = vmax.f32 %v6015, 0.0
    %v6021 = vld [vmem:[#allocation2 + $0x258] sm:$0xff]
    %v6022 = vld [vmem:[#allocation2 + $0x260] sm:$0xff]
    %v6023 = vld [vmem:[#allocation2 + $0x268] sm:$0xff]
    %v6024 = vld [vmem:[#allocation2 + $0x270] sm:$0xff]
    %v6025 = vld [vmem:[#allocation2 + $0x278] sm:$0xff]
    %v6026 = vld [vmem:[#allocation2 + $0x280] sm:$0xff]
    %v6027 = vld [vmem:[#allocation2 + $0x288] sm:$0xff]
    %v6028 = vld [vmem:[#allocation2 + $0x290] sm:$0xff]
    %v6029 = vld [vmem:[#allocation2 + $0x298] sm:$0x1]
    %v6030 = vlaneseq
    %v6031 = vshrl.u32 %v6030, 7
    %v6032 = vsub.s32 0, %v6031
    %v6033 = vrot.slane %v6029, %v6032
    %v6035 = vsel %vm2817, %v6018, 0
    %v6038 = vsel %vm2817, %v6019, 0
    %v6041 = vsel %vm2817, %v6020, 0
    %6043 = vmatprep.subr.mxu0 0.0
    %6044 = vmatpush1.msra.mxu0 %v6021
    %6045 = vmatprep.subr.mxu0 0.0
    %6046 = vmatpush1.msra.mxu0 %v6022
    %6047 = vmatprep.subr.mxu0 0.0
    %6048 = vmatpush1.msra.mxu0 %v6023
    %6049 = vmatprep.subr.mxu0 0.0
    %6050 = vmatpush1.msra.mxu0 %v6024
    %6051 = vmatprep.subr.mxu0 0.0
    %6052 = vmatpush1.msra.mxu0 %v6025
    %6053 = vmatprep.subr.mxu0 0.0
    %6054 = vmatpush1.msra.mxu0 %v6026
    %6055 = vmatprep.subr.mxu0 0.0
    %6056 = vmatpush1.msra.mxu0 %v6027
    %6057 = vmatprep.subr.mxu0 0.0
    %6058 = vmatpush1.msra.mxu0 %v6028
    %6059 = vmatprep.subr.mxu0 0.0
    %6060 = vmatpush1.msra.mxu0 0.0
    %6061 = vmatprep.subr.mxu0 0.0
    %6062 = vmatpush1.msra.mxu0 0.0
    %6063 = vmatprep.subr.mxu0 0.0
    %6064 = vmatpush1.msra.mxu0 0.0
    %6065 = vmatprep.subr.mxu0 0.0
    %6066 = vmatpush1.msra.mxu0 0.0
    %6067 = vmatprep.subr.mxu0 0.0
    %6068 = vmatpush1.msra.mxu0 0.0
    %6069 = vmatprep.subr.mxu0 0.0
    %6070 = vmatpush1.msra.mxu0 0.0
    %6071 = vmatprep.subr.mxu0 0.0
    %6072 = vmatpush1.msra.mxu0 0.0
    %6073 = vmatprep.subr.mxu0 0.0
    %6074 = vmatpush1.msra.mxu0 0.0
    %6075 = vmatprep.subr.mxu0 0.0
    %6076 = vmatpush1.msra.mxu0 0.0
    %6077 = vmatprep.subr.mxu0 0.0
    %6078 = vmatpush1.msra.mxu0 0.0
    %6079 = vmatprep.subr.mxu0 0.0
    %6080 = vmatpush1.msra.mxu0 0.0
    %6081 = vmatprep.subr.mxu0 0.0
    %6082 = vmatpush1.msra.mxu0 0.0
    %6083 = vmatprep.subr.mxu0 0.0
    %6084 = vmatpush1.msra.mxu0 0.0
    %6085 = vmatprep.subr.mxu0 0.0
    %6086 = vmatpush1.msra.mxu0 0.0
    %6087 = vmatprep.subr.mxu0 0.0
    %6088 = vmatpush1.msra.mxu0 0.0
    %6089 = vmatprep.subr.mxu0 0.0
    %6090 = vmatpush1.msra.mxu0 0.0
    %6091 = vmatprep.subr.mxu0 0.0
    %6092 = vmatpush1.msra.mxu0 0.0
    %6093 = vmatprep.subr.mxu0 0.0
    %6094 = vmatpush1.msra.mxu0 0.0
    %6095 = vmatprep.subr.mxu0 0.0
    %6096 = vmatpush1.msra.mxu0 0.0
    %6097 = vmatprep.subr.mxu0 0.0
    %6098 = vmatpush1.msra.mxu0 0.0
    %6099 = vmatprep.subr.mxu0 0.0
    %6100 = vmatpush1.msra.mxu0 0.0
    %6101 = vmatprep.subr.mxu0 0.0
    %6102 = vmatpush1.msra.mxu0 0.0
    %6103 = vmatprep.subr.mxu0 0.0
    %6104 = vmatpush1.msra.mxu0 0.0
    %6105 = vmatprep.subr.mxu0 0.0
    %6106 = vmatpush1.msra.mxu0 0.0
    %6107 = vmatprep.mubr.f32.mxu0 0.0
    %6108 = vmatmul.mubr.f32.gmra.mrb[0].mxu0 %v6035
    %v6109 = vpop.f32.mrb[0].mxu0
    %v6110 = vadd.f32 %v6033, %v6109
    %v6111 = vpop.f32.mrb[0].mxu0
    %6112 = vmatprep.mubr.f32.mxu0 0.0
    %6113 = vmatmul.mubr.f32.gmra.mrb[0].mxu0 %v6038
    %v6114 = vpop.f32.mrb[0].mxu0
    %v6115 = vadd.f32 %v6033, %v6114
    %v6116 = vpop.f32.mrb[0].mxu0
    %6117 = vmatprep.mubr.f32.mxu0 0.0
    %6118 = vmatmul.mubr.f32.gmra.mrb[0].mxu0 %v6041
    %v6119 = vpop.f32.mrb[0].mxu0
    %v6120 = vadd.f32 %v6033, %v6119
    %v6121 = vpop.f32.mrb[0].mxu0
    %6122 = vdwg.mxu0
    %v6123 = vadd.f32 %v5917, %v6110
    %v6124 = vadd.f32 %v5918, %v6115
    %v6125 = vadd.f32 %v5919, %v6120
    %v6126 = vld [vmem:[#allocation2 + $0x2c0] sm:$0x1]
    %v6127 = vld [vmem:[#allocation2 + $0x2c8] sm:$0x1]
    %v6128 = vsel %vm55, %v6123, 0.0
    %6129 = vadd.xlane.f32.xlu0 %v6128
    %v6130 = vpop.xlane.xlu0 %6129
    %v6131 = vsel %vm55, %v6124, 0.0
    %6132 = vadd.xlane.f32.xlu0 %v6131
    %v6133 = vpop.xlane.xlu0 %6132
    %v6134 = vsel %vm55, %v6125, 0.0
    %6135 = vadd.xlane.f32.xlu0 %v6134
    %v6136 = vpop.xlane.xlu0 %6135
    %v6137 = vmul.f32 %v6130, %v1286
    %v6138 = vmul.f32 %v6133, %v1286
    %v6139 = vmul.f32 %v6136, %v1286
    %v6140 = vsub.f32 %v6123, %v6137
    %v6141 = vsub.f32 %v6124, %v6138
    %v6142 = vsub.f32 %v6125, %v6139
    %v6143 = vmul.f32 %v6140, %v6140
    %v6144 = vmul.f32 %v6141, %v6141
    %v6145 = vmul.f32 %v6142, %v6142
    %v6146 = vsel %vm55, %v6143, 0.0
    %6147 = vadd.xlane.f32.xlu0 %v6146
    %v6148 = vpop.xlane.xlu0 %6147
    %v6149 = vsel %vm55, %v6144, 0.0
    %6150 = vadd.xlane.f32.xlu0 %v6149
    %v6151 = vpop.xlane.xlu0 %6150
    %v6152 = vsel %vm55, %v6145, 0.0
    %6153 = vadd.xlane.f32.xlu0 %v6152
    %v6154 = vpop.xlane.xlu0 %6153
    %v6155 = vmul.f32 %v6148, %v1286
    %v6156 = vmul.f32 %v6151, %v1286
    %v6157 = vmul.f32 %v6154, %v1286
    %v6158 = vadd.f32 %v6155, 1e-05
    %v6159 = vadd.f32 %v6156, 1e-05
    %v6160 = vadd.f32 %v6157, 1e-05
    %v6161 = vrsqrt.pop %v6158
    %v6162 = vrsqrt.pop %v6159
    %v6163 = vrsqrt.pop %v6160
    %v6164 = vmul.f32 %v6140, %v6161
    %v6165 = vmul.f32 %v6141, %v6162
    %v6166 = vmul.f32 %v6142, %v6163
    %v6167 = vlaneseq
    %v6168 = vshrl.u32 %v6167, 7
    %v6169 = vsub.s32 0, %v6168
    %v6170 = vrot.slane %v6126, %v6169
    %v6171 = vmul.f32 %v6164, %v6170
    %v6172 = vmul.f32 %v6165, %v6170
    %v6173 = vmul.f32 %v6166, %v6170
    %v6174 = vlaneseq
    %v6175 = vshrl.u32 %v6174, 7
    %v6176 = vsub.s32 0, %v6175
    %v6177 = vrot.slane %v6127, %v6176
    %v6178 = vadd.f32 %v6171, %v6177
    %v6179 = vadd.f32 %v6172, %v6177
    %v6180 = vadd.f32 %v6173, %v6177
    %v6181 = vld [vmem:[#allocation2 + $0x2d0] sm:$0xff]
    %v6182 = vld [vmem:[#allocation2 + $0x2d8] sm:$0xff]
    %v6183 = vld [vmem:[#allocation2 + $0x2e0] sm:$0xff]
    %v6184 = vld [vmem:[#allocation2 + $0x2e8] sm:$0xff]
    %v6185 = vld [vmem:[#allocation2 + $0x2f0] sm:$0x1]
    %v6186 = vlaneseq
    %v6187 = vshrl.u32 %v6186, 7
    %v6188 = vsub.s32 0, %v6187
    %v6189 = vrot.slane %v6185, %v6188
    %v6191 = vsel %vm55, %v2939, 0
    %v6194 = vsel %vm55, %v2940, 0
    %6196 = vmatprep.subr.mxu0 0.0
    %6197 = vmatpush1.msra.mxu0 %v6181
    %6198 = vmatprep.subr.mxu0 0.0
    %6199 = vmatpush1.msra.mxu0 %v6182
    %6200 = vmatprep.subr.mxu0 0.0
    %6201 = vmatpush1.msra.mxu0 %v6183
    %6202 = vmatprep.subr.mxu0 0.0
    %6203 = vmatpush1.msra.mxu0 %v6184
    %6204 = vmatprep.subr.mxu0 0.0
    %6205 = vmatpush1.msra.mxu0 0.0
    %6206 = vmatprep.subr.mxu0 0.0
    %6207 = vmatpush1.msra.mxu0 0.0
    %6208 = vmatprep.subr.mxu0 0.0
    %6209 = vmatpush1.msra.mxu0 0.0
    %6210 = vmatprep.subr.mxu0 0.0
    %6211 = vmatpush1.msra.mxu0 0.0
    %6212 = vmatprep.subr.mxu0 0.0
    %6213 = vmatpush1.msra.mxu0 0.0
    %6214 = vmatprep.subr.mxu0 0.0
    %6215 = vmatpush1.msra.mxu0 0.0
    %6216 = vmatprep.subr.mxu0 0.0
    %6217 = vmatpush1.msra.mxu0 0.0
    %6218 = vmatprep.subr.mxu0 0.0
    %6219 = vmatpush1.msra.mxu0 0.0
    %6220 = vmatprep.subr.mxu0 0.0
    %6221 = vmatpush1.msra.mxu0 0.0
    %6222 = vmatprep.subr.mxu0 0.0
    %6223 = vmatpush1.msra.mxu0 0.0
    %6224 = vmatprep.subr.mxu0 0.0
    %6225 = vmatpush1.msra.mxu0 0.0
    %6226 = vmatprep.subr.mxu0 0.0
    %6227 = vmatpush1.msra.mxu0 0.0
    %6228 = vmatprep.subr.mxu0 0.0
    %6229 = vmatpush1.msra.mxu0 0.0
    %6230 = vmatprep.subr.mxu0 0.0
    %6231 = vmatpush1.msra.mxu0 0.0
    %6232 = vmatprep.subr.mxu0 0.0
    %6233 = vmatpush1.msra.mxu0 0.0
    %6234 = vmatprep.subr.mxu0 0.0
    %6235 = vmatpush1.msra.mxu0 0.0
    %6236 = vmatprep.subr.mxu0 0.0
    %6237 = vmatpush1.msra.mxu0 0.0
    %6238 = vmatprep.subr.mxu0 0.0
    %6239 = vmatpush1.msra.mxu0 0.0
    %6240 = vmatprep.subr.mxu0 0.0
    %6241 = vmatpush1.msra.mxu0 0.0
    %6242 = vmatprep.subr.mxu0 0.0
    %6243 = vmatpush1.msra.mxu0 0.0
    %6244 = vmatprep.subr.mxu0 0.0
    %6245 = vmatpush1.msra.mxu0 0.0
    %6246 = vmatprep.subr.mxu0 0.0
    %6247 = vmatpush1.msra.mxu0 0.0
    %6248 = vmatprep.subr.mxu0 0.0
    %6249 = vmatpush1.msra.mxu0 0.0
    %6250 = vmatprep.subr.mxu0 0.0
    %6251 = vmatpush1.msra.mxu0 0.0
    %6252 = vmatprep.subr.mxu0 0.0
    %6253 = vmatpush1.msra.mxu0 0.0
    %6254 = vmatprep.subr.mxu0 0.0
    %6255 = vmatpush1.msra.mxu0 0.0
    %6256 = vmatprep.subr.mxu0 0.0
    %6257 = vmatpush1.msra.mxu0 0.0
    %6258 = vmatprep.subr.mxu0 0.0
    %6259 = vmatpush1.msra.mxu0 0.0
    %6260 = vmatprep.mubr.f32.mxu0 0.0
    %6261 = vmatmul.mubr.f32.gmra.mrb[0].mxu0 %v6191
    %v6262 = vpop.f32.mrb[0].mxu0
    %v6263 = vadd.f32 %v6189, %v6262
    %v6264 = vpop.f32.mrb[0].mxu0
    %6265 = vmatprep.mubr.f32.mxu0 0.0
    %6266 = vmatmul.mubr.f32.gmra.mrb[0].mxu0 %v6194
    %v6267 = vpop.f32.mrb[0].mxu0
    %v6268 = vadd.f32 %v6189, %v6267
    %v6269 = vpop.f32.mrb[0].mxu0
    %6270 = vdwg.mxu0
    %v6271 = vld [vmem:[#allocation2 + $0x2f8] sm:$0xff]
    %v6272 = vld [vmem:[#allocation2 + $0x300] sm:$0xff]
    %v6273 = vld [vmem:[#allocation2 + $0x308] sm:$0xff]
    %v6274 = vld [vmem:[#allocation2 + $0x310] sm:$0xff]
    %6277 = vrot.lane.b32.xlu0 %v6263, 96
    %v6278 = vpop.permute.xlu0 %6277
    %6279 = vrot.lane.b32.xlu0 %v6268, 96
    %v6280 = vpop.permute.xlu0 %6279
    %v6281 = vsel %vm147, %v6263, 0
    %v6283 = vsel %vm147, %v6268, 0
    %v6285 = vsel %vm147, %v6278, 0
    %v6287 = vsel %vm147, %v6280, 0
    %6289 = vmatprep.subr.mxu0 0.0
    %6290 = vmatpush1.xpose.msra.mxu0 %v6285
    %6291 = vmatprep.subr.mxu0 0.0
    %6292 = vmatpush1.xpose.msra.mxu0 %v6287
    %6293 = vmatprep.subr.mxu0 0.0
    %6294 = vmatpush1.xpose.msra.mxu0 0.0
    %6295 = vmatprep.subr.mxu0 0.0
    %6296 = vmatpush1.xpose.msra.mxu0 0.0
    %6297 = vmatprep.subr.mxu0 0.0
    %6298 = vmatpush1.xpose.msra.mxu0 0.0
    %6299 = vmatprep.subr.mxu0 0.0
    %6300 = vmatpush1.xpose.msra.mxu0 0.0
    %6301 = vmatprep.subr.mxu0 0.0
    %6302 = vmatpush1.xpose.msra.mxu0 0.0
    %6303 = vmatprep.subr.mxu0 0.0
    %6304 = vmatpush1.xpose.msra.mxu0 0.0
    %6305 = vmatprep.subr.mxu0 0.0
    %6306 = vmatpush1.xpose.msra.mxu0 0.0
    %6307 = vmatprep.subr.mxu0 0.0
    %6308 = vmatpush1.xpose.msra.mxu0 0.0
    %6309 = vmatprep.subr.mxu0 0.0
    %6310 = vmatpush1.xpose.msra.mxu0 0.0
    %6311 = vmatprep.subr.mxu0 0.0
    %6312 = vmatpush1.xpose.msra.mxu0 0.0
    %6313 = vmatprep.subr.mxu0 0.0
    %6314 = vmatpush1.xpose.msra.mxu0 0.0
    %6315 = vmatprep.subr.mxu0 0.0
    %6316 = vmatpush1.xpose.msra.mxu0 0.0
    %6317 = vmatprep.subr.mxu0 0.0
    %6318 = vmatpush1.xpose.msra.mxu0 0.0
    %6319 = vmatprep.subr.mxu0 0.0
    %6320 = vmatpush1.xpose.msra.mxu0 0.0
    %6321 = vmatprep.subr.mxu0 0.0
    %6322 = vmatpush1.xpose.msra.mxu0 0.0
    %6323 = vmatprep.subr.mxu0 0.0
    %6324 = vmatpush1.xpose.msra.mxu0 0.0
    %6325 = vmatprep.subr.mxu0 0.0
    %6326 = vmatpush1.xpose.msra.mxu0 0.0
    %6327 = vmatprep.subr.mxu0 0.0
    %6328 = vmatpush1.xpose.msra.mxu0 0.0
    %6329 = vmatprep.subr.mxu0 0.0
    %6330 = vmatpush1.xpose.msra.mxu0 0.0
    %6331 = vmatprep.subr.mxu0 0.0
    %6332 = vmatpush1.xpose.msra.mxu0 0.0
    %6333 = vmatprep.subr.mxu0 0.0
    %6334 = vmatpush1.xpose.msra.mxu0 0.0
    %6335 = vmatprep.subr.mxu0 0.0
    %6336 = vmatpush1.xpose.msra.mxu0 0.0
    %6337 = vmatprep.subr.mxu0 0.0
    %6338 = vmatpush1.xpose.msra.mxu0 0.0
    %6339 = vmatprep.subr.mxu0 0.0
    %6340 = vmatpush1.xpose.msra.mxu0 0.0
    %6341 = vmatprep.subr.mxu0 0.0
    %6342 = vmatpush1.xpose.msra.mxu0 0.0
    %6343 = vmatprep.subr.mxu0 0.0
    %6344 = vmatpush1.xpose.msra.mxu0 0.0
    %6345 = vmatprep.subr.mxu0 0.0
    %6346 = vmatpush1.xpose.msra.mxu0 0.0
    %6347 = vmatprep.subr.mxu0 0.0
    %6348 = vmatpush1.xpose.msra.mxu0 0.0
    %6349 = vmatprep.subr.mxu0 0.0
    %6350 = vmatpush1.xpose.msra.mxu0 0.0
    %6351 = vmatprep.subr.mxu0 0.0
    %6352 = vmatpush1.xpose.msra.mxu0 0.0
    %6353 = vmatprep.mubr.f32.mxu0 0.0
    %6354 = vmatmul.mubr.f32.gmra.mrb[0].mxu0 %v6281
    %v6355 = vpop.f32.mrb[0].mxu0
    %v6356 = vadd.f32 %v36, %v6355
    %v6357 = vpop.f32.mrb[0].mxu0
    %6358 = vmatprep.mubr.f32.mxu0 0.0
    %6359 = vmatmul.mubr.f32.gmra.mrb[0].mxu0 %v6283
    %v6360 = vpop.f32.mrb[0].mxu0
    %v6361 = vadd.f32 %v37, %v6360
    %v6362 = vpop.f32.mrb[0].mxu0
    %6363 = vdwg.mxu0
    %v6364 = vsel %vm231, %v6356, -inf
    %6365 = vmax.xlane.f32.xlu0 %v6364
    %v6366 = vpop.xlane.xlu0 %6365
    %v6367 = vsel %vm231, %v6361, -inf
    %6368 = vmax.xlane.f32.xlu0 %v6367
    %v6369 = vpop.xlane.xlu0 %6368
    %v6370 = vsub.f32 %v6356, %v6366
    %v6371 = vsub.f32 %v6361, %v6369
    %v6372 = vmul.f32 %v6370, 1.442695
    %v6373 = vpow.pop %v6372
    %v6374 = vmul.f32 %v6371, 1.442695
    %v6375 = vpow.pop %v6374
    %v6376 = vsel %vm231, %v6373, 0.0
    %6377 = vadd.xlane.f32.xlu0 %v6376
    %v6378 = vpop.xlane.xlu0 %6377
    %v6379 = vsel %vm231, %v6375, 0.0
    %6380 = vadd.xlane.f32.xlu0 %v6379
    %v6381 = vpop.xlane.xlu0 %6380
    %v6382 = vrcp.pop %v6378
    %v6383 = vrcp.pop %v6381
    %v6384 = vmul.f32 %v6373, %v6382
    %v6385 = vmul.f32 %v6375, %v6383
    %6386 = vrot.lane.b32.xlu0 %v6263, 64
    %v6387 = vpop.permute.xlu0 %6386
    %6388 = vrot.lane.b32.xlu0 %v6268, 64
    %v6389 = vpop.permute.xlu0 %6388
    %v6393 = vsel %vm231, %v6384, 0
    %v6396 = vsel %vm231, %v6385, 0
    %6398 = vmatprep.subr.mxu0 0.0
    %6399 = vmatpush1.msra.mxu0 %v6387
    %6400 = vmatprep.subr.mxu0 0.0
    %6401 = vmatpush1.msra.mxu0 %v6389
    %6402 = vmatprep.subr.mxu0 0.0
    %6403 = vmatpush1.msra.mxu0 0.0
    %6404 = vmatprep.subr.mxu0 0.0
    %6405 = vmatpush1.msra.mxu0 0.0
    %6406 = vmatprep.subr.mxu0 0.0
    %6407 = vmatpush1.msra.mxu0 0.0
    %6408 = vmatprep.subr.mxu0 0.0
    %6409 = vmatpush1.msra.mxu0 0.0
    %6410 = vmatprep.subr.mxu0 0.0
    %6411 = vmatpush1.msra.mxu0 0.0
    %6412 = vmatprep.subr.mxu0 0.0
    %6413 = vmatpush1.msra.mxu0 0.0
    %6414 = vmatprep.subr.mxu0 0.0
    %6415 = vmatpush1.msra.mxu0 0.0
    %6416 = vmatprep.subr.mxu0 0.0
    %6417 = vmatpush1.msra.mxu0 0.0
    %6418 = vmatprep.subr.mxu0 0.0
    %6419 = vmatpush1.msra.mxu0 0.0
    %6420 = vmatprep.subr.mxu0 0.0
    %6421 = vmatpush1.msra.mxu0 0.0
    %6422 = vmatprep.subr.mxu0 0.0
    %6423 = vmatpush1.msra.mxu0 0.0
    %6424 = vmatprep.subr.mxu0 0.0
    %6425 = vmatpush1.msra.mxu0 0.0
    %6426 = vmatprep.subr.mxu0 0.0
    %6427 = vmatpush1.msra.mxu0 0.0
    %6428 = vmatprep.subr.mxu0 0.0
    %6429 = vmatpush1.msra.mxu0 0.0
    %6430 = vmatprep.subr.mxu0 0.0
    %6431 = vmatpush1.msra.mxu0 0.0
    %6432 = vmatprep.subr.mxu0 0.0
    %6433 = vmatpush1.msra.mxu0 0.0
    %6434 = vmatprep.subr.mxu0 0.0
    %6435 = vmatpush1.msra.mxu0 0.0
    %6436 = vmatprep.subr.mxu0 0.0
    %6437 = vmatpush1.msra.mxu0 0.0
    %6438 = vmatprep.subr.mxu0 0.0
    %6439 = vmatpush1.msra.mxu0 0.0
    %6440 = vmatprep.subr.mxu0 0.0
    %6441 = vmatpush1.msra.mxu0 0.0
    %6442 = vmatprep.subr.mxu0 0.0
    %6443 = vmatpush1.msra.mxu0 0.0
    %6444 = vmatprep.subr.mxu0 0.0
    %6445 = vmatpush1.msra.mxu0 0.0
    %6446 = vmatprep.subr.mxu0 0.0
    %6447 = vmatpush1.msra.mxu0 0.0
    %6448 = vmatprep.subr.mxu0 0.0
    %6449 = vmatpush1.msra.mxu0 0.0
    %6450 = vmatprep.subr.mxu0 0.0
    %6451 = vmatpush1.msra.mxu0 0.0
    %6452 = vmatprep.subr.mxu0 0.0
    %6453 = vmatpush1.msra.mxu0 0.0
    %6454 = vmatprep.subr.mxu0 0.0
    %6455 = vmatpush1.msra.mxu0 0.0
    %6456 = vmatprep.subr.mxu0 0.0
    %6457 = vmatpush1.msra.mxu0 0.0
    %6458 = vmatprep.subr.mxu0 0.0
    %6459 = vmatpush1.msra.mxu0 0.0
    %6460 = vmatprep.subr.mxu0 0.0
    %6461 = vmatpush1.msra.mxu0 0.0
    %6462 = vmatprep.mubr.f32.mxu0 0.0
    %6463 = vmatmul.mubr.f32.gmra.mrb[0].mxu0 %v6393
    %v6464 = vpop.f32.mrb[0].mxu0
    %v6465 = vadd.f32 0.0, %v6464
    %v6466 = vpop.f32.mrb[0].mxu0
    %6467 = vmatprep.mubr.f32.mxu0 0.0
    %6468 = vmatmul.mubr.f32.gmra.mrb[0].mxu0 %v6396
    %v6469 = vpop.f32.mrb[0].mxu0
    %v6470 = vadd.f32 0.0, %v6469
    %v6471 = vpop.f32.mrb[0].mxu0
    %6472 = vdwg.mxu0
    %6473 = vrot.lane.b32.xlu0 %v6263, 120
    %v6474 = vpop.permute.xlu0 %6473
    %6475 = vrot.lane.b32.xlu0 %v6268, 120
    %v6476 = vpop.permute.xlu0 %6475
    %6477 = vrot.lane.b32.xlu0 %v6263, 88
    %v6478 = vpop.permute.xlu0 %6477
    %6479 = vrot.lane.b32.xlu0 %v6268, 88
    %v6480 = vpop.permute.xlu0 %6479
    %v6481 = vsel %vm147, %v6474, 0
    %v6483 = vsel %vm147, %v6476, 0
    %v6485 = vsel %vm147, %v6478, 0
    %v6487 = vsel %vm147, %v6480, 0
    %6489 = vmatprep.subr.mxu0 0.0
    %6490 = vmatpush1.xpose.msra.mxu0 %v6485
    %6491 = vmatprep.subr.mxu0 0.0
    %6492 = vmatpush1.xpose.msra.mxu0 %v6487
    %6493 = vmatprep.subr.mxu0 0.0
    %6494 = vmatpush1.xpose.msra.mxu0 0.0
    %6495 = vmatprep.subr.mxu0 0.0
    %6496 = vmatpush1.xpose.msra.mxu0 0.0
    %6497 = vmatprep.subr.mxu0 0.0
    %6498 = vmatpush1.xpose.msra.mxu0 0.0
    %6499 = vmatprep.subr.mxu0 0.0
    %6500 = vmatpush1.xpose.msra.mxu0 0.0
    %6501 = vmatprep.subr.mxu0 0.0
    %6502 = vmatpush1.xpose.msra.mxu0 0.0
    %6503 = vmatprep.subr.mxu0 0.0
    %6504 = vmatpush1.xpose.msra.mxu0 0.0
    %6505 = vmatprep.subr.mxu0 0.0
    %6506 = vmatpush1.xpose.msra.mxu0 0.0
    %6507 = vmatprep.subr.mxu0 0.0
    %6508 = vmatpush1.xpose.msra.mxu0 0.0
    %6509 = vmatprep.subr.mxu0 0.0
    %6510 = vmatpush1.xpose.msra.mxu0 0.0
    %6511 = vmatprep.subr.mxu0 0.0
    %6512 = vmatpush1.xpose.msra.mxu0 0.0
    %6513 = vmatprep.subr.mxu0 0.0
    %6514 = vmatpush1.xpose.msra.mxu0 0.0
    %6515 = vmatprep.subr.mxu0 0.0
    %6516 = vmatpush1.xpose.msra.mxu0 0.0
    %6517 = vmatprep.subr.mxu0 0.0
    %6518 = vmatpush1.xpose.msra.mxu0 0.0
    %6519 = vmatprep.subr.mxu0 0.0
    %6520 = vmatpush1.xpose.msra.mxu0 0.0
    %6521 = vmatprep.subr.mxu0 0.0
    %6522 = vmatpush1.xpose.msra.mxu0 0.0
    %6523 = vmatprep.subr.mxu0 0.0
    %6524 = vmatpush1.xpose.msra.mxu0 0.0
    %6525 = vmatprep.subr.mxu0 0.0
    %6526 = vmatpush1.xpose.msra.mxu0 0.0
    %6527 = vmatprep.subr.mxu0 0.0
    %6528 = vmatpush1.xpose.msra.mxu0 0.0
    %6529 = vmatprep.subr.mxu0 0.0
    %6530 = vmatpush1.xpose.msra.mxu0 0.0
    %6531 = vmatprep.subr.mxu0 0.0
    %6532 = vmatpush1.xpose.msra.mxu0 0.0
    %6533 = vmatprep.subr.mxu0 0.0
    %6534 = vmatpush1.xpose.msra.mxu0 0.0
    %6535 = vmatprep.subr.mxu0 0.0
    %6536 = vmatpush1.xpose.msra.mxu0 0.0
    %6537 = vmatprep.subr.mxu0 0.0
    %6538 = vmatpush1.xpose.msra.mxu0 0.0
    %6539 = vmatprep.subr.mxu0 0.0
    %6540 = vmatpush1.xpose.msra.mxu0 0.0
    %6541 = vmatprep.subr.mxu0 0.0
    %6542 = vmatpush1.xpose.msra.mxu0 0.0
    %6543 = vmatprep.subr.mxu0 0.0
    %6544 = vmatpush1.xpose.msra.mxu0 0.0
    %6545 = vmatprep.subr.mxu0 0.0
    %6546 = vmatpush1.xpose.msra.mxu0 0.0
    %6547 = vmatprep.subr.mxu0 0.0
    %6548 = vmatpush1.xpose.msra.mxu0 0.0
    %6549 = vmatprep.subr.mxu0 0.0
    %6550 = vmatpush1.xpose.msra.mxu0 0.0
    %6551 = vmatprep.subr.mxu0 0.0
    %6552 = vmatpush1.xpose.msra.mxu0 0.0
    %6553 = vmatprep.mubr.f32.mxu0 0.0
    %6554 = vmatmul.mubr.f32.gmra.mrb[0].mxu0 %v6481
    %v6555 = vpop.f32.mrb[0].mxu0
    %v6556 = vadd.f32 %v36, %v6555
    %v6557 = vpop.f32.mrb[0].mxu0
    %6558 = vmatprep.mubr.f32.mxu0 0.0
    %6559 = vmatmul.mubr.f32.gmra.mrb[0].mxu0 %v6483
    %v6560 = vpop.f32.mrb[0].mxu0
    %v6561 = vadd.f32 %v37, %v6560
    %v6562 = vpop.f32.mrb[0].mxu0
    %6563 = vdwg.mxu0
    %v6564 = vsel %vm231, %v6556, -inf
    %6565 = vmax.xlane.f32.xlu0 %v6564
    %v6566 = vpop.xlane.xlu0 %6565
    %v6567 = vsel %vm231, %v6561, -inf
    %6568 = vmax.xlane.f32.xlu0 %v6567
    %v6569 = vpop.xlane.xlu0 %6568
    %v6570 = vsub.f32 %v6556, %v6566
    %v6571 = vsub.f32 %v6561, %v6569
    %v6572 = vmul.f32 %v6570, 1.442695
    %v6573 = vpow.pop %v6572
    %v6574 = vmul.f32 %v6571, 1.442695
    %v6575 = vpow.pop %v6574
    %v6576 = vsel %vm231, %v6573, 0.0
    %6577 = vadd.xlane.f32.xlu0 %v6576
    %v6578 = vpop.xlane.xlu0 %6577
    %v6579 = vsel %vm231, %v6575, 0.0
    %6580 = vadd.xlane.f32.xlu0 %v6579
    %v6581 = vpop.xlane.xlu0 %6580
    %v6582 = vrcp.pop %v6578
    %v6583 = vrcp.pop %v6581
    %v6584 = vmul.f32 %v6573, %v6582
    %v6585 = vmul.f32 %v6575, %v6583
    %6586 = vrot.lane.b32.xlu0 %v6263, 56
    %v6587 = vpop.permute.xlu0 %6586
    %6588 = vrot.lane.b32.xlu0 %v6268, 56
    %v6589 = vpop.permute.xlu0 %6588
    %v6593 = vsel %vm231, %v6584, 0
    %v6596 = vsel %vm231, %v6585, 0
    %6598 = vmatprep.subr.mxu0 0.0
    %6599 = vmatpush1.msra.mxu0 %v6587
    %6600 = vmatprep.subr.mxu0 0.0
    %6601 = vmatpush1.msra.mxu0 %v6589
    %6602 = vmatprep.subr.mxu0 0.0
    %6603 = vmatpush1.msra.mxu0 0.0
    %6604 = vmatprep.subr.mxu0 0.0
    %6605 = vmatpush1.msra.mxu0 0.0
    %6606 = vmatprep.subr.mxu0 0.0
    %6607 = vmatpush1.msra.mxu0 0.0
    %6608 = vmatprep.subr.mxu0 0.0
    %6609 = vmatpush1.msra.mxu0 0.0
    %6610 = vmatprep.subr.mxu0 0.0
    %6611 = vmatpush1.msra.mxu0 0.0
    %6612 = vmatprep.subr.mxu0 0.0
    %6613 = vmatpush1.msra.mxu0 0.0
    %6614 = vmatprep.subr.mxu0 0.0
    %6615 = vmatpush1.msra.mxu0 0.0
    %6616 = vmatprep.subr.mxu0 0.0
    %6617 = vmatpush1.msra.mxu0 0.0
    %6618 = vmatprep.subr.mxu0 0.0
    %6619 = vmatpush1.msra.mxu0 0.0
    %6620 = vmatprep.subr.mxu0 0.0
    %6621 = vmatpush1.msra.mxu0 0.0
    %6622 = vmatprep.subr.mxu0 0.0
    %6623 = vmatpush1.msra.mxu0 0.0
    %6624 = vmatprep.subr.mxu0 0.0
    %6625 = vmatpush1.msra.mxu0 0.0
    %6626 = vmatprep.subr.mxu0 0.0
    %6627 = vmatpush1.msra.mxu0 0.0
    %6628 = vmatprep.subr.mxu0 0.0
    %6629 = vmatpush1.msra.mxu0 0.0
    %6630 = vmatprep.subr.mxu0 0.0
    %6631 = vmatpush1.msra.mxu0 0.0
    %6632 = vmatprep.subr.mxu0 0.0
    %6633 = vmatpush1.msra.mxu0 0.0
    %6634 = vmatprep.subr.mxu0 0.0
    %6635 = vmatpush1.msra.mxu0 0.0
    %6636 = vmatprep.subr.mxu0 0.0
    %6637 = vmatpush1.msra.mxu0 0.0
    %6638 = vmatprep.subr.mxu0 0.0
    %6639 = vmatpush1.msra.mxu0 0.0
    %6640 = vmatprep.subr.mxu0 0.0
    %6641 = vmatpush1.msra.mxu0 0.0
    %6642 = vmatprep.subr.mxu0 0.0
    %6643 = vmatpush1.msra.mxu0 0.0
    %6644 = vmatprep.subr.mxu0 0.0
    %6645 = vmatpush1.msra.mxu0 0.0
    %6646 = vmatprep.subr.mxu0 0.0
    %6647 = vmatpush1.msra.mxu0 0.0
    %6648 = vmatprep.subr.mxu0 0.0
    %6649 = vmatpush1.msra.mxu0 0.0
    %6650 = vmatprep.subr.mxu0 0.0
    %6651 = vmatpush1.msra.mxu0 0.0
    %6652 = vmatprep.subr.mxu0 0.0
    %6653 = vmatpush1.msra.mxu0 0.0
    %6654 = vmatprep.subr.mxu0 0.0
    %6655 = vmatpush1.msra.mxu0 0.0
    %6656 = vmatprep.subr.mxu0 0.0
    %6657 = vmatpush1.msra.mxu0 0.0
    %6658 = vmatprep.subr.mxu0 0.0
    %6659 = vmatpush1.msra.mxu0 0.0
    %6660 = vmatprep.subr.mxu0 0.0
    %6661 = vmatpush1.msra.mxu0 0.0
    %6662 = vmatprep.mubr.f32.mxu0 0.0
    %6663 = vmatmul.mubr.f32.gmra.mrb[0].mxu0 %v6593
    %v6664 = vpop.f32.mrb[0].mxu0
    %v6665 = vadd.f32 0.0, %v6664
    %v6666 = vpop.f32.mrb[0].mxu0
    %6667 = vmatprep.mubr.f32.mxu0 0.0
    %6668 = vmatmul.mubr.f32.gmra.mrb[0].mxu0 %v6596
    %v6669 = vpop.f32.mrb[0].mxu0
    %v6670 = vadd.f32 0.0, %v6669
    %v6671 = vpop.f32.mrb[0].mxu0
    %6672 = vdwg.mxu0
    %v6674 = vsel %vm147, %v6665, 0
    %v6677 = vsel %vm147, %v6670, 0
    %6679 = vmatprep.subr.mxu0 0.0
    %6680 = vmatpush1.msra.mxu0 %v6272
    %6681 = vmatprep.subr.mxu0 0.0
    %6682 = vmatpush1.msra.mxu0 0.0
    %6683 = vmatprep.subr.mxu0 0.0
    %6684 = vmatpush1.msra.mxu0 0.0
    %6685 = vmatprep.subr.mxu0 0.0
    %6686 = vmatpush1.msra.mxu0 0.0
    %6687 = vmatprep.subr.mxu0 0.0
    %6688 = vmatpush1.msra.mxu0 0.0
    %6689 = vmatprep.subr.mxu0 0.0
    %6690 = vmatpush1.msra.mxu0 0.0
    %6691 = vmatprep.subr.mxu0 0.0
    %6692 = vmatpush1.msra.mxu0 0.0
    %6693 = vmatprep.subr.mxu0 0.0
    %6694 = vmatpush1.msra.mxu0 0.0
    %6695 = vmatprep.subr.mxu0 0.0
    %6696 = vmatpush1.msra.mxu0 0.0
    %6697 = vmatprep.subr.mxu0 0.0
    %6698 = vmatpush1.msra.mxu0 0.0
    %6699 = vmatprep.subr.mxu0 0.0
    %6700 = vmatpush1.msra.mxu0 0.0
    %6701 = vmatprep.subr.mxu0 0.0
    %6702 = vmatpush1.msra.mxu0 0.0
    %6703 = vmatprep.subr.mxu0 0.0
    %6704 = vmatpush1.msra.mxu0 0.0
    %6705 = vmatprep.subr.mxu0 0.0
    %6706 = vmatpush1.msra.mxu0 0.0
    %6707 = vmatprep.subr.mxu0 0.0
    %6708 = vmatpush1.msra.mxu0 0.0
    %6709 = vmatprep.subr.mxu0 0.0
    %6710 = vmatpush1.msra.mxu0 0.0
    %6711 = vmatprep.subr.mxu0 0.0
    %6712 = vmatpush1.msra.mxu0 0.0
    %6713 = vmatprep.subr.mxu0 0.0
    %6714 = vmatpush1.msra.mxu0 0.0
    %6715 = vmatprep.subr.mxu0 0.0
    %6716 = vmatpush1.msra.mxu0 0.0
    %6717 = vmatprep.subr.mxu0 0.0
    %6718 = vmatpush1.msra.mxu0 0.0
    %6719 = vmatprep.subr.mxu0 0.0
    %6720 = vmatpush1.msra.mxu0 0.0
    %6721 = vmatprep.subr.mxu0 0.0
    %6722 = vmatpush1.msra.mxu0 0.0
    %6723 = vmatprep.subr.mxu0 0.0
    %6724 = vmatpush1.msra.mxu0 0.0
    %6725 = vmatprep.subr.mxu0 0.0
    %6726 = vmatpush1.msra.mxu0 0.0
    %6727 = vmatprep.subr.mxu0 0.0
    %6728 = vmatpush1.msra.mxu0 0.0
    %6729 = vmatprep.subr.mxu0 0.0
    %6730 = vmatpush1.msra.mxu0 0.0
    %6731 = vmatprep.subr.mxu0 0.0
    %6732 = vmatpush1.msra.mxu0 0.0
    %6733 = vmatprep.subr.mxu0 0.0
    %6734 = vmatpush1.msra.mxu0 0.0
    %6735 = vmatprep.subr.mxu0 0.0
    %6736 = vmatpush1.msra.mxu0 0.0
    %6737 = vmatprep.subr.mxu0 0.0
    %6738 = vmatpush1.msra.mxu0 0.0
    %6739 = vmatprep.subr.mxu0 0.0
    %6740 = vmatpush1.msra.mxu0 0.0
    %6741 = vmatprep.subr.mxu0 0.0
    %6742 = vmatpush1.msra.mxu0 0.0
    %6743 = vmatprep.mubr.f32.mxu0 0.0
    %6744 = vmatmul.mubr.f32.gmra.mrb[0].mxu0 %v6674
    %v6745 = vpop.f32.mrb[0].mxu0
    %v6746 = vadd.f32 0.0, %v6745
    %v6747 = vpop.f32.mrb[0].mxu0
    %6748 = vmatprep.mubr.f32.mxu0 0.0
    %6749 = vmatmul.mubr.f32.gmra.mrb[0].mxu0 %v6677
    %v6750 = vpop.f32.mrb[0].mxu0
    %v6751 = vadd.f32 0.0, %v6750
    %v6752 = vpop.f32.mrb[0].mxu0
    %6753 = vdwg.mxu0
    %v6755 = vsel %vm147, %v6465, 0
    %v6758 = vsel %vm147, %v6470, 0
    %6760 = vmatprep.subr.mxu0 0.0
    %6761 = vmatpush1.msra.mxu0 %v6271
    %6762 = vmatprep.subr.mxu0 0.0
    %6763 = vmatpush1.msra.mxu0 0.0
    %6764 = vmatprep.subr.mxu0 0.0
    %6765 = vmatpush1.msra.mxu0 0.0
    %6766 = vmatprep.subr.mxu0 0.0
    %6767 = vmatpush1.msra.mxu0 0.0
    %6768 = vmatprep.subr.mxu0 0.0
    %6769 = vmatpush1.msra.mxu0 0.0
    %6770 = vmatprep.subr.mxu0 0.0
    %6771 = vmatpush1.msra.mxu0 0.0
    %6772 = vmatprep.subr.mxu0 0.0
    %6773 = vmatpush1.msra.mxu0 0.0
    %6774 = vmatprep.subr.mxu0 0.0
    %6775 = vmatpush1.msra.mxu0 0.0
    %6776 = vmatprep.subr.mxu0 0.0
    %6777 = vmatpush1.msra.mxu0 0.0
    %6778 = vmatprep.subr.mxu0 0.0
    %6779 = vmatpush1.msra.mxu0 0.0
    %6780 = vmatprep.subr.mxu0 0.0
    %6781 = vmatpush1.msra.mxu0 0.0
    %6782 = vmatprep.subr.mxu0 0.0
    %6783 = vmatpush1.msra.mxu0 0.0
    %6784 = vmatprep.subr.mxu0 0.0
    %6785 = vmatpush1.msra.mxu0 0.0
    %6786 = vmatprep.subr.mxu0 0.0
    %6787 = vmatpush1.msra.mxu0 0.0
    %6788 = vmatprep.subr.mxu0 0.0
    %6789 = vmatpush1.msra.mxu0 0.0
    %6790 = vmatprep.subr.mxu0 0.0
    %6791 = vmatpush1.msra.mxu0 0.0
    %6792 = vmatprep.subr.mxu0 0.0
    %6793 = vmatpush1.msra.mxu0 0.0
    %6794 = vmatprep.subr.mxu0 0.0
    %6795 = vmatpush1.msra.mxu0 0.0
    %6796 = vmatprep.subr.mxu0 0.0
    %6797 = vmatpush1.msra.mxu0 0.0
    %6798 = vmatprep.subr.mxu0 0.0
    %6799 = vmatpush1.msra.mxu0 0.0
    %6800 = vmatprep.subr.mxu0 0.0
    %6801 = vmatpush1.msra.mxu0 0.0
    %6802 = vmatprep.subr.mxu0 0.0
    %6803 = vmatpush1.msra.mxu0 0.0
    %6804 = vmatprep.subr.mxu0 0.0
    %6805 = vmatpush1.msra.mxu0 0.0
    %6806 = vmatprep.subr.mxu0 0.0
    %6807 = vmatpush1.msra.mxu0 0.0
    %6808 = vmatprep.subr.mxu0 0.0
    %6809 = vmatpush1.msra.mxu0 0.0
    %6810 = vmatprep.subr.mxu0 0.0
    %6811 = vmatpush1.msra.mxu0 0.0
    %6812 = vmatprep.subr.mxu0 0.0
    %6813 = vmatpush1.msra.mxu0 0.0
    %6814 = vmatprep.subr.mxu0 0.0
    %6815 = vmatpush1.msra.mxu0 0.0
    %6816 = vmatprep.subr.mxu0 0.0
    %6817 = vmatpush1.msra.mxu0 0.0
    %6818 = vmatprep.subr.mxu0 0.0
    %6819 = vmatpush1.msra.mxu0 0.0
    %6820 = vmatprep.subr.mxu0 0.0
    %6821 = vmatpush1.msra.mxu0 0.0
    %6822 = vmatprep.subr.mxu0 0.0
    %6823 = vmatpush1.msra.mxu0 0.0
    %6824 = vmatprep.mubr.f32.mxu0 0.0
    %6825 = vmatmul.mubr.f32.gmra.mrb[0].mxu0 %v6755
    %v6826 = vpop.f32.mrb[0].mxu0
    %v6827 = vadd.f32 %v6746, %v6826
    %v6828 = vpop.f32.mrb[0].mxu0
    %6829 = vmatprep.mubr.f32.mxu0 0.0
    %6830 = vmatmul.mubr.f32.gmra.mrb[0].mxu0 %v6758
    %v6831 = vpop.f32.mrb[0].mxu0
    %v6832 = vadd.f32 %v6751, %v6831
    %v6833 = vpop.f32.mrb[0].mxu0
    %6834 = vdwg.mxu0
    %6835 = vrot.lane.b32.xlu0 %v6263, 112
    %v6836 = vpop.permute.xlu0 %6835
    %6837 = vrot.lane.b32.xlu0 %v6268, 112
    %v6838 = vpop.permute.xlu0 %6837
    %6839 = vrot.lane.b32.xlu0 %v6263, 80
    %v6840 = vpop.permute.xlu0 %6839
    %6841 = vrot.lane.b32.xlu0 %v6268, 80
    %v6842 = vpop.permute.xlu0 %6841
    %v6843 = vsel %vm147, %v6836, 0
    %v6845 = vsel %vm147, %v6838, 0
    %v6847 = vsel %vm147, %v6840, 0
    %v6849 = vsel %vm147, %v6842, 0
    %6851 = vmatprep.subr.mxu0 0.0
    %6852 = vmatpush1.xpose.msra.mxu0 %v6847
    %6853 = vmatprep.subr.mxu0 0.0
    %6854 = vmatpush1.xpose.msra.mxu0 %v6849
    %6855 = vmatprep.subr.mxu0 0.0
    %6856 = vmatpush1.xpose.msra.mxu0 0.0
    %6857 = vmatprep.subr.mxu0 0.0
    %6858 = vmatpush1.xpose.msra.mxu0 0.0
    %6859 = vmatprep.subr.mxu0 0.0
    %6860 = vmatpush1.xpose.msra.mxu0 0.0
    %6861 = vmatprep.subr.mxu0 0.0
    %6862 = vmatpush1.xpose.msra.mxu0 0.0
    %6863 = vmatprep.subr.mxu0 0.0
    %6864 = vmatpush1.xpose.msra.mxu0 0.0
    %6865 = vmatprep.subr.mxu0 0.0
    %6866 = vmatpush1.xpose.msra.mxu0 0.0
    %6867 = vmatprep.subr.mxu0 0.0
    %6868 = vmatpush1.xpose.msra.mxu0 0.0
    %6869 = vmatprep.subr.mxu0 0.0
    %6870 = vmatpush1.xpose.msra.mxu0 0.0
    %6871 = vmatprep.subr.mxu0 0.0
    %6872 = vmatpush1.xpose.msra.mxu0 0.0
    %6873 = vmatprep.subr.mxu0 0.0
    %6874 = vmatpush1.xpose.msra.mxu0 0.0
    %6875 = vmatprep.subr.mxu0 0.0
    %6876 = vmatpush1.xpose.msra.mxu0 0.0
    %6877 = vmatprep.subr.mxu0 0.0
    %6878 = vmatpush1.xpose.msra.mxu0 0.0
    %6879 = vmatprep.subr.mxu0 0.0
    %6880 = vmatpush1.xpose.msra.mxu0 0.0
    %6881 = vmatprep.subr.mxu0 0.0
    %6882 = vmatpush1.xpose.msra.mxu0 0.0
    %6883 = vmatprep.subr.mxu0 0.0
    %6884 = vmatpush1.xpose.msra.mxu0 0.0
    %6885 = vmatprep.subr.mxu0 0.0
    %6886 = vmatpush1.xpose.msra.mxu0 0.0
    %6887 = vmatprep.subr.mxu0 0.0
    %6888 = vmatpush1.xpose.msra.mxu0 0.0
    %6889 = vmatprep.subr.mxu0 0.0
    %6890 = vmatpush1.xpose.msra.mxu0 0.0
    %6891 = vmatprep.subr.mxu0 0.0
    %6892 = vmatpush1.xpose.msra.mxu0 0.0
    %6893 = vmatprep.subr.mxu0 0.0
    %6894 = vmatpush1.xpose.msra.mxu0 0.0
    %6895 = vmatprep.subr.mxu0 0.0
    %6896 = vmatpush1.xpose.msra.mxu0 0.0
    %6897 = vmatprep.subr.mxu0 0.0
    %6898 = vmatpush1.xpose.msra.mxu0 0.0
    %6899 = vmatprep.subr.mxu0 0.0
    %6900 = vmatpush1.xpose.msra.mxu0 0.0
    %6901 = vmatprep.subr.mxu0 0.0
    %6902 = vmatpush1.xpose.msra.mxu0 0.0
    %6903 = vmatprep.subr.mxu0 0.0
    %6904 = vmatpush1.xpose.msra.mxu0 0.0
    %6905 = vmatprep.subr.mxu0 0.0
    %6906 = vmatpush1.xpose.msra.mxu0 0.0
    %6907 = vmatprep.subr.mxu0 0.0
    %6908 = vmatpush1.xpose.msra.mxu0 0.0
    %6909 = vmatprep.subr.mxu0 0.0
    %6910 = vmatpush1.xpose.msra.mxu0 0.0
    %6911 = vmatprep.subr.mxu0 0.0
    %6912 = vmatpush1.xpose.msra.mxu0 0.0
    %6913 = vmatprep.subr.mxu0 0.0
    %6914 = vmatpush1.xpose.msra.mxu0 0.0
    %6915 = vmatprep.mubr.f32.mxu0 0.0
    %6916 = vmatmul.mubr.f32.gmra.mrb[0].mxu0 %v6843
    %v6917 = vpop.f32.mrb[0].mxu0
    %v6918 = vadd.f32 %v36, %v6917
    %v6919 = vpop.f32.mrb[0].mxu0
    %6920 = vmatprep.mubr.f32.mxu0 0.0
    %6921 = vmatmul.mubr.f32.gmra.mrb[0].mxu0 %v6845
    %v6922 = vpop.f32.mrb[0].mxu0
    %v6923 = vadd.f32 %v37, %v6922
    %v6924 = vpop.f32.mrb[0].mxu0
    %6925 = vdwg.mxu0
    %v6926 = vsel %vm231, %v6918, -inf
    %6927 = vmax.xlane.f32.xlu0 %v6926
    %v6928 = vpop.xlane.xlu0 %6927
    %v6929 = vsel %vm231, %v6923, -inf
    %6930 = vmax.xlane.f32.xlu0 %v6929
    %v6931 = vpop.xlane.xlu0 %6930
    %v6932 = vsub.f32 %v6918, %v6928
    %v6933 = vsub.f32 %v6923, %v6931
    %v6934 = vmul.f32 %v6932, 1.442695
    %v6935 = vpow.pop %v6934
    %v6936 = vmul.f32 %v6933, 1.442695
    %v6937 = vpow.pop %v6936
    %v6938 = vsel %vm231, %v6935, 0.0
    %6939 = vadd.xlane.f32.xlu0 %v6938
    %v6940 = vpop.xlane.xlu0 %6939
    %v6941 = vsel %vm231, %v6937, 0.0
    %6942 = vadd.xlane.f32.xlu0 %v6941
    %v6943 = vpop.xlane.xlu0 %6942
    %v6944 = vrcp.pop %v6940
    %v6945 = vrcp.pop %v6943
    %v6946 = vmul.f32 %v6935, %v6944
    %v6947 = vmul.f32 %v6937, %v6945
    %6948 = vrot.lane.b32.xlu0 %v6263, 48
    %v6949 = vpop.permute.xlu0 %6948
    %6950 = vrot.lane.b32.xlu0 %v6268, 48
    %v6951 = vpop.permute.xlu0 %6950
    %v6955 = vsel %vm231, %v6946, 0
    %v6958 = vsel %vm231, %v6947, 0
    %6960 = vmatprep.subr.mxu0 0.0
    %6961 = vmatpush1.msra.mxu0 %v6949
    %6962 = vmatprep.subr.mxu0 0.0
    %6963 = vmatpush1.msra.mxu0 %v6951
    %6964 = vmatprep.subr.mxu0 0.0
    %6965 = vmatpush1.msra.mxu0 0.0
    %6966 = vmatprep.subr.mxu0 0.0
    %6967 = vmatpush1.msra.mxu0 0.0
    %6968 = vmatprep.subr.mxu0 0.0
    %6969 = vmatpush1.msra.mxu0 0.0
    %6970 = vmatprep.subr.mxu0 0.0
    %6971 = vmatpush1.msra.mxu0 0.0
    %6972 = vmatprep.subr.mxu0 0.0
    %6973 = vmatpush1.msra.mxu0 0.0
    %6974 = vmatprep.subr.mxu0 0.0
    %6975 = vmatpush1.msra.mxu0 0.0
    %6976 = vmatprep.subr.mxu0 0.0
    %6977 = vmatpush1.msra.mxu0 0.0
    %6978 = vmatprep.subr.mxu0 0.0
    %6979 = vmatpush1.msra.mxu0 0.0
    %6980 = vmatprep.subr.mxu0 0.0
    %6981 = vmatpush1.msra.mxu0 0.0
    %6982 = vmatprep.subr.mxu0 0.0
    %6983 = vmatpush1.msra.mxu0 0.0
    %6984 = vmatprep.subr.mxu0 0.0
    %6985 = vmatpush1.msra.mxu0 0.0
    %6986 = vmatprep.subr.mxu0 0.0
    %6987 = vmatpush1.msra.mxu0 0.0
    %6988 = vmatprep.subr.mxu0 0.0
    %6989 = vmatpush1.msra.mxu0 0.0
    %6990 = vmatprep.subr.mxu0 0.0
    %6991 = vmatpush1.msra.mxu0 0.0
    %6992 = vmatprep.subr.mxu0 0.0
    %6993 = vmatpush1.msra.mxu0 0.0
    %6994 = vmatprep.subr.mxu0 0.0
    %6995 = vmatpush1.msra.mxu0 0.0
    %6996 = vmatprep.subr.mxu0 0.0
    %6997 = vmatpush1.msra.mxu0 0.0
    %6998 = vmatprep.subr.mxu0 0.0
    %6999 = vmatpush1.msra.mxu0 0.0
    %7000 = vmatprep.subr.mxu0 0.0
    %7001 = vmatpush1.msra.mxu0 0.0
    %7002 = vmatprep.subr.mxu0 0.0
    %7003 = vmatpush1.msra.mxu0 0.0
    %7004 = vmatprep.subr.mxu0 0.0
    %7005 = vmatpush1.msra.mxu0 0.0
    %7006 = vmatprep.subr.mxu0 0.0
    %7007 = vmatpush1.msra.mxu0 0.0
    %7008 = vmatprep.subr.mxu0 0.0
    %7009 = vmatpush1.msra.mxu0 0.0
    %7010 = vmatprep.subr.mxu0 0.0
    %7011 = vmatpush1.msra.mxu0 0.0
    %7012 = vmatprep.subr.mxu0 0.0
    %7013 = vmatpush1.msra.mxu0 0.0
    %7014 = vmatprep.subr.mxu0 0.0
    %7015 = vmatpush1.msra.mxu0 0.0
    %7016 = vmatprep.subr.mxu0 0.0
    %7017 = vmatpush1.msra.mxu0 0.0
    %7018 = vmatprep.subr.mxu0 0.0
    %7019 = vmatpush1.msra.mxu0 0.0
    %7020 = vmatprep.subr.mxu0 0.0
    %7021 = vmatpush1.msra.mxu0 0.0
    %7022 = vmatprep.subr.mxu0 0.0
    %7023 = vmatpush1.msra.mxu0 0.0
    %7024 = vmatprep.mubr.f32.mxu0 0.0
    %7025 = vmatmul.mubr.f32.gmra.mrb[0].mxu0 %v6955
    %v7026 = vpop.f32.mrb[0].mxu0
    %v7027 = vadd.f32 0.0, %v7026
    %v7028 = vpop.f32.mrb[0].mxu0
    %7029 = vmatprep.mubr.f32.mxu0 0.0
    %7030 = vmatmul.mubr.f32.gmra.mrb[0].mxu0 %v6958
    %v7031 = vpop.f32.mrb[0].mxu0
    %v7032 = vadd.f32 0.0, %v7031
    %v7033 = vpop.f32.mrb[0].mxu0
    %7034 = vdwg.mxu0
    %v7036 = vsel %vm147, %v7027, 0
    %v7039 = vsel %vm147, %v7032, 0
    %7041 = vmatprep.subr.mxu0 0.0
    %7042 = vmatpush1.msra.mxu0 %v6273
    %7043 = vmatprep.subr.mxu0 0.0
    %7044 = vmatpush1.msra.mxu0 0.0
    %7045 = vmatprep.subr.mxu0 0.0
    %7046 = vmatpush1.msra.mxu0 0.0
    %7047 = vmatprep.subr.mxu0 0.0
    %7048 = vmatpush1.msra.mxu0 0.0
    %7049 = vmatprep.subr.mxu0 0.0
    %7050 = vmatpush1.msra.mxu0 0.0
    %7051 = vmatprep.subr.mxu0 0.0
    %7052 = vmatpush1.msra.mxu0 0.0
    %7053 = vmatprep.subr.mxu0 0.0
    %7054 = vmatpush1.msra.mxu0 0.0
    %7055 = vmatprep.subr.mxu0 0.0
    %7056 = vmatpush1.msra.mxu0 0.0
    %7057 = vmatprep.subr.mxu0 0.0
    %7058 = vmatpush1.msra.mxu0 0.0
    %7059 = vmatprep.subr.mxu0 0.0
    %7060 = vmatpush1.msra.mxu0 0.0
    %7061 = vmatprep.subr.mxu0 0.0
    %7062 = vmatpush1.msra.mxu0 0.0
    %7063 = vmatprep.subr.mxu0 0.0
    %7064 = vmatpush1.msra.mxu0 0.0
    %7065 = vmatprep.subr.mxu0 0.0
    %7066 = vmatpush1.msra.mxu0 0.0
    %7067 = vmatprep.subr.mxu0 0.0
    %7068 = vmatpush1.msra.mxu0 0.0
    %7069 = vmatprep.subr.mxu0 0.0
    %7070 = vmatpush1.msra.mxu0 0.0
    %7071 = vmatprep.subr.mxu0 0.0
    %7072 = vmatpush1.msra.mxu0 0.0
    %7073 = vmatprep.subr.mxu0 0.0
    %7074 = vmatpush1.msra.mxu0 0.0
    %7075 = vmatprep.subr.mxu0 0.0
    %7076 = vmatpush1.msra.mxu0 0.0
    %7077 = vmatprep.subr.mxu0 0.0
    %7078 = vmatpush1.msra.mxu0 0.0
    %7079 = vmatprep.subr.mxu0 0.0
    %7080 = vmatpush1.msra.mxu0 0.0
    %7081 = vmatprep.subr.mxu0 0.0
    %7082 = vmatpush1.msra.mxu0 0.0
    %7083 = vmatprep.subr.mxu0 0.0
    %7084 = vmatpush1.msra.mxu0 0.0
    %7085 = vmatprep.subr.mxu0 0.0
    %7086 = vmatpush1.msra.mxu0 0.0
    %7087 = vmatprep.subr.mxu0 0.0
    %7088 = vmatpush1.msra.mxu0 0.0
    %7089 = vmatprep.subr.mxu0 0.0
    %7090 = vmatpush1.msra.mxu0 0.0
    %7091 = vmatprep.subr.mxu0 0.0
    %7092 = vmatpush1.msra.mxu0 0.0
    %7093 = vmatprep.subr.mxu0 0.0
    %7094 = vmatpush1.msra.mxu0 0.0
    %7095 = vmatprep.subr.mxu0 0.0
    %7096 = vmatpush1.msra.mxu0 0.0
    %7097 = vmatprep.subr.mxu0 0.0
    %7098 = vmatpush1.msra.mxu0 0.0
    %7099 = vmatprep.subr.mxu0 0.0
    %7100 = vmatpush1.msra.mxu0 0.0
    %7101 = vmatprep.subr.mxu0 0.0
    %7102 = vmatpush1.msra.mxu0 0.0
    %7103 = vmatprep.subr.mxu0 0.0
    %7104 = vmatpush1.msra.mxu0 0.0
    %7105 = vmatprep.mubr.f32.mxu0 0.0
    %7106 = vmatmul.mubr.f32.gmra.mrb[0].mxu0 %v7036
    %v7107 = vpop.f32.mrb[0].mxu0
    %v7108 = vadd.f32 0.0, %v7107
    %v7109 = vpop.f32.mrb[0].mxu0
    %7110 = vmatprep.mubr.f32.mxu0 0.0
    %7111 = vmatmul.mubr.f32.gmra.mrb[0].mxu0 %v7039
    %v7112 = vpop.f32.mrb[0].mxu0
    %v7113 = vadd.f32 0.0, %v7112
    %v7114 = vpop.f32.mrb[0].mxu0
    %7115 = vdwg.mxu0
    %v7116 = vadd.f32 %v6827, %v7108
    %v7117 = vadd.f32 %v6832, %v7113
    %7118 = vrot.lane.b32.xlu0 %v6263, 104
    %v7119 = vpop.permute.xlu0 %7118
    %7120 = vrot.lane.b32.xlu0 %v6268, 104
    %v7121 = vpop.permute.xlu0 %7120
    %7122 = vrot.lane.b32.xlu0 %v6263, 72
    %v7123 = vpop.permute.xlu0 %7122
    %7124 = vrot.lane.b32.xlu0 %v6268, 72
    %v7125 = vpop.permute.xlu0 %7124
    %v7126 = vsel %vm147, %v7119, 0
    %v7128 = vsel %vm147, %v7121, 0
    %v7130 = vsel %vm147, %v7123, 0
    %v7132 = vsel %vm147, %v7125, 0
    %7134 = vmatprep.subr.mxu0 0.0
    %7135 = vmatpush1.xpose.msra.mxu0 %v7130
    %7136 = vmatprep.subr.mxu0 0.0
    %7137 = vmatpush1.xpose.msra.mxu0 %v7132
    %7138 = vmatprep.subr.mxu0 0.0
    %7139 = vmatpush1.xpose.msra.mxu0 0.0
    %7140 = vmatprep.subr.mxu0 0.0
    %7141 = vmatpush1.xpose.msra.mxu0 0.0
    %7142 = vmatprep.subr.mxu0 0.0
    %7143 = vmatpush1.xpose.msra.mxu0 0.0
    %7144 = vmatprep.subr.mxu0 0.0
    %7145 = vmatpush1.xpose.msra.mxu0 0.0
    %7146 = vmatprep.subr.mxu0 0.0
    %7147 = vmatpush1.xpose.msra.mxu0 0.0
    %7148 = vmatprep.subr.mxu0 0.0
    %7149 = vmatpush1.xpose.msra.mxu0 0.0
    %7150 = vmatprep.subr.mxu0 0.0
    %7151 = vmatpush1.xpose.msra.mxu0 0.0
    %7152 = vmatprep.subr.mxu0 0.0
    %7153 = vmatpush1.xpose.msra.mxu0 0.0
    %7154 = vmatprep.subr.mxu0 0.0
    %7155 = vmatpush1.xpose.msra.mxu0 0.0
    %7156 = vmatprep.subr.mxu0 0.0
    %7157 = vmatpush1.xpose.msra.mxu0 0.0
    %7158 = vmatprep.subr.mxu0 0.0
    %7159 = vmatpush1.xpose.msra.mxu0 0.0
    %7160 = vmatprep.subr.mxu0 0.0
    %7161 = vmatpush1.xpose.msra.mxu0 0.0
    %7162 = vmatprep.subr.mxu0 0.0
    %7163 = vmatpush1.xpose.msra.mxu0 0.0
    %7164 = vmatprep.subr.mxu0 0.0
    %7165 = vmatpush1.xpose.msra.mxu0 0.0
    %7166 = vmatprep.subr.mxu0 0.0
    %7167 = vmatpush1.xpose.msra.mxu0 0.0
    %7168 = vmatprep.subr.mxu0 0.0
    %7169 = vmatpush1.xpose.msra.mxu0 0.0
    %7170 = vmatprep.subr.mxu0 0.0
    %7171 = vmatpush1.xpose.msra.mxu0 0.0
    %7172 = vmatprep.subr.mxu0 0.0
    %7173 = vmatpush1.xpose.msra.mxu0 0.0
    %7174 = vmatprep.subr.mxu0 0.0
    %7175 = vmatpush1.xpose.msra.mxu0 0.0
    %7176 = vmatprep.subr.mxu0 0.0
    %7177 = vmatpush1.xpose.msra.mxu0 0.0
    %7178 = vmatprep.subr.mxu0 0.0
    %7179 = vmatpush1.xpose.msra.mxu0 0.0
    %7180 = vmatprep.subr.mxu0 0.0
    %7181 = vmatpush1.xpose.msra.mxu0 0.0
    %7182 = vmatprep.subr.mxu0 0.0
    %7183 = vmatpush1.xpose.msra.mxu0 0.0
    %7184 = vmatprep.subr.mxu0 0.0
    %7185 = vmatpush1.xpose.msra.mxu0 0.0
    %7186 = vmatprep.subr.mxu0 0.0
    %7187 = vmatpush1.xpose.msra.mxu0 0.0
    %7188 = vmatprep.subr.mxu0 0.0
    %7189 = vmatpush1.xpose.msra.mxu0 0.0
    %7190 = vmatprep.subr.mxu0 0.0
    %7191 = vmatpush1.xpose.msra.mxu0 0.0
    %7192 = vmatprep.subr.mxu0 0.0
    %7193 = vmatpush1.xpose.msra.mxu0 0.0
    %7194 = vmatprep.subr.mxu0 0.0
    %7195 = vmatpush1.xpose.msra.mxu0 0.0
    %7196 = vmatprep.subr.mxu0 0.0
    %7197 = vmatpush1.xpose.msra.mxu0 0.0
    %7198 = vmatprep.mubr.f32.mxu0 0.0
    %7199 = vmatmul.mubr.f32.gmra.mrb[0].mxu0 %v7126
    %v7200 = vpop.f32.mrb[0].mxu0
    %v7201 = vadd.f32 %v36, %v7200
    %v7202 = vpop.f32.mrb[0].mxu0
    %7203 = vmatprep.mubr.f32.mxu0 0.0
    %7204 = vmatmul.mubr.f32.gmra.mrb[0].mxu0 %v7128
    %v7205 = vpop.f32.mrb[0].mxu0
    %v7206 = vadd.f32 %v37, %v7205
    %v7207 = vpop.f32.mrb[0].mxu0
    %7208 = vdwg.mxu0
    %v7209 = vsel %vm231, %v7201, -inf
    %7210 = vmax.xlane.f32.xlu0 %v7209
    %v7211 = vpop.xlane.xlu0 %7210
    %v7212 = vsel %vm231, %v7206, -inf
    %7213 = vmax.xlane.f32.xlu0 %v7212
    %v7214 = vpop.xlane.xlu0 %7213
    %v7215 = vsub.f32 %v7201, %v7211
    %v7216 = vsub.f32 %v7206, %v7214
    %v7217 = vmul.f32 %v7215, 1.442695
    %v7218 = vpow.pop %v7217
    %v7219 = vmul.f32 %v7216, 1.442695
    %v7220 = vpow.pop %v7219
    %v7221 = vsel %vm231, %v7218, 0.0
    %7222 = vadd.xlane.f32.xlu0 %v7221
    %v7223 = vpop.xlane.xlu0 %7222
    %v7224 = vsel %vm231, %v7220, 0.0
    %7225 = vadd.xlane.f32.xlu0 %v7224
    %v7226 = vpop.xlane.xlu0 %7225
    %v7227 = vrcp.pop %v7223
    %v7228 = vrcp.pop %v7226
    %v7229 = vmul.f32 %v7218, %v7227
    %v7230 = vmul.f32 %v7220, %v7228
    %7231 = vrot.lane.b32.xlu0 %v6263, 40
    %v7232 = vpop.permute.xlu0 %7231
    %7233 = vrot.lane.b32.xlu0 %v6268, 40
    %v7234 = vpop.permute.xlu0 %7233
    %v7238 = vsel %vm231, %v7229, 0
    %v7241 = vsel %vm231, %v7230, 0
    %7243 = vmatprep.subr.mxu0 0.0
    %7244 = vmatpush1.msra.mxu0 %v7232
    %7245 = vmatprep.subr.mxu0 0.0
    %7246 = vmatpush1.msra.mxu0 %v7234
    %7247 = vmatprep.subr.mxu0 0.0
    %7248 = vmatpush1.msra.mxu0 0.0
    %7249 = vmatprep.subr.mxu0 0.0
    %7250 = vmatpush1.msra.mxu0 0.0
    %7251 = vmatprep.subr.mxu0 0.0
    %7252 = vmatpush1.msra.mxu0 0.0
    %7253 = vmatprep.subr.mxu0 0.0
    %7254 = vmatpush1.msra.mxu0 0.0
    %7255 = vmatprep.subr.mxu0 0.0
    %7256 = vmatpush1.msra.mxu0 0.0
    %7257 = vmatprep.subr.mxu0 0.0
    %7258 = vmatpush1.msra.mxu0 0.0
    %7259 = vmatprep.subr.mxu0 0.0
    %7260 = vmatpush1.msra.mxu0 0.0
    %7261 = vmatprep.subr.mxu0 0.0
    %7262 = vmatpush1.msra.mxu0 0.0
    %7263 = vmatprep.subr.mxu0 0.0
    %7264 = vmatpush1.msra.mxu0 0.0
    %7265 = vmatprep.subr.mxu0 0.0
    %7266 = vmatpush1.msra.mxu0 0.0
    %7267 = vmatprep.subr.mxu0 0.0
    %7268 = vmatpush1.msra.mxu0 0.0
    %7269 = vmatprep.subr.mxu0 0.0
    %7270 = vmatpush1.msra.mxu0 0.0
    %7271 = vmatprep.subr.mxu0 0.0
    %7272 = vmatpush1.msra.mxu0 0.0
    %7273 = vmatprep.subr.mxu0 0.0
    %7274 = vmatpush1.msra.mxu0 0.0
    %7275 = vmatprep.subr.mxu0 0.0
    %7276 = vmatpush1.msra.mxu0 0.0
    %7277 = vmatprep.subr.mxu0 0.0
    %7278 = vmatpush1.msra.mxu0 0.0
    %7279 = vmatprep.subr.mxu0 0.0
    %7280 = vmatpush1.msra.mxu0 0.0
    %7281 = vmatprep.subr.mxu0 0.0
    %7282 = vmatpush1.msra.mxu0 0.0
    %7283 = vmatprep.subr.mxu0 0.0
    %7284 = vmatpush1.msra.mxu0 0.0
    %7285 = vmatprep.subr.mxu0 0.0
    %7286 = vmatpush1.msra.mxu0 0.0
    %7287 = vmatprep.subr.mxu0 0.0
    %7288 = vmatpush1.msra.mxu0 0.0
    %7289 = vmatprep.subr.mxu0 0.0
    %7290 = vmatpush1.msra.mxu0 0.0
    %7291 = vmatprep.subr.mxu0 0.0
    %7292 = vmatpush1.msra.mxu0 0.0
    %7293 = vmatprep.subr.mxu0 0.0
    %7294 = vmatpush1.msra.mxu0 0.0
    %7295 = vmatprep.subr.mxu0 0.0
    %7296 = vmatpush1.msra.mxu0 0.0
    %7297 = vmatprep.subr.mxu0 0.0
    %7298 = vmatpush1.msra.mxu0 0.0
    %7299 = vmatprep.subr.mxu0 0.0
    %7300 = vmatpush1.msra.mxu0 0.0
    %7301 = vmatprep.subr.mxu0 0.0
    %7302 = vmatpush1.msra.mxu0 0.0
    %7303 = vmatprep.subr.mxu0 0.0
    %7304 = vmatpush1.msra.mxu0 0.0
    %7305 = vmatprep.subr.mxu0 0.0
    %7306 = vmatpush1.msra.mxu0 0.0
    %7307 = vmatprep.mubr.f32.mxu0 0.0
    %7308 = vmatmul.mubr.f32.gmra.mrb[0].mxu0 %v7238
    %v7309 = vpop.f32.mrb[0].mxu0
    %v7310 = vadd.f32 0.0, %v7309
    %v7311 = vpop.f32.mrb[0].mxu0
    %7312 = vmatprep.mubr.f32.mxu0 0.0
    %7313 = vmatmul.mubr.f32.gmra.mrb[0].mxu0 %v7241
    %v7314 = vpop.f32.mrb[0].mxu0
    %v7315 = vadd.f32 0.0, %v7314
    %v7316 = vpop.f32.mrb[0].mxu0
    %7317 = vdwg.mxu0
    %v7319 = vsel %vm147, %v7310, 0
    %v7322 = vsel %vm147, %v7315, 0
    %7324 = vmatprep.subr.mxu0 0.0
    %7325 = vmatpush1.msra.mxu0 %v6274
    %7326 = vmatprep.subr.mxu0 0.0
    %7327 = vmatpush1.msra.mxu0 0.0
    %7328 = vmatprep.subr.mxu0 0.0
    %7329 = vmatpush1.msra.mxu0 0.0
    %7330 = vmatprep.subr.mxu0 0.0
    %7331 = vmatpush1.msra.mxu0 0.0
    %7332 = vmatprep.subr.mxu0 0.0
    %7333 = vmatpush1.msra.mxu0 0.0
    %7334 = vmatprep.subr.mxu0 0.0
    %7335 = vmatpush1.msra.mxu0 0.0
    %7336 = vmatprep.subr.mxu0 0.0
    %7337 = vmatpush1.msra.mxu0 0.0
    %7338 = vmatprep.subr.mxu0 0.0
    %7339 = vmatpush1.msra.mxu0 0.0
    %7340 = vmatprep.subr.mxu0 0.0
    %7341 = vmatpush1.msra.mxu0 0.0
    %7342 = vmatprep.subr.mxu0 0.0
    %7343 = vmatpush1.msra.mxu0 0.0
    %7344 = vmatprep.subr.mxu0 0.0
    %7345 = vmatpush1.msra.mxu0 0.0
    %7346 = vmatprep.subr.mxu0 0.0
    %7347 = vmatpush1.msra.mxu0 0.0
    %7348 = vmatprep.subr.mxu0 0.0
    %7349 = vmatpush1.msra.mxu0 0.0
    %7350 = vmatprep.subr.mxu0 0.0
    %7351 = vmatpush1.msra.mxu0 0.0
    %7352 = vmatprep.subr.mxu0 0.0
    %7353 = vmatpush1.msra.mxu0 0.0
    %7354 = vmatprep.subr.mxu0 0.0
    %7355 = vmatpush1.msra.mxu0 0.0
    %7356 = vmatprep.subr.mxu0 0.0
    %7357 = vmatpush1.msra.mxu0 0.0
    %7358 = vmatprep.subr.mxu0 0.0
    %7359 = vmatpush1.msra.mxu0 0.0
    %7360 = vmatprep.subr.mxu0 0.0
    %7361 = vmatpush1.msra.mxu0 0.0
    %7362 = vmatprep.subr.mxu0 0.0
    %7363 = vmatpush1.msra.mxu0 0.0
    %7364 = vmatprep.subr.mxu0 0.0
    %7365 = vmatpush1.msra.mxu0 0.0
    %7366 = vmatprep.subr.mxu0 0.0
    %7367 = vmatpush1.msra.mxu0 0.0
    %7368 = vmatprep.subr.mxu0 0.0
    %7369 = vmatpush1.msra.mxu0 0.0
    %7370 = vmatprep.subr.mxu0 0.0
    %7371 = vmatpush1.msra.mxu0 0.0
    %7372 = vmatprep.subr.mxu0 0.0
    %7373 = vmatpush1.msra.mxu0 0.0
    %7374 = vmatprep.subr.mxu0 0.0
    %7375 = vmatpush1.msra.mxu0 0.0
    %7376 = vmatprep.subr.mxu0 0.0
    %7377 = vmatpush1.msra.mxu0 0.0
    %7378 = vmatprep.subr.mxu0 0.0
    %7379 = vmatpush1.msra.mxu0 0.0
    %7380 = vmatprep.subr.mxu0 0.0
    %7381 = vmatpush1.msra.mxu0 0.0
    %7382 = vmatprep.subr.mxu0 0.0
    %7383 = vmatpush1.msra.mxu0 0.0
    %7384 = vmatprep.subr.mxu0 0.0
    %7385 = vmatpush1.msra.mxu0 0.0
    %7386 = vmatprep.subr.mxu0 0.0
    %7387 = vmatpush1.msra.mxu0 0.0
    %7388 = vmatprep.mubr.f32.mxu0 0.0
    %7389 = vmatmul.mubr.f32.gmra.mrb[0].mxu0 %v7319
    %v7390 = vpop.f32.mrb[0].mxu0
    %v7391 = vadd.f32 0.0, %v7390
    %v7392 = vpop.f32.mrb[0].mxu0
    %7393 = vmatprep.mubr.f32.mxu0 0.0
    %7394 = vmatmul.mubr.f32.gmra.mrb[0].mxu0 %v7322
    %v7395 = vpop.f32.mrb[0].mxu0
    %v7396 = vadd.f32 0.0, %v7395
    %v7397 = vpop.f32.mrb[0].mxu0
    %7398 = vdwg.mxu0
    %v7399 = vadd.f32 %v7116, %v7391
    %v7400 = vadd.f32 %v7117, %v7396
    %v7401 = vld [vmem:[#allocation2 + $0x318] sm:$0x1]
    %v7402 = vlaneseq
    %v7403 = vshrl.u32 %v7402, 7
    %v7404 = vsub.s32 0, %v7403
    %v7405 = vrot.slane %v7401, %v7404
    %v7406 = vadd.f32 %v7399, %v7405
    %v7407 = vadd.f32 %v7400, %v7405
    %v7408 = vadd.f32 %v2939, %v7406
    %v7409 = vadd.f32 %v2940, %v7407
    %v7410 = vld [vmem:[#allocation2 + $0x390] sm:$0x1]
    %v7411 = vld [vmem:[#allocation2 + $0x398] sm:$0x1]
    %v7412 = vsel %vm55, %v7408, 0.0
    %7413 = vadd.xlane.f32.xlu0 %v7412
    %v7414 = vpop.xlane.xlu0 %7413
    %v7415 = vsel %vm55, %v7409, 0.0
    %7416 = vadd.xlane.f32.xlu0 %v7415
    %v7417 = vpop.xlane.xlu0 %7416
    %v7418 = vmul.f32 %v7414, %v1286
    %v7419 = vmul.f32 %v7417, %v1286
    %v7420 = vsub.f32 %v7408, %v7418
    %v7421 = vsub.f32 %v7409, %v7419
    %v7422 = vmul.f32 %v7420, %v7420
    %v7423 = vmul.f32 %v7421, %v7421
    %v7424 = vsel %vm55, %v7422, 0.0
    %7425 = vadd.xlane.f32.xlu0 %v7424
    %v7426 = vpop.xlane.xlu0 %7425
    %v7427 = vsel %vm55, %v7423, 0.0
    %7428 = vadd.xlane.f32.xlu0 %v7427
    %v7429 = vpop.xlane.xlu0 %7428
    %v7430 = vmul.f32 %v7426, %v1286
    %v7431 = vmul.f32 %v7429, %v1286
    %v7432 = vadd.f32 %v7430, 1e-05
    %v7433 = vadd.f32 %v7431, 1e-05
    %v7434 = vrsqrt.pop %v7432
    %v7435 = vrsqrt.pop %v7433
    %v7436 = vmul.f32 %v7420, %v7434
    %v7437 = vmul.f32 %v7421, %v7435
    %v7438 = vlaneseq
    %v7439 = vshrl.u32 %v7438, 7
    %v7440 = vsub.s32 0, %v7439
    %v7441 = vrot.slane %v7410, %v7440
    %v7442 = vmul.f32 %v7436, %v7441
    %v7443 = vmul.f32 %v7437, %v7441
    %v7444 = vlaneseq
    %v7445 = vshrl.u32 %v7444, 7
    %v7446 = vsub.s32 0, %v7445
    %v7447 = vrot.slane %v7411, %v7446
    %v7448 = vadd.f32 %v7442, %v7447
    %v7449 = vadd.f32 %v7443, %v7447
    %v7450 = vld [vmem:[#allocation2 + $0x320] sm:$0xff]
    %v7451 = vld [vmem:[#allocation2 + $0x328] sm:$0xff]
    %v7452 = vld [vmem:[#allocation2 + $0x330] sm:$0xff]
    %v7453 = vld [vmem:[#allocation2 + $0x338] sm:$0xff]
    %v7454 = vld [vmem:[#allocation2 + $0x340] sm:$0x1]
    %v7455 = vlaneseq
    %v7456 = vshrl.u32 %v7455, 7
    %v7457 = vsub.s32 0, %v7456
    %v7458 = vrot.slane %v7454, %v7457
    %v7460 = vsel %vm55, %v7448, 0
    %v7463 = vsel %vm55, %v7449, 0
    %7465 = vmatprep.subr.mxu0 0.0
    %7466 = vmatpush1.msra.mxu0 %v7450
    %7467 = vmatprep.subr.mxu0 0.0
    %7468 = vmatpush1.msra.mxu0 %v7451
    %7469 = vmatprep.subr.mxu0 0.0
    %7470 = vmatpush1.msra.mxu0 %v7452
    %7471 = vmatprep.subr.mxu0 0.0
    %7472 = vmatpush1.msra.mxu0 %v7453
    %7473 = vmatprep.subr.mxu0 0.0
    %7474 = vmatpush1.msra.mxu0 0.0
    %7475 = vmatprep.subr.mxu0 0.0
    %7476 = vmatpush1.msra.mxu0 0.0
    %7477 = vmatprep.subr.mxu0 0.0
    %7478 = vmatpush1.msra.mxu0 0.0
    %7479 = vmatprep.subr.mxu0 0.0
    %7480 = vmatpush1.msra.mxu0 0.0
    %7481 = vmatprep.subr.mxu0 0.0
    %7482 = vmatpush1.msra.mxu0 0.0
    %7483 = vmatprep.subr.mxu0 0.0
    %7484 = vmatpush1.msra.mxu0 0.0
    %7485 = vmatprep.subr.mxu0 0.0
    %7486 = vmatpush1.msra.mxu0 0.0
    %7487 = vmatprep.subr.mxu0 0.0
    %7488 = vmatpush1.msra.mxu0 0.0
    %7489 = vmatprep.subr.mxu0 0.0
    %7490 = vmatpush1.msra.mxu0 0.0
    %7491 = vmatprep.subr.mxu0 0.0
    %7492 = vmatpush1.msra.mxu0 0.0
    %7493 = vmatprep.subr.mxu0 0.0
    %7494 = vmatpush1.msra.mxu0 0.0
    %7495 = vmatprep.subr.mxu0 0.0
    %7496 = vmatpush1.msra.mxu0 0.0
    %7497 = vmatprep.subr.mxu0 0.0
    %7498 = vmatpush1.msra.mxu0 0.0
    %7499 = vmatprep.subr.mxu0 0.0
    %7500 = vmatpush1.msra.mxu0 0.0
    %7501 = vmatprep.subr.mxu0 0.0
    %7502 = vmatpush1.msra.mxu0 0.0
    %7503 = vmatprep.subr.mxu0 0.0
    %7504 = vmatpush1.msra.mxu0 0.0
    %7505 = vmatprep.subr.mxu0 0.0
    %7506 = vmatpush1.msra.mxu0 0.0
    %7507 = vmatprep.subr.mxu0 0.0
    %7508 = vmatpush1.msra.mxu0 0.0
    %7509 = vmatprep.subr.mxu0 0.0
    %7510 = vmatpush1.msra.mxu0 0.0
    %7511 = vmatprep.subr.mxu0 0.0
    %7512 = vmatpush1.msra.mxu0 0.0
    %7513 = vmatprep.subr.mxu0 0.0
    %7514 = vmatpush1.msra.mxu0 0.0
    %7515 = vmatprep.subr.mxu0 0.0
    %7516 = vmatpush1.msra.mxu0 0.0
    %7517 = vmatprep.subr.mxu0 0.0
    %7518 = vmatpush1.msra.mxu0 0.0
    %7519 = vmatprep.subr.mxu0 0.0
    %7520 = vmatpush1.msra.mxu0 0.0
    %7521 = vmatprep.subr.mxu0 0.0
    %7522 = vmatpush1.msra.mxu0 0.0
    %7523 = vmatprep.subr.mxu0 0.0
    %7524 = vmatpush1.msra.mxu0 0.0
    %7525 = vmatprep.subr.mxu0 0.0
    %7526 = vmatpush1.msra.mxu0 0.0
    %7527 = vmatprep.subr.mxu0 0.0
    %7528 = vmatpush1.msra.mxu0 0.0
    %7529 = vmatprep.mubr.f32.mxu0 0.0
    %7530 = vmatmul.mubr.f32.gmra.mrb[0].mxu0 %v7460
    %v7531 = vpop.f32.mrb[0].mxu0
    %v7532 = vadd.f32 %v7458, %v7531
    %v7533 = vpop.f32.mrb[0].mxu0
    %7534 = vmatprep.mubr.f32.mxu0 0.0
    %7535 = vmatmul.mubr.f32.gmra.mrb[0].mxu0 %v7463
    %v7536 = vpop.f32.mrb[0].mxu0
    %v7537 = vadd.f32 %v7458, %v7536
    %v7538 = vpop.f32.mrb[0].mxu0
    %7539 = vdwg.mxu0
    %v7540 = vmax.f32 %v7532, 0.0
    %v7541 = vmax.f32 %v7537, 0.0
    %v7542 = vld [vmem:[#allocation2 + $0x348] sm:$0xff]
    %v7543 = vld [vmem:[#allocation2 + $0x350] sm:$0xff]
    %v7544 = vld [vmem:[#allocation2 + $0x358] sm:$0xff]
    %v7545 = vld [vmem:[#allocation2 + $0x360] sm:$0xff]
    %v7546 = vld [vmem:[#allocation2 + $0x368] sm:$0xff]
    %v7547 = vld [vmem:[#allocation2 + $0x370] sm:$0xff]
    %v7548 = vld [vmem:[#allocation2 + $0x378] sm:$0xff]
    %v7549 = vld [vmem:[#allocation2 + $0x380] sm:$0xff]
    %v7550 = vld [vmem:[#allocation2 + $0x388] sm:$0x1]
    %v7551 = vlaneseq
    %v7552 = vshrl.u32 %v7551, 7
    %v7553 = vsub.s32 0, %v7552
    %v7554 = vrot.slane %v7550, %v7553
    %v7556 = vsel %vm2817, %v7540, 0
    %v7559 = vsel %vm2817, %v7541, 0
    %7561 = vmatprep.subr.mxu0 0.0
    %7562 = vmatpush1.msra.mxu0 %v7542
    %7563 = vmatprep.subr.mxu0 0.0
    %7564 = vmatpush1.msra.mxu0 %v7543
    %7565 = vmatprep.subr.mxu0 0.0
    %7566 = vmatpush1.msra.mxu0 %v7544
    %7567 = vmatprep.subr.mxu0 0.0
    %7568 = vmatpush1.msra.mxu0 %v7545
    %7569 = vmatprep.subr.mxu0 0.0
    %7570 = vmatpush1.msra.mxu0 %v7546
    %7571 = vmatprep.subr.mxu0 0.0
    %7572 = vmatpush1.msra.mxu0 %v7547
    %7573 = vmatprep.subr.mxu0 0.0
    %7574 = vmatpush1.msra.mxu0 %v7548
    %7575 = vmatprep.subr.mxu0 0.0
    %7576 = vmatpush1.msra.mxu0 %v7549
    %7577 = vmatprep.subr.mxu0 0.0
    %7578 = vmatpush1.msra.mxu0 0.0
    %7579 = vmatprep.subr.mxu0 0.0
    %7580 = vmatpush1.msra.mxu0 0.0
    %7581 = vmatprep.subr.mxu0 0.0
    %7582 = vmatpush1.msra.mxu0 0.0
    %7583 = vmatprep.subr.mxu0 0.0
    %7584 = vmatpush1.msra.mxu0 0.0
    %7585 = vmatprep.subr.mxu0 0.0
    %7586 = vmatpush1.msra.mxu0 0.0
    %7587 = vmatprep.subr.mxu0 0.0
    %7588 = vmatpush1.msra.mxu0 0.0
    %7589 = vmatprep.subr.mxu0 0.0
    %7590 = vmatpush1.msra.mxu0 0.0
    %7591 = vmatprep.subr.mxu0 0.0
    %7592 = vmatpush1.msra.mxu0 0.0
    %7593 = vmatprep.subr.mxu0 0.0
    %7594 = vmatpush1.msra.mxu0 0.0
    %7595 = vmatprep.subr.mxu0 0.0
    %7596 = vmatpush1.msra.mxu0 0.0
    %7597 = vmatprep.subr.mxu0 0.0
    %7598 = vmatpush1.msra.mxu0 0.0
    %7599 = vmatprep.subr.mxu0 0.0
    %7600 = vmatpush1.msra.mxu0 0.0
    %7601 = vmatprep.subr.mxu0 0.0
    %7602 = vmatpush1.msra.mxu0 0.0
    %7603 = vmatprep.subr.mxu0 0.0
    %7604 = vmatpush1.msra.mxu0 0.0
    %7605 = vmatprep.subr.mxu0 0.0
    %7606 = vmatpush1.msra.mxu0 0.0
    %7607 = vmatprep.subr.mxu0 0.0
    %7608 = vmatpush1.msra.mxu0 0.0
    %7609 = vmatprep.subr.mxu0 0.0
    %7610 = vmatpush1.msra.mxu0 0.0
    %7611 = vmatprep.subr.mxu0 0.0
    %7612 = vmatpush1.msra.mxu0 0.0
    %7613 = vmatprep.subr.mxu0 0.0
    %7614 = vmatpush1.msra.mxu0 0.0
    %7615 = vmatprep.subr.mxu0 0.0
    %7616 = vmatpush1.msra.mxu0 0.0
    %7617 = vmatprep.subr.mxu0 0.0
    %7618 = vmatpush1.msra.mxu0 0.0
    %7619 = vmatprep.subr.mxu0 0.0
    %7620 = vmatpush1.msra.mxu0 0.0
    %7621 = vmatprep.subr.mxu0 0.0
    %7622 = vmatpush1.msra.mxu0 0.0
    %7623 = vmatprep.subr.mxu0 0.0
    %7624 = vmatpush1.msra.mxu0 0.0
    %7625 = vmatprep.mubr.f32.mxu0 0.0
    %7626 = vmatmul.mubr.f32.gmra.mrb[0].mxu0 %v7556
    %v7627 = vpop.f32.mrb[0].mxu0
    %v7628 = vadd.f32 %v7554, %v7627
    %v7629 = vpop.f32.mrb[0].mxu0
    %7630 = vmatprep.mubr.f32.mxu0 0.0
    %7631 = vmatmul.mubr.f32.gmra.mrb[0].mxu0 %v7559
    %v7632 = vpop.f32.mrb[0].mxu0
    %v7633 = vadd.f32 %v7554, %v7632
    %v7634 = vpop.f32.mrb[0].mxu0
    %7635 = vdwg.mxu0
    %v7636 = vadd.f32 %v7448, %v7628
    %v7637 = vadd.f32 %v7449, %v7633
    %v7638 = vld [vmem:[#allocation2 + $0x3a0] sm:$0x1]
    %v7639 = vld [vmem:[#allocation2 + $0x3a8] sm:$0x1]
    %v7640 = vsel %vm55, %v7636, 0.0
    %7641 = vadd.xlane.f32.xlu0 %v7640
    %v7642 = vpop.xlane.xlu0 %7641
    %v7643 = vsel %vm55, %v7637, 0.0
    %7644 = vadd.xlane.f32.xlu0 %v7643
    %v7645 = vpop.xlane.xlu0 %7644
    %v7646 = vmul.f32 %v7642, %v1286
    %v7647 = vmul.f32 %v7645, %v1286
    %v7648 = vsub.f32 %v7636, %v7646
    %v7649 = vsub.f32 %v7637, %v7647
    %v7650 = vmul.f32 %v7648, %v7648
    %v7651 = vmul.f32 %v7649, %v7649
    %v7652 = vsel %vm55, %v7650, 0.0
    %7653 = vadd.xlane.f32.xlu0 %v7652
    %v7654 = vpop.xlane.xlu0 %7653
    %v7655 = vsel %vm55, %v7651, 0.0
    %7656 = vadd.xlane.f32.xlu0 %v7655
    %v7657 = vpop.xlane.xlu0 %7656
    %v7658 = vmul.f32 %v7654, %v1286
    %v7659 = vmul.f32 %v7657, %v1286
    %v7660 = vadd.f32 %v7658, 1e-05
    %v7661 = vadd.f32 %v7659, 1e-05
    %v7662 = vrsqrt.pop %v7660
    %v7663 = vrsqrt.pop %v7661
    %v7664 = vmul.f32 %v7648, %v7662
    %v7665 = vmul.f32 %v7649, %v7663
    %v7666 = vlaneseq
    %v7667 = vshrl.u32 %v7666, 7
    %v7668 = vsub.s32 0, %v7667
    %v7669 = vrot.slane %v7638, %v7668
    %v7670 = vmul.f32 %v7664, %v7669
    %v7671 = vmul.f32 %v7665, %v7669
    %v7672 = vlaneseq
    %v7673 = vshrl.u32 %v7672, 7
    %v7674 = vsub.s32 0, %v7673
    %v7675 = vrot.slane %v7639, %v7674
    %v7676 = vadd.f32 %v7670, %v7675
    %v7677 = vadd.f32 %v7671, %v7675
    %v7678 = vld [vmem:[#allocation2 + $0x3b0] sm:$0xff]
    %v7679 = vld [vmem:[#allocation2 + $0x3b8] sm:$0xff]
    %v7680 = vld [vmem:[#allocation2 + $0x3c0] sm:$0xff]
    %v7681 = vld [vmem:[#allocation2 + $0x3c8] sm:$0xff]
    %v7682 = vld [vmem:[#allocation2 + $0x3d0] sm:$0x1]
    %v7683 = vlaneseq
    %v7684 = vshrl.u32 %v7683, 7
    %v7685 = vsub.s32 0, %v7684
    %v7686 = vrot.slane %v7682, %v7685
    %v7688 = vsel %vm55, %v6178, 0
    %v7691 = vsel %vm55, %v6179, 0
    %v7694 = vsel %vm55, %v6180, 0
    %7696 = vmatprep.subr.mxu0 0.0
    %7697 = vmatpush1.msra.mxu0 %v7678
    %7698 = vmatprep.subr.mxu0 0.0
    %7699 = vmatpush1.msra.mxu0 %v7679
    %7700 = vmatprep.subr.mxu0 0.0
    %7701 = vmatpush1.msra.mxu0 %v7680
    %7702 = vmatprep.subr.mxu0 0.0
    %7703 = vmatpush1.msra.mxu0 %v7681
    %7704 = vmatprep.subr.mxu0 0.0
    %7705 = vmatpush1.msra.mxu0 0.0
    %7706 = vmatprep.subr.mxu0 0.0
    %7707 = vmatpush1.msra.mxu0 0.0
    %7708 = vmatprep.subr.mxu0 0.0
    %7709 = vmatpush1.msra.mxu0 0.0
    %7710 = vmatprep.subr.mxu0 0.0
    %7711 = vmatpush1.msra.mxu0 0.0
    %7712 = vmatprep.subr.mxu0 0.0
    %7713 = vmatpush1.msra.mxu0 0.0
    %7714 = vmatprep.subr.mxu0 0.0
    %7715 = vmatpush1.msra.mxu0 0.0
    %7716 = vmatprep.subr.mxu0 0.0
    %7717 = vmatpush1.msra.mxu0 0.0
    %7718 = vmatprep.subr.mxu0 0.0
    %7719 = vmatpush1.msra.mxu0 0.0
    %7720 = vmatprep.subr.mxu0 0.0
    %7721 = vmatpush1.msra.mxu0 0.0
    %7722 = vmatprep.subr.mxu0 0.0
    %7723 = vmatpush1.msra.mxu0 0.0
    %7724 = vmatprep.subr.mxu0 0.0
    %7725 = vmatpush1.msra.mxu0 0.0
    %7726 = vmatprep.subr.mxu0 0.0
    %7727 = vmatpush1.msra.mxu0 0.0
    %7728 = vmatprep.subr.mxu0 0.0
    %7729 = vmatpush1.msra.mxu0 0.0
    %7730 = vmatprep.subr.mxu0 0.0
    %7731 = vmatpush1.msra.mxu0 0.0
    %7732 = vmatprep.subr.mxu0 0.0
    %7733 = vmatpush1.msra.mxu0 0.0
    %7734 = vmatprep.subr.mxu0 0.0
    %7735 = vmatpush1.msra.mxu0 0.0
    %7736 = vmatprep.subr.mxu0 0.0
    %7737 = vmatpush1.msra.mxu0 0.0
    %7738 = vmatprep.subr.mxu0 0.0
    %7739 = vmatpush1.msra.mxu0 0.0
    %7740 = vmatprep.subr.mxu0 0.0
    %7741 = vmatpush1.msra.mxu0 0.0
    %7742 = vmatprep.subr.mxu0 0.0
    %7743 = vmatpush1.msra.mxu0 0.0
    %7744 = vmatprep.subr.mxu0 0.0
    %7745 = vmatpush1.msra.mxu0 0.0
    %7746 = vmatprep.subr.mxu0 0.0
    %7747 = vmatpush1.msra.mxu0 0.0
    %7748 = vmatprep.subr.mxu0 0.0
    %7749 = vmatpush1.msra.mxu0 0.0
    %7750 = vmatprep.subr.mxu0 0.0
    %7751 = vmatpush1.msra.mxu0 0.0
    %7752 = vmatprep.subr.mxu0 0.0
    %7753 = vmatpush1.msra.mxu0 0.0
    %7754 = vmatprep.subr.mxu0 0.0
    %7755 = vmatpush1.msra.mxu0 0.0
    %7756 = vmatprep.subr.mxu0 0.0
    %7757 = vmatpush1.msra.mxu0 0.0
    %7758 = vmatprep.subr.mxu0 0.0
    %7759 = vmatpush1.msra.mxu0 0.0
    %7760 = vmatprep.mubr.f32.mxu0 0.0
    %7761 = vmatmul.mubr.f32.gmra.mrb[0].mxu0 %v7688
    %v7762 = vpop.f32.mrb[0].mxu0
    %v7763 = vadd.f32 %v7686, %v7762
    %v7764 = vpop.f32.mrb[0].mxu0
    %7765 = vmatprep.mubr.f32.mxu0 0.0
    %7766 = vmatmul.mubr.f32.gmra.mrb[0].mxu0 %v7691
    %v7767 = vpop.f32.mrb[0].mxu0
    %v7768 = vadd.f32 %v7686, %v7767
    %v7769 = vpop.f32.mrb[0].mxu0
    %7770 = vmatprep.mubr.f32.mxu0 0.0
    %7771 = vmatmul.mubr.f32.gmra.mrb[0].mxu0 %v7694
    %v7772 = vpop.f32.mrb[0].mxu0
    %v7773 = vadd.f32 %v7686, %v7772
    %v7774 = vpop.f32.mrb[0].mxu0
    %7775 = vdwg.mxu0
    %v7776 = vld [vmem:[#allocation2 + $0x3d8] sm:$0xff]
    %v7777 = vld [vmem:[#allocation2 + $0x3e0] sm:$0xff]
    %v7778 = vld [vmem:[#allocation2 + $0x3e8] sm:$0xff]
    %v7779 = vld [vmem:[#allocation2 + $0x3f0] sm:$0xff]
    %7783 = vrot.lane.b32.xlu0 %v7763, 96
    %v7784 = vpop.permute.xlu0 %7783
    %7785 = vrot.lane.b32.xlu0 %v7768, 96
    %v7786 = vpop.permute.xlu0 %7785
    %7787 = vrot.lane.b32.xlu0 %v7773, 96
    %v7788 = vpop.permute.xlu0 %7787
    %v7789 = vsel %vm147, %v7763, 0
    %v7791 = vsel %vm147, %v7768, 0
    %v7793 = vsel %vm147, %v7773, 0
    %v7795 = vsel %vm147, %v7784, 0
    %v7797 = vsel %vm147, %v7786, 0
    %v7799 = vsel %vm147, %v7788, 0
    %7801 = vmatprep.subr.mxu0 0.0
    %7802 = vmatpush1.xpose.msra.mxu0 %v7795
    %7803 = vmatprep.subr.mxu0 0.0
    %7804 = vmatpush1.xpose.msra.mxu0 %v7797
    %7805 = vmatprep.subr.mxu0 0.0
    %7806 = vmatpush1.xpose.msra.mxu0 %v7799
    %7807 = vmatprep.subr.mxu0 0.0
    %7808 = vmatpush1.xpose.msra.mxu0 0.0
    %7809 = vmatprep.subr.mxu0 0.0
    %7810 = vmatpush1.xpose.msra.mxu0 0.0
    %7811 = vmatprep.subr.mxu0 0.0
    %7812 = vmatpush1.xpose.msra.mxu0 0.0
    %7813 = vmatprep.subr.mxu0 0.0
    %7814 = vmatpush1.xpose.msra.mxu0 0.0
    %7815 = vmatprep.subr.mxu0 0.0
    %7816 = vmatpush1.xpose.msra.mxu0 0.0
    %7817 = vmatprep.subr.mxu0 0.0
    %7818 = vmatpush1.xpose.msra.mxu0 0.0
    %7819 = vmatprep.subr.mxu0 0.0
    %7820 = vmatpush1.xpose.msra.mxu0 0.0
    %7821 = vmatprep.subr.mxu0 0.0
    %7822 = vmatpush1.xpose.msra.mxu0 0.0
    %7823 = vmatprep.subr.mxu0 0.0
    %7824 = vmatpush1.xpose.msra.mxu0 0.0
    %7825 = vmatprep.subr.mxu0 0.0
    %7826 = vmatpush1.xpose.msra.mxu0 0.0
    %7827 = vmatprep.subr.mxu0 0.0
    %7828 = vmatpush1.xpose.msra.mxu0 0.0
    %7829 = vmatprep.subr.mxu0 0.0
    %7830 = vmatpush1.xpose.msra.mxu0 0.0
    %7831 = vmatprep.subr.mxu0 0.0
    %7832 = vmatpush1.xpose.msra.mxu0 0.0
    %7833 = vmatprep.subr.mxu0 0.0
    %7834 = vmatpush1.xpose.msra.mxu0 0.0
    %7835 = vmatprep.subr.mxu0 0.0
    %7836 = vmatpush1.xpose.msra.mxu0 0.0
    %7837 = vmatprep.subr.mxu0 0.0
    %7838 = vmatpush1.xpose.msra.mxu0 0.0
    %7839 = vmatprep.subr.mxu0 0.0
    %7840 = vmatpush1.xpose.msra.mxu0 0.0
    %7841 = vmatprep.subr.mxu0 0.0
    %7842 = vmatpush1.xpose.msra.mxu0 0.0
    %7843 = vmatprep.subr.mxu0 0.0
    %7844 = vmatpush1.xpose.msra.mxu0 0.0
    %7845 = vmatprep.subr.mxu0 0.0
    %7846 = vmatpush1.xpose.msra.mxu0 0.0
    %7847 = vmatprep.subr.mxu0 0.0
    %7848 = vmatpush1.xpose.msra.mxu0 0.0
    %7849 = vmatprep.subr.mxu0 0.0
    %7850 = vmatpush1.xpose.msra.mxu0 0.0
    %7851 = vmatprep.subr.mxu0 0.0
    %7852 = vmatpush1.xpose.msra.mxu0 0.0
    %7853 = vmatprep.subr.mxu0 0.0
    %7854 = vmatpush1.xpose.msra.mxu0 0.0
    %7855 = vmatprep.subr.mxu0 0.0
    %7856 = vmatpush1.xpose.msra.mxu0 0.0
    %7857 = vmatprep.subr.mxu0 0.0
    %7858 = vmatpush1.xpose.msra.mxu0 0.0
    %7859 = vmatprep.subr.mxu0 0.0
    %7860 = vmatpush1.xpose.msra.mxu0 0.0
    %7861 = vmatprep.subr.mxu0 0.0
    %7862 = vmatpush1.xpose.msra.mxu0 0.0
    %7863 = vmatprep.subr.mxu0 0.0
    %7864 = vmatpush1.xpose.msra.mxu0 0.0
    %7865 = vmatprep.mubr.f32.mxu0 0.0
    %7866 = vmatmul.mubr.f32.gmra.mrb[0].mxu0 %v7789
    %v7867 = vpop.f32.mrb[0].mxu0
    %v7868 = vadd.f32 %v40, %v7867
    %v7869 = vpop.f32.mrb[0].mxu0
    %7870 = vmatprep.mubr.f32.mxu0 0.0
    %7871 = vmatmul.mubr.f32.gmra.mrb[0].mxu0 %v7791
    %v7872 = vpop.f32.mrb[0].mxu0
    %v7873 = vadd.f32 %v41, %v7872
    %v7874 = vpop.f32.mrb[0].mxu0
    %7875 = vmatprep.mubr.f32.mxu0 0.0
    %7876 = vmatmul.mubr.f32.gmra.mrb[0].mxu0 %v7793
    %v7877 = vpop.f32.mrb[0].mxu0
    %v7878 = vadd.f32 %v42, %v7877
    %v7879 = vpop.f32.mrb[0].mxu0
    %7880 = vdwg.mxu0
    %v7881 = vsel %vm1601, %v7868, -inf
    %7882 = vmax.xlane.f32.xlu0 %v7881
    %v7883 = vpop.xlane.xlu0 %7882
    %v7884 = vsel %vm1601, %v7873, -inf
    %7885 = vmax.xlane.f32.xlu0 %v7884
    %v7886 = vpop.xlane.xlu0 %7885
    %v7887 = vsel %vm1601, %v7878, -inf
    %7888 = vmax.xlane.f32.xlu0 %v7887
    %v7889 = vpop.xlane.xlu0 %7888
    %v7890 = vsub.f32 %v7868, %v7883
    %v7891 = vsub.f32 %v7873, %v7886
    %v7892 = vsub.f32 %v7878, %v7889
    %v7893 = vmul.f32 %v7890, 1.442695
    %v7894 = vpow.pop %v7893
    %v7895 = vmul.f32 %v7891, 1.442695
    %v7896 = vpow.pop %v7895
    %v7897 = vmul.f32 %v7892, 1.442695
    %v7898 = vpow.pop %v7897
    %v7899 = vsel %vm1601, %v7894, 0.0
    %7900 = vadd.xlane.f32.xlu0 %v7899
    %v7901 = vpop.xlane.xlu0 %7900
    %v7902 = vsel %vm1601, %v7896, 0.0
    %7903 = vadd.xlane.f32.xlu0 %v7902
    %v7904 = vpop.xlane.xlu0 %7903
    %v7905 = vsel %vm1601, %v7898, 0.0
    %7906 = vadd.xlane.f32.xlu0 %v7905
    %v7907 = vpop.xlane.xlu0 %7906
    %v7908 = vrcp.pop %v7901
    %v7909 = vrcp.pop %v7904
    %v7910 = vrcp.pop %v7907
    %v7911 = vmul.f32 %v7894, %v7908
    %v7912 = vmul.f32 %v7896, %v7909
    %v7913 = vmul.f32 %v7898, %v7910
    %7914 = vrot.lane.b32.xlu0 %v7763, 64
    %v7915 = vpop.permute.xlu0 %7914
    %7916 = vrot.lane.b32.xlu0 %v7768, 64
    %v7917 = vpop.permute.xlu0 %7916
    %7918 = vrot.lane.b32.xlu0 %v7773, 64
    %v7919 = vpop.permute.xlu0 %7918
    %v7924 = vsel %vm1601, %v7911, 0
    %v7927 = vsel %vm1601, %v7912, 0
    %v7930 = vsel %vm1601, %v7913, 0
    %7932 = vmatprep.subr.mxu0 0.0
    %7933 = vmatpush1.msra.mxu0 %v7915
    %7934 = vmatprep.subr.mxu0 0.0
    %7935 = vmatpush1.msra.mxu0 %v7917
    %7936 = vmatprep.subr.mxu0 0.0
    %7937 = vmatpush1.msra.mxu0 %v7919
    %7938 = vmatprep.subr.mxu0 0.0
    %7939 = vmatpush1.msra.mxu0 0.0
    %7940 = vmatprep.subr.mxu0 0.0
    %7941 = vmatpush1.msra.mxu0 0.0
    %7942 = vmatprep.subr.mxu0 0.0
    %7943 = vmatpush1.msra.mxu0 0.0
    %7944 = vmatprep.subr.mxu0 0.0
    %7945 = vmatpush1.msra.mxu0 0.0
    %7946 = vmatprep.subr.mxu0 0.0
    %7947 = vmatpush1.msra.mxu0 0.0
    %7948 = vmatprep.subr.mxu0 0.0
    %7949 = vmatpush1.msra.mxu0 0.0
    %7950 = vmatprep.subr.mxu0 0.0
    %7951 = vmatpush1.msra.mxu0 0.0
    %7952 = vmatprep.subr.mxu0 0.0
    %7953 = vmatpush1.msra.mxu0 0.0
    %7954 = vmatprep.subr.mxu0 0.0
    %7955 = vmatpush1.msra.mxu0 0.0
    %7956 = vmatprep.subr.mxu0 0.0
    %7957 = vmatpush1.msra.mxu0 0.0
    %7958 = vmatprep.subr.mxu0 0.0
    %7959 = vmatpush1.msra.mxu0 0.0
    %7960 = vmatprep.subr.mxu0 0.0
    %7961 = vmatpush1.msra.mxu0 0.0
    %7962 = vmatprep.subr.mxu0 0.0
    %7963 = vmatpush1.msra.mxu0 0.0
    %7964 = vmatprep.subr.mxu0 0.0
    %7965 = vmatpush1.msra.mxu0 0.0
    %7966 = vmatprep.subr.mxu0 0.0
    %7967 = vmatpush1.msra.mxu0 0.0
    %7968 = vmatprep.subr.mxu0 0.0
    %7969 = vmatpush1.msra.mxu0 0.0
    %7970 = vmatprep.subr.mxu0 0.0
    %7971 = vmatpush1.msra.mxu0 0.0
    %7972 = vmatprep.subr.mxu0 0.0
    %7973 = vmatpush1.msra.mxu0 0.0
    %7974 = vmatprep.subr.mxu0 0.0
    %7975 = vmatpush1.msra.mxu0 0.0
    %7976 = vmatprep.subr.mxu0 0.0
    %7977 = vmatpush1.msra.mxu0 0.0
    %7978 = vmatprep.subr.mxu0 0.0
    %7979 = vmatpush1.msra.mxu0 0.0
    %7980 = vmatprep.subr.mxu0 0.0
    %7981 = vmatpush1.msra.mxu0 0.0
    %7982 = vmatprep.subr.mxu0 0.0
    %7983 = vmatpush1.msra.mxu0 0.0
    %7984 = vmatprep.subr.mxu0 0.0
    %7985 = vmatpush1.msra.mxu0 0.0
    %7986 = vmatprep.subr.mxu0 0.0
    %7987 = vmatpush1.msra.mxu0 0.0
    %7988 = vmatprep.subr.mxu0 0.0
    %7989 = vmatpush1.msra.mxu0 0.0
    %7990 = vmatprep.subr.mxu0 0.0
    %7991 = vmatpush1.msra.mxu0 0.0
    %7992 = vmatprep.subr.mxu0 0.0
    %7993 = vmatpush1.msra.mxu0 0.0
    %7994 = vmatprep.subr.mxu0 0.0
    %7995 = vmatpush1.msra.mxu0 0.0
    %7996 = vmatprep.mubr.f32.mxu0 0.0
    %7997 = vmatmul.mubr.f32.gmra.mrb[0].mxu0 %v7924
    %v7998 = vpop.f32.mrb[0].mxu0
    %v7999 = vadd.f32 0.0, %v7998
    %v8000 = vpop.f32.mrb[0].mxu0
    %8001 = vmatprep.mubr.f32.mxu0 0.0
    %8002 = vmatmul.mubr.f32.gmra.mrb[0].mxu0 %v7927
    %v8003 = vpop.f32.mrb[0].mxu0
    %v8004 = vadd.f32 0.0, %v8003
    %v8005 = vpop.f32.mrb[0].mxu0
    %8006 = vmatprep.mubr.f32.mxu0 0.0
    %8007 = vmatmul.mubr.f32.gmra.mrb[0].mxu0 %v7930
    %v8008 = vpop.f32.mrb[0].mxu0
    %v8009 = vadd.f32 0.0, %v8008
    %v8010 = vpop.f32.mrb[0].mxu0
    %8011 = vdwg.mxu0
    %8012 = vrot.lane.b32.xlu0 %v7763, 120
    %v8013 = vpop.permute.xlu0 %8012
    %8014 = vrot.lane.b32.xlu0 %v7768, 120
    %v8015 = vpop.permute.xlu0 %8014
    %8016 = vrot.lane.b32.xlu0 %v7773, 120
    %v8017 = vpop.permute.xlu0 %8016
    %8018 = vrot.lane.b32.xlu0 %v7763, 88
    %v8019 = vpop.permute.xlu0 %8018
    %8020 = vrot.lane.b32.xlu0 %v7768, 88
    %v8021 = vpop.permute.xlu0 %8020
    %8022 = vrot.lane.b32.xlu0 %v7773, 88
    %v8023 = vpop.permute.xlu0 %8022
    %v8024 = vsel %vm147, %v8013, 0
    %v8026 = vsel %vm147, %v8015, 0
    %v8028 = vsel %vm147, %v8017, 0
    %v8030 = vsel %vm147, %v8019, 0
    %v8032 = vsel %vm147, %v8021, 0
    %v8034 = vsel %vm147, %v8023, 0
    %8036 = vmatprep.subr.mxu0 0.0
    %8037 = vmatpush1.xpose.msra.mxu0 %v8030
    %8038 = vmatprep.subr.mxu0 0.0
    %8039 = vmatpush1.xpose.msra.mxu0 %v8032
    %8040 = vmatprep.subr.mxu0 0.0
    %8041 = vmatpush1.xpose.msra.mxu0 %v8034
    %8042 = vmatprep.subr.mxu0 0.0
    %8043 = vmatpush1.xpose.msra.mxu0 0.0
    %8044 = vmatprep.subr.mxu0 0.0
    %8045 = vmatpush1.xpose.msra.mxu0 0.0
    %8046 = vmatprep.subr.mxu0 0.0
    %8047 = vmatpush1.xpose.msra.mxu0 0.0
    %8048 = vmatprep.subr.mxu0 0.0
    %8049 = vmatpush1.xpose.msra.mxu0 0.0
    %8050 = vmatprep.subr.mxu0 0.0
    %8051 = vmatpush1.xpose.msra.mxu0 0.0
    %8052 = vmatprep.subr.mxu0 0.0
    %8053 = vmatpush1.xpose.msra.mxu0 0.0
    %8054 = vmatprep.subr.mxu0 0.0
    %8055 = vmatpush1.xpose.msra.mxu0 0.0
    %8056 = vmatprep.subr.mxu0 0.0
    %8057 = vmatpush1.xpose.msra.mxu0 0.0
    %8058 = vmatprep.subr.mxu0 0.0
    %8059 = vmatpush1.xpose.msra.mxu0 0.0
    %8060 = vmatprep.subr.mxu0 0.0
    %8061 = vmatpush1.xpose.msra.mxu0 0.0
    %8062 = vmatprep.subr.mxu0 0.0
    %8063 = vmatpush1.xpose.msra.mxu0 0.0
    %8064 = vmatprep.subr.mxu0 0.0
    %8065 = vmatpush1.xpose.msra.mxu0 0.0
    %8066 = vmatprep.subr.mxu0 0.0
    %8067 = vmatpush1.xpose.msra.mxu0 0.0
    %8068 = vmatprep.subr.mxu0 0.0
    %8069 = vmatpush1.xpose.msra.mxu0 0.0
    %8070 = vmatprep.subr.mxu0 0.0
    %8071 = vmatpush1.xpose.msra.mxu0 0.0
    %8072 = vmatprep.subr.mxu0 0.0
    %8073 = vmatpush1.xpose.msra.mxu0 0.0
    %8074 = vmatprep.subr.mxu0 0.0
    %8075 = vmatpush1.xpose.msra.mxu0 0.0
    %8076 = vmatprep.subr.mxu0 0.0
    %8077 = vmatpush1.xpose.msra.mxu0 0.0
    %8078 = vmatprep.subr.mxu0 0.0
    %8079 = vmatpush1.xpose.msra.mxu0 0.0
    %8080 = vmatprep.subr.mxu0 0.0
    %8081 = vmatpush1.xpose.msra.mxu0 0.0
    %8082 = vmatprep.subr.mxu0 0.0
    %8083 = vmatpush1.xpose.msra.mxu0 0.0
    %8084 = vmatprep.subr.mxu0 0.0
    %8085 = vmatpush1.xpose.msra.mxu0 0.0
    %8086 = vmatprep.subr.mxu0 0.0
    %8087 = vmatpush1.xpose.msra.mxu0 0.0
    %8088 = vmatprep.subr.mxu0 0.0
    %8089 = vmatpush1.xpose.msra.mxu0 0.0
    %8090 = vmatprep.subr.mxu0 0.0
    %8091 = vmatpush1.xpose.msra.mxu0 0.0
    %8092 = vmatprep.subr.mxu0 0.0
    %8093 = vmatpush1.xpose.msra.mxu0 0.0
    %8094 = vmatprep.subr.mxu0 0.0
    %8095 = vmatpush1.xpose.msra.mxu0 0.0
    %8096 = vmatprep.subr.mxu0 0.0
    %8097 = vmatpush1.xpose.msra.mxu0 0.0
    %8098 = vmatprep.subr.mxu0 0.0
    %8099 = vmatpush1.xpose.msra.mxu0 0.0
    %8100 = vmatprep.mubr.f32.mxu0 0.0
    %8101 = vmatmul.mubr.f32.gmra.mrb[0].mxu0 %v8024
    %v8102 = vpop.f32.mrb[0].mxu0
    %v8103 = vadd.f32 %v40, %v8102
    %v8104 = vpop.f32.mrb[0].mxu0
    %8105 = vmatprep.mubr.f32.mxu0 0.0
    %8106 = vmatmul.mubr.f32.gmra.mrb[0].mxu0 %v8026
    %v8107 = vpop.f32.mrb[0].mxu0
    %v8108 = vadd.f32 %v41, %v8107
    %v8109 = vpop.f32.mrb[0].mxu0
    %8110 = vmatprep.mubr.f32.mxu0 0.0
    %8111 = vmatmul.mubr.f32.gmra.mrb[0].mxu0 %v8028
    %v8112 = vpop.f32.mrb[0].mxu0
    %v8113 = vadd.f32 %v42, %v8112
    %v8114 = vpop.f32.mrb[0].mxu0
    %8115 = vdwg.mxu0
    %v8116 = vsel %vm1601, %v8103, -inf
    %8117 = vmax.xlane.f32.xlu0 %v8116
    %v8118 = vpop.xlane.xlu0 %8117
    %v8119 = vsel %vm1601, %v8108, -inf
    %8120 = vmax.xlane.f32.xlu0 %v8119
    %v8121 = vpop.xlane.xlu0 %8120
    %v8122 = vsel %vm1601, %v8113, -inf
    %8123 = vmax.xlane.f32.xlu0 %v8122
    %v8124 = vpop.xlane.xlu0 %8123
    %v8125 = vsub.f32 %v8103, %v8118
    %v8126 = vsub.f32 %v8108, %v8121
    %v8127 = vsub.f32 %v8113, %v8124
    %v8128 = vmul.f32 %v8125, 1.442695
    %v8129 = vpow.pop %v8128
    %v8130 = vmul.f32 %v8126, 1.442695
    %v8131 = vpow.pop %v8130
    %v8132 = vmul.f32 %v8127, 1.442695
    %v8133 = vpow.pop %v8132
    %v8134 = vsel %vm1601, %v8129, 0.0
    %8135 = vadd.xlane.f32.xlu0 %v8134
    %v8136 = vpop.xlane.xlu0 %8135
    %v8137 = vsel %vm1601, %v8131, 0.0
    %8138 = vadd.xlane.f32.xlu0 %v8137
    %v8139 = vpop.xlane.xlu0 %8138
    %v8140 = vsel %vm1601, %v8133, 0.0
    %8141 = vadd.xlane.f32.xlu0 %v8140
    %v8142 = vpop.xlane.xlu0 %8141
    %v8143 = vrcp.pop %v8136
    %v8144 = vrcp.pop %v8139
    %v8145 = vrcp.pop %v8142
    %v8146 = vmul.f32 %v8129, %v8143
    %v8147 = vmul.f32 %v8131, %v8144
    %v8148 = vmul.f32 %v8133, %v8145
    %8149 = vrot.lane.b32.xlu0 %v7763, 56
    %v8150 = vpop.permute.xlu0 %8149
    %8151 = vrot.lane.b32.xlu0 %v7768, 56
    %v8152 = vpop.permute.xlu0 %8151
    %8153 = vrot.lane.b32.xlu0 %v7773, 56
    %v8154 = vpop.permute.xlu0 %8153
    %v8159 = vsel %vm1601, %v8146, 0
    %v8162 = vsel %vm1601, %v8147, 0
    %v8165 = vsel %vm1601, %v8148, 0
    %8167 = vmatprep.subr.mxu0 0.0
    %8168 = vmatpush1.msra.mxu0 %v8150
    %8169 = vmatprep.subr.mxu0 0.0
    %8170 = vmatpush1.msra.mxu0 %v8152
    %8171 = vmatprep.subr.mxu0 0.0
    %8172 = vmatpush1.msra.mxu0 %v8154
    %8173 = vmatprep.subr.mxu0 0.0
    %8174 = vmatpush1.msra.mxu0 0.0
    %8175 = vmatprep.subr.mxu0 0.0
    %8176 = vmatpush1.msra.mxu0 0.0
    %8177 = vmatprep.subr.mxu0 0.0
    %8178 = vmatpush1.msra.mxu0 0.0
    %8179 = vmatprep.subr.mxu0 0.0
    %8180 = vmatpush1.msra.mxu0 0.0
    %8181 = vmatprep.subr.mxu0 0.0
    %8182 = vmatpush1.msra.mxu0 0.0
    %8183 = vmatprep.subr.mxu0 0.0
    %8184 = vmatpush1.msra.mxu0 0.0
    %8185 = vmatprep.subr.mxu0 0.0
    %8186 = vmatpush1.msra.mxu0 0.0
    %8187 = vmatprep.subr.mxu0 0.0
    %8188 = vmatpush1.msra.mxu0 0.0
    %8189 = vmatprep.subr.mxu0 0.0
    %8190 = vmatpush1.msra.mxu0 0.0
    %8191 = vmatprep.subr.mxu0 0.0
    %8192 = vmatpush1.msra.mxu0 0.0
    %8193 = vmatprep.subr.mxu0 0.0
    %8194 = vmatpush1.msra.mxu0 0.0
    %8195 = vmatprep.subr.mxu0 0.0
    %8196 = vmatpush1.msra.mxu0 0.0
    %8197 = vmatprep.subr.mxu0 0.0
    %8198 = vmatpush1.msra.mxu0 0.0
    %8199 = vmatprep.subr.mxu0 0.0
    %8200 = vmatpush1.msra.mxu0 0.0
    %8201 = vmatprep.subr.mxu0 0.0
    %8202 = vmatpush1.msra.mxu0 0.0
    %8203 = vmatprep.subr.mxu0 0.0
    %8204 = vmatpush1.msra.mxu0 0.0
    %8205 = vmatprep.subr.mxu0 0.0
    %8206 = vmatpush1.msra.mxu0 0.0
    %8207 = vmatprep.subr.mxu0 0.0
    %8208 = vmatpush1.msra.mxu0 0.0
    %8209 = vmatprep.subr.mxu0 0.0
    %8210 = vmatpush1.msra.mxu0 0.0
    %8211 = vmatprep.subr.mxu0 0.0
    %8212 = vmatpush1.msra.mxu0 0.0
    %8213 = vmatprep.subr.mxu0 0.0
    %8214 = vmatpush1.msra.mxu0 0.0
    %8215 = vmatprep.subr.mxu0 0.0
    %8216 = vmatpush1.msra.mxu0 0.0
    %8217 = vmatprep.subr.mxu0 0.0
    %8218 = vmatpush1.msra.mxu0 0.0
    %8219 = vmatprep.subr.mxu0 0.0
    %8220 = vmatpush1.msra.mxu0 0.0
    %8221 = vmatprep.subr.mxu0 0.0
    %8222 = vmatpush1.msra.mxu0 0.0
    %8223 = vmatprep.subr.mxu0 0.0
    %8224 = vmatpush1.msra.mxu0 0.0
    %8225 = vmatprep.subr.mxu0 0.0
    %8226 = vmatpush1.msra.mxu0 0.0
    %8227 = vmatprep.subr.mxu0 0.0
    %8228 = vmatpush1.msra.mxu0 0.0
    %8229 = vmatprep.subr.mxu0 0.0
    %8230 = vmatpush1.msra.mxu0 0.0
    %8231 = vmatprep.mubr.f32.mxu0 0.0
    %8232 = vmatmul.mubr.f32.gmra.mrb[0].mxu0 %v8159
    %v8233 = vpop.f32.mrb[0].mxu0
    %v8234 = vadd.f32 0.0, %v8233
    %v8235 = vpop.f32.mrb[0].mxu0
    %8236 = vmatprep.mubr.f32.mxu0 0.0
    %8237 = vmatmul.mubr.f32.gmra.mrb[0].mxu0 %v8162
    %v8238 = vpop.f32.mrb[0].mxu0
    %v8239 = vadd.f32 0.0, %v8238
    %v8240 = vpop.f32.mrb[0].mxu0
    %8241 = vmatprep.mubr.f32.mxu0 0.0
    %8242 = vmatmul.mubr.f32.gmra.mrb[0].mxu0 %v8165
    %v8243 = vpop.f32.mrb[0].mxu0
    %v8244 = vadd.f32 0.0, %v8243
    %v8245 = vpop.f32.mrb[0].mxu0
    %8246 = vdwg.mxu0
    %v8248 = vsel %vm147, %v8234, 0
    %v8251 = vsel %vm147, %v8239, 0
    %v8254 = vsel %vm147, %v8244, 0
    %8256 = vmatprep.subr.mxu0 0.0
    %8257 = vmatpush1.msra.mxu0 %v7777
    %8258 = vmatprep.subr.mxu0 0.0
    %8259 = vmatpush1.msra.mxu0 0.0
    %8260 = vmatprep.subr.mxu0 0.0
    %8261 = vmatpush1.msra.mxu0 0.0
    %8262 = vmatprep.subr.mxu0 0.0
    %8263 = vmatpush1.msra.mxu0 0.0
    %8264 = vmatprep.subr.mxu0 0.0
    %8265 = vmatpush1.msra.mxu0 0.0
    %8266 = vmatprep.subr.mxu0 0.0
    %8267 = vmatpush1.msra.mxu0 0.0
    %8268 = vmatprep.subr.mxu0 0.0
    %8269 = vmatpush1.msra.mxu0 0.0
    %8270 = vmatprep.subr.mxu0 0.0
    %8271 = vmatpush1.msra.mxu0 0.0
    %8272 = vmatprep.subr.mxu0 0.0
    %8273 = vmatpush1.msra.mxu0 0.0
    %8274 = vmatprep.subr.mxu0 0.0
    %8275 = vmatpush1.msra.mxu0 0.0
    %8276 = vmatprep.subr.mxu0 0.0
    %8277 = vmatpush1.msra.mxu0 0.0
    %8278 = vmatprep.subr.mxu0 0.0
    %8279 = vmatpush1.msra.mxu0 0.0
    %8280 = vmatprep.subr.mxu0 0.0
    %8281 = vmatpush1.msra.mxu0 0.0
    %8282 = vmatprep.subr.mxu0 0.0
    %8283 = vmatpush1.msra.mxu0 0.0
    %8284 = vmatprep.subr.mxu0 0.0
    %8285 = vmatpush1.msra.mxu0 0.0
    %8286 = vmatprep.subr.mxu0 0.0
    %8287 = vmatpush1.msra.mxu0 0.0
    %8288 = vmatprep.subr.mxu0 0.0
    %8289 = vmatpush1.msra.mxu0 0.0
    %8290 = vmatprep.subr.mxu0 0.0
    %8291 = vmatpush1.msra.mxu0 0.0
    %8292 = vmatprep.subr.mxu0 0.0
    %8293 = vmatpush1.msra.mxu0 0.0
    %8294 = vmatprep.subr.mxu0 0.0
    %8295 = vmatpush1.msra.mxu0 0.0
    %8296 = vmatprep.subr.mxu0 0.0
    %8297 = vmatpush1.msra.mxu0 0.0
    %8298 = vmatprep.subr.mxu0 0.0
    %8299 = vmatpush1.msra.mxu0 0.0
    %8300 = vmatprep.subr.mxu0 0.0
    %8301 = vmatpush1.msra.mxu0 0.0
    %8302 = vmatprep.subr.mxu0 0.0
    %8303 = vmatpush1.msra.mxu0 0.0
    %8304 = vmatprep.subr.mxu0 0.0
    %8305 = vmatpush1.msra.mxu0 0.0
    %8306 = vmatprep.subr.mxu0 0.0
    %8307 = vmatpush1.msra.mxu0 0.0
    %8308 = vmatprep.subr.mxu0 0.0
    %8309 = vmatpush1.msra.mxu0 0.0
    %8310 = vmatprep.subr.mxu0 0.0
    %8311 = vmatpush1.msra.mxu0 0.0
    %8312 = vmatprep.subr.mxu0 0.0
    %8313 = vmatpush1.msra.mxu0 0.0
    %8314 = vmatprep.subr.mxu0 0.0
    %8315 = vmatpush1.msra.mxu0 0.0
    %8316 = vmatprep.subr.mxu0 0.0
    %8317 = vmatpush1.msra.mxu0 0.0
    %8318 = vmatprep.subr.mxu0 0.0
    %8319 = vmatpush1.msra.mxu0 0.0
    %8320 = vmatprep.mubr.f32.mxu0 0.0
    %8321 = vmatmul.mubr.f32.gmra.mrb[0].mxu0 %v8248
    %v8322 = vpop.f32.mrb[0].mxu0
    %v8323 = vadd.f32 0.0, %v8322
    %v8324 = vpop.f32.mrb[0].mxu0
    %8325 = vmatprep.mubr.f32.mxu0 0.0
    %8326 = vmatmul.mubr.f32.gmra.mrb[0].mxu0 %v8251
    %v8327 = vpop.f32.mrb[0].mxu0
    %v8328 = vadd.f32 0.0, %v8327
    %v8329 = vpop.f32.mrb[0].mxu0
    %8330 = vmatprep.mubr.f32.mxu0 0.0
    %8331 = vmatmul.mubr.f32.gmra.mrb[0].mxu0 %v8254
    %v8332 = vpop.f32.mrb[0].mxu0
    %v8333 = vadd.f32 0.0, %v8332
    %v8334 = vpop.f32.mrb[0].mxu0
    %8335 = vdwg.mxu0
    %v8337 = vsel %vm147, %v7999, 0
    %v8340 = vsel %vm147, %v8004, 0
    %v8343 = vsel %vm147, %v8009, 0
    %8345 = vmatprep.subr.mxu0 0.0
    %8346 = vmatpush1.msra.mxu0 %v7776
    %8347 = vmatprep.subr.mxu0 0.0
    %8348 = vmatpush1.msra.mxu0 0.0
    %8349 = vmatprep.subr.mxu0 0.0
    %8350 = vmatpush1.msra.mxu0 0.0
    %8351 = vmatprep.subr.mxu0 0.0
    %8352 = vmatpush1.msra.mxu0 0.0
    %8353 = vmatprep.subr.mxu0 0.0
    %8354 = vmatpush1.msra.mxu0 0.0
    %8355 = vmatprep.subr.mxu0 0.0
    %8356 = vmatpush1.msra.mxu0 0.0
    %8357 = vmatprep.subr.mxu0 0.0
    %8358 = vmatpush1.msra.mxu0 0.0
    %8359 = vmatprep.subr.mxu0 0.0
    %8360 = vmatpush1.msra.mxu0 0.0
    %8361 = vmatprep.subr.mxu0 0.0
    %8362 = vmatpush1.msra.mxu0 0.0
    %8363 = vmatprep.subr.mxu0 0.0
    %8364 = vmatpush1.msra.mxu0 0.0
    %8365 = vmatprep.subr.mxu0 0.0
    %8366 = vmatpush1.msra.mxu0 0.0
    %8367 = vmatprep.subr.mxu0 0.0
    %8368 = vmatpush1.msra.mxu0 0.0
    %8369 = vmatprep.subr.mxu0 0.0
    %8370 = vmatpush1.msra.mxu0 0.0
    %8371 = vmatprep.subr.mxu0 0.0
    %8372 = vmatpush1.msra.mxu0 0.0
    %8373 = vmatprep.subr.mxu0 0.0
    %8374 = vmatpush1.msra.mxu0 0.0
    %8375 = vmatprep.subr.mxu0 0.0
    %8376 = vmatpush1.msra.mxu0 0.0
    %8377 = vmatprep.subr.mxu0 0.0
    %8378 = vmatpush1.msra.mxu0 0.0
    %8379 = vmatprep.subr.mxu0 0.0
    %8380 = vmatpush1.msra.mxu0 0.0
    %8381 = vmatprep.subr.mxu0 0.0
    %8382 = vmatpush1.msra.mxu0 0.0
    %8383 = vmatprep.subr.mxu0 0.0
    %8384 = vmatpush1.msra.mxu0 0.0
    %8385 = vmatprep.subr.mxu0 0.0
    %8386 = vmatpush1.msra.mxu0 0.0
    %8387 = vmatprep.subr.mxu0 0.0
    %8388 = vmatpush1.msra.mxu0 0.0
    %8389 = vmatprep.subr.mxu0 0.0
    %8390 = vmatpush1.msra.mxu0 0.0
    %8391 = vmatprep.subr.mxu0 0.0
    %8392 = vmatpush1.msra.mxu0 0.0
    %8393 = vmatprep.subr.mxu0 0.0
    %8394 = vmatpush1.msra.mxu0 0.0
    %8395 = vmatprep.subr.mxu0 0.0
    %8396 = vmatpush1.msra.mxu0 0.0
    %8397 = vmatprep.subr.mxu0 0.0
    %8398 = vmatpush1.msra.mxu0 0.0
    %8399 = vmatprep.subr.mxu0 0.0
    %8400 = vmatpush1.msra.mxu0 0.0
    %8401 = vmatprep.subr.mxu0 0.0
    %8402 = vmatpush1.msra.mxu0 0.0
    %8403 = vmatprep.subr.mxu0 0.0
    %8404 = vmatpush1.msra.mxu0 0.0
    %8405 = vmatprep.subr.mxu0 0.0
    %8406 = vmatpush1.msra.mxu0 0.0
    %8407 = vmatprep.subr.mxu0 0.0
    %8408 = vmatpush1.msra.mxu0 0.0
    %8409 = vmatprep.mubr.f32.mxu0 0.0
    %8410 = vmatmul.mubr.f32.gmra.mrb[0].mxu0 %v8337
    %v8411 = vpop.f32.mrb[0].mxu0
    %v8412 = vadd.f32 %v8323, %v8411
    %v8413 = vpop.f32.mrb[0].mxu0
    %8414 = vmatprep.mubr.f32.mxu0 0.0
    %8415 = vmatmul.mubr.f32.gmra.mrb[0].mxu0 %v8340
    %v8416 = vpop.f32.mrb[0].mxu0
    %v8417 = vadd.f32 %v8328, %v8416
    %v8418 = vpop.f32.mrb[0].mxu0
    %8419 = vmatprep.mubr.f32.mxu0 0.0
    %8420 = vmatmul.mubr.f32.gmra.mrb[0].mxu0 %v8343
    %v8421 = vpop.f32.mrb[0].mxu0
    %v8422 = vadd.f32 %v8333, %v8421
    %v8423 = vpop.f32.mrb[0].mxu0
    %8424 = vdwg.mxu0
    %8425 = vrot.lane.b32.xlu0 %v7763, 112
    %v8426 = vpop.permute.xlu0 %8425
    %8427 = vrot.lane.b32.xlu0 %v7768, 112
    %v8428 = vpop.permute.xlu0 %8427
    %8429 = vrot.lane.b32.xlu0 %v7773, 112
    %v8430 = vpop.permute.xlu0 %8429
    %8431 = vrot.lane.b32.xlu0 %v7763, 80
    %v8432 = vpop.permute.xlu0 %8431
    %8433 = vrot.lane.b32.xlu0 %v7768, 80
    %v8434 = vpop.permute.xlu0 %8433
    %8435 = vrot.lane.b32.xlu0 %v7773, 80
    %v8436 = vpop.permute.xlu0 %8435
    %v8437 = vsel %vm147, %v8426, 0
    %v8439 = vsel %vm147, %v8428, 0
    %v8441 = vsel %vm147, %v8430, 0
    %v8443 = vsel %vm147, %v8432, 0
    %v8445 = vsel %vm147, %v8434, 0
    %v8447 = vsel %vm147, %v8436, 0
    %8449 = vmatprep.subr.mxu0 0.0
    %8450 = vmatpush1.xpose.msra.mxu0 %v8443
    %8451 = vmatprep.subr.mxu0 0.0
    %8452 = vmatpush1.xpose.msra.mxu0 %v8445
    %8453 = vmatprep.subr.mxu0 0.0
    %8454 = vmatpush1.xpose.msra.mxu0 %v8447
    %8455 = vmatprep.subr.mxu0 0.0
    %8456 = vmatpush1.xpose.msra.mxu0 0.0
    %8457 = vmatprep.subr.mxu0 0.0
    %8458 = vmatpush1.xpose.msra.mxu0 0.0
    %8459 = vmatprep.subr.mxu0 0.0
    %8460 = vmatpush1.xpose.msra.mxu0 0.0
    %8461 = vmatprep.subr.mxu0 0.0
    %8462 = vmatpush1.xpose.msra.mxu0 0.0
    %8463 = vmatprep.subr.mxu0 0.0
    %8464 = vmatpush1.xpose.msra.mxu0 0.0
    %8465 = vmatprep.subr.mxu0 0.0
    %8466 = vmatpush1.xpose.msra.mxu0 0.0
    %8467 = vmatprep.subr.mxu0 0.0
    %8468 = vmatpush1.xpose.msra.mxu0 0.0
    %8469 = vmatprep.subr.mxu0 0.0
    %8470 = vmatpush1.xpose.msra.mxu0 0.0
    %8471 = vmatprep.subr.mxu0 0.0
    %8472 = vmatpush1.xpose.msra.mxu0 0.0
    %8473 = vmatprep.subr.mxu0 0.0
    %8474 = vmatpush1.xpose.msra.mxu0 0.0
    %8475 = vmatprep.subr.mxu0 0.0
    %8476 = vmatpush1.xpose.msra.mxu0 0.0
    %8477 = vmatprep.subr.mxu0 0.0
    %8478 = vmatpush1.xpose.msra.mxu0 0.0
    %8479 = vmatprep.subr.mxu0 0.0
    %8480 = vmatpush1.xpose.msra.mxu0 0.0
    %8481 = vmatprep.subr.mxu0 0.0
    %8482 = vmatpush1.xpose.msra.mxu0 0.0
    %8483 = vmatprep.subr.mxu0 0.0
    %8484 = vmatpush1.xpose.msra.mxu0 0.0
    %8485 = vmatprep.subr.mxu0 0.0
    %8486 = vmatpush1.xpose.msra.mxu0 0.0
    %8487 = vmatprep.subr.mxu0 0.0
    %8488 = vmatpush1.xpose.msra.mxu0 0.0
    %8489 = vmatprep.subr.mxu0 0.0
    %8490 = vmatpush1.xpose.msra.mxu0 0.0
    %8491 = vmatprep.subr.mxu0 0.0
    %8492 = vmatpush1.xpose.msra.mxu0 0.0
    %8493 = vmatprep.subr.mxu0 0.0
    %8494 = vmatpush1.xpose.msra.mxu0 0.0
    %8495 = vmatprep.subr.mxu0 0.0
    %8496 = vmatpush1.xpose.msra.mxu0 0.0
    %8497 = vmatprep.subr.mxu0 0.0
    %8498 = vmatpush1.xpose.msra.mxu0 0.0
    %8499 = vmatprep.subr.mxu0 0.0
    %8500 = vmatpush1.xpose.msra.mxu0 0.0
    %8501 = vmatprep.subr.mxu0 0.0
    %8502 = vmatpush1.xpose.msra.mxu0 0.0
    %8503 = vmatprep.subr.mxu0 0.0
    %8504 = vmatpush1.xpose.msra.mxu0 0.0
    %8505 = vmatprep.subr.mxu0 0.0
    %8506 = vmatpush1.xpose.msra.mxu0 0.0
    %8507 = vmatprep.subr.mxu0 0.0
    %8508 = vmatpush1.xpose.msra.mxu0 0.0
    %8509 = vmatprep.subr.mxu0 0.0
    %8510 = vmatpush1.xpose.msra.mxu0 0.0
    %8511 = vmatprep.subr.mxu0 0.0
    %8512 = vmatpush1.xpose.msra.mxu0 0.0
    %8513 = vmatprep.mubr.f32.mxu0 0.0
    %8514 = vmatmul.mubr.f32.gmra.mrb[0].mxu0 %v8437
    %v8515 = vpop.f32.mrb[0].mxu0
    %v8516 = vadd.f32 %v40, %v8515
    %v8517 = vpop.f32.mrb[0].mxu0
    %8518 = vmatprep.mubr.f32.mxu0 0.0
    %8519 = vmatmul.mubr.f32.gmra.mrb[0].mxu0 %v8439
    %v8520 = vpop.f32.mrb[0].mxu0
    %v8521 = vadd.f32 %v41, %v8520
    %v8522 = vpop.f32.mrb[0].mxu0
    %8523 = vmatprep.mubr.f32.mxu0 0.0
    %8524 = vmatmul.mubr.f32.gmra.mrb[0].mxu0 %v8441
    %v8525 = vpop.f32.mrb[0].mxu0
    %v8526 = vadd.f32 %v42, %v8525
    %v8527 = vpop.f32.mrb[0].mxu0
    %8528 = vdwg.mxu0
    %v8529 = vsel %vm1601, %v8516, -inf
    %8530 = vmax.xlane.f32.xlu0 %v8529
    %v8531 = vpop.xlane.xlu0 %8530
    %v8532 = vsel %vm1601, %v8521, -inf
    %8533 = vmax.xlane.f32.xlu0 %v8532
    %v8534 = vpop.xlane.xlu0 %8533
    %v8535 = vsel %vm1601, %v8526, -inf
    %8536 = vmax.xlane.f32.xlu0 %v8535
    %v8537 = vpop.xlane.xlu0 %8536
    %v8538 = vsub.f32 %v8516, %v8531
    %v8539 = vsub.f32 %v8521, %v8534
    %v8540 = vsub.f32 %v8526, %v8537
    %v8541 = vmul.f32 %v8538, 1.442695
    %v8542 = vpow.pop %v8541
    %v8543 = vmul.f32 %v8539, 1.442695
    %v8544 = vpow.pop %v8543
    %v8545 = vmul.f32 %v8540, 1.442695
    %v8546 = vpow.pop %v8545
    %v8547 = vsel %vm1601, %v8542, 0.0
    %8548 = vadd.xlane.f32.xlu0 %v8547
    %v8549 = vpop.xlane.xlu0 %8548
    %v8550 = vsel %vm1601, %v8544, 0.0
    %8551 = vadd.xlane.f32.xlu0 %v8550
    %v8552 = vpop.xlane.xlu0 %8551
    %v8553 = vsel %vm1601, %v8546, 0.0
    %8554 = vadd.xlane.f32.xlu0 %v8553
    %v8555 = vpop.xlane.xlu0 %8554
    %v8556 = vrcp.pop %v8549
    %v8557 = vrcp.pop %v8552
    %v8558 = vrcp.pop %v8555
    %v8559 = vmul.f32 %v8542, %v8556
    %v8560 = vmul.f32 %v8544, %v8557
    %v8561 = vmul.f32 %v8546, %v8558
    %8562 = vrot.lane.b32.xlu0 %v7763, 48
    %v8563 = vpop.permute.xlu0 %8562
    %8564 = vrot.lane.b32.xlu0 %v7768, 48
    %v8565 = vpop.permute.xlu0 %8564
    %8566 = vrot.lane.b32.xlu0 %v7773, 48
    %v8567 = vpop.permute.xlu0 %8566
    %v8572 = vsel %vm1601, %v8559, 0
    %v8575 = vsel %vm1601, %v8560, 0
    %v8578 = vsel %vm1601, %v8561, 0
    %8580 = vmatprep.subr.mxu0 0.0
    %8581 = vmatpush1.msra.mxu0 %v8563
    %8582 = vmatprep.subr.mxu0 0.0
    %8583 = vmatpush1.msra.mxu0 %v8565
    %8584 = vmatprep.subr.mxu0 0.0
    %8585 = vmatpush1.msra.mxu0 %v8567
    %8586 = vmatprep.subr.mxu0 0.0
    %8587 = vmatpush1.msra.mxu0 0.0
    %8588 = vmatprep.subr.mxu0 0.0
    %8589 = vmatpush1.msra.mxu0 0.0
    %8590 = vmatprep.subr.mxu0 0.0
    %8591 = vmatpush1.msra.mxu0 0.0
    %8592 = vmatprep.subr.mxu0 0.0
    %8593 = vmatpush1.msra.mxu0 0.0
    %8594 = vmatprep.subr.mxu0 0.0
    %8595 = vmatpush1.msra.mxu0 0.0
    %8596 = vmatprep.subr.mxu0 0.0
    %8597 = vmatpush1.msra.mxu0 0.0
    %8598 = vmatprep.subr.mxu0 0.0
    %8599 = vmatpush1.msra.mxu0 0.0
    %8600 = vmatprep.subr.mxu0 0.0
    %8601 = vmatpush1.msra.mxu0 0.0
    %8602 = vmatprep.subr.mxu0 0.0
    %8603 = vmatpush1.msra.mxu0 0.0
    %8604 = vmatprep.subr.mxu0 0.0
    %8605 = vmatpush1.msra.mxu0 0.0
    %8606 = vmatprep.subr.mxu0 0.0
    %8607 = vmatpush1.msra.mxu0 0.0
    %8608 = vmatprep.subr.mxu0 0.0
    %8609 = vmatpush1.msra.mxu0 0.0
    %8610 = vmatprep.subr.mxu0 0.0
    %8611 = vmatpush1.msra.mxu0 0.0
    %8612 = vmatprep.subr.mxu0 0.0
    %8613 = vmatpush1.msra.mxu0 0.0
    %8614 = vmatprep.subr.mxu0 0.0
    %8615 = vmatpush1.msra.mxu0 0.0
    %8616 = vmatprep.subr.mxu0 0.0
    %8617 = vmatpush1.msra.mxu0 0.0
    %8618 = vmatprep.subr.mxu0 0.0
    %8619 = vmatpush1.msra.mxu0 0.0
    %8620 = vmatprep.subr.mxu0 0.0
    %8621 = vmatpush1.msra.mxu0 0.0
    %8622 = vmatprep.subr.mxu0 0.0
    %8623 = vmatpush1.msra.mxu0 0.0
    %8624 = vmatprep.subr.mxu0 0.0
    %8625 = vmatpush1.msra.mxu0 0.0
    %8626 = vmatprep.subr.mxu0 0.0
    %8627 = vmatpush1.msra.mxu0 0.0
    %8628 = vmatprep.subr.mxu0 0.0
    %8629 = vmatpush1.msra.mxu0 0.0
    %8630 = vmatprep.subr.mxu0 0.0
    %8631 = vmatpush1.msra.mxu0 0.0
    %8632 = vmatprep.subr.mxu0 0.0
    %8633 = vmatpush1.msra.mxu0 0.0
    %8634 = vmatprep.subr.mxu0 0.0
    %8635 = vmatpush1.msra.mxu0 0.0
    %8636 = vmatprep.subr.mxu0 0.0
    %8637 = vmatpush1.msra.mxu0 0.0
    %8638 = vmatprep.subr.mxu0 0.0
    %8639 = vmatpush1.msra.mxu0 0.0
    %8640 = vmatprep.subr.mxu0 0.0
    %8641 = vmatpush1.msra.mxu0 0.0
    %8642 = vmatprep.subr.mxu0 0.0
    %8643 = vmatpush1.msra.mxu0 0.0
    %8644 = vmatprep.mubr.f32.mxu0 0.0
    %8645 = vmatmul.mubr.f32.gmra.mrb[0].mxu0 %v8572
    %v8646 = vpop.f32.mrb[0].mxu0
    %v8647 = vadd.f32 0.0, %v8646
    %v8648 = vpop.f32.mrb[0].mxu0
    %8649 = vmatprep.mubr.f32.mxu0 0.0
    %8650 = vmatmul.mubr.f32.gmra.mrb[0].mxu0 %v8575
    %v8651 = vpop.f32.mrb[0].mxu0
    %v8652 = vadd.f32 0.0, %v8651
    %v8653 = vpop.f32.mrb[0].mxu0
    %8654 = vmatprep.mubr.f32.mxu0 0.0
    %8655 = vmatmul.mubr.f32.gmra.mrb[0].mxu0 %v8578
    %v8656 = vpop.f32.mrb[0].mxu0
    %v8657 = vadd.f32 0.0, %v8656
    %v8658 = vpop.f32.mrb[0].mxu0
    %8659 = vdwg.mxu0
    %v8661 = vsel %vm147, %v8647, 0
    %v8664 = vsel %vm147, %v8652, 0
    %v8667 = vsel %vm147, %v8657, 0
    %8669 = vmatprep.subr.mxu0 0.0
    %8670 = vmatpush1.msra.mxu0 %v7778
    %8671 = vmatprep.subr.mxu0 0.0
    %8672 = vmatpush1.msra.mxu0 0.0
    %8673 = vmatprep.subr.mxu0 0.0
    %8674 = vmatpush1.msra.mxu0 0.0
    %8675 = vmatprep.subr.mxu0 0.0
    %8676 = vmatpush1.msra.mxu0 0.0
    %8677 = vmatprep.subr.mxu0 0.0
    %8678 = vmatpush1.msra.mxu0 0.0
    %8679 = vmatprep.subr.mxu0 0.0
    %8680 = vmatpush1.msra.mxu0 0.0
    %8681 = vmatprep.subr.mxu0 0.0
    %8682 = vmatpush1.msra.mxu0 0.0
    %8683 = vmatprep.subr.mxu0 0.0
    %8684 = vmatpush1.msra.mxu0 0.0
    %8685 = vmatprep.subr.mxu0 0.0
    %8686 = vmatpush1.msra.mxu0 0.0
    %8687 = vmatprep.subr.mxu0 0.0
    %8688 = vmatpush1.msra.mxu0 0.0
    %8689 = vmatprep.subr.mxu0 0.0
    %8690 = vmatpush1.msra.mxu0 0.0
    %8691 = vmatprep.subr.mxu0 0.0
    %8692 = vmatpush1.msra.mxu0 0.0
    %8693 = vmatprep.subr.mxu0 0.0
    %8694 = vmatpush1.msra.mxu0 0.0
    %8695 = vmatprep.subr.mxu0 0.0
    %8696 = vmatpush1.msra.mxu0 0.0
    %8697 = vmatprep.subr.mxu0 0.0
    %8698 = vmatpush1.msra.mxu0 0.0
    %8699 = vmatprep.subr.mxu0 0.0
    %8700 = vmatpush1.msra.mxu0 0.0
    %8701 = vmatprep.subr.mxu0 0.0
    %8702 = vmatpush1.msra.mxu0 0.0
    %8703 = vmatprep.subr.mxu0 0.0
    %8704 = vmatpush1.msra.mxu0 0.0
    %8705 = vmatprep.subr.mxu0 0.0
    %8706 = vmatpush1.msra.mxu0 0.0
    %8707 = vmatprep.subr.mxu0 0.0
    %8708 = vmatpush1.msra.mxu0 0.0
    %8709 = vmatprep.subr.mxu0 0.0
    %8710 = vmatpush1.msra.mxu0 0.0
    %8711 = vmatprep.subr.mxu0 0.0
    %8712 = vmatpush1.msra.mxu0 0.0
    %8713 = vmatprep.subr.mxu0 0.0
    %8714 = vmatpush1.msra.mxu0 0.0
    %8715 = vmatprep.subr.mxu0 0.0
    %8716 = vmatpush1.msra.mxu0 0.0
    %8717 = vmatprep.subr.mxu0 0.0
    %8718 = vmatpush1.msra.mxu0 0.0
    %8719 = vmatprep.subr.mxu0 0.0
    %8720 = vmatpush1.msra.mxu0 0.0
    %8721 = vmatprep.subr.mxu0 0.0
    %8722 = vmatpush1.msra.mxu0 0.0
    %8723 = vmatprep.subr.mxu0 0.0
    %8724 = vmatpush1.msra.mxu0 0.0
    %8725 = vmatprep.subr.mxu0 0.0
    %8726 = vmatpush1.msra.mxu0 0.0
    %8727 = vmatprep.subr.mxu0 0.0
    %8728 = vmatpush1.msra.mxu0 0.0
    %8729 = vmatprep.subr.mxu0 0.0
    %8730 = vmatpush1.msra.mxu0 0.0
    %8731 = vmatprep.subr.mxu0 0.0
    %8732 = vmatpush1.msra.mxu0 0.0
    %8733 = vmatprep.mubr.f32.mxu0 0.0
    %8734 = vmatmul.mubr.f32.gmra.mrb[0].mxu0 %v8661
    %v8735 = vpop.f32.mrb[0].mxu0
    %v8736 = vadd.f32 0.0, %v8735
    %v8737 = vpop.f32.mrb[0].mxu0
    %8738 = vmatprep.mubr.f32.mxu0 0.0
    %8739 = vmatmul.mubr.f32.gmra.mrb[0].mxu0 %v8664
    %v8740 = vpop.f32.mrb[0].mxu0
    %v8741 = vadd.f32 0.0, %v8740
    %v8742 = vpop.f32.mrb[0].mxu0
    %8743 = vmatprep.mubr.f32.mxu0 0.0
    %8744 = vmatmul.mubr.f32.gmra.mrb[0].mxu0 %v8667
    %v8745 = vpop.f32.mrb[0].mxu0
    %v8746 = vadd.f32 0.0, %v8745
    %v8747 = vpop.f32.mrb[0].mxu0
    %8748 = vdwg.mxu0
    %v8749 = vadd.f32 %v8412, %v8736
    %v8750 = vadd.f32 %v8417, %v8741
    %v8751 = vadd.f32 %v8422, %v8746
    %8752 = vrot.lane.b32.xlu0 %v7763, 104
    %v8753 = vpop.permute.xlu0 %8752
    %8754 = vrot.lane.b32.xlu0 %v7768, 104
    %v8755 = vpop.permute.xlu0 %8754
    %8756 = vrot.lane.b32.xlu0 %v7773, 104
    %v8757 = vpop.permute.xlu0 %8756
    %8758 = vrot.lane.b32.xlu0 %v7763, 72
    %v8759 = vpop.permute.xlu0 %8758
    %8760 = vrot.lane.b32.xlu0 %v7768, 72
    %v8761 = vpop.permute.xlu0 %8760
    %8762 = vrot.lane.b32.xlu0 %v7773, 72
    %v8763 = vpop.permute.xlu0 %8762
    %v8764 = vsel %vm147, %v8753, 0
    %v8766 = vsel %vm147, %v8755, 0
    %v8768 = vsel %vm147, %v8757, 0
    %v8770 = vsel %vm147, %v8759, 0
    %v8772 = vsel %vm147, %v8761, 0
    %v8774 = vsel %vm147, %v8763, 0
    %8776 = vmatprep.subr.mxu0 0.0
    %8777 = vmatpush1.xpose.msra.mxu0 %v8770
    %8778 = vmatprep.subr.mxu0 0.0
    %8779 = vmatpush1.xpose.msra.mxu0 %v8772
    %8780 = vmatprep.subr.mxu0 0.0
    %8781 = vmatpush1.xpose.msra.mxu0 %v8774
    %8782 = vmatprep.subr.mxu0 0.0
    %8783 = vmatpush1.xpose.msra.mxu0 0.0
    %8784 = vmatprep.subr.mxu0 0.0
    %8785 = vmatpush1.xpose.msra.mxu0 0.0
    %8786 = vmatprep.subr.mxu0 0.0
    %8787 = vmatpush1.xpose.msra.mxu0 0.0
    %8788 = vmatprep.subr.mxu0 0.0
    %8789 = vmatpush1.xpose.msra.mxu0 0.0
    %8790 = vmatprep.subr.mxu0 0.0
    %8791 = vmatpush1.xpose.msra.mxu0 0.0
    %8792 = vmatprep.subr.mxu0 0.0
    %8793 = vmatpush1.xpose.msra.mxu0 0.0
    %8794 = vmatprep.subr.mxu0 0.0
    %8795 = vmatpush1.xpose.msra.mxu0 0.0
    %8796 = vmatprep.subr.mxu0 0.0
    %8797 = vmatpush1.xpose.msra.mxu0 0.0
    %8798 = vmatprep.subr.mxu0 0.0
    %8799 = vmatpush1.xpose.msra.mxu0 0.0
    %8800 = vmatprep.subr.mxu0 0.0
    %8801 = vmatpush1.xpose.msra.mxu0 0.0
    %8802 = vmatprep.subr.mxu0 0.0
    %8803 = vmatpush1.xpose.msra.mxu0 0.0
    %8804 = vmatprep.subr.mxu0 0.0
    %8805 = vmatpush1.xpose.msra.mxu0 0.0
    %8806 = vmatprep.subr.mxu0 0.0
    %8807 = vmatpush1.xpose.msra.mxu0 0.0
    %8808 = vmatprep.subr.mxu0 0.0
    %8809 = vmatpush1.xpose.msra.mxu0 0.0
    %8810 = vmatprep.subr.mxu0 0.0
    %8811 = vmatpush1.xpose.msra.mxu0 0.0
    %8812 = vmatprep.subr.mxu0 0.0
    %8813 = vmatpush1.xpose.msra.mxu0 0.0
    %8814 = vmatprep.subr.mxu0 0.0
    %8815 = vmatpush1.xpose.msra.mxu0 0.0
    %8816 = vmatprep.subr.mxu0 0.0
    %8817 = vmatpush1.xpose.msra.mxu0 0.0
    %8818 = vmatprep.subr.mxu0 0.0
    %8819 = vmatpush1.xpose.msra.mxu0 0.0
    %8820 = vmatprep.subr.mxu0 0.0
    %8821 = vmatpush1.xpose.msra.mxu0 0.0
    %8822 = vmatprep.subr.mxu0 0.0
    %8823 = vmatpush1.xpose.msra.mxu0 0.0
    %8824 = vmatprep.subr.mxu0 0.0
    %8825 = vmatpush1.xpose.msra.mxu0 0.0
    %8826 = vmatprep.subr.mxu0 0.0
    %8827 = vmatpush1.xpose.msra.mxu0 0.0
    %8828 = vmatprep.subr.mxu0 0.0
    %8829 = vmatpush1.xpose.msra.mxu0 0.0
    %8830 = vmatprep.subr.mxu0 0.0
    %8831 = vmatpush1.xpose.msra.mxu0 0.0
    %8832 = vmatprep.subr.mxu0 0.0
    %8833 = vmatpush1.xpose.msra.mxu0 0.0
    %8834 = vmatprep.subr.mxu0 0.0
    %8835 = vmatpush1.xpose.msra.mxu0 0.0
    %8836 = vmatprep.subr.mxu0 0.0
    %8837 = vmatpush1.xpose.msra.mxu0 0.0
    %8838 = vmatprep.subr.mxu0 0.0
    %8839 = vmatpush1.xpose.msra.mxu0 0.0
    %8840 = vmatprep.mubr.f32.mxu0 0.0
    %8841 = vmatmul.mubr.f32.gmra.mrb[0].mxu0 %v8764
    %v8842 = vpop.f32.mrb[0].mxu0
    %v8843 = vadd.f32 %v40, %v8842
    %v8844 = vpop.f32.mrb[0].mxu0
    %8845 = vmatprep.mubr.f32.mxu0 0.0
    %8846 = vmatmul.mubr.f32.gmra.mrb[0].mxu0 %v8766
    %v8847 = vpop.f32.mrb[0].mxu0
    %v8848 = vadd.f32 %v41, %v8847
    %v8849 = vpop.f32.mrb[0].mxu0
    %8850 = vmatprep.mubr.f32.mxu0 0.0
    %8851 = vmatmul.mubr.f32.gmra.mrb[0].mxu0 %v8768
    %v8852 = vpop.f32.mrb[0].mxu0
    %v8853 = vadd.f32 %v42, %v8852
    %v8854 = vpop.f32.mrb[0].mxu0
    %8855 = vdwg.mxu0
    %v8856 = vsel %vm1601, %v8843, -inf
    %8857 = vmax.xlane.f32.xlu0 %v8856
    %v8858 = vpop.xlane.xlu0 %8857
    %v8859 = vsel %vm1601, %v8848, -inf
    %8860 = vmax.xlane.f32.xlu0 %v8859
    %v8861 = vpop.xlane.xlu0 %8860
    %v8862 = vsel %vm1601, %v8853, -inf
    %8863 = vmax.xlane.f32.xlu0 %v8862
    %v8864 = vpop.xlane.xlu0 %8863
    %v8865 = vsub.f32 %v8843, %v8858
    %v8866 = vsub.f32 %v8848, %v8861
    %v8867 = vsub.f32 %v8853, %v8864
    %v8868 = vmul.f32 %v8865, 1.442695
    %v8869 = vpow.pop %v8868
    %v8870 = vmul.f32 %v8866, 1.442695
    %v8871 = vpow.pop %v8870
    %v8872 = vmul.f32 %v8867, 1.442695
    %v8873 = vpow.pop %v8872
    %v8874 = vsel %vm1601, %v8869, 0.0
    %8875 = vadd.xlane.f32.xlu0 %v8874
    %v8876 = vpop.xlane.xlu0 %8875
    %v8877 = vsel %vm1601, %v8871, 0.0
    %8878 = vadd.xlane.f32.xlu0 %v8877
    %v8879 = vpop.xlane.xlu0 %8878
    %v8880 = vsel %vm1601, %v8873, 0.0
    %8881 = vadd.xlane.f32.xlu0 %v8880
    %v8882 = vpop.xlane.xlu0 %8881
    %v8883 = vrcp.pop %v8876
    %v8884 = vrcp.pop %v8879
    %v8885 = vrcp.pop %v8882
    %v8886 = vmul.f32 %v8869, %v8883
    %v8887 = vmul.f32 %v8871, %v8884
    %v8888 = vmul.f32 %v8873, %v8885
    %8889 = vrot.lane.b32.xlu0 %v7763, 40
    %v8890 = vpop.permute.xlu0 %8889
    %8891 = vrot.lane.b32.xlu0 %v7768, 40
    %v8892 = vpop.permute.xlu0 %8891
    %8893 = vrot.lane.b32.xlu0 %v7773, 40
    %v8894 = vpop.permute.xlu0 %8893
    %v8899 = vsel %vm1601, %v8886, 0
    %v8902 = vsel %vm1601, %v8887, 0
    %v8905 = vsel %vm1601, %v8888, 0
    %8907 = vmatprep.subr.mxu0 0.0
    %8908 = vmatpush1.msra.mxu0 %v8890
    %8909 = vmatprep.subr.mxu0 0.0
    %8910 = vmatpush1.msra.mxu0 %v8892
    %8911 = vmatprep.subr.mxu0 0.0
    %8912 = vmatpush1.msra.mxu0 %v8894
    %8913 = vmatprep.subr.mxu0 0.0
    %8914 = vmatpush1.msra.mxu0 0.0
    %8915 = vmatprep.subr.mxu0 0.0
    %8916 = vmatpush1.msra.mxu0 0.0
    %8917 = vmatprep.subr.mxu0 0.0
    %8918 = vmatpush1.msra.mxu0 0.0
    %8919 = vmatprep.subr.mxu0 0.0
    %8920 = vmatpush1.msra.mxu0 0.0
    %8921 = vmatprep.subr.mxu0 0.0
    %8922 = vmatpush1.msra.mxu0 0.0
    %8923 = vmatprep.subr.mxu0 0.0
    %8924 = vmatpush1.msra.mxu0 0.0
    %8925 = vmatprep.subr.mxu0 0.0
    %8926 = vmatpush1.msra.mxu0 0.0
    %8927 = vmatprep.subr.mxu0 0.0
    %8928 = vmatpush1.msra.mxu0 0.0
    %8929 = vmatprep.subr.mxu0 0.0
    %8930 = vmatpush1.msra.mxu0 0.0
    %8931 = vmatprep.subr.mxu0 0.0
    %8932 = vmatpush1.msra.mxu0 0.0
    %8933 = vmatprep.subr.mxu0 0.0
    %8934 = vmatpush1.msra.mxu0 0.0
    %8935 = vmatprep.subr.mxu0 0.0
    %8936 = vmatpush1.msra.mxu0 0.0
    %8937 = vmatprep.subr.mxu0 0.0
    %8938 = vmatpush1.msra.mxu0 0.0
    %8939 = vmatprep.subr.mxu0 0.0
    %8940 = vmatpush1.msra.mxu0 0.0
    %8941 = vmatprep.subr.mxu0 0.0
    %8942 = vmatpush1.msra.mxu0 0.0
    %8943 = vmatprep.subr.mxu0 0.0
    %8944 = vmatpush1.msra.mxu0 0.0
    %8945 = vmatprep.subr.mxu0 0.0
    %8946 = vmatpush1.msra.mxu0 0.0
    %8947 = vmatprep.subr.mxu0 0.0
    %8948 = vmatpush1.msra.mxu0 0.0
    %8949 = vmatprep.subr.mxu0 0.0
    %8950 = vmatpush1.msra.mxu0 0.0
    %8951 = vmatprep.subr.mxu0 0.0
    %8952 = vmatpush1.msra.mxu0 0.0
    %8953 = vmatprep.subr.mxu0 0.0
    %8954 = vmatpush1.msra.mxu0 0.0
    %8955 = vmatprep.subr.mxu0 0.0
    %8956 = vmatpush1.msra.mxu0 0.0
    %8957 = vmatprep.subr.mxu0 0.0
    %8958 = vmatpush1.msra.mxu0 0.0
    %8959 = vmatprep.subr.mxu0 0.0
    %8960 = vmatpush1.msra.mxu0 0.0
    %8961 = vmatprep.subr.mxu0 0.0
    %8962 = vmatpush1.msra.mxu0 0.0
    %8963 = vmatprep.subr.mxu0 0.0
    %8964 = vmatpush1.msra.mxu0 0.0
    %8965 = vmatprep.subr.mxu0 0.0
    %8966 = vmatpush1.msra.mxu0 0.0
    %8967 = vmatprep.subr.mxu0 0.0
    %8968 = vmatpush1.msra.mxu0 0.0
    %8969 = vmatprep.subr.mxu0 0.0
    %8970 = vmatpush1.msra.mxu0 0.0
    %8971 = vmatprep.mubr.f32.mxu0 0.0
    %8972 = vmatmul.mubr.f32.gmra.mrb[0].mxu0 %v8899
    %v8973 = vpop.f32.mrb[0].mxu0
    %v8974 = vadd.f32 0.0, %v8973
    %v8975 = vpop.f32.mrb[0].mxu0
    %8976 = vmatprep.mubr.f32.mxu0 0.0
    %8977 = vmatmul.mubr.f32.gmra.mrb[0].mxu0 %v8902
    %v8978 = vpop.f32.mrb[0].mxu0
    %v8979 = vadd.f32 0.0, %v8978
    %v8980 = vpop.f32.mrb[0].mxu0
    %8981 = vmatprep.mubr.f32.mxu0 0.0
    %8982 = vmatmul.mubr.f32.gmra.mrb[0].mxu0 %v8905
    %v8983 = vpop.f32.mrb[0].mxu0
    %v8984 = vadd.f32 0.0, %v8983
    %v8985 = vpop.f32.mrb[0].mxu0
    %8986 = vdwg.mxu0
    %v8988 = vsel %vm147, %v8974, 0
    %v8991 = vsel %vm147, %v8979, 0
    %v8994 = vsel %vm147, %v8984, 0
    %8996 = vmatprep.subr.mxu0 0.0
    %8997 = vmatpush1.msra.mxu0 %v7779
    %8998 = vmatprep.subr.mxu0 0.0
    %8999 = vmatpush1.msra.mxu0 0.0
    %9000 = vmatprep.subr.mxu0 0.0
    %9001 = vmatpush1.msra.mxu0 0.0
    %9002 = vmatprep.subr.mxu0 0.0
    %9003 = vmatpush1.msra.mxu0 0.0
    %9004 = vmatprep.subr.mxu0 0.0
    %9005 = vmatpush1.msra.mxu0 0.0
    %9006 = vmatprep.subr.mxu0 0.0
    %9007 = vmatpush1.msra.mxu0 0.0
    %9008 = vmatprep.subr.mxu0 0.0
    %9009 = vmatpush1.msra.mxu0 0.0
    %9010 = vmatprep.subr.mxu0 0.0
    %9011 = vmatpush1.msra.mxu0 0.0
    %9012 = vmatprep.subr.mxu0 0.0
    %9013 = vmatpush1.msra.mxu0 0.0
    %9014 = vmatprep.subr.mxu0 0.0
    %9015 = vmatpush1.msra.mxu0 0.0
    %9016 = vmatprep.subr.mxu0 0.0
    %9017 = vmatpush1.msra.mxu0 0.0
    %9018 = vmatprep.subr.mxu0 0.0
    %9019 = vmatpush1.msra.mxu0 0.0
    %9020 = vmatprep.subr.mxu0 0.0
    %9021 = vmatpush1.msra.mxu0 0.0
    %9022 = vmatprep.subr.mxu0 0.0
    %9023 = vmatpush1.msra.mxu0 0.0
    %9024 = vmatprep.subr.mxu0 0.0
    %9025 = vmatpush1.msra.mxu0 0.0
    %9026 = vmatprep.subr.mxu0 0.0
    %9027 = vmatpush1.msra.mxu0 0.0
    %9028 = vmatprep.subr.mxu0 0.0
    %9029 = vmatpush1.msra.mxu0 0.0
    %9030 = vmatprep.subr.mxu0 0.0
    %9031 = vmatpush1.msra.mxu0 0.0
    %9032 = vmatprep.subr.mxu0 0.0
    %9033 = vmatpush1.msra.mxu0 0.0
    %9034 = vmatprep.subr.mxu0 0.0
    %9035 = vmatpush1.msra.mxu0 0.0
    %9036 = vmatprep.subr.mxu0 0.0
    %9037 = vmatpush1.msra.mxu0 0.0
    %9038 = vmatprep.subr.mxu0 0.0
    %9039 = vmatpush1.msra.mxu0 0.0
    %9040 = vmatprep.subr.mxu0 0.0
    %9041 = vmatpush1.msra.mxu0 0.0
    %9042 = vmatprep.subr.mxu0 0.0
    %9043 = vmatpush1.msra.mxu0 0.0
    %9044 = vmatprep.subr.mxu0 0.0
    %9045 = vmatpush1.msra.mxu0 0.0
    %9046 = vmatprep.subr.mxu0 0.0
    %9047 = vmatpush1.msra.mxu0 0.0
    %9048 = vmatprep.subr.mxu0 0.0
    %9049 = vmatpush1.msra.mxu0 0.0
    %9050 = vmatprep.subr.mxu0 0.0
    %9051 = vmatpush1.msra.mxu0 0.0
    %9052 = vmatprep.subr.mxu0 0.0
    %9053 = vmatpush1.msra.mxu0 0.0
    %9054 = vmatprep.subr.mxu0 0.0
    %9055 = vmatpush1.msra.mxu0 0.0
    %9056 = vmatprep.subr.mxu0 0.0
    %9057 = vmatpush1.msra.mxu0 0.0
    %9058 = vmatprep.subr.mxu0 0.0
    %9059 = vmatpush1.msra.mxu0 0.0
    %9060 = vmatprep.mubr.f32.mxu0 0.0
    %9061 = vmatmul.mubr.f32.gmra.mrb[0].mxu0 %v8988
    %v9062 = vpop.f32.mrb[0].mxu0
    %v9063 = vadd.f32 0.0, %v9062
    %v9064 = vpop.f32.mrb[0].mxu0
    %9065 = vmatprep.mubr.f32.mxu0 0.0
    %9066 = vmatmul.mubr.f32.gmra.mrb[0].mxu0 %v8991
    %v9067 = vpop.f32.mrb[0].mxu0
    %v9068 = vadd.f32 0.0, %v9067
    %v9069 = vpop.f32.mrb[0].mxu0
    %9070 = vmatprep.mubr.f32.mxu0 0.0
    %9071 = vmatmul.mubr.f32.gmra.mrb[0].mxu0 %v8994
    %v9072 = vpop.f32.mrb[0].mxu0
    %v9073 = vadd.f32 0.0, %v9072
    %v9074 = vpop.f32.mrb[0].mxu0
    %9075 = vdwg.mxu0
    %v9076 = vadd.f32 %v8749, %v9063
    %v9077 = vadd.f32 %v8750, %v9068
    %v9078 = vadd.f32 %v8751, %v9073
    %v9079 = vld [vmem:[#allocation2 + $0x3f8] sm:$0x1]
    %v9080 = vlaneseq
    %v9081 = vshrl.u32 %v9080, 7
    %v9082 = vsub.s32 0, %v9081
    %v9083 = vrot.slane %v9079, %v9082
    %v9084 = vadd.f32 %v9076, %v9083
    %v9085 = vadd.f32 %v9077, %v9083
    %v9086 = vadd.f32 %v9078, %v9083
    %v9087 = vadd.f32 %v6178, %v9084
    %v9088 = vadd.f32 %v6179, %v9085
    %v9089 = vadd.f32 %v6180, %v9086
    %v9090 = vld [vmem:[#allocation2 + $0x470] sm:$0x1]
    %v9091 = vld [vmem:[#allocation2 + $0x478] sm:$0x1]
    %v9092 = vsel %vm55, %v9087, 0.0
    %9093 = vadd.xlane.f32.xlu0 %v9092
    %v9094 = vpop.xlane.xlu0 %9093
    %v9095 = vsel %vm55, %v9088, 0.0
    %9096 = vadd.xlane.f32.xlu0 %v9095
    %v9097 = vpop.xlane.xlu0 %9096
    %v9098 = vsel %vm55, %v9089, 0.0
    %9099 = vadd.xlane.f32.xlu0 %v9098
    %v9100 = vpop.xlane.xlu0 %9099
    %v9101 = vmul.f32 %v9094, %v1286
    %v9102 = vmul.f32 %v9097, %v1286
    %v9103 = vmul.f32 %v9100, %v1286
    %v9104 = vsub.f32 %v9087, %v9101
    %v9105 = vsub.f32 %v9088, %v9102
    %v9106 = vsub.f32 %v9089, %v9103
    %v9107 = vmul.f32 %v9104, %v9104
    %v9108 = vmul.f32 %v9105, %v9105
    %v9109 = vmul.f32 %v9106, %v9106
    %v9110 = vsel %vm55, %v9107, 0.0
    %9111 = vadd.xlane.f32.xlu0 %v9110
    %v9112 = vpop.xlane.xlu0 %9111
    %v9113 = vsel %vm55, %v9108, 0.0
    %9114 = vadd.xlane.f32.xlu0 %v9113
    %v9115 = vpop.xlane.xlu0 %9114
    %v9116 = vsel %vm55, %v9109, 0.0
    %9117 = vadd.xlane.f32.xlu0 %v9116
    %v9118 = vpop.xlane.xlu0 %9117
    %v9119 = vmul.f32 %v9112, %v1286
    %v9120 = vmul.f32 %v9115, %v1286
    %v9121 = vmul.f32 %v9118, %v1286
    %v9122 = vadd.f32 %v9119, 1e-05
    %v9123 = vadd.f32 %v9120, 1e-05
    %v9124 = vadd.f32 %v9121, 1e-05
    %v9125 = vrsqrt.pop %v9122
    %v9126 = vrsqrt.pop %v9123
    %v9127 = vrsqrt.pop %v9124
    %v9128 = vmul.f32 %v9104, %v9125
    %v9129 = vmul.f32 %v9105, %v9126
    %v9130 = vmul.f32 %v9106, %v9127
    %v9131 = vlaneseq
    %v9132 = vshrl.u32 %v9131, 7
    %v9133 = vsub.s32 0, %v9132
    %v9134 = vrot.slane %v9090, %v9133
    %v9135 = vmul.f32 %v9128, %v9134
    %v9136 = vmul.f32 %v9129, %v9134
    %v9137 = vmul.f32 %v9130, %v9134
    %v9138 = vlaneseq
    %v9139 = vshrl.u32 %v9138, 7
    %v9140 = vsub.s32 0, %v9139
    %v9141 = vrot.slane %v9091, %v9140
    %v9142 = vadd.f32 %v9135, %v9141
    %v9143 = vadd.f32 %v9136, %v9141
    %v9144 = vadd.f32 %v9137, %v9141
    %v9145 = vld [vmem:[#allocation2 + $0x400] sm:$0xff]
    %v9146 = vld [vmem:[#allocation2 + $0x408] sm:$0xff]
    %v9147 = vld [vmem:[#allocation2 + $0x410] sm:$0xff]
    %v9148 = vld [vmem:[#allocation2 + $0x418] sm:$0xff]
    %v9149 = vld [vmem:[#allocation2 + $0x420] sm:$0x1]
    %v9150 = vlaneseq
    %v9151 = vshrl.u32 %v9150, 7
    %v9152 = vsub.s32 0, %v9151
    %v9153 = vrot.slane %v9149, %v9152
    %v9155 = vsel %vm55, %v9142, 0
    %v9158 = vsel %vm55, %v9143, 0
    %v9161 = vsel %vm55, %v9144, 0
    %9163 = vmatprep.subr.mxu0 0.0
    %9164 = vmatpush1.msra.mxu0 %v9145
    %9165 = vmatprep.subr.mxu0 0.0
    %9166 = vmatpush1.msra.mxu0 %v9146
    %9167 = vmatprep.subr.mxu0 0.0
    %9168 = vmatpush1.msra.mxu0 %v9147
    %9169 = vmatprep.subr.mxu0 0.0
    %9170 = vmatpush1.msra.mxu0 %v9148
    %9171 = vmatprep.subr.mxu0 0.0
    %9172 = vmatpush1.msra.mxu0 0.0
    %9173 = vmatprep.subr.mxu0 0.0
    %9174 = vmatpush1.msra.mxu0 0.0
    %9175 = vmatprep.subr.mxu0 0.0
    %9176 = vmatpush1.msra.mxu0 0.0
    %9177 = vmatprep.subr.mxu0 0.0
    %9178 = vmatpush1.msra.mxu0 0.0
    %9179 = vmatprep.subr.mxu0 0.0
    %9180 = vmatpush1.msra.mxu0 0.0
    %9181 = vmatprep.subr.mxu0 0.0
    %9182 = vmatpush1.msra.mxu0 0.0
    %9183 = vmatprep.subr.mxu0 0.0
    %9184 = vmatpush1.msra.mxu0 0.0
    %9185 = vmatprep.subr.mxu0 0.0
    %9186 = vmatpush1.msra.mxu0 0.0
    %9187 = vmatprep.subr.mxu0 0.0
    %9188 = vmatpush1.msra.mxu0 0.0
    %9189 = vmatprep.subr.mxu0 0.0
    %9190 = vmatpush1.msra.mxu0 0.0
    %9191 = vmatprep.subr.mxu0 0.0
    %9192 = vmatpush1.msra.mxu0 0.0
    %9193 = vmatprep.subr.mxu0 0.0
    %9194 = vmatpush1.msra.mxu0 0.0
    %9195 = vmatprep.subr.mxu0 0.0
    %9196 = vmatpush1.msra.mxu0 0.0
    %9197 = vmatprep.subr.mxu0 0.0
    %9198 = vmatpush1.msra.mxu0 0.0
    %9199 = vmatprep.subr.mxu0 0.0
    %9200 = vmatpush1.msra.mxu0 0.0
    %9201 = vmatprep.subr.mxu0 0.0
    %9202 = vmatpush1.msra.mxu0 0.0
    %9203 = vmatprep.subr.mxu0 0.0
    %9204 = vmatpush1.msra.mxu0 0.0
    %9205 = vmatprep.subr.mxu0 0.0
    %9206 = vmatpush1.msra.mxu0 0.0
    %9207 = vmatprep.subr.mxu0 0.0
    %9208 = vmatpush1.msra.mxu0 0.0
    %9209 = vmatprep.subr.mxu0 0.0
    %9210 = vmatpush1.msra.mxu0 0.0
    %9211 = vmatprep.subr.mxu0 0.0
    %9212 = vmatpush1.msra.mxu0 0.0
    %9213 = vmatprep.subr.mxu0 0.0
    %9214 = vmatpush1.msra.mxu0 0.0
    %9215 = vmatprep.subr.mxu0 0.0
    %9216 = vmatpush1.msra.mxu0 0.0
    %9217 = vmatprep.subr.mxu0 0.0
    %9218 = vmatpush1.msra.mxu0 0.0
    %9219 = vmatprep.subr.mxu0 0.0
    %9220 = vmatpush1.msra.mxu0 0.0
    %9221 = vmatprep.subr.mxu0 0.0
    %9222 = vmatpush1.msra.mxu0 0.0
    %9223 = vmatprep.subr.mxu0 0.0
    %9224 = vmatpush1.msra.mxu0 0.0
    %9225 = vmatprep.subr.mxu0 0.0
    %9226 = vmatpush1.msra.mxu0 0.0
    %9227 = vmatprep.mubr.f32.mxu0 0.0
    %9228 = vmatmul.mubr.f32.gmra.mrb[0].mxu0 %v9155
    %v9229 = vpop.f32.mrb[0].mxu0
    %v9230 = vadd.f32 %v9153, %v9229
    %v9231 = vpop.f32.mrb[0].mxu0
    %9232 = vmatprep.mubr.f32.mxu0 0.0
    %9233 = vmatmul.mubr.f32.gmra.mrb[0].mxu0 %v9158
    %v9234 = vpop.f32.mrb[0].mxu0
    %v9235 = vadd.f32 %v9153, %v9234
    %v9236 = vpop.f32.mrb[0].mxu0
    %9237 = vmatprep.mubr.f32.mxu0 0.0
    %9238 = vmatmul.mubr.f32.gmra.mrb[0].mxu0 %v9161
    %v9239 = vpop.f32.mrb[0].mxu0
    %v9240 = vadd.f32 %v9153, %v9239
    %v9241 = vpop.f32.mrb[0].mxu0
    %9242 = vdwg.mxu0
    %v9243 = vmax.f32 %v9230, 0.0
    %v9244 = vmax.f32 %v9235, 0.0
    %v9245 = vmax.f32 %v9240, 0.0
    %v9246 = vld [vmem:[#allocation2 + $0x428] sm:$0xff]
    %v9247 = vld [vmem:[#allocation2 + $0x430] sm:$0xff]
    %v9248 = vld [vmem:[#allocation2 + $0x438] sm:$0xff]
    %v9249 = vld [vmem:[#allocation2 + $0x440] sm:$0xff]
    %v9250 = vld [vmem:[#allocation2 + $0x448] sm:$0xff]
    %v9251 = vld [vmem:[#allocation2 + $0x450] sm:$0xff]
    %v9252 = vld [vmem:[#allocation2 + $0x458] sm:$0xff]
    %v9253 = vld [vmem:[#allocation2 + $0x460] sm:$0xff]
    %v9254 = vld [vmem:[#allocation2 + $0x468] sm:$0x1]
    %v9255 = vlaneseq
    %v9256 = vshrl.u32 %v9255, 7
    %v9257 = vsub.s32 0, %v9256
    %v9258 = vrot.slane %v9254, %v9257
    %v9260 = vsel %vm2817, %v9243, 0
    %v9263 = vsel %vm2817, %v9244, 0
    %v9266 = vsel %vm2817, %v9245, 0
    %9268 = vmatprep.subr.mxu0 0.0
    %9269 = vmatpush1.msra.mxu0 %v9246
    %9270 = vmatprep.subr.mxu0 0.0
    %9271 = vmatpush1.msra.mxu0 %v9247
    %9272 = vmatprep.subr.mxu0 0.0
    %9273 = vmatpush1.msra.mxu0 %v9248
    %9274 = vmatprep.subr.mxu0 0.0
    %9275 = vmatpush1.msra.mxu0 %v9249
    %9276 = vmatprep.subr.mxu0 0.0
    %9277 = vmatpush1.msra.mxu0 %v9250
    %9278 = vmatprep.subr.mxu0 0.0
    %9279 = vmatpush1.msra.mxu0 %v9251
    %9280 = vmatprep.subr.mxu0 0.0
    %9281 = vmatpush1.msra.mxu0 %v9252
    %9282 = vmatprep.subr.mxu0 0.0
    %9283 = vmatpush1.msra.mxu0 %v9253
    %9284 = vmatprep.subr.mxu0 0.0
    %9285 = vmatpush1.msra.mxu0 0.0
    %9286 = vmatprep.subr.mxu0 0.0
    %9287 = vmatpush1.msra.mxu0 0.0
    %9288 = vmatprep.subr.mxu0 0.0
    %9289 = vmatpush1.msra.mxu0 0.0
    %9290 = vmatprep.subr.mxu0 0.0
    %9291 = vmatpush1.msra.mxu0 0.0
    %9292 = vmatprep.subr.mxu0 0.0
    %9293 = vmatpush1.msra.mxu0 0.0
    %9294 = vmatprep.subr.mxu0 0.0
    %9295 = vmatpush1.msra.mxu0 0.0
    %9296 = vmatprep.subr.mxu0 0.0
    %9297 = vmatpush1.msra.mxu0 0.0
    %9298 = vmatprep.subr.mxu0 0.0
    %9299 = vmatpush1.msra.mxu0 0.0
    %9300 = vmatprep.subr.mxu0 0.0
    %9301 = vmatpush1.msra.mxu0 0.0
    %9302 = vmatprep.subr.mxu0 0.0
    %9303 = vmatpush1.msra.mxu0 0.0
    %9304 = vmatprep.subr.mxu0 0.0
    %9305 = vmatpush1.msra.mxu0 0.0
    %9306 = vmatprep.subr.mxu0 0.0
    %9307 = vmatpush1.msra.mxu0 0.0
    %9308 = vmatprep.subr.mxu0 0.0
    %9309 = vmatpush1.msra.mxu0 0.0
    %9310 = vmatprep.subr.mxu0 0.0
    %9311 = vmatpush1.msra.mxu0 0.0
    %9312 = vmatprep.subr.mxu0 0.0
    %9313 = vmatpush1.msra.mxu0 0.0
    %9314 = vmatprep.subr.mxu0 0.0
    %9315 = vmatpush1.msra.mxu0 0.0
    %9316 = vmatprep.subr.mxu0 0.0
    %9317 = vmatpush1.msra.mxu0 0.0
    %9318 = vmatprep.subr.mxu0 0.0
    %9319 = vmatpush1.msra.mxu0 0.0
    %9320 = vmatprep.subr.mxu0 0.0
    %9321 = vmatpush1.msra.mxu0 0.0
    %9322 = vmatprep.subr.mxu0 0.0
    %9323 = vmatpush1.msra.mxu0 0.0
    %9324 = vmatprep.subr.mxu0 0.0
    %9325 = vmatpush1.msra.mxu0 0.0
    %9326 = vmatprep.subr.mxu0 0.0
    %9327 = vmatpush1.msra.mxu0 0.0
    %9328 = vmatprep.subr.mxu0 0.0
    %9329 = vmatpush1.msra.mxu0 0.0
    %9330 = vmatprep.subr.mxu0 0.0
    %9331 = vmatpush1.msra.mxu0 0.0
    %9332 = vmatprep.mubr.f32.mxu0 0.0
    %9333 = vmatmul.mubr.f32.gmra.mrb[0].mxu0 %v9260
    %v9334 = vpop.f32.mrb[0].mxu0
    %v9335 = vadd.f32 %v9258, %v9334
    %v9336 = vpop.f32.mrb[0].mxu0
    %9337 = vmatprep.mubr.f32.mxu0 0.0
    %9338 = vmatmul.mubr.f32.gmra.mrb[0].mxu0 %v9263
    %v9339 = vpop.f32.mrb[0].mxu0
    %v9340 = vadd.f32 %v9258, %v9339
    %v9341 = vpop.f32.mrb[0].mxu0
    %9342 = vmatprep.mubr.f32.mxu0 0.0
    %9343 = vmatmul.mubr.f32.gmra.mrb[0].mxu0 %v9266
    %v9344 = vpop.f32.mrb[0].mxu0
    %v9345 = vadd.f32 %v9258, %v9344
    %v9346 = vpop.f32.mrb[0].mxu0
    %9347 = vdwg.mxu0
    %v9348 = vadd.f32 %v9142, %v9335
    %v9349 = vadd.f32 %v9143, %v9340
    %v9350 = vadd.f32 %v9144, %v9345
    %v9351 = vld [vmem:[#allocation2 + $0x480] sm:$0x1]
    %v9352 = vld [vmem:[#allocation2 + $0x488] sm:$0x1]
    %v9353 = vsel %vm55, %v9348, 0.0
    %9354 = vadd.xlane.f32.xlu0 %v9353
    %v9355 = vpop.xlane.xlu0 %9354
    %v9356 = vsel %vm55, %v9349, 0.0
    %9357 = vadd.xlane.f32.xlu0 %v9356
    %v9358 = vpop.xlane.xlu0 %9357
    %v9359 = vsel %vm55, %v9350, 0.0
    %9360 = vadd.xlane.f32.xlu0 %v9359
    %v9361 = vpop.xlane.xlu0 %9360
    %v9362 = vmul.f32 %v9355, %v1286
    %v9363 = vmul.f32 %v9358, %v1286
    %v9364 = vmul.f32 %v9361, %v1286
    %v9365 = vsub.f32 %v9348, %v9362
    %v9366 = vsub.f32 %v9349, %v9363
    %v9367 = vsub.f32 %v9350, %v9364
    %v9368 = vmul.f32 %v9365, %v9365
    %v9369 = vmul.f32 %v9366, %v9366
    %v9370 = vmul.f32 %v9367, %v9367
    %v9371 = vsel %vm55, %v9368, 0.0
    %9372 = vadd.xlane.f32.xlu0 %v9371
    %v9373 = vpop.xlane.xlu0 %9372
    %v9374 = vsel %vm55, %v9369, 0.0
    %9375 = vadd.xlane.f32.xlu0 %v9374
    %v9376 = vpop.xlane.xlu0 %9375
    %v9377 = vsel %vm55, %v9370, 0.0
    %9378 = vadd.xlane.f32.xlu0 %v9377
    %v9379 = vpop.xlane.xlu0 %9378
    %v9380 = vmul.f32 %v9373, %v1286
    %v9381 = vmul.f32 %v9376, %v1286
    %v9382 = vmul.f32 %v9379, %v1286
    %v9383 = vadd.f32 %v9380, 1e-05
    %v9384 = vadd.f32 %v9381, 1e-05
    %v9385 = vadd.f32 %v9382, 1e-05
    %v9386 = vrsqrt.pop %v9383
    %v9387 = vrsqrt.pop %v9384
    %v9388 = vrsqrt.pop %v9385
    %v9389 = vmul.f32 %v9365, %v9386
    %v9390 = vmul.f32 %v9366, %v9387
    %v9391 = vmul.f32 %v9367, %v9388
    %v9392 = vlaneseq
    %v9393 = vshrl.u32 %v9392, 7
    %v9394 = vsub.s32 0, %v9393
    %v9395 = vrot.slane %v9351, %v9394
    %v9396 = vmul.f32 %v9389, %v9395
    %v9397 = vmul.f32 %v9390, %v9395
    %v9398 = vmul.f32 %v9391, %v9395
    %v9399 = vlaneseq
    %v9400 = vshrl.u32 %v9399, 7
    %v9401 = vsub.s32 0, %v9400
    %v9402 = vrot.slane %v9352, %v9401
    %v9403 = vadd.f32 %v9396, %v9402
    %v9404 = vadd.f32 %v9397, %v9402
    %v9405 = vadd.f32 %v9398, %v9402
    %9406 = vst.msk [vmem:[#allocation5] sm:$0xff] %vm55, %v7676
    %9407 = vst.msk [vmem:[#allocation5 + $0x8] sm:$0xff] %vm55, %v7677
    %9408 = vst.msk [vmem:[%s4] sm:$0xff] %vm55, %v9403
    %9409 = vst.msk [vmem:[%s4 + $0x8] sm:$0xff] %vm55, %v9404
    %9410 = vst.msk [vmem:[%s4 + $0x10] sm:$0xff] %vm55, %v9405
    // Predicated region
    $region18: #{forward.1} parent=1 // pred_check
      _
    $region19: #{forward.1} parent=1 // pred_check_branch
      %9412 = sbr.rel (0) target = $region21
    $region20: #{forward.1} parent=1 // pred_region
      %s9414 = ssub.s32 256, 256
      %9415 = vsyncadd [#allocation4], %s9414
      %s9416 = sshll.u32 [#allocation5], 4
      %s9417 = int_to_ptr.vmem [resolvable:$true] %s9416
      %9422 = dma.vmem_to_hbm [thread:$0]  %s9417, 256, %s3, [#allocation4], 128, 128, 8
    $region21: #{forward.1} parent=1 // pred_fallthru
      _
    // Predicated region
    $region22: #{forward.1} parent=1 // pred_check
      _
    $region23: #{forward.1} parent=1 // pred_check_branch
      %9424 = sbr.rel (0) target = $region25
    $region24: #{forward.1} parent=1 // pred_region
      _
    $region25: #{forward.1} parent=1 // pred_fallthru
      _
    // Predicated region
    $region26: #{forward.1} parent=1 // pred_check
      _
    $region27: #{forward.1} parent=1 // pred_check_branch
      %9426 = sbr.rel (0) target = $region29
    $region28: #{forward.1} parent=1 // pred_region
      %9427 = dma.done [#allocation4], 256
    $region29: #{forward.1} parent=1 // pred_fallthru
      _
    // Predicated region
    $region30: #{forward.1} parent=1 // pred_check
      _
    $region31: #{forward.1} parent=1 // pred_check_branch
      %9429 = sbr.rel (0) target = $region33
    $region32: #{forward.1} parent=1 // pred_region
      _
    $region33: #{forward.1} parent=1 // pred_fallthru
      _
    %9430 = vsyncpa [#allocation3], 1
    %9431 = vsyncpa [#allocation4], 1

</llo_original>
